<compile_context>
chip_gen: v7x
topology: tpu7x:2x2x1
jax: 0.10.0
libtpu: 0.0.40
codegen_flags: <defaults>
</compile_context>

<pallas_src>
import jax
import jax.numpy as jnp
from jax import lax
from jax.experimental import pallas as pl
from jax.experimental.pallas import tpu as pltpu

BN_EPS = 1e-5
LANES = 128      # channel dims padded to a multiple of the TPU lane width
ROW_TILE = 256   # rows per grid step for the flattened (rows, C) kernels
                 # (raise toward 512-1024 for production-size inputs on v6e/v7x)

_COMPILER_PARAMS = pltpu.CompilerParams(
    dimension_semantics=("parallel",),
    vmem_limit_bytes=32 * 1024 * 1024,
)


def _ceil_to(x, m):
    return (x + m - 1) // m * m


def _pad_to(a, shape, value=0.0):
    widths = [(0, t - s) for s, t in zip(a.shape, shape)]
    return jnp.pad(a, widths, constant_values=value)


# ---------------------------------------------------------------------------
# Kernels
# ---------------------------------------------------------------------------

def conv1x1_stats_kernel(x_ref, w_ref, y_ref, ps_ref, pq_ref):
    """1x1 conv == channel matmul on a row tile, plus per-channel partial stats."""
    y = jnp.dot(x_ref[...], w_ref[...], preferred_element_type=jnp.float32)
    y_ref[...] = y
    ps_ref[...] = jnp.sum(y, axis=0, keepdims=True).reshape(1, 1, -1)
    pq_ref[...] = jnp.sum(y * y, axis=0, keepdims=True).reshape(1, 1, -1)


def bn_relu_kernel(y_ref, scale_ref, shift_ref, o_ref):
    """Folded BatchNorm (y*scale + shift) + ReLU on a lane-dense row tile."""
    y = y_ref[...] * scale_ref[...] + shift_ref[...]
    o_ref[...] = jnp.maximum(y, 0.0).astype(o_ref.dtype)


def conv3x3_stats_kernel(xp_ref, w_ref, bias_ref, y_ref, ps_ref, pq_ref):
    """3x3 conv (stride 1) on one pre-padded image + per-channel partial stats.

    xp_ref : (1, H+2, W+2, C)  bf16   zero-padded activation
    w_ref  : (3, 3, C, Cout)   bf16   HWIO weights (channel-padded)
    bias   : (1, Cout)         f32
    y_ref  : (1, H, W, Cout)   f32    raw conv output
    ps/pq  : (1, 1, Cout)      f32    per-image channel sum / sum-of-squares
    """
    _, Hp, Wp, C = xp_ref.shape
    H, W = Hp - 2, Wp - 2
    Cout = y_ref.shape[-1]
    acc = jnp.zeros((H * W, Cout), jnp.float32)
    # 9 shifted (H*W, C) x (C, Cout) matmuls; C is padded to 128 so every MXU
    # push has a full 128-wide contraction (perf review: keep 9-matmul form,
    # but make K a multiple of 128).
    for kh in range(3):
        for kw in range(3):
            patch = xp_ref[:, kh:kh + H, kw:kw + W, :].reshape(H * W, C)
            acc = acc + jnp.dot(patch, w_ref[kh, kw],
                                preferred_element_type=jnp.float32)
    acc = acc + bias_ref[...]
    y_ref[...] = acc.reshape(1, H, W, Cout)
    ps_ref[...] = jnp.sum(acc, axis=0, keepdims=True).reshape(1, 1, -1)
    pq_ref[...] = jnp.sum(acc * acc, axis=0, keepdims=True).reshape(1, 1, -1)


def residual_bn_relu_kernel(y_ref, res_ref, scale_ref, shift_ref, o_ref):
    """Final fused stage: out = ReLU(BN3(y3) + identity)."""
    y = (y_ref[...] * scale_ref[...] + shift_ref[...]
         + res_ref[...].astype(jnp.float32))
    o_ref[...] = jnp.maximum(y, 0.0)


# ---------------------------------------------------------------------------
# pallas_call wrappers
# ---------------------------------------------------------------------------

def _conv1x1_stats(x_flat, w):
    R, Cin = x_flat.shape
    C = w.shape[1]
    grid = (R // ROW_TILE,)
    return pl.pallas_call(
        conv1x1_stats_kernel,
        grid=grid,
        in_specs=[
            pl.BlockSpec((ROW_TILE, Cin), lambda i: (i, 0)),
            pl.BlockSpec((Cin, C), lambda i: (0, 0)),
        ],
        out_specs=[
            pl.BlockSpec((ROW_TILE, C), lambda i: (i, 0)),
            pl.BlockSpec((1, 1, C), lambda i: (i, 0, 0)),
            pl.BlockSpec((1, 1, C), lambda i: (i, 0, 0)),
        ],
        out_shape=[
            jax.ShapeDtypeStruct((R, C), jnp.float32),
            jax.ShapeDtypeStruct((grid[0], 1, C), jnp.float32),
            jax.ShapeDtypeStruct((grid[0], 1, C), jnp.float32),
        ],
        compiler_params=_COMPILER_PARAMS,
    )(x_flat, w)


def _bn_relu(y_flat, scale, shift, out_dtype):
    R, C = y_flat.shape
    grid = (R // ROW_TILE,)
    return pl.pallas_call(
        bn_relu_kernel,
        grid=grid,
        in_specs=[
            pl.BlockSpec((ROW_TILE, C), lambda i: (i, 0)),
            pl.BlockSpec((1, C), lambda i: (0, 0)),
            pl.BlockSpec((1, C), lambda i: (0, 0)),
        ],
        out_specs=pl.BlockSpec((ROW_TILE, C), lambda i: (i, 0)),
        out_shape=jax.ShapeDtypeStruct((R, C), out_dtype),
        compiler_params=_COMPILER_PARAMS,
    )(y_flat, scale, shift)


def _conv3x3_stats(xp, w, bias):
    N, Hp, Wp, C = xp.shape
    H, W = Hp - 2, Wp - 2
    Cout = w.shape[-1]
    grid = (N,)
    return pl.pallas_call(
        conv3x3_stats_kernel,
        grid=grid,
        in_specs=[
            pl.BlockSpec((1, Hp, Wp, C), lambda n: (n, 0, 0, 0)),
            pl.BlockSpec((3, 3, C, Cout), lambda n: (0, 0, 0, 0)),
            pl.BlockSpec((1, Cout), lambda n: (0, 0)),
        ],
        out_specs=[
            pl.BlockSpec((1, H, W, Cout), lambda n: (n, 0, 0, 0)),
            pl.BlockSpec((1, 1, Cout), lambda n: (n, 0, 0)),
            pl.BlockSpec((1, 1, Cout), lambda n: (n, 0, 0)),
        ],
        out_shape=[
            jax.ShapeDtypeStruct((N, H, W, Cout), jnp.float32),
            jax.ShapeDtypeStruct((N, 1, Cout), jnp.float32),
            jax.ShapeDtypeStruct((N, 1, Cout), jnp.float32),
        ],
        compiler_params=_COMPILER_PARAMS,
    )(xp, w, bias)


def _residual_bn_relu(y_flat, res_flat, scale, shift):
    R, C = y_flat.shape
    grid = (R // ROW_TILE,)
    return pl.pallas_call(
        residual_bn_relu_kernel,
        grid=grid,
        in_specs=[
            pl.BlockSpec((ROW_TILE, C), lambda i: (i, 0)),
            pl.BlockSpec((ROW_TILE, C), lambda i: (i, 0)),
            pl.BlockSpec((1, C), lambda i: (0, 0)),
            pl.BlockSpec((1, C), lambda i: (0, 0)),
        ],
        out_specs=pl.BlockSpec((ROW_TILE, C), lambda i: (i, 0)),
        out_shape=jax.ShapeDtypeStruct((R, C), jnp.float32),
        compiler_params=_COMPILER_PARAMS,
    )(y_flat, res_flat, scale, shift)


def _bn_fold(ps, pq, count, gamma_p, beta_p):
    """Per-channel (1, C) scale/shift from partial sums (training-mode BN)."""
    s = jnp.sum(ps, axis=0).reshape(1, -1)
    q = jnp.sum(pq, axis=0).reshape(1, -1)
    mean = s / count
    var = jnp.maximum(q / count - mean * mean, 0.0)   # biased variance
    scale = gamma_p * lax.rsqrt(var + BN_EPS)
    shift = beta_p - mean * scale
    return scale, shift


# ---------------------------------------------------------------------------
# Full block forward
# ---------------------------------------------------------------------------

def refinement_residual_block(x_nchw, params):
    (w1, g1, b1, w2, g2, b2, w3, bias3, g3, b3) = params
    N, Cin, H, W = x_nchw.shape
    Cout = w1.shape[0]
    CinP = _ceil_to(Cin, LANES)
    CP = _ceil_to(Cout, LANES)
    R = N * H * W
    R_pad = _ceil_to(R, ROW_TILE)
    count = float(R)   # true per-channel element count for BN stats
                       # (zero-padded rows/channels contribute 0 to both sums)

    # ---- layout: NCHW -> lane-dense flattened NHWC, bf16 matmul operands ----
    x_nhwc = jnp.transpose(x_nchw, (0, 2, 3, 1)).astype(jnp.float32)
    x_flat = _pad_to(x_nhwc.reshape(R, Cin), (R_pad, CinP)).astype(jnp.bfloat16)

    # ---- parameters: HWIO layouts, channel-padded, bf16 for the MXU ----
    w1_p = _pad_to(w1[:, :, 0, 0].T, (CinP, CP)).astype(jnp.bfloat16)
    w2_p = _pad_to(jnp.transpose(w2, (2, 3, 1, 0)), (3, 3, CP, CP)).astype(jnp.bfloat16)
    w3_p = _pad_to(jnp.transpose(w3, (2, 3, 1, 0)), (3, 3, CP, CP)).astype(jnp.bfloat16)
    zero_bias = jnp.zeros((1, CP), jnp.float32)
    bias3_p = _pad_to(bias3.reshape(1, Cout).astype(jnp.float32), (1, CP))
    g1_p = _pad_to(g1.reshape(1, Cout).astype(jnp.float32), (1, CP), 1.0)
    g2_p = _pad_to(g2.reshape(1, Cout).astype(jnp.float32), (1, CP), 1.0)
    g3_p = _pad_to(g3.reshape(1, Cout).astype(jnp.float32), (1, CP), 1.0)
    b1_p = _pad_to(b1.reshape(1, Cout).astype(jnp.float32), (1, CP))
    b2_p = _pad_to(b2.reshape(1, Cout).astype(jnp.float32), (1, CP))
    b3_p = _pad_to(b3.reshape(1, Cout).astype(jnp.float32), (1, CP))

    # ---- stage 1: a1 = ReLU(BN1(Conv1x1(x))) ----
    y1, ps1, pq1 = _conv1x1_stats(x_flat, w1_p)
    scale1, shift1 = _bn_fold(ps1, pq1, count, g1_p, b1_p)
    a1_flat = _bn_relu(y1, scale1, shift1, jnp.bfloat16)          # (R_pad, CP)

    # ---- stage 2: a2 = ReLU(BN2(Conv3x3(a1))) ----
    # TODO(synk): fuse the 1-px zero-halo write into the bn_relu kernel so this
    # wrapper-side spatial pad disappears from the hot path.
    a1p = jnp.pad(a1_flat[:R].reshape(N, H, W, CP),
                  ((0, 0), (1, 1), (1, 1), (0, 0)))
    y2, ps2, pq2 = _conv3x3_stats(a1p, w2_p, zero_bias)
    scale2, shift2 = _bn_fold(ps2, pq2, count, g2_p, b2_p)
    y2_flat = _pad_to(y2.reshape(R, CP), (R_pad, CP))
    a2_flat = _bn_relu(y2_flat, scale2, shift2, jnp.bfloat16)

    # ---- stage 3: out = ReLU(BN3(Conv3x3(a2) + bias) + a1) ----
    a2p = jnp.pad(a2_flat[:R].reshape(N, H, W, CP),
                  ((0, 0), (1, 1), (1, 1), (0, 0)))
    y3, ps3, pq3 = _conv3x3_stats(a2p, w3_p, bias3_p)
    scale3, shift3 = _bn_fold(ps3, pq3, count, g3_p, b3_p)
    y3_flat = _pad_to(y3.reshape(R, CP), (R_pad, CP))
    out_flat = _residual_bn_relu(y3_flat, a1_flat, scale3, shift3)

    out = out_flat[:R].reshape(N, H, W, CP)[..., :Cout]
    return jnp.transpose(out, (0, 3, 1, 2))                       # back to NCHW


# ---------------------------------------------------------------------------
# Pure-JAX reference (mirrors the PyTorch training-mode forward)
# ---------------------------------------------------------------------------

def reference(x, params):
    (w1, g1, b1, w2, g2, b2, w3, bias3, g3, b3) = params

    def conv(a, w, pad):
        return lax.conv_general_dilated(
            a, w, window_strides=(1, 1), padding=((pad, pad), (pad, pad)),
            dimension_numbers=("NCHW", "OIHW", "NCHW"),
            precision=lax.Precision.HIGHEST)

    def bn(y, g, b):
        m = jnp.mean(y, axis=(0, 2, 3), keepdims=True)
        v = jnp.mean((y - m) ** 2, axis=(0, 2, 3), keepdims=True)
        return ((y - m) * lax.rsqrt(v + BN_EPS) * g.reshape(1, -1, 1, 1)
                + b.reshape(1, -1, 1, 1))

    a1 = jnp.maximum(bn(conv(x, w1, 0), g1, b1), 0.0)
    a2 = jnp.maximum(bn(conv(a1, w2, 1), g2, b2), 0.0)
    y3 = conv(a2, w3, 1) + bias3.reshape(1, -1, 1, 1)
    return jnp.maximum(bn(y3, g3, b3) + a1, 0.0)


if __name__ == "__main__":
    N, Cin, Cout, H, W = 2, 4, 8, 16, 16

    key = jax.random.PRNGKey(0)
    k = jax.random.split(key, 5)
    x = jax.random.normal(k[0], (N, Cin, H, W), jnp.float32)

    # Deterministic Kaiming-style conv weights; BN affine at PyTorch init
    # (gamma=1, beta=0); conv2[1] carries a bias (bias=True in Conv3x3).
    w1 = (2.0 / Cin) ** 0.5 * jax.random.normal(k[1], (Cout, Cin, 1, 1), jnp.float32)
    w2 = (2.0 / (Cout * 9)) ** 0.5 * jax.random.normal(k[2], (Cout, Cout, 3, 3), jnp.float32)
    w3 = (2.0 / (Cout * 9)) ** 0.5 * jax.random.normal(k[3], (Cout, Cout, 3, 3), jnp.float32)
    bias3 = 0.1 * jax.random.normal(k[4], (Cout,), jnp.float32)
    ones = jnp.ones((Cout,), jnp.float32)
    zeros = jnp.zeros((Cout,), jnp.float32)
    params = (w1, ones, zeros, w2, ones, zeros, w3, bias3, ones, zeros)

    fwd = jax.jit(refinement_residual_block)
    out = jax.block_until_ready(fwd(x, params))
    assert out.shape == (N, Cout, H, W), out.shape

    ref = reference(x, params)
    err = float(jnp.max(jnp.abs(out - ref)))
    # bf16 matmul operands (f32 accumulation + f32 BN) vs an f32 HIGHEST-precision
    # reference across three conv+BN stages -> allow a few e-2 of slack.
    assert jnp.allclose(out, ref, atol=5e-2, rtol=5e-2), err

    print("KERNEL_OK")
</pallas_src>

<mosaic_0001>
module attributes {stable_mosaic.version = 11 : i64} {
  func.func @bn_relu_kernel(%arg0: i32, %arg1: memref<256x128xf32, #tpu.memory_space<vmem>>, %arg2: memref<1x128xf32, #tpu.memory_space<vmem>>, %arg3: memref<1x128xf32, #tpu.memory_space<vmem>>, %arg4: memref<256x128xbf16, #tpu.memory_space<vmem>>) attributes {dimension_semantics = [#tpu.dimension_semantics<parallel>], iteration_bounds = array<i64: 2>, scalar_prefetch = 0 : i64, scratch_operands = 0 : i64, tpu.core_type = #tpu.core_type<tc>, window_params = [{transform_indices = @transform_0, window_bounds = array<i64: 256, 128>}, {pipeline_mode = #tpu.pipeline_mode<synchronous>, transform_indices = @transform_1, window_bounds = array<i64: 1, 128>}, {pipeline_mode = #tpu.pipeline_mode<synchronous>, transform_indices = @transform_2, window_bounds = array<i64: 1, 128>}, {transform_indices = @transform_3, window_bounds = array<i64: 256, 128>}]} {
    %c0 = arith.constant 0 : index
    %c0_0 = arith.constant 0 : index
    %0 = vector.load %arg1[%c0, %c0_0] : memref<256x128xf32, #tpu.memory_space<vmem>>, vector<256x128xf32>
    %c0_1 = arith.constant 0 : index
    %c0_2 = arith.constant 0 : index
    %1 = vector.load %arg2[%c0_1, %c0_2] : memref<1x128xf32, #tpu.memory_space<vmem>>, vector<1x128xf32>
    %2 = vector.broadcast %1 : vector<1x128xf32> to vector<256x128xf32>
    %3 = arith.mulf %0, %2 : vector<256x128xf32>
    %c0_3 = arith.constant 0 : index
    %c0_4 = arith.constant 0 : index
    %4 = vector.load %arg3[%c0_3, %c0_4] : memref<1x128xf32, #tpu.memory_space<vmem>>, vector<1x128xf32>
    %5 = vector.broadcast %4 : vector<1x128xf32> to vector<256x128xf32>
    %6 = arith.addf %3, %5 : vector<256x128xf32>
    %cst = arith.constant 0.000000e+00 : f32
    %7 = vector.broadcast %cst : f32 to vector<256x128xf32>
    %8 = arith.maximumf %6, %7 : vector<256x128xf32>
    %9 = arith.truncf %8 : vector<256x128xf32> to vector<256x128xbf16>
    %c0_5 = arith.constant 0 : index
    %c0_6 = arith.constant 0 : index
    %10 = vector.load %arg4[%c0_5, %c0_6] : memref<256x128xbf16, #tpu.memory_space<vmem>>, vector<256x128xbf16>
    tpu.vector_store %arg4[%c0_5, %c0_6], %9 {strides = array<i32>} : memref<256x128xbf16, #tpu.memory_space<vmem>>, vector<256x128xbf16>,
    return
  }
  func.func @transform_0(%arg0: i32) -> (i32, i32) {
    %c0_i32 = arith.constant 0 : i32
    %c0_i32_0 = arith.constant 0 : i32
    return %arg0, %c0_i32 : i32, i32
  }
  func.func @transform_1(%arg0: i32) -> (i32, i32) {
    %c0_i32 = arith.constant 0 : i32
    %c0_i32_0 = arith.constant 0 : i32
    %c0_i32_1 = arith.constant 0 : i32
    return %c0_i32, %c0_i32_0 : i32, i32
  }
  func.func @transform_2(%arg0: i32) -> (i32, i32) {
    %c0_i32 = arith.constant 0 : i32
    %c0_i32_0 = arith.constant 0 : i32
    %c0_i32_1 = arith.constant 0 : i32
    return %c0_i32, %c0_i32_0 : i32, i32
  }
  func.func @transform_3(%arg0: i32) -> (i32, i32) {
    %c0_i32 = arith.constant 0 : i32
    %c0_i32_0 = arith.constant 0 : i32
    return %arg0, %c0_i32 : i32, i32
  }
}

module attributes {stable_mosaic.version = 11 : i64} {
  func.func @conv1x1_stats_kernel(%arg0: i32, %arg1: memref<256x128xbf16, #tpu.memory_space<vmem>>, %arg2: memref<128x128xbf16, #tpu.memory_space<vmem>>, %arg3: memref<256x128xf32, #tpu.memory_space<vmem>>, %arg4: memref<1x1x128xf32, #tpu.memory_space<vmem>>, %arg5: memref<1x1x128xf32, #tpu.memory_space<vmem>>) attributes {dimension_semantics = [#tpu.dimension_semantics<parallel>], iteration_bounds = array<i64: 2>, scalar_prefetch = 0 : i64, scratch_operands = 0 : i64, tpu.core_type = #tpu.core_type<tc>, window_params = [{transform_indices = @transform_0, window_bounds = array<i64: 256, 128>}, {pipeline_mode = #tpu.pipeline_mode<synchronous>, transform_indices = @transform_1, window_bounds = array<i64: 128, 128>}, {transform_indices = @transform_2, window_bounds = array<i64: 256, 128>}, {transform_indices = @transform_3, window_bounds = array<i64: 1, 1, 128>}, {transform_indices = @transform_4, window_bounds = array<i64: 1, 1, 128>}]} {
    %c0 = arith.constant 0 : index
    %c0_0 = arith.constant 0 : index
    %0 = vector.load %arg1[%c0, %c0_0] : memref<256x128xbf16, #tpu.memory_space<vmem>>, vector<256x128xbf16>
    %c0_1 = arith.constant 0 : index
    %c0_2 = arith.constant 0 : index
    %1 = vector.load %arg2[%c0_1, %c0_2] : memref<128x128xbf16, #tpu.memory_space<vmem>>, vector<128x128xbf16>
    %cst = arith.constant dense<0.000000e+00> : vector<256x128xf32>
    %2 = tpu.matmul %0, %1, %cst {dimension_numbers = #tpu.dot_dimension_numbers<[1], [0], [0], [1], [0, 0, 1, 1], [], []>} : vector<256x128xbf16>, vector<128x128xbf16>, vector<256x128xf32> -> vector<256x128xf32>
    %c0_3 = arith.constant 0 : index
    %c0_4 = arith.constant 0 : index
    %3 = vector.load %arg3[%c0_3, %c0_4] : memref<256x128xf32, #tpu.memory_space<vmem>>, vector<256x128xf32>
    tpu.vector_store %arg3[%c0_3, %c0_4], %2 {strides = array<i32>} : memref<256x128xf32, #tpu.memory_space<vmem>>, vector<256x128xf32>,
    %cst_5 = arith.constant dense<0.000000e+00> : vector<128xf32>
    %4 = vector.multi_reduction <add>, %2, %cst_5 [0] : vector<256x128xf32> to vector<128xf32>
    %5 = vector.shape_cast %4 : vector<128xf32> to vector<1x128xf32>
    %6 = vector.shape_cast %5 : vector<1x128xf32> to vector<1x1x128xf32>
    %c0_6 = arith.constant 0 : index
    %c0_7 = arith.constant 0 : index
    %c0_8 = arith.constant 0 : index
    %7 = vector.load %arg4[%c0_6, %c0_7, %c0_8] : memref<1x1x128xf32, #tpu.memory_space<vmem>>, vector<1x1x128xf32>
    tpu.vector_store %arg4[%c0_6, %c0_7, %c0_8], %6 {strides = array<i32>} : memref<1x1x128xf32, #tpu.memory_space<vmem>>, vector<1x1x128xf32>,
    %8 = arith.mulf %2, %2 : vector<256x128xf32>
    %cst_9 = arith.constant dense<0.000000e+00> : vector<128xf32>
    %9 = vector.multi_reduction <add>, %8, %cst_9 [0] : vector<256x128xf32> to vector<128xf32>
    %10 = vector.shape_cast %9 : vector<128xf32> to vector<1x128xf32>
    %11 = vector.shape_cast %10 : vector<1x128xf32> to vector<1x1x128xf32>
    %c0_10 = arith.constant 0 : index
    %c0_11 = arith.constant 0 : index
    %c0_12 = arith.constant 0 : index
    %12 = vector.load %arg5[%c0_10, %c0_11, %c0_12] : memref<1x1x128xf32, #tpu.memory_space<vmem>>, vector<1x1x128xf32>
    tpu.vector_store %arg5[%c0_10, %c0_11, %c0_12], %11 {strides = array<i32>} : memref<1x1x128xf32, #tpu.memory_space<vmem>>, vector<1x1x128xf32>,
    return
  }
  func.func @transform_0(%arg0: i32) -> (i32, i32) {
    %c0_i32 = arith.constant 0 : i32
    %c0_i32_0 = arith.constant 0 : i32
    return %arg0, %c0_i32 : i32, i32
  }
  func.func @transform_1(%arg0: i32) -> (i32, i32) {
    %c0_i32 = arith.constant 0 : i32
    %c0_i32_0 = arith.constant 0 : i32
    %c0_i32_1 = arith.constant 0 : i32
    return %c0_i32, %c0_i32_0 : i32, i32
  }
  func.func @transform_2(%arg0: i32) -> (i32, i32) {
    %c0_i32 = arith.constant 0 : i32
    %c0_i32_0 = arith.constant 0 : i32
    return %arg0, %c0_i32 : i32, i32
  }
  func.func @transform_3(%arg0: i32) -> (i32, i32, i32) {
    %c0_i32 = arith.constant 0 : i32
    %c0_i32_0 = arith.constant 0 : i32
    %c0_i32_1 = arith.constant 0 : i32
    return %arg0, %c0_i32, %c0_i32_0 : i32, i32, i32
  }
  func.func @transform_4(%arg0: i32) -> (i32, i32, i32) {
    %c0_i32 = arith.constant 0 : i32
    %c0_i32_0 = arith.constant 0 : i32
    %c0_i32_1 = arith.constant 0 : i32
    return %arg0, %c0_i32, %c0_i32_0 : i32, i32, i32
  }
}

module attributes {stable_mosaic.version = 11 : i64} {
  func.func @conv3x3_stats_kernel(%arg0: i32, %arg1: memref<1x18x18x128xbf16, #tpu.memory_space<vmem>>, %arg2: memref<3x3x128x128xbf16, #tpu.memory_space<vmem>>, %arg3: memref<1x128xf32, #tpu.memory_space<vmem>>, %arg4: memref<1x16x16x128xf32, #tpu.memory_space<vmem>>, %arg5: memref<1x1x128xf32, #tpu.memory_space<vmem>>, %arg6: memref<1x1x128xf32, #tpu.memory_space<vmem>>) attributes {dimension_semantics = [#tpu.dimension_semantics<parallel>], iteration_bounds = array<i64: 2>, scalar_prefetch = 0 : i64, scratch_operands = 0 : i64, tpu.core_type = #tpu.core_type<tc>, window_params = [{transform_indices = @transform_0, window_bounds = array<i64: 1, 18, 18, 128>}, {pipeline_mode = #tpu.pipeline_mode<synchronous>, transform_indices = @transform_1, window_bounds = array<i64: 3, 3, 128, 128>}, {pipeline_mode = #tpu.pipeline_mode<synchronous>, transform_indices = @transform_2, window_bounds = array<i64: 1, 128>}, {transform_indices = @transform_3, window_bounds = array<i64: 1, 16, 16, 128>}, {transform_indices = @transform_4, window_bounds = array<i64: 1, 1, 128>}, {transform_indices = @transform_5, window_bounds = array<i64: 1, 1, 128>}]} {
    %cst = arith.constant 0.000000e+00 : f32
    %0 = vector.broadcast %cst : f32 to vector<256x128xf32>
    %c0 = arith.constant 0 : index
    %c0_0 = arith.constant 0 : index
    %c0_1 = arith.constant 0 : index
    %c0_2 = arith.constant 0 : index
    %1 = vector.load %arg1[%c0, %c0_0, %c0_1, %c0_2] : memref<1x18x18x128xbf16, #tpu.memory_space<vmem>>, vector<1x16x16x128xbf16>
    %2 = vector.shape_cast %1 : vector<1x16x16x128xbf16> to vector<256x128xbf16>
    %c0_3 = arith.constant 0 : index
    %c0_4 = arith.constant 0 : index
    %c0_5 = arith.constant 0 : index
    %c0_6 = arith.constant 0 : index
    %3 = vector.load %arg2[%c0_3, %c0_4, %c0_5, %c0_6] : memref<3x3x128x128xbf16, #tpu.memory_space<vmem>>, vector<1x1x128x128xbf16>
    %4 = vector.shape_cast %3 : vector<1x1x128x128xbf16> to vector<128x128xbf16>
    %cst_7 = arith.constant dense<0.000000e+00> : vector<256x128xf32>
    %5 = tpu.matmul %2, %4, %cst_7 {dimension_numbers = #tpu.dot_dimension_numbers<[1], [0], [0], [1], [0, 0, 1, 1], [], []>} : vector<256x128xbf16>, vector<128x128xbf16>, vector<256x128xf32> -> vector<256x128xf32>
    %6 = arith.addf %0, %5 : vector<256x128xf32>
    %c0_8 = arith.constant 0 : index
    %c0_9 = arith.constant 0 : index
    %c1 = arith.constant 1 : index
    %c0_10 = arith.constant 0 : index
    %7 = vector.load %arg1[%c0_8, %c0_9, %c1, %c0_10] : memref<1x18x18x128xbf16, #tpu.memory_space<vmem>>, vector<1x16x16x128xbf16>
    %8 = vector.shape_cast %7 : vector<1x16x16x128xbf16> to vector<256x128xbf16>
    %c0_11 = arith.constant 0 : index
    %c1_12 = arith.constant 1 : index
    %c0_13 = arith.constant 0 : index
    %c0_14 = arith.constant 0 : index
    %9 = vector.load %arg2[%c0_11, %c1_12, %c0_13, %c0_14] : memref<3x3x128x128xbf16, #tpu.memory_space<vmem>>, vector<1x1x128x128xbf16>
    %10 = vector.shape_cast %9 : vector<1x1x128x128xbf16> to vector<128x128xbf16>
    %cst_15 = arith.constant dense<0.000000e+00> : vector<256x128xf32>
    %11 = tpu.matmul %8, %10, %cst_15 {dimension_numbers = #tpu.dot_dimension_numbers<[1], [0], [0], [1], [0, 0, 1, 1], [], []>} : vector<256x128xbf16>, vector<128x128xbf16>, vector<256x128xf32> -> vector<256x128xf32>
    %12 = arith.addf %6, %11 : vector<256x128xf32>
    %c0_16 = arith.constant 0 : index
    %c0_17 = arith.constant 0 : index
    %c2 = arith.constant 2 : index
    %c0_18 = arith.constant 0 : index
    %13 = vector.load %arg1[%c0_16, %c0_17, %c2, %c0_18] : memref<1x18x18x128xbf16, #tpu.memory_space<vmem>>, vector<1x16x16x128xbf16>
    %14 = vector.shape_cast %13 : vector<1x16x16x128xbf16> to vector<256x128xbf16>
    %c0_19 = arith.constant 0 : index
    %c2_20 = arith.constant 2 : index
    %c0_21 = arith.constant 0 : index
    %c0_22 = arith.constant 0 : index
    %15 = vector.load %arg2[%c0_19, %c2_20, %c0_21, %c0_22] : memref<3x3x128x128xbf16, #tpu.memory_space<vmem>>, vector<1x1x128x128xbf16>
    %16 = vector.shape_cast %15 : vector<1x1x128x128xbf16> to vector<128x128xbf16>
    %cst_23 = arith.constant dense<0.000000e+00> : vector<256x128xf32>
    %17 = tpu.matmul %14, %16, %cst_23 {dimension_numbers = #tpu.dot_dimension_numbers<[1], [0], [0], [1], [0, 0, 1, 1], [], []>} : vector<256x128xbf16>, vector<128x128xbf16>, vector<256x128xf32> -> vector<256x128xf32>
    %18 = arith.addf %12, %17 : vector<256x128xf32>
    %c0_24 = arith.constant 0 : index
    %c1_25 = arith.constant 1 : index
    %c0_26 = arith.constant 0 : index
    %c0_27 = arith.constant 0 : index
    %19 = vector.load %arg1[%c0_24, %c1_25, %c0_26, %c0_27] : memref<1x18x18x128xbf16, #tpu.memory_space<vmem>>, vector<1x16x16x128xbf16>
    %20 = vector.shape_cast %19 : vector<1x16x16x128xbf16> to vector<256x128xbf16>
    %c1_28 = arith.constant 1 : index
    %c0_29 = arith.constant 0 : index
    %c0_30 = arith.constant 0 : index
    %c0_31 = arith.constant 0 : index
    %21 = vector.load %arg2[%c1_28, %c0_29, %c0_30, %c0_31] : memref<3x3x128x128xbf16, #tpu.memory_space<vmem>>, vector<1x1x128x128xbf16>
    %22 = vector.shape_cast %21 : vector<1x1x128x128xbf16> to vector<128x128xbf16>
    %cst_32 = arith.constant dense<0.000000e+00> : vector<256x128xf32>
    %23 = tpu.matmul %20, %22, %cst_32 {dimension_numbers = #tpu.dot_dimension_numbers<[1], [0], [0], [1], [0, 0, 1, 1], [], []>} : vector<256x128xbf16>, vector<128x128xbf16>, vector<256x128xf32> -> vector<256x128xf32>
    %24 = arith.addf %18, %23 : vector<256x128xf32>
    %c0_33 = arith.constant 0 : index
    %c1_34 = arith.constant 1 : index
    %c1_35 = arith.constant 1 : index
    %c0_36 = arith.constant 0 : index
    %25 = vector.load %arg1[%c0_33, %c1_34, %c1_35, %c0_36] : memref<1x18x18x128xbf16, #tpu.memory_space<vmem>>, vector<1x16x16x128xbf16>
    %26 = vector.shape_cast %25 : vector<1x16x16x128xbf16> to vector<256x128xbf16>
    %c1_37 = arith.constant 1 : index
    %c1_38 = arith.constant 1 : index
    %c0_39 = arith.constant 0 : index
    %c0_40 = arith.constant 0 : index
    %27 = vector.load %arg2[%c1_37, %c1_38, %c0_39, %c0_40] : memref<3x3x128x128xbf16, #tpu.memory_space<vmem>>, vector<1x1x128x128xbf16>
    %28 = vector.shape_cast %27 : vector<1x1x128x128xbf16> to vector<128x128xbf16>
    %cst_41 = arith.constant dense<0.000000e+00> : vector<256x128xf32>
    %29 = tpu.matmul %26, %28, %cst_41 {dimension_numbers = #tpu.dot_dimension_numbers<[1], [0], [0], [1], [0, 0, 1, 1], [], []>} : vector<256x128xbf16>, vector<128x128xbf16>, vector<256x128xf32> -> vector<256x128xf32>
    %30 = arith.addf %24, %29 : vector<256x128xf32>
    %c0_42 = arith.constant 0 : index
    %c1_43 = arith.constant 1 : index
    %c2_44 = arith.constant 2 : index
    %c0_45 = arith.constant 0 : index
    %31 = vector.load %arg1[%c0_42, %c1_43, %c2_44, %c0_45] : memref<1x18x18x128xbf16, #tpu.memory_space<vmem>>, vector<1x16x16x128xbf16>
    %32 = vector.shape_cast %31 : vector<1x16x16x128xbf16> to vector<256x128xbf16>
    %c1_46 = arith.constant 1 : index
    %c2_47 = arith.constant 2 : index
    %c0_48 = arith.constant 0 : index
    %c0_49 = arith.constant 0 : index
    %33 = vector.load %arg2[%c1_46, %c2_47, %c0_48, %c0_49] : memref<3x3x128x128xbf16, #tpu.memory_space<vmem>>, vector<1x1x128x128xbf16>
    %34 = vector.shape_cast %33 : vector<1x1x128x128xbf16> to vector<128x128xbf16>
    %cst_50 = arith.constant dense<0.000000e+00> : vector<256x128xf32>
    %35 = tpu.matmul %32, %34, %cst_50 {dimension_numbers = #tpu.dot_dimension_numbers<[1], [0], [0], [1], [0, 0, 1, 1], [], []>} : vector<256x128xbf16>, vector<128x128xbf16>, vector<256x128xf32> -> vector<256x128xf32>
    %36 = arith.addf %30, %35 : vector<256x128xf32>
    %c0_51 = arith.constant 0 : index
    %c2_52 = arith.constant 2 : index
    %c0_53 = arith.constant 0 : index
    %c0_54 = arith.constant 0 : index
    %37 = vector.load %arg1[%c0_51, %c2_52, %c0_53, %c0_54] : memref<1x18x18x128xbf16, #tpu.memory_space<vmem>>, vector<1x16x16x128xbf16>
    %38 = vector.shape_cast %37 : vector<1x16x16x128xbf16> to vector<256x128xbf16>
    %c2_55 = arith.constant 2 : index
    %c0_56 = arith.constant 0 : index
    %c0_57 = arith.constant 0 : index
    %c0_58 = arith.constant 0 : index
    %39 = vector.load %arg2[%c2_55, %c0_56, %c0_57, %c0_58] : memref<3x3x128x128xbf16, #tpu.memory_space<vmem>>, vector<1x1x128x128xbf16>
    %40 = vector.shape_cast %39 : vector<1x1x128x128xbf16> to vector<128x128xbf16>
    %cst_59 = arith.constant dense<0.000000e+00> : vector<256x128xf32>
    %41 = tpu.matmul %38, %40, %cst_59 {dimension_numbers = #tpu.dot_dimension_numbers<[1], [0], [0], [1], [0, 0, 1, 1], [], []>} : vector<256x128xbf16>, vector<128x128xbf16>, vector<256x128xf32> -> vector<256x128xf32>
    %42 = arith.addf %36, %41 : vector<256x128xf32>
    %c0_60 = arith.constant 0 : index
    %c2_61 = arith.constant 2 : index
    %c1_62 = arith.constant 1 : index
    %c0_63 = arith.constant 0 : index
    %43 = vector.load %arg1[%c0_60, %c2_61, %c1_62, %c0_63] : memref<1x18x18x128xbf16, #tpu.memory_space<vmem>>, vector<1x16x16x128xbf16>
    %44 = vector.shape_cast %43 : vector<1x16x16x128xbf16> to vector<256x128xbf16>
    %c2_64 = arith.constant 2 : index
    %c1_65 = arith.constant 1 : index
    %c0_66 = arith.constant 0 : index
    %c0_67 = arith.constant 0 : index
    %45 = vector.load %arg2[%c2_64, %c1_65, %c0_66, %c0_67] : memref<3x3x128x128xbf16, #tpu.memory_space<vmem>>, vector<1x1x128x128xbf16>
    %46 = vector.shape_cast %45 : vector<1x1x128x128xbf16> to vector<128x128xbf16>
    %cst_68 = arith.constant dense<0.000000e+00> : vector<256x128xf32>
    %47 = tpu.matmul %44, %46, %cst_68 {dimension_numbers = #tpu.dot_dimension_numbers<[1], [0], [0], [1], [0, 0, 1, 1], [], []>} : vector<256x128xbf16>, vector<128x128xbf16>, vector<256x128xf32> -> vector<256x128xf32>
    %48 = arith.addf %42, %47 : vector<256x128xf32>
    %c0_69 = arith.constant 0 : index
    %c2_70 = arith.constant 2 : index
    %c2_71 = arith.constant 2 : index
    %c0_72 = arith.constant 0 : index
    %49 = vector.load %arg1[%c0_69, %c2_70, %c2_71, %c0_72] : memref<1x18x18x128xbf16, #tpu.memory_space<vmem>>, vector<1x16x16x128xbf16>
    %50 = vector.shape_cast %49 : vector<1x16x16x128xbf16> to vector<256x128xbf16>
    %c2_73 = arith.constant 2 : index
    %c2_74 = arith.constant 2 : index
    %c0_75 = arith.constant 0 : index
    %c0_76 = arith.constant 0 : index
    %51 = vector.load %arg2[%c2_73, %c2_74, %c0_75, %c0_76] : memref<3x3x128x128xbf16, #tpu.memory_space<vmem>>, vector<1x1x128x128xbf16>
    %52 = vector.shape_cast %51 : vector<1x1x128x128xbf16> to vector<128x128xbf16>
    %cst_77 = arith.constant dense<0.000000e+00> : vector<256x128xf32>
    %53 = tpu.matmul %50, %52, %cst_77 {dimension_numbers = #tpu.dot_dimension_numbers<[1], [0], [0], [1], [0, 0, 1, 1], [], []>} : vector<256x128xbf16>, vector<128x128xbf16>, vector<256x128xf32> -> vector<256x128xf32>
    %54 = arith.addf %48, %53 : vector<256x128xf32>
    %c0_78 = arith.constant 0 : index
    %c0_79 = arith.constant 0 : index
    %55 = vector.load %arg3[%c0_78, %c0_79] : memref<1x128xf32, #tpu.memory_space<vmem>>, vector<1x128xf32>
    %56 = vector.broadcast %55 : vector<1x128xf32> to vector<256x128xf32>
    %57 = arith.addf %54, %56 : vector<256x128xf32>
    %58 = vector.shape_cast %57 : vector<256x128xf32> to vector<1x16x16x128xf32>
    %c0_80 = arith.constant 0 : index
    %c0_81 = arith.constant 0 : index
    %c0_82 = arith.constant 0 : index
    %c0_83 = arith.constant 0 : index
    %59 = vector.load %arg4[%c0_80, %c0_81, %c0_82, %c0_83] : memref<1x16x16x128xf32, #tpu.memory_space<vmem>>, vector<1x16x16x128xf32>
    tpu.vector_store %arg4[%c0_80, %c0_81, %c0_82, %c0_83], %58 {strides = array<i32>} : memref<1x16x16x128xf32, #tpu.memory_space<vmem>>, vector<1x16x16x128xf32>,
    %cst_84 = arith.constant dense<0.000000e+00> : vector<128xf32>
    %60 = vector.multi_reduction <add>, %57, %cst_84 [0] : vector<256x128xf32> to vector<128xf32>
    %61 = vector.shape_cast %60 : vector<128xf32> to vector<1x128xf32>
    %62 = vector.shape_cast %61 : vector<1x128xf32> to vector<1x1x128xf32>
    %c0_85 = arith.constant 0 : index
    %c0_86 = arith.constant 0 : index
    %c0_87 = arith.constant 0 : index
    %63 = vector.load %arg5[%c0_85, %c0_86, %c0_87] : memref<1x1x128xf32, #tpu.memory_space<vmem>>, vector<1x1x128xf32>
    tpu.vector_store %arg5[%c0_85, %c0_86, %c0_87], %62 {strides = array<i32>} : memref<1x1x128xf32, #tpu.memory_space<vmem>>, vector<1x1x128xf32>,
    %64 = arith.mulf %57, %57 : vector<256x128xf32>
    %cst_88 = arith.constant dense<0.000000e+00> : vector<128xf32>
    %65 = vector.multi_reduction <add>, %64, %cst_88 [0] : vector<256x128xf32> to vector<128xf32>
    %66 = vector.shape_cast %65 : vector<128xf32> to vector<1x128xf32>
    %67 = vector.shape_cast %66 : vector<1x128xf32> to vector<1x1x128xf32>
    %c0_89 = arith.constant 0 : index
    %c0_90 = arith.constant 0 : index
    %c0_91 = arith.constant 0 : index
    %68 = vector.load %arg6[%c0_89, %c0_90, %c0_91] : memref<1x1x128xf32, #tpu.memory_space<vmem>>, vector<1x1x128xf32>
    tpu.vector_store %arg6[%c0_89, %c0_90, %c0_91], %67 {strides = array<i32>} : memref<1x1x128xf32, #tpu.memory_space<vmem>>, vector<1x1x128xf32>,
    return
  }
  func.func @transform_0(%arg0: i32) -> (i32, i32, i32, i32) {
    %c0_i32 = arith.constant 0 : i32
    %c0_i32_0 = arith.constant 0 : i32
    %c0_i32_1 = arith.constant 0 : i32
    %c0_i32_2 = arith.constant 0 : i32
    return %arg0, %c0_i32, %c0_i32_0, %c0_i32_1 : i32, i32, i32, i32
  }
  func.func @transform_1(%arg0: i32) -> (i32, i32, i32, i32) {
    %c0_i32 = arith.constant 0 : i32
    %c0_i32_0 = arith.constant 0 : i32
    %c0_i32_1 = arith.constant 0 : i32
    %c0_i32_2 = arith.constant 0 : i32
    %c0_i32_3 = arith.constant 0 : i32
    return %c0_i32, %c0_i32_0, %c0_i32_1, %c0_i32_2 : i32, i32, i32, i32
  }
  func.func @transform_2(%arg0: i32) -> (i32, i32) {
    %c0_i32 = arith.constant 0 : i32
    %c0_i32_0 = arith.constant 0 : i32
    %c0_i32_1 = arith.constant 0 : i32
    return %c0_i32, %c0_i32_0 : i32, i32
  }
  func.func @transform_3(%arg0: i32) -> (i32, i32, i32, i32) {
    %c0_i32 = arith.constant 0 : i32
    %c0_i32_0 = arith.constant 0 : i32
    %c0_i32_1 = arith.constant 0 : i32
    %c0_i32_2 = arith.constant 0 : i32
    return %arg0, %c0_i32, %c0_i32_0, %c0_i32_1 : i32, i32, i32, i32
  }
  func.func @transform_4(%arg0: i32) -> (i32, i32, i32) {
    %c0_i32 = arith.constant 0 : i32
    %c0_i32_0 = arith.constant 0 : i32
    %c0_i32_1 = arith.constant 0 : i32
    return %arg0, %c0_i32, %c0_i32_0 : i32, i32, i32
  }
  func.func @transform_5(%arg0: i32) -> (i32, i32, i32) {
    %c0_i32 = arith.constant 0 : i32
    %c0_i32_0 = arith.constant 0 : i32
    %c0_i32_1 = arith.constant 0 : i32
    return %arg0, %c0_i32, %c0_i32_0 : i32, i32, i32
  }
}

module attributes {stable_mosaic.version = 11 : i64} {
  func.func @residual_bn_relu_kernel(%arg0: i32, %arg1: memref<256x128xf32, #tpu.memory_space<vmem>>, %arg2: memref<256x128xbf16, #tpu.memory_space<vmem>>, %arg3: memref<1x128xf32, #tpu.memory_space<vmem>>, %arg4: memref<1x128xf32, #tpu.memory_space<vmem>>, %arg5: memref<256x128xf32, #tpu.memory_space<vmem>>) attributes {dimension_semantics = [#tpu.dimension_semantics<parallel>], iteration_bounds = array<i64: 2>, scalar_prefetch = 0 : i64, scratch_operands = 0 : i64, tpu.core_type = #tpu.core_type<tc>, window_params = [{transform_indices = @transform_0, window_bounds = array<i64: 256, 128>}, {transform_indices = @transform_1, window_bounds = array<i64: 256, 128>}, {pipeline_mode = #tpu.pipeline_mode<synchronous>, transform_indices = @transform_2, window_bounds = array<i64: 1, 128>}, {pipeline_mode = #tpu.pipeline_mode<synchronous>, transform_indices = @transform_3, window_bounds = array<i64: 1, 128>}, {transform_indices = @transform_4, window_bounds = array<i64: 256, 128>}]} {
    %c0 = arith.constant 0 : index
    %c0_0 = arith.constant 0 : index
    %0 = vector.load %arg1[%c0, %c0_0] : memref<256x128xf32, #tpu.memory_space<vmem>>, vector<256x128xf32>
    %c0_1 = arith.constant 0 : index
    %c0_2 = arith.constant 0 : index
    %1 = vector.load %arg3[%c0_1, %c0_2] : memref<1x128xf32, #tpu.memory_space<vmem>>, vector<1x128xf32>
    %2 = vector.broadcast %1 : vector<1x128xf32> to vector<256x128xf32>
    %3 = arith.mulf %0, %2 : vector<256x128xf32>
    %c0_3 = arith.constant 0 : index
    %c0_4 = arith.constant 0 : index
    %4 = vector.load %arg4[%c0_3, %c0_4] : memref<1x128xf32, #tpu.memory_space<vmem>>, vector<1x128xf32>
    %5 = vector.broadcast %4 : vector<1x128xf32> to vector<256x128xf32>
    %6 = arith.addf %3, %5 : vector<256x128xf32>
    %c0_5 = arith.constant 0 : index
    %c0_6 = arith.constant 0 : index
    %7 = vector.load %arg2[%c0_5, %c0_6] : memref<256x128xbf16, #tpu.memory_space<vmem>>, vector<256x128xbf16>
    %8 = arith.extf %7 : vector<256x128xbf16> to vector<256x128xf32>
    %9 = arith.addf %6, %8 : vector<256x128xf32>
    %cst = arith.constant 0.000000e+00 : f32
    %10 = vector.broadcast %cst : f32 to vector<256x128xf32>
    %11 = arith.maximumf %9, %10 : vector<256x128xf32>
    %c0_7 = arith.constant 0 : index
    %c0_8 = arith.constant 0 : index
    %12 = vector.load %arg5[%c0_7, %c0_8] : memref<256x128xf32, #tpu.memory_space<vmem>>, vector<256x128xf32>
    tpu.vector_store %arg5[%c0_7, %c0_8], %11 {strides = array<i32>} : memref<256x128xf32, #tpu.memory_space<vmem>>, vector<256x128xf32>,
    return
  }
  func.func @transform_0(%arg0: i32) -> (i32, i32) {
    %c0_i32 = arith.constant 0 : i32
    %c0_i32_0 = arith.constant 0 : i32
    return %arg0, %c0_i32 : i32, i32
  }
  func.func @transform_1(%arg0: i32) -> (i32, i32) {
    %c0_i32 = arith.constant 0 : i32
    %c0_i32_0 = arith.constant 0 : i32
    return %arg0, %c0_i32 : i32, i32
  }
  func.func @transform_2(%arg0: i32) -> (i32, i32) {
    %c0_i32 = arith.constant 0 : i32
    %c0_i32_0 = arith.constant 0 : i32
    %c0_i32_1 = arith.constant 0 : i32
    return %c0_i32, %c0_i32_0 : i32, i32
  }
  func.func @transform_3(%arg0: i32) -> (i32, i32) {
    %c0_i32 = arith.constant 0 : i32
    %c0_i32_0 = arith.constant 0 : i32
    %c0_i32_1 = arith.constant 0 : i32
    return %c0_i32, %c0_i32_0 : i32, i32
  }
  func.func @transform_4(%arg0: i32) -> (i32, i32) {
    %c0_i32 = arith.constant 0 : i32
    %c0_i32_0 = arith.constant 0 : i32
    return %arg0, %c0_i32 : i32, i32
  }
}

</mosaic_0001>

<llo_original>
// kernel: refinement_residual_block.7
$region0: #{refinement_residual_block.7}
  #allocation0 [shape = 'u32[]', space=smem, size = 0x4, offset = 0x4, fixed_abs, tag = 'smem constant byte address 0x4 - core index']
  #allocation1 [shape = 'u32[144,128]{1,0:T(1,128)}', space=vmem, size = 0x12000, scoped, tag = 'internal scratch']
  %s0 = inlined_call_operand.vmem [shape: f32[512,128], index: 0, kind: input, shape index: {}]
  %s1 = inlined_call_operand.vmem [shape: f32[1,128], index: 1, kind: input, shape index: {}]
  %s2 = inlined_call_operand.vmem [shape: f32[1,128], index: 2, kind: input, shape index: {}]
  %s3 = inlined_call_operand.vmem [shape: bf16[512,128], index: 3, kind: output, shape index: {}]
  %s4 = sld [smem:[#allocation0]]
  $region45: #{refinement_residual_block.7} parent=0
    _
  %s6 = ssub.s32 1, %s4
  %s7 = scalar_select 0, %s6, %s4
  loop: start=0, step=1, limit=4
  $region2: #{refinement_residual_block.7} parent=0 // loop_pre_header
    _
  $region3: #{refinement_residual_block.7} parent=0 // loop_header
    %s9 = sphi 0, %s13
    %p10 = scmp.ge.s32.totalorder %s9, 4
    %s19 = sphi 0, %s21
    %s22 = sphi 0, %s19
    %s23 = sphi 0, %s22
    %s39 = sphi 0, %s23
    %s43 = sphi 0, %s43
    %s45 = sphi 0, %s43
    %s46 = sphi 0, %s45
    %s60 = sphi 0, %s46
    %s64 = sphi 0, %s64
    %s66 = sphi 0, %s64
    %s67 = sphi 0, %s66
    %s81 = sphi 0, %s67
    %s87 = sphi 0, %s89
    %s90 = sphi 0, %s87
    %s91 = sphi 0, %s90
    %s107 = sphi 0, %s91
  $region4: #{refinement_residual_block.7} parent=0 // loop_header_branch
    %12 = sbr.rel (%p10) target = $region8
  $region5: #{refinement_residual_block.7} parent=0 // loop_body
    %s14 = ssub.s32 %s9, 1
    %s15 = ssub.s32 %s9, 2
    %s16 = sadd.s32 %s9, 1
    %s17 = ssub.s32 %s9, %s16
    %p18 = scmp.eq.s32.totalorder %s17, 0
    %s20 = sadd.s32 %s19, 1
    %s21 = scalar_select %p18, %s19, %s20
    %p24 = pneg %p18
    %p25 = scmp.eq.s32.totalorder %s9, 1
    %p26 = por %p24, %p25
    %p27 = scmp.ne.s32.totalorder %s19, %s22
    %p28 = scmp.eq.s32.totalorder %s9, 0
    %p29 = por %p27, %p28
    %p30 = scmp.ne.s32.totalorder %s19, %s22
    %p31 = scmp.eq.s32.totalorder %s14, 1
    %p32 = por %p30, %p31
    %p33 = scmp.ne.s32.totalorder %s22, %s23
    %p34 = scmp.eq.s32.totalorder %s14, 0
    %p35 = por %p33, %p34
    %p36 = scmp.ne.s32.totalorder %s22, %s23
    %p37 = scmp.eq.s32.totalorder %s15, 1
    %p38 = por %p36, %p37
    %p40 = scmp.ne.s32.totalorder %s23, %s39
    %p41 = scmp.eq.s32.totalorder %s15, 0
    %p42 = por %p40, %p41
    %s44 = sadd.s32 %s43, 1
    %p47 = scmp.eq.s32.totalorder %s9, 1
    %p48 = scmp.ne.s32.totalorder %s43, %s45
    %p49 = scmp.eq.s32.totalorder %s9, 0
    %p50 = por %p48, %p49
    %p51 = scmp.ne.s32.totalorder %s43, %s45
    %p52 = scmp.eq.s32.totalorder %s14, 1
    %p53 = por %p51, %p52
    %p54 = scmp.ne.s32.totalorder %s45, %s46
    %p55 = scmp.eq.s32.totalorder %s14, 0
    %p56 = por %p54, %p55
    %p57 = scmp.ne.s32.totalorder %s45, %s46
    %p58 = scmp.eq.s32.totalorder %s15, 1
    %p59 = por %p57, %p58
    %p61 = scmp.ne.s32.totalorder %s46, %s60
    %p62 = scmp.eq.s32.totalorder %s15, 0
    %p63 = por %p61, %p62
    %s65 = sadd.s32 %s64, 1
    %p68 = scmp.eq.s32.totalorder %s9, 1
    %p69 = scmp.ne.s32.totalorder %s64, %s66
    %p70 = scmp.eq.s32.totalorder %s9, 0
    %p71 = por %p69, %p70
    %p72 = scmp.ne.s32.totalorder %s64, %s66
    %p73 = scmp.eq.s32.totalorder %s14, 1
    %p74 = por %p72, %p73
    %p75 = scmp.ne.s32.totalorder %s66, %s67
    %p76 = scmp.eq.s32.totalorder %s14, 0
    %p77 = por %p75, %p76
    %p78 = scmp.ne.s32.totalorder %s66, %s67
    %p79 = scmp.eq.s32.totalorder %s15, 1
    %p80 = por %p78, %p79
    %p82 = scmp.ne.s32.totalorder %s67, %s81
    %p83 = scmp.eq.s32.totalorder %s15, 0
    %p84 = por %p82, %p83
    %s85 = ssub.s32 %s9, %s16
    %p86 = scmp.eq.s32.totalorder %s85, 0
    %s88 = sadd.s32 %s87, 1
    %s89 = scalar_select %p86, %s87, %s88
    %p92 = pneg %p86
    %p93 = scmp.eq.s32.totalorder %s9, 1
    %p94 = por %p92, %p93
    %p95 = scmp.ne.s32.totalorder %s87, %s90
    %p96 = scmp.eq.s32.totalorder %s9, 0
    %p97 = por %p95, %p96
    %p98 = scmp.ne.s32.totalorder %s87, %s90
    %p99 = scmp.eq.s32.totalorder %s14, 1
    %p100 = por %p98, %p99
    %p101 = scmp.ne.s32.totalorder %s90, %s91
    %p102 = scmp.eq.s32.totalorder %s14, 0
    %p103 = por %p101, %p102
    %p104 = scmp.ne.s32.totalorder %s90, %s91
    %p105 = scmp.eq.s32.totalorder %s15, 1
    %p106 = por %p104, %p105
    %p108 = scmp.ne.s32.totalorder %s91, %s107
    %p109 = scmp.eq.s32.totalorder %s15, 0
    %p110 = por %p108, %p109
    %p111 = scmp.le.s32.totalorder 1, %s9
    %p112 = scmp.lt.s32.totalorder %s9, 3
    %p113 = pnand %p111, %p112
    %p114 = pneg %p113
    // Predicated region
    $region9: #{refinement_residual_block.7} parent=5 // pred_check
      _
    $region10: #{refinement_residual_block.7} parent=5 // pred_check_branch
      %116 = sbr.rel (%p113) target = $region12
    $region11: #{refinement_residual_block.7} parent=5 // pred_region
      %s117 = ssub.s32 %s9, 1
      // Predicated region
      $region13: #{refinement_residual_block.7} parent=11 // pred_check
        %p118 = pneg %p56
      $region14: #{refinement_residual_block.7} parent=11 // pred_check_branch
        %120 = sbr.rel (%p118) target = $region16
      $region15: #{refinement_residual_block.7} parent=11 // pred_region
        _
      $region16: #{refinement_residual_block.7} parent=11 // pred_fallthru
        _
      // Predicated region
      $region17: #{refinement_residual_block.7} parent=11 // pred_check
        %p121 = pneg %p77
      $region18: #{refinement_residual_block.7} parent=11 // pred_check_branch
        %123 = sbr.rel (%p121) target = $region20
      $region19: #{refinement_residual_block.7} parent=11 // pred_region
        _
      $region20: #{refinement_residual_block.7} parent=11 // pred_fallthru
        _
    $region12: #{refinement_residual_block.7} parent=5 // pred_fallthru
      _
    %p124 = scmp.lt.s32.totalorder %s9, 2
    // Predicated region
    $region21: #{refinement_residual_block.7} parent=5 // pred_check
      %p125 = pneg %p124
    $region22: #{refinement_residual_block.7} parent=5 // pred_check_branch
      %127 = sbr.rel (%p125) target = $region24
    $region23: #{refinement_residual_block.7} parent=5 // pred_region
      // Predicated region
      $region25: #{refinement_residual_block.7} parent=23 // pred_check
        %p128 = pneg %p29
      $region26: #{refinement_residual_block.7} parent=23 // pred_check_branch
        %130 = sbr.rel (%p128) target = $region28
      $region27: #{refinement_residual_block.7} parent=23 // pred_region
        %s131 = smul.u32 32, %s9
        %p132 = scmp.lt.s32.totalorder %s131, 63
        %s133 = scalar_select %p132, %s131, 63
        %s134 = smul.addr %s133, 8
        %s135 = scalar_lea.vmem %s0, %s134
        %s136 = smul.u32 32, %s9
      $region28: #{refinement_residual_block.7} parent=23 // pred_fallthru
        _
    $region24: #{refinement_residual_block.7} parent=5 // pred_fallthru
      _
    %p137 = scmp.le.s32.totalorder 1, %s9
    %p138 = scmp.lt.s32.totalorder %s9, 3
    %p139 = pnand %p137, %p138
    %p140 = pneg %p139
    // Predicated region
    $region29: #{refinement_residual_block.7} parent=5 // pred_check
      _
    $region30: #{refinement_residual_block.7} parent=5 // pred_check_branch
      %142 = sbr.rel (%p139) target = $region32
    $region31: #{refinement_residual_block.7} parent=5 // pred_region
      %s143 = ssub.s32 %s9, 1
      %s144 = smul.u32 32, %s14
      %p145 = scmp.lt.s32.totalorder %s144, 63
      %s146 = scalar_select %p145, %s144, 63
      %s147 = smul.addr %s146, 8
      %s148 = scalar_lea.vmem %s0, %s147
      %p149 = pneg %p35
      %p150 = pneg %p32
      %p151 = pneg %p56
      %p152 = pneg %p53
      %p153 = pneg %p77
      %p154 = pneg %p74
      %p155 = pneg %p103
      %p156 = pneg %p100
      %s157 = smul.u32 32, %s14
      %p158 = scmp.lt.s32.totalorder %s157, 63
      %s159 = scalar_select %p158, %s157, 63
      %s160 = smul.addr %s159, 4
      %s161 = scalar_lea.vmem %s3, %s160
      %s162 = smul.u32 32, %s14
      %p163 = scmp.lt.s32.totalorder %s162, 63
      %s164 = scalar_select %p163, %s162, 63
      %s165 = smul.addr %s164, 8
      %s166 = scalar_lea.vmem %s0, %s165
      %s167 = smul.u32 32, %s14
      %s168 = smul.u32 32, %s14
      %p169 = scmp.lt.s32.totalorder %s168, 63
      %s170 = scalar_select %p169, %s168, 63
      %s171 = smul.addr %s170, 4
      %s172 = scalar_lea.vmem %s3, %s171
      %s173 = smul.u32 32, %s14
      %v174 = vld [vmem:[%s166] sm:$0xff]
      %v175 = vld [vmem:[%s166 + $0x8] sm:$0xff]
      %v176 = vld [vmem:[%s166 + $0x10] sm:$0xff]
      %v177 = vld [vmem:[%s166 + $0x18] sm:$0xff]
      %v178 = vld [vmem:[%s166 + $0x20] sm:$0xff]
      %v179 = vld [vmem:[%s166 + $0x28] sm:$0xff]
      %v180 = vld [vmem:[%s166 + $0x30] sm:$0xff]
      %v181 = vld [vmem:[%s166 + $0x38] sm:$0xff]
      %v182 = vld [vmem:[%s166 + $0x40] sm:$0xff]
      %v183 = vld [vmem:[%s166 + $0x48] sm:$0xff]
      %v184 = vld [vmem:[%s166 + $0x50] sm:$0xff]
      %v185 = vld [vmem:[%s166 + $0x58] sm:$0xff]
      %v186 = vld [vmem:[%s166 + $0x60] sm:$0xff]
      %v187 = vld [vmem:[%s166 + $0x68] sm:$0xff]
      %v188 = vld [vmem:[%s166 + $0x70] sm:$0xff]
      %v189 = vld [vmem:[%s166 + $0x78] sm:$0xff]
      %v190 = vld [vmem:[%s166 + $0x80] sm:$0xff]
      %v191 = vld [vmem:[%s166 + $0x88] sm:$0xff]
      %v192 = vld [vmem:[%s166 + $0x90] sm:$0xff]
      %v193 = vld [vmem:[%s166 + $0x98] sm:$0xff]
      %v194 = vld [vmem:[%s166 + $0xa0] sm:$0xff]
      %v195 = vld [vmem:[%s166 + $0xa8] sm:$0xff]
      %v196 = vld [vmem:[%s166 + $0xb0] sm:$0xff]
      %v197 = vld [vmem:[%s166 + $0xb8] sm:$0xff]
      %v198 = vld [vmem:[%s166 + $0xc0] sm:$0xff]
      %v199 = vld [vmem:[%s166 + $0xc8] sm:$0xff]
      %v200 = vld [vmem:[%s166 + $0xd0] sm:$0xff]
      %v201 = vld [vmem:[%s166 + $0xd8] sm:$0xff]
      %v202 = vld [vmem:[%s166 + $0xe0] sm:$0xff]
      %v203 = vld [vmem:[%s166 + $0xe8] sm:$0xff]
      %v204 = vld [vmem:[%s166 + $0xf0] sm:$0xff]
      %v205 = vld [vmem:[%s166 + $0xf8] sm:$0xff]
      %v206 = vld [vmem:[%s1] sm:$0x1]
      %v208 = vlaneseq
      %v209 = vshrl.u32 %v208, 7
      %v210 = vsub.s32 0, %v209
      %v211 = vrot.slane %v206, %v210
      %v213 = vmul.f32 %v174, %v211
      %v214 = vmul.f32 %v175, %v211
      %v215 = vmul.f32 %v176, %v211
      %v216 = vmul.f32 %v177, %v211
      %v217 = vmul.f32 %v178, %v211
      %v218 = vmul.f32 %v179, %v211
      %v219 = vmul.f32 %v180, %v211
      %v220 = vmul.f32 %v181, %v211
      %v221 = vmul.f32 %v182, %v211
      %v222 = vmul.f32 %v183, %v211
      %v223 = vmul.f32 %v184, %v211
      %v224 = vmul.f32 %v185, %v211
      %v225 = vmul.f32 %v186, %v211
      %v226 = vmul.f32 %v187, %v211
      %v227 = vmul.f32 %v188, %v211
      %v228 = vmul.f32 %v189, %v211
      %v229 = vmul.f32 %v190, %v211
      %v230 = vmul.f32 %v191, %v211
      %v231 = vmul.f32 %v192, %v211
      %v232 = vmul.f32 %v193, %v211
      %v233 = vmul.f32 %v194, %v211
      %v234 = vmul.f32 %v195, %v211
      %v235 = vmul.f32 %v196, %v211
      %v236 = vmul.f32 %v197, %v211
      %v237 = vmul.f32 %v198, %v211
      %v238 = vmul.f32 %v199, %v211
      %v239 = vmul.f32 %v200, %v211
      %v240 = vmul.f32 %v201, %v211
      %v241 = vmul.f32 %v202, %v211
      %v242 = vmul.f32 %v203, %v211
      %v243 = vmul.f32 %v204, %v211
      %v244 = vmul.f32 %v205, %v211
      %v245 = vld [vmem:[%s2] sm:$0x1]
      %v247 = vlaneseq
      %v248 = vshrl.u32 %v247, 7
      %v249 = vsub.s32 0, %v248
      %v250 = vrot.slane %v245, %v249
      %v252 = vadd.f32 %v213, %v250
      %v253 = vadd.f32 %v214, %v250
      %v254 = vadd.f32 %v215, %v250
      %v255 = vadd.f32 %v216, %v250
      %v256 = vadd.f32 %v217, %v250
      %v257 = vadd.f32 %v218, %v250
      %v258 = vadd.f32 %v219, %v250
      %v259 = vadd.f32 %v220, %v250
      %v260 = vadd.f32 %v221, %v250
      %v261 = vadd.f32 %v222, %v250
      %v262 = vadd.f32 %v223, %v250
      %v263 = vadd.f32 %v224, %v250
      %v264 = vadd.f32 %v225, %v250
      %v265 = vadd.f32 %v226, %v250
      %v266 = vadd.f32 %v227, %v250
      %v267 = vadd.f32 %v228, %v250
      %v268 = vadd.f32 %v229, %v250
      %v269 = vadd.f32 %v230, %v250
      %v270 = vadd.f32 %v231, %v250
      %v271 = vadd.f32 %v232, %v250
      %v272 = vadd.f32 %v233, %v250
      %v273 = vadd.f32 %v234, %v250
      %v274 = vadd.f32 %v235, %v250
      %v275 = vadd.f32 %v236, %v250
      %v276 = vadd.f32 %v237, %v250
      %v277 = vadd.f32 %v238, %v250
      %v278 = vadd.f32 %v239, %v250
      %v279 = vadd.f32 %v240, %v250
      %v280 = vadd.f32 %v241, %v250
      %v281 = vadd.f32 %v242, %v250
      %v282 = vadd.f32 %v243, %v250
      %v283 = vadd.f32 %v244, %v250
      %v284 = vmax.f32 %v252, 0.0
      %v285 = vmax.f32 %v253, 0.0
      %v286 = vmax.f32 %v254, 0.0
      %v287 = vmax.f32 %v255, 0.0
      %v288 = vmax.f32 %v256, 0.0
      %v289 = vmax.f32 %v257, 0.0
      %v290 = vmax.f32 %v258, 0.0
      %v291 = vmax.f32 %v259, 0.0
      %v292 = vmax.f32 %v260, 0.0
      %v293 = vmax.f32 %v261, 0.0
      %v294 = vmax.f32 %v262, 0.0
      %v295 = vmax.f32 %v263, 0.0
      %v296 = vmax.f32 %v264, 0.0
      %v297 = vmax.f32 %v265, 0.0
      %v298 = vmax.f32 %v266, 0.0
      %v299 = vmax.f32 %v267, 0.0
      %v300 = vmax.f32 %v268, 0.0
      %v301 = vmax.f32 %v269, 0.0
      %v302 = vmax.f32 %v270, 0.0
      %v303 = vmax.f32 %v271, 0.0
      %v304 = vmax.f32 %v272, 0.0
      %v305 = vmax.f32 %v273, 0.0
      %v306 = vmax.f32 %v274, 0.0
      %v307 = vmax.f32 %v275, 0.0
      %v308 = vmax.f32 %v276, 0.0
      %v309 = vmax.f32 %v277, 0.0
      %v310 = vmax.f32 %v278, 0.0
      %v311 = vmax.f32 %v279, 0.0
      %v312 = vmax.f32 %v280, 0.0
      %v313 = vmax.f32 %v281, 0.0
      %v314 = vmax.f32 %v282, 0.0
      %v315 = vmax.f32 %v283, 0.0
      %v316 = vpack.c.bf16 %v285, %v284
      %v317 = vpack.c.bf16 %v287, %v286
      %v318 = vpack.c.bf16 %v289, %v288
      %v319 = vpack.c.bf16 %v291, %v290
      %v320 = vpack.c.bf16 %v293, %v292
      %v321 = vpack.c.bf16 %v295, %v294
      %v322 = vpack.c.bf16 %v297, %v296
      %v323 = vpack.c.bf16 %v299, %v298
      %v324 = vpack.c.bf16 %v301, %v300
      %v325 = vpack.c.bf16 %v303, %v302
      %v326 = vpack.c.bf16 %v305, %v304
      %v327 = vpack.c.bf16 %v307, %v306
      %v328 = vpack.c.bf16 %v309, %v308
      %v329 = vpack.c.bf16 %v311, %v310
      %v330 = vpack.c.bf16 %v313, %v312
      %v331 = vpack.c.bf16 %v315, %v314
      %v348 = vunpack.c.l.b16 %v316
      %v349 = vunpack.c.h.b16 %v316
      %v350 = vunpack.c.l.b16 %v317
      %v351 = vunpack.c.h.b16 %v317
      %v352 = vunpack.c.l.b16 %v318
      %v353 = vunpack.c.h.b16 %v318
      %v354 = vunpack.c.l.b16 %v319
      %v355 = vunpack.c.h.b16 %v319
      %v356 = vunpack.c.l.b16 %v320
      %v357 = vunpack.c.h.b16 %v320
      %v358 = vunpack.c.l.b16 %v321
      %v359 = vunpack.c.h.b16 %v321
      %v360 = vunpack.c.l.b16 %v322
      %v361 = vunpack.c.h.b16 %v322
      %v362 = vunpack.c.l.b16 %v323
      %v363 = vunpack.c.h.b16 %v323
      %v364 = vunpack.c.l.b16 %v324
      %v365 = vunpack.c.h.b16 %v324
      %v366 = vunpack.c.l.b16 %v325
      %v367 = vunpack.c.h.b16 %v325
      %v368 = vunpack.c.l.b16 %v326
      %v369 = vunpack.c.h.b16 %v326
      %v370 = vunpack.c.l.b16 %v327
      %v371 = vunpack.c.h.b16 %v327
      %v372 = vunpack.c.l.b16 %v328
      %v373 = vunpack.c.h.b16 %v328
      %v374 = vunpack.c.l.b16 %v329
      %v375 = vunpack.c.h.b16 %v329
      %v376 = vunpack.c.l.b16 %v330
      %v377 = vunpack.c.h.b16 %v330
      %v378 = vunpack.c.l.b16 %v331
      %v379 = vunpack.c.h.b16 %v331
      %v380 = vpack.c.b16 %v348, %v348
      %v381 = vpack.c.b16 %v349, %v349
      %v382 = vpack.c.b16 %v350, %v350
      %v383 = vpack.c.b16 %v351, %v351
      %v384 = vpack.c.b16 %v352, %v352
      %v385 = vpack.c.b16 %v353, %v353
      %v386 = vpack.c.b16 %v354, %v354
      %v387 = vpack.c.b16 %v355, %v355
      %v388 = vpack.c.b16 %v356, %v356
      %v389 = vpack.c.b16 %v357, %v357
      %v390 = vpack.c.b16 %v358, %v358
      %v391 = vpack.c.b16 %v359, %v359
      %v392 = vpack.c.b16 %v360, %v360
      %v393 = vpack.c.b16 %v361, %v361
      %v394 = vpack.c.b16 %v362, %v362
      %v395 = vpack.c.b16 %v363, %v363
      %v396 = vpack.c.b16 %v364, %v364
      %v397 = vpack.c.b16 %v365, %v365
      %v398 = vpack.c.b16 %v366, %v366
      %v399 = vpack.c.b16 %v367, %v367
      %v400 = vpack.c.b16 %v368, %v368
      %v401 = vpack.c.b16 %v369, %v369
      %v402 = vpack.c.b16 %v370, %v370
      %v403 = vpack.c.b16 %v371, %v371
      %v404 = vpack.c.b16 %v372, %v372
      %v405 = vpack.c.b16 %v373, %v373
      %v406 = vpack.c.b16 %v374, %v374
      %v407 = vpack.c.b16 %v375, %v375
      %v408 = vpack.c.b16 %v376, %v376
      %v409 = vpack.c.b16 %v377, %v377
      %v410 = vpack.c.b16 %v378, %v378
      %v411 = vpack.c.b16 %v379, %v379
      %444 = vst [vmem:[%s172] sm:$0xf] %v380
      %445 = vst [vmem:[%s172 + $0x4] sm:$0xf] %v381
      %446 = vst [vmem:[%s172 + $0x8] sm:$0xf] %v382
      %447 = vst [vmem:[%s172 + $0xc] sm:$0xf] %v383
      %448 = vst [vmem:[%s172 + $0x10] sm:$0xf] %v384
      %449 = vst [vmem:[%s172 + $0x14] sm:$0xf] %v385
      %450 = vst [vmem:[%s172 + $0x18] sm:$0xf] %v386
      %451 = vst [vmem:[%s172 + $0x1c] sm:$0xf] %v387
      %452 = vst [vmem:[%s172 + $0x20] sm:$0xf] %v388
      %453 = vst [vmem:[%s172 + $0x24] sm:$0xf] %v389
      %454 = vst [vmem:[%s172 + $0x28] sm:$0xf] %v390
      %455 = vst [vmem:[%s172 + $0x2c] sm:$0xf] %v391
      %456 = vst [vmem:[%s172 + $0x30] sm:$0xf] %v392
      %457 = vst [vmem:[%s172 + $0x34] sm:$0xf] %v393
      %458 = vst [vmem:[%s172 + $0x38] sm:$0xf] %v394
      %459 = vst [vmem:[%s172 + $0x3c] sm:$0xf] %v395
      %460 = vst [vmem:[%s172 + $0x40] sm:$0xf] %v396
      %461 = vst [vmem:[%s172 + $0x44] sm:$0xf] %v397
      %462 = vst [vmem:[%s172 + $0x48] sm:$0xf] %v398
      %463 = vst [vmem:[%s172 + $0x4c] sm:$0xf] %v399
      %464 = vst [vmem:[%s172 + $0x50] sm:$0xf] %v400
      %465 = vst [vmem:[%s172 + $0x54] sm:$0xf] %v401
      %466 = vst [vmem:[%s172 + $0x58] sm:$0xf] %v402
      %467 = vst [vmem:[%s172 + $0x5c] sm:$0xf] %v403
      %468 = vst [vmem:[%s172 + $0x60] sm:$0xf] %v404
      %469 = vst [vmem:[%s172 + $0x64] sm:$0xf] %v405
      %470 = vst [vmem:[%s172 + $0x68] sm:$0xf] %v406
      %471 = vst [vmem:[%s172 + $0x6c] sm:$0xf] %v407
      %472 = vst [vmem:[%s172 + $0x70] sm:$0xf] %v408
      %473 = vst [vmem:[%s172 + $0x74] sm:$0xf] %v409
      %474 = vst [vmem:[%s172 + $0x78] sm:$0xf] %v410
      %475 = vst [vmem:[%s172 + $0x7c] sm:$0xf] %v411
      %s476 = smul.u32 32, %s14
      %p477 = scmp.lt.s32.totalorder %s476, 63
      %s478 = scalar_select %p477, %s476, 63
      %s479 = smul.addr %s478, 4
      %s480 = scalar_lea.vmem %s3, %s479
      // Predicated region
      $region33: #{refinement_residual_block.7} parent=31 // pred_check
        %p481 = pneg %p100
      $region34: #{refinement_residual_block.7} parent=31 // pred_check_branch
        %483 = sbr.rel (%p481) target = $region36
      $region35: #{refinement_residual_block.7} parent=31 // pred_region
        %s484 = smul.u32 32, %s14
      $region36: #{refinement_residual_block.7} parent=31 // pred_fallthru
        _
    $region32: #{refinement_residual_block.7} parent=5 // pred_fallthru
      _
    %p485 = scmp.le.s32.totalorder 2, %s9
    // Predicated region
    $region37: #{refinement_residual_block.7} parent=5 // pred_check
      %p486 = pneg %p485
    $region38: #{refinement_residual_block.7} parent=5 // pred_check_branch
      %488 = sbr.rel (%p486) target = $region40
    $region39: #{refinement_residual_block.7} parent=5 // pred_region
      %s489 = ssub.s32 %s9, 2
      // Predicated region
      $region41: #{refinement_residual_block.7} parent=39 // pred_check
        %p490 = pneg %p106
      $region42: #{refinement_residual_block.7} parent=39 // pred_check_branch
        %492 = sbr.rel (%p490) target = $region44
      $region43: #{refinement_residual_block.7} parent=39 // pred_region
        %s493 = smul.u32 32, %s15
        %p494 = scmp.lt.s32.totalorder %s493, 63
        %s495 = scalar_select %p494, %s493, 63
        %s496 = smul.addr %s495, 4
        %s497 = scalar_lea.vmem %s3, %s496
      $region44: #{refinement_residual_block.7} parent=39 // pred_fallthru
        _
    $region40: #{refinement_residual_block.7} parent=5 // pred_fallthru
      _
  $region6: #{refinement_residual_block.7} parent=0 // loop_footer
    %s13 = sadd.s32 1, %s9
  $region7: #{refinement_residual_block.7} parent=0 // loop_footer_branch
    %8 = sbr.rel target = $region3
  $region8: #{refinement_residual_block.7} parent=0 // loop_exit
    _

// kernel: refinement_residual_block.6
$region0: #{refinement_residual_block.6}
  #allocation0 [shape = 'u32[]', space=smem, size = 0x4, offset = 0x4, fixed_abs, tag = 'smem constant byte address 0x4 - core index']
  #allocation1 [shape = 'u32[144,128]{1,0:T(1,128)}', space=vmem, size = 0x12000, scoped, tag = 'internal scratch']
  %s0 = inlined_call_operand.vmem [shape: bf16[512,128], index: 0, kind: input, shape index: {}]
  %s1 = inlined_call_operand.vmem [shape: bf16[128,128], index: 1, kind: input, shape index: {}]
  %s2 = inlined_call_operand.vmem [shape: f32[512,128], index: 2, kind: output, shape index: {0}]
  %s3 = inlined_call_operand.vmem [shape: f32[2,1,128], index: 3, kind: output, shape index: {1}]
  %s4 = inlined_call_operand.vmem [shape: f32[2,1,128], index: 4, kind: output, shape index: {2}]
  %5 = xla_tuple %s2, %s3, %s4
  %s6 = sld [smem:[#allocation0]]
  $region57: #{refinement_residual_block.6} parent=0
    _
  %s8 = ssub.s32 1, %s6
  %s9 = scalar_select 0, %s8, %s6
  loop: start=0, step=1, limit=4
  $region2: #{refinement_residual_block.6} parent=0 // loop_pre_header
    _
  $region3: #{refinement_residual_block.6} parent=0 // loop_header
    %s11 = sphi 0, %s15
    %p12 = scmp.ge.s32.totalorder %s11, 4
    %s21 = sphi 0, %s23
    %s24 = sphi 0, %s21
    %s25 = sphi 0, %s24
    %s41 = sphi 0, %s25
    %s45 = sphi 0, %s45
    %s47 = sphi 0, %s45
    %s48 = sphi 0, %s47
    %s62 = sphi 0, %s48
    %s68 = sphi 0, %s70
    %s71 = sphi 0, %s68
    %s72 = sphi 0, %s71
    %s88 = sphi 0, %s72
    %s94 = sphi 0, %s96
    %s97 = sphi 0, %s94
    %s98 = sphi 0, %s97
    %s114 = sphi 0, %s98
    %s120 = sphi 0, %s122
    %s123 = sphi 0, %s120
    %s124 = sphi 0, %s123
    %s140 = sphi 0, %s124
  $region4: #{refinement_residual_block.6} parent=0 // loop_header_branch
    %14 = sbr.rel (%p12) target = $region8
  $region5: #{refinement_residual_block.6} parent=0 // loop_body
    %s16 = ssub.s32 %s11, 1
    %s17 = ssub.s32 %s11, 2
    %s18 = sadd.s32 %s11, 1
    %s19 = ssub.s32 %s11, %s18
    %p20 = scmp.eq.s32.totalorder %s19, 0
    %s22 = sadd.s32 %s21, 1
    %s23 = scalar_select %p20, %s21, %s22
    %p26 = pneg %p20
    %p27 = scmp.eq.s32.totalorder %s11, 1
    %p28 = por %p26, %p27
    %p29 = scmp.ne.s32.totalorder %s21, %s24
    %p30 = scmp.eq.s32.totalorder %s11, 0
    %p31 = por %p29, %p30
    %p32 = scmp.ne.s32.totalorder %s21, %s24
    %p33 = scmp.eq.s32.totalorder %s16, 1
    %p34 = por %p32, %p33
    %p35 = scmp.ne.s32.totalorder %s24, %s25
    %p36 = scmp.eq.s32.totalorder %s16, 0
    %p37 = por %p35, %p36
    %p38 = scmp.ne.s32.totalorder %s24, %s25
    %p39 = scmp.eq.s32.totalorder %s17, 1
    %p40 = por %p38, %p39
    %p42 = scmp.ne.s32.totalorder %s25, %s41
    %p43 = scmp.eq.s32.totalorder %s17, 0
    %p44 = por %p42, %p43
    %s46 = sadd.s32 %s45, 1
    %p49 = scmp.eq.s32.totalorder %s11, 1
    %p50 = scmp.ne.s32.totalorder %s45, %s47
    %p51 = scmp.eq.s32.totalorder %s11, 0
    %p52 = por %p50, %p51
    %p53 = scmp.ne.s32.totalorder %s45, %s47
    %p54 = scmp.eq.s32.totalorder %s16, 1
    %p55 = por %p53, %p54
    %p56 = scmp.ne.s32.totalorder %s47, %s48
    %p57 = scmp.eq.s32.totalorder %s16, 0
    %p58 = por %p56, %p57
    %p59 = scmp.ne.s32.totalorder %s47, %s48
    %p60 = scmp.eq.s32.totalorder %s17, 1
    %p61 = por %p59, %p60
    %p63 = scmp.ne.s32.totalorder %s48, %s62
    %p64 = scmp.eq.s32.totalorder %s17, 0
    %p65 = por %p63, %p64
    %s66 = ssub.s32 %s11, %s18
    %p67 = scmp.eq.s32.totalorder %s66, 0
    %s69 = sadd.s32 %s68, 1
    %s70 = scalar_select %p67, %s68, %s69
    %p73 = pneg %p67
    %p74 = scmp.eq.s32.totalorder %s11, 1
    %p75 = por %p73, %p74
    %p76 = scmp.ne.s32.totalorder %s68, %s71
    %p77 = scmp.eq.s32.totalorder %s11, 0
    %p78 = por %p76, %p77
    %p79 = scmp.ne.s32.totalorder %s68, %s71
    %p80 = scmp.eq.s32.totalorder %s16, 1
    %p81 = por %p79, %p80
    %p82 = scmp.ne.s32.totalorder %s71, %s72
    %p83 = scmp.eq.s32.totalorder %s16, 0
    %p84 = por %p82, %p83
    %p85 = scmp.ne.s32.totalorder %s71, %s72
    %p86 = scmp.eq.s32.totalorder %s17, 1
    %p87 = por %p85, %p86
    %p89 = scmp.ne.s32.totalorder %s72, %s88
    %p90 = scmp.eq.s32.totalorder %s17, 0
    %p91 = por %p89, %p90
    %s92 = ssub.s32 %s11, %s18
    %p93 = scmp.eq.s32.totalorder %s92, 0
    %s95 = sadd.s32 %s94, 1
    %s96 = scalar_select %p93, %s94, %s95
    %p99 = pneg %p93
    %p100 = scmp.eq.s32.totalorder %s11, 1
    %p101 = por %p99, %p100
    %p102 = scmp.ne.s32.totalorder %s94, %s97
    %p103 = scmp.eq.s32.totalorder %s11, 0
    %p104 = por %p102, %p103
    %p105 = scmp.ne.s32.totalorder %s94, %s97
    %p106 = scmp.eq.s32.totalorder %s16, 1
    %p107 = por %p105, %p106
    %p108 = scmp.ne.s32.totalorder %s97, %s98
    %p109 = scmp.eq.s32.totalorder %s16, 0
    %p110 = por %p108, %p109
    %p111 = scmp.ne.s32.totalorder %s97, %s98
    %p112 = scmp.eq.s32.totalorder %s17, 1
    %p113 = por %p111, %p112
    %p115 = scmp.ne.s32.totalorder %s98, %s114
    %p116 = scmp.eq.s32.totalorder %s17, 0
    %p117 = por %p115, %p116
    %s118 = ssub.s32 %s11, %s18
    %p119 = scmp.eq.s32.totalorder %s118, 0
    %s121 = sadd.s32 %s120, 1
    %s122 = scalar_select %p119, %s120, %s121
    %p125 = pneg %p119
    %p126 = scmp.eq.s32.totalorder %s11, 1
    %p127 = por %p125, %p126
    %p128 = scmp.ne.s32.totalorder %s120, %s123
    %p129 = scmp.eq.s32.totalorder %s11, 0
    %p130 = por %p128, %p129
    %p131 = scmp.ne.s32.totalorder %s120, %s123
    %p132 = scmp.eq.s32.totalorder %s16, 1
    %p133 = por %p131, %p132
    %p134 = scmp.ne.s32.totalorder %s123, %s124
    %p135 = scmp.eq.s32.totalorder %s16, 0
    %p136 = por %p134, %p135
    %p137 = scmp.ne.s32.totalorder %s123, %s124
    %p138 = scmp.eq.s32.totalorder %s17, 1
    %p139 = por %p137, %p138
    %p141 = scmp.ne.s32.totalorder %s124, %s140
    %p142 = scmp.eq.s32.totalorder %s17, 0
    %p143 = por %p141, %p142
    %p144 = scmp.le.s32.totalorder 1, %s11
    %p145 = scmp.lt.s32.totalorder %s11, 3
    %p146 = pnand %p144, %p145
    %p147 = pneg %p146
    // Predicated region
    $region9: #{refinement_residual_block.6} parent=5 // pred_check
      _
    $region10: #{refinement_residual_block.6} parent=5 // pred_check_branch
      %149 = sbr.rel (%p146) target = $region12
    $region11: #{refinement_residual_block.6} parent=5 // pred_region
      %s150 = ssub.s32 %s11, 1
      // Predicated region
      $region13: #{refinement_residual_block.6} parent=11 // pred_check
        %p151 = pneg %p58
      $region14: #{refinement_residual_block.6} parent=11 // pred_check_branch
        %153 = sbr.rel (%p151) target = $region16
      $region15: #{refinement_residual_block.6} parent=11 // pred_region
        _
      $region16: #{refinement_residual_block.6} parent=11 // pred_fallthru
        _
    $region12: #{refinement_residual_block.6} parent=5 // pred_fallthru
      _
    %p154 = scmp.lt.s32.totalorder %s11, 2
    // Predicated region
    $region17: #{refinement_residual_block.6} parent=5 // pred_check
      %p155 = pneg %p154
    $region18: #{refinement_residual_block.6} parent=5 // pred_check_branch
      %157 = sbr.rel (%p155) target = $region20
    $region19: #{refinement_residual_block.6} parent=5 // pred_region
      // Predicated region
      $region21: #{refinement_residual_block.6} parent=19 // pred_check
        %p158 = pneg %p31
      $region22: #{refinement_residual_block.6} parent=19 // pred_check_branch
        %160 = sbr.rel (%p158) target = $region24
      $region23: #{refinement_residual_block.6} parent=19 // pred_region
        %s161 = smul.u32 32, %s11
        %p162 = scmp.lt.s32.totalorder %s161, 63
        %s163 = scalar_select %p162, %s161, 63
        %s164 = smul.addr %s163, 4
        %s165 = scalar_lea.vmem %s0, %s164
        %s166 = smul.u32 32, %s11
      $region24: #{refinement_residual_block.6} parent=19 // pred_fallthru
        _
    $region20: #{refinement_residual_block.6} parent=5 // pred_fallthru
      _
    %p167 = scmp.le.s32.totalorder 1, %s11
    %p168 = scmp.lt.s32.totalorder %s11, 3
    %p169 = pnand %p167, %p168
    %p170 = pneg %p169
    // Predicated region
    $region25: #{refinement_residual_block.6} parent=5 // pred_check
      _
    $region26: #{refinement_residual_block.6} parent=5 // pred_check_branch
      %172 = sbr.rel (%p169) target = $region28
    $region27: #{refinement_residual_block.6} parent=5 // pred_region
      %s173 = ssub.s32 %s11, 1
      %s174 = smul.u32 32, %s16
      %p175 = scmp.lt.s32.totalorder %s174, 63
      %s176 = scalar_select %p175, %s174, 63
      %s177 = smul.addr %s176, 4
      %s178 = scalar_lea.vmem %s0, %s177
      %p179 = pneg %p37
      %p180 = pneg %p34
      %p181 = pneg %p58
      %p182 = pneg %p55
      %p183 = pneg %p84
      %p184 = pneg %p81
      %s185 = smul.u32 32, %s16
      %p186 = scmp.lt.s32.totalorder %s185, 63
      %s187 = scalar_select %p186, %s185, 63
      %s188 = smul.addr %s187, 8
      %s189 = scalar_lea.vmem %s2, %s188
      %p190 = pneg %p110
      %p191 = pneg %p107
      %p192 = scmp.lt.s32.totalorder %s16, 1
      %s193 = scalar_select %p192, %s16, 1
      %s194 = scalar_lea.vmem %s3, %s193
      %p195 = pneg %p136
      %p196 = pneg %p133
      %p197 = scmp.lt.s32.totalorder %s16, 1
      %s198 = scalar_select %p197, %s16, 1
      %s199 = scalar_lea.vmem %s4, %s198
      %s200 = smul.u32 32, %s16
      %p201 = scmp.lt.s32.totalorder %s200, 63
      %s202 = scalar_select %p201, %s200, 63
      %s203 = smul.addr %s202, 4
      %s204 = scalar_lea.vmem %s0, %s203
      %s205 = smul.u32 32, %s16
      %s206 = smul.u32 32, %s16
      %p207 = scmp.lt.s32.totalorder %s206, 63
      %s208 = scalar_select %p207, %s206, 63
      %s209 = smul.addr %s208, 8
      %s210 = scalar_lea.vmem %s2, %s209
      %s211 = smul.u32 32, %s16
      %p212 = scmp.lt.s32.totalorder %s16, 1
      %s213 = scalar_select %p212, %s16, 1
      %s214 = scalar_lea.vmem %s3, %s213
      %p215 = scmp.lt.s32.totalorder %s16, 1
      %s216 = scalar_select %p215, %s16, 1
      %s217 = scalar_lea.vmem %s4, %s216
      %v219 = vld [vmem:[%s204] sm:$0xf]
      %v220 = vld [vmem:[%s204 + $0x4] sm:$0xf]
      %v221 = vld [vmem:[%s204 + $0x8] sm:$0xf]
      %v222 = vld [vmem:[%s204 + $0xc] sm:$0xf]
      %v223 = vld [vmem:[%s204 + $0x10] sm:$0xf]
      %v224 = vld [vmem:[%s204 + $0x14] sm:$0xf]
      %v225 = vld [vmem:[%s204 + $0x18] sm:$0xf]
      %v226 = vld [vmem:[%s204 + $0x1c] sm:$0xf]
      %v227 = vld [vmem:[%s204 + $0x20] sm:$0xf]
      %v228 = vld [vmem:[%s204 + $0x24] sm:$0xf]
      %v229 = vld [vmem:[%s204 + $0x28] sm:$0xf]
      %v230 = vld [vmem:[%s204 + $0x2c] sm:$0xf]
      %v231 = vld [vmem:[%s204 + $0x30] sm:$0xf]
      %v232 = vld [vmem:[%s204 + $0x34] sm:$0xf]
      %v233 = vld [vmem:[%s204 + $0x38] sm:$0xf]
      %v234 = vld [vmem:[%s204 + $0x3c] sm:$0xf]
      %v235 = vld [vmem:[%s204 + $0x40] sm:$0xf]
      %v236 = vld [vmem:[%s204 + $0x44] sm:$0xf]
      %v237 = vld [vmem:[%s204 + $0x48] sm:$0xf]
      %v238 = vld [vmem:[%s204 + $0x4c] sm:$0xf]
      %v239 = vld [vmem:[%s204 + $0x50] sm:$0xf]
      %v240 = vld [vmem:[%s204 + $0x54] sm:$0xf]
      %v241 = vld [vmem:[%s204 + $0x58] sm:$0xf]
      %v242 = vld [vmem:[%s204 + $0x5c] sm:$0xf]
      %v243 = vld [vmem:[%s204 + $0x60] sm:$0xf]
      %v244 = vld [vmem:[%s204 + $0x64] sm:$0xf]
      %v245 = vld [vmem:[%s204 + $0x68] sm:$0xf]
      %v246 = vld [vmem:[%s204 + $0x6c] sm:$0xf]
      %v247 = vld [vmem:[%s204 + $0x70] sm:$0xf]
      %v248 = vld [vmem:[%s204 + $0x74] sm:$0xf]
      %v249 = vld [vmem:[%s204 + $0x78] sm:$0xf]
      %v250 = vld [vmem:[%s204 + $0x7c] sm:$0xf]
      %v251 = vld [vmem:[%s1] sm:$0xf]
      %v252 = vld [vmem:[%s1 + $0x4] sm:$0xf]
      %v253 = vld [vmem:[%s1 + $0x8] sm:$0xf]
      %v254 = vld [vmem:[%s1 + $0xc] sm:$0xf]
      %v255 = vld [vmem:[%s1 + $0x10] sm:$0xf]
      %v256 = vld [vmem:[%s1 + $0x14] sm:$0xf]
      %v257 = vld [vmem:[%s1 + $0x18] sm:$0xf]
      %v258 = vld [vmem:[%s1 + $0x1c] sm:$0xf]
      %v259 = vld [vmem:[%s1 + $0x20] sm:$0xf]
      %v260 = vld [vmem:[%s1 + $0x24] sm:$0xf]
      %v261 = vld [vmem:[%s1 + $0x28] sm:$0xf]
      %v262 = vld [vmem:[%s1 + $0x2c] sm:$0xf]
      %v263 = vld [vmem:[%s1 + $0x30] sm:$0xf]
      %v264 = vld [vmem:[%s1 + $0x34] sm:$0xf]
      %v265 = vld [vmem:[%s1 + $0x38] sm:$0xf]
      %v266 = vld [vmem:[%s1 + $0x3c] sm:$0xf]
      %v299 = vunpack.c.l.b16 %v219
      %v300 = vunpack.c.l.b16 %v220
      %v301 = vunpack.c.l.b16 %v221
      %v302 = vunpack.c.l.b16 %v222
      %v303 = vunpack.c.l.b16 %v223
      %v304 = vunpack.c.l.b16 %v224
      %v305 = vunpack.c.l.b16 %v225
      %v306 = vunpack.c.l.b16 %v226
      %v307 = vunpack.c.l.b16 %v227
      %v308 = vunpack.c.l.b16 %v228
      %v309 = vunpack.c.l.b16 %v229
      %v310 = vunpack.c.l.b16 %v230
      %v311 = vunpack.c.l.b16 %v231
      %v312 = vunpack.c.l.b16 %v232
      %v313 = vunpack.c.l.b16 %v233
      %v314 = vunpack.c.l.b16 %v234
      %v315 = vunpack.c.l.b16 %v235
      %v316 = vunpack.c.l.b16 %v236
      %v317 = vunpack.c.l.b16 %v237
      %v318 = vunpack.c.l.b16 %v238
      %v319 = vunpack.c.l.b16 %v239
      %v320 = vunpack.c.l.b16 %v240
      %v321 = vunpack.c.l.b16 %v241
      %v322 = vunpack.c.l.b16 %v242
      %v323 = vunpack.c.l.b16 %v243
      %v324 = vunpack.c.l.b16 %v244
      %v325 = vunpack.c.l.b16 %v245
      %v326 = vunpack.c.l.b16 %v246
      %v327 = vunpack.c.l.b16 %v247
      %v328 = vunpack.c.l.b16 %v248
      %v329 = vunpack.c.l.b16 %v249
      %v330 = vunpack.c.l.b16 %v250
      %v331 = vpack.c.b16 %v300, %v299
      %v332 = vpack.c.b16 %v302, %v301
      %v333 = vpack.c.b16 %v304, %v303
      %v334 = vpack.c.b16 %v306, %v305
      %v335 = vpack.c.b16 %v308, %v307
      %v336 = vpack.c.b16 %v310, %v309
      %v337 = vpack.c.b16 %v312, %v311
      %v338 = vpack.c.b16 %v314, %v313
      %v339 = vpack.c.b16 %v316, %v315
      %v340 = vpack.c.b16 %v318, %v317
      %v341 = vpack.c.b16 %v320, %v319
      %v342 = vpack.c.b16 %v322, %v321
      %v343 = vpack.c.b16 %v324, %v323
      %v344 = vpack.c.b16 %v326, %v325
      %v345 = vpack.c.b16 %v328, %v327
      %v346 = vpack.c.b16 %v330, %v329
      %v379 = vunpack.c.l.b16 %v251
      %v380 = vunpack.c.l.b16 %v252
      %v381 = vunpack.c.l.b16 %v253
      %v382 = vunpack.c.l.b16 %v254
      %v383 = vunpack.c.l.b16 %v255
      %v384 = vunpack.c.l.b16 %v256
      %v385 = vunpack.c.l.b16 %v257
      %v386 = vunpack.c.l.b16 %v258
      %v387 = vunpack.c.l.b16 %v259
      %v388 = vunpack.c.l.b16 %v260
      %v389 = vunpack.c.l.b16 %v261
      %v390 = vunpack.c.l.b16 %v262
      %v391 = vunpack.c.l.b16 %v263
      %v392 = vunpack.c.l.b16 %v264
      %v393 = vunpack.c.l.b16 %v265
      %v394 = vunpack.c.l.b16 %v266
      %v395 = vpack.c.b16 %v380, %v379
      %v396 = vpack.c.b16 %v382, %v381
      %v397 = vpack.c.b16 %v384, %v383
      %v398 = vpack.c.b16 %v386, %v385
      %v399 = vpack.c.b16 %v388, %v387
      %v400 = vpack.c.b16 %v390, %v389
      %v401 = vpack.c.b16 %v392, %v391
      %v402 = vpack.c.b16 %v394, %v393
      %411 = vmatprep.subr.bf16.mxu0 0
      %412 = vmatpush1.bf16.msra.mxu0 %v395
      %413 = vmatprep.subr.bf16.mxu0 0
      %414 = vmatpush1.bf16.msra.mxu0 %v396
      %415 = vmatprep.subr.bf16.mxu0 0
      %416 = vmatpush1.bf16.msra.mxu0 %v397
      %417 = vmatprep.subr.bf16.mxu0 0
      %418 = vmatpush1.bf16.msra.mxu0 %v398
      %419 = vmatprep.subr.bf16.mxu0 0
      %420 = vmatpush1.bf16.msra.mxu0 %v399
      %421 = vmatprep.subr.bf16.mxu0 0
      %422 = vmatpush1.bf16.msra.mxu0 %v400
      %423 = vmatprep.subr.bf16.mxu0 0
      %424 = vmatpush1.bf16.msra.mxu0 %v401
      %425 = vmatprep.subr.bf16.mxu0 0
      %426 = vmatpush1.bf16.msra.mxu0 %v402
      %427 = vmatprep.subr.bf16.mxu0 0
      %428 = vmatpush1.bf16.msra.mxu0 0
      %429 = vmatprep.subr.bf16.mxu0 0
      %430 = vmatpush1.bf16.msra.mxu0 0
      %431 = vmatprep.subr.bf16.mxu0 0
      %432 = vmatpush1.bf16.msra.mxu0 0
      %433 = vmatprep.subr.bf16.mxu0 0
      %434 = vmatpush1.bf16.msra.mxu0 0
      %435 = vmatprep.subr.bf16.mxu0 0
      %436 = vmatpush1.bf16.msra.mxu0 0
      %437 = vmatprep.subr.bf16.mxu0 0
      %438 = vmatpush1.bf16.msra.mxu0 0
      %439 = vmatprep.subr.bf16.mxu0 0
      %440 = vmatpush1.bf16.msra.mxu0 0
      %441 = vmatprep.subr.bf16.mxu0 0
      %442 = vmatpush1.bf16.msra.mxu0 0
      %443 = vmatprep.mubr.bf16.mxu0 0
      %444 = vmatmul.mubr.bf16.gmra.mrb[0].mxu0 %v331
      %v445 = vpop.f32.mrb[0].mxu0
      %v446 = vadd.f32 0.0, %v445
      %v447 = vpop.f32.mrb[0].mxu0
      %v448 = vpop.f32.mrb[0].mxu0
      %v449 = vadd.f32 0.0, %v448
      %v450 = vpop.f32.mrb[0].mxu0
      %451 = vmatprep.mubr.bf16.mxu0 0
      %452 = vmatmul.mubr.bf16.gmra.mrb[0].mxu0 %v332
      %v453 = vpop.f32.mrb[0].mxu0
      %v454 = vadd.f32 0.0, %v453
      %v455 = vpop.f32.mrb[0].mxu0
      %v456 = vpop.f32.mrb[0].mxu0
      %v457 = vadd.f32 0.0, %v456
      %v458 = vpop.f32.mrb[0].mxu0
      %459 = vmatprep.mubr.bf16.mxu0 0
      %460 = vmatmul.mubr.bf16.gmra.mrb[0].mxu0 %v333
      %v461 = vpop.f32.mrb[0].mxu0
      %v462 = vadd.f32 0.0, %v461
      %v463 = vpop.f32.mrb[0].mxu0
      %v464 = vpop.f32.mrb[0].mxu0
      %v465 = vadd.f32 0.0, %v464
      %v466 = vpop.f32.mrb[0].mxu0
      %467 = vmatprep.mubr.bf16.mxu0 0
      %468 = vmatmul.mubr.bf16.gmra.mrb[0].mxu0 %v334
      %v469 = vpop.f32.mrb[0].mxu0
      %v470 = vadd.f32 0.0, %v469
      %v471 = vpop.f32.mrb[0].mxu0
      %v472 = vpop.f32.mrb[0].mxu0
      %v473 = vadd.f32 0.0, %v472
      %v474 = vpop.f32.mrb[0].mxu0
      %475 = vmatprep.mubr.bf16.mxu0 0
      %476 = vmatmul.mubr.bf16.gmra.mrb[0].mxu0 %v335
      %v477 = vpop.f32.mrb[0].mxu0
      %v478 = vadd.f32 0.0, %v477
      %v479 = vpop.f32.mrb[0].mxu0
      %v480 = vpop.f32.mrb[0].mxu0
      %v481 = vadd.f32 0.0, %v480
      %v482 = vpop.f32.mrb[0].mxu0
      %483 = vmatprep.mubr.bf16.mxu0 0
      %484 = vmatmul.mubr.bf16.gmra.mrb[0].mxu0 %v336
      %v485 = vpop.f32.mrb[0].mxu0
      %v486 = vadd.f32 0.0, %v485
      %v487 = vpop.f32.mrb[0].mxu0
      %v488 = vpop.f32.mrb[0].mxu0
      %v489 = vadd.f32 0.0, %v488
      %v490 = vpop.f32.mrb[0].mxu0
      %491 = vmatprep.mubr.bf16.mxu0 0
      %492 = vmatmul.mubr.bf16.gmra.mrb[0].mxu0 %v337
      %v493 = vpop.f32.mrb[0].mxu0
      %v494 = vadd.f32 0.0, %v493
      %v495 = vpop.f32.mrb[0].mxu0
      %v496 = vpop.f32.mrb[0].mxu0
      %v497 = vadd.f32 0.0, %v496
      %v498 = vpop.f32.mrb[0].mxu0
      %499 = vmatprep.mubr.bf16.mxu0 0
      %500 = vmatmul.mubr.bf16.gmra.mrb[0].mxu0 %v338
      %v501 = vpop.f32.mrb[0].mxu0
      %v502 = vadd.f32 0.0, %v501
      %v503 = vpop.f32.mrb[0].mxu0
      %v504 = vpop.f32.mrb[0].mxu0
      %v505 = vadd.f32 0.0, %v504
      %v506 = vpop.f32.mrb[0].mxu0
      %507 = vmatprep.mubr.bf16.mxu0 0
      %508 = vmatmul.mubr.bf16.gmra.mrb[0].mxu0 %v339
      %v509 = vpop.f32.mrb[0].mxu0
      %v510 = vadd.f32 0.0, %v509
      %v511 = vpop.f32.mrb[0].mxu0
      %v512 = vpop.f32.mrb[0].mxu0
      %v513 = vadd.f32 0.0, %v512
      %v514 = vpop.f32.mrb[0].mxu0
      %515 = vmatprep.mubr.bf16.mxu0 0
      %516 = vmatmul.mubr.bf16.gmra.mrb[0].mxu0 %v340
      %v517 = vpop.f32.mrb[0].mxu0
      %v518 = vadd.f32 0.0, %v517
      %v519 = vpop.f32.mrb[0].mxu0
      %v520 = vpop.f32.mrb[0].mxu0
      %v521 = vadd.f32 0.0, %v520
      %v522 = vpop.f32.mrb[0].mxu0
      %523 = vmatprep.mubr.bf16.mxu0 0
      %524 = vmatmul.mubr.bf16.gmra.mrb[0].mxu0 %v341
      %v525 = vpop.f32.mrb[0].mxu0
      %v526 = vadd.f32 0.0, %v525
      %v527 = vpop.f32.mrb[0].mxu0
      %v528 = vpop.f32.mrb[0].mxu0
      %v529 = vadd.f32 0.0, %v528
      %v530 = vpop.f32.mrb[0].mxu0
      %531 = vmatprep.mubr.bf16.mxu0 0
      %532 = vmatmul.mubr.bf16.gmra.mrb[0].mxu0 %v342
      %v533 = vpop.f32.mrb[0].mxu0
      %v534 = vadd.f32 0.0, %v533
      %v535 = vpop.f32.mrb[0].mxu0
      %v536 = vpop.f32.mrb[0].mxu0
      %v537 = vadd.f32 0.0, %v536
      %v538 = vpop.f32.mrb[0].mxu0
      %539 = vmatprep.mubr.bf16.mxu0 0
      %540 = vmatmul.mubr.bf16.gmra.mrb[0].mxu0 %v343
      %v541 = vpop.f32.mrb[0].mxu0
      %v542 = vadd.f32 0.0, %v541
      %v543 = vpop.f32.mrb[0].mxu0
      %v544 = vpop.f32.mrb[0].mxu0
      %v545 = vadd.f32 0.0, %v544
      %v546 = vpop.f32.mrb[0].mxu0
      %547 = vmatprep.mubr.bf16.mxu0 0
      %548 = vmatmul.mubr.bf16.gmra.mrb[0].mxu0 %v344
      %v549 = vpop.f32.mrb[0].mxu0
      %v550 = vadd.f32 0.0, %v549
      %v551 = vpop.f32.mrb[0].mxu0
      %v552 = vpop.f32.mrb[0].mxu0
      %v553 = vadd.f32 0.0, %v552
      %v554 = vpop.f32.mrb[0].mxu0
      %555 = vmatprep.mubr.bf16.mxu0 0
      %556 = vmatmul.mubr.bf16.gmra.mrb[0].mxu0 %v345
      %v557 = vpop.f32.mrb[0].mxu0
      %v558 = vadd.f32 0.0, %v557
      %v559 = vpop.f32.mrb[0].mxu0
      %v560 = vpop.f32.mrb[0].mxu0
      %v561 = vadd.f32 0.0, %v560
      %v562 = vpop.f32.mrb[0].mxu0
      %563 = vmatprep.mubr.bf16.mxu0 0
      %564 = vmatmul.mubr.bf16.gmra.mrb[0].mxu0 %v346
      %v565 = vpop.f32.mrb[0].mxu0
      %v566 = vadd.f32 0.0, %v565
      %v567 = vpop.f32.mrb[0].mxu0
      %v568 = vpop.f32.mrb[0].mxu0
      %v569 = vadd.f32 0.0, %v568
      %v570 = vpop.f32.mrb[0].mxu0
      %571 = vdwg.mxu0
      %572 = vst [vmem:[%s210] sm:$0xff] %v446
      %573 = vst [vmem:[%s210 + $0x8] sm:$0xff] %v449
      %574 = vst [vmem:[%s210 + $0x10] sm:$0xff] %v454
      %575 = vst [vmem:[%s210 + $0x18] sm:$0xff] %v457
      %576 = vst [vmem:[%s210 + $0x20] sm:$0xff] %v462
      %577 = vst [vmem:[%s210 + $0x28] sm:$0xff] %v465
      %578 = vst [vmem:[%s210 + $0x30] sm:$0xff] %v470
      %579 = vst [vmem:[%s210 + $0x38] sm:$0xff] %v473
      %580 = vst [vmem:[%s210 + $0x40] sm:$0xff] %v478
      %581 = vst [vmem:[%s210 + $0x48] sm:$0xff] %v481
      %582 = vst [vmem:[%s210 + $0x50] sm:$0xff] %v486
      %583 = vst [vmem:[%s210 + $0x58] sm:$0xff] %v489
      %584 = vst [vmem:[%s210 + $0x60] sm:$0xff] %v494
      %585 = vst [vmem:[%s210 + $0x68] sm:$0xff] %v497
      %586 = vst [vmem:[%s210 + $0x70] sm:$0xff] %v502
      %587 = vst [vmem:[%s210 + $0x78] sm:$0xff] %v505
      %588 = vst [vmem:[%s210 + $0x80] sm:$0xff] %v510
      %589 = vst [vmem:[%s210 + $0x88] sm:$0xff] %v513
      %590 = vst [vmem:[%s210 + $0x90] sm:$0xff] %v518
      %591 = vst [vmem:[%s210 + $0x98] sm:$0xff] %v521
      %592 = vst [vmem:[%s210 + $0xa0] sm:$0xff] %v526
      %593 = vst [vmem:[%s210 + $0xa8] sm:$0xff] %v529
      %594 = vst [vmem:[%s210 + $0xb0] sm:$0xff] %v534
      %595 = vst [vmem:[%s210 + $0xb8] sm:$0xff] %v537
      %596 = vst [vmem:[%s210 + $0xc0] sm:$0xff] %v542
      %597 = vst [vmem:[%s210 + $0xc8] sm:$0xff] %v545
      %598 = vst [vmem:[%s210 + $0xd0] sm:$0xff] %v550
      %599 = vst [vmem:[%s210 + $0xd8] sm:$0xff] %v553
      %600 = vst [vmem:[%s210 + $0xe0] sm:$0xff] %v558
      %601 = vst [vmem:[%s210 + $0xe8] sm:$0xff] %v561
      %602 = vst [vmem:[%s210 + $0xf0] sm:$0xff] %v566
      %603 = vst [vmem:[%s210 + $0xf8] sm:$0xff] %v569
      %v604 = vadd.f32 %v446, %v449
      %v605 = vadd.f32 %v604, %v454
      %v606 = vadd.f32 %v605, %v457
      %v607 = vadd.f32 %v606, %v462
      %v608 = vadd.f32 %v607, %v465
      %v609 = vadd.f32 %v608, %v470
      %v610 = vadd.f32 %v609, %v473
      %v611 = vadd.f32 %v610, %v478
      %v612 = vadd.f32 %v611, %v481
      %v613 = vadd.f32 %v612, %v486
      %v614 = vadd.f32 %v613, %v489
      %v615 = vadd.f32 %v614, %v494
      %v616 = vadd.f32 %v615, %v497
      %v617 = vadd.f32 %v616, %v502
      %v618 = vadd.f32 %v617, %v505
      %v619 = vadd.f32 %v618, %v510
      %v620 = vadd.f32 %v619, %v513
      %v621 = vadd.f32 %v620, %v518
      %v622 = vadd.f32 %v621, %v521
      %v623 = vadd.f32 %v622, %v526
      %v624 = vadd.f32 %v623, %v529
      %v625 = vadd.f32 %v624, %v534
      %v626 = vadd.f32 %v625, %v537
      %v627 = vadd.f32 %v626, %v542
      %v628 = vadd.f32 %v627, %v545
      %v629 = vadd.f32 %v628, %v550
      %v630 = vadd.f32 %v629, %v553
      %v631 = vadd.f32 %v630, %v558
      %v632 = vadd.f32 %v631, %v561
      %v633 = vadd.f32 %v632, %v566
      %v634 = vadd.f32 %v633, %v569
      %v635 = vrot.slane %v634, 4
      %v636 = vadd.f32 %v634, %v635
      %v637 = vrot.slane %v636, 2
      %v638 = vadd.f32 %v636, %v637
      %v639 = vrot.slane %v638, 1
      %v640 = vadd.f32 %v638, %v639
      %641 = vst [vmem:[%s214] sm:$0x1] %v640
      %v642 = vmul.f32 %v446, %v446
      %v643 = vmul.f32 %v449, %v449
      %v644 = vmul.f32 %v454, %v454
      %v645 = vmul.f32 %v457, %v457
      %v646 = vmul.f32 %v462, %v462
      %v647 = vmul.f32 %v465, %v465
      %v648 = vmul.f32 %v470, %v470
      %v649 = vmul.f32 %v473, %v473
      %v650 = vmul.f32 %v478, %v478
      %v651 = vmul.f32 %v481, %v481
      %v652 = vmul.f32 %v486, %v486
      %v653 = vmul.f32 %v489, %v489
      %v654 = vmul.f32 %v494, %v494
      %v655 = vmul.f32 %v497, %v497
      %v656 = vmul.f32 %v502, %v502
      %v657 = vmul.f32 %v505, %v505
      %v658 = vmul.f32 %v510, %v510
      %v659 = vmul.f32 %v513, %v513
      %v660 = vmul.f32 %v518, %v518
      %v661 = vmul.f32 %v521, %v521
      %v662 = vmul.f32 %v526, %v526
      %v663 = vmul.f32 %v529, %v529
      %v664 = vmul.f32 %v534, %v534
      %v665 = vmul.f32 %v537, %v537
      %v666 = vmul.f32 %v542, %v542
      %v667 = vmul.f32 %v545, %v545
      %v668 = vmul.f32 %v550, %v550
      %v669 = vmul.f32 %v553, %v553
      %v670 = vmul.f32 %v558, %v558
      %v671 = vmul.f32 %v561, %v561
      %v672 = vmul.f32 %v566, %v566
      %v673 = vmul.f32 %v569, %v569
      %v674 = vadd.f32 %v642, %v643
      %v675 = vadd.f32 %v674, %v644
      %v676 = vadd.f32 %v675, %v645
      %v677 = vadd.f32 %v676, %v646
      %v678 = vadd.f32 %v677, %v647
      %v679 = vadd.f32 %v678, %v648
      %v680 = vadd.f32 %v679, %v649
      %v681 = vadd.f32 %v680, %v650
      %v682 = vadd.f32 %v681, %v651
      %v683 = vadd.f32 %v682, %v652
      %v684 = vadd.f32 %v683, %v653
      %v685 = vadd.f32 %v684, %v654
      %v686 = vadd.f32 %v685, %v655
      %v687 = vadd.f32 %v686, %v656
      %v688 = vadd.f32 %v687, %v657
      %v689 = vadd.f32 %v688, %v658
      %v690 = vadd.f32 %v689, %v659
      %v691 = vadd.f32 %v690, %v660
      %v692 = vadd.f32 %v691, %v661
      %v693 = vadd.f32 %v692, %v662
      %v694 = vadd.f32 %v693, %v663
      %v695 = vadd.f32 %v694, %v664
      %v696 = vadd.f32 %v695, %v665
      %v697 = vadd.f32 %v696, %v666
      %v698 = vadd.f32 %v697, %v667
      %v699 = vadd.f32 %v698, %v668
      %v700 = vadd.f32 %v699, %v669
      %v701 = vadd.f32 %v700, %v670
      %v702 = vadd.f32 %v701, %v671
      %v703 = vadd.f32 %v702, %v672
      %v704 = vadd.f32 %v703, %v673
      %v705 = vrot.slane %v704, 4
      %v706 = vadd.f32 %v704, %v705
      %v707 = vrot.slane %v706, 2
      %v708 = vadd.f32 %v706, %v707
      %v709 = vrot.slane %v708, 1
      %v710 = vadd.f32 %v708, %v709
      %711 = vst [vmem:[%s217] sm:$0x1] %v710
      %s712 = smul.u32 32, %s16
      %p713 = scmp.lt.s32.totalorder %s712, 63
      %s714 = scalar_select %p713, %s712, 63
      %s715 = smul.addr %s714, 8
      %s716 = scalar_lea.vmem %s2, %s715
      %p717 = scmp.lt.s32.totalorder %s16, 1
      %s718 = scalar_select %p717, %s16, 1
      %s719 = scalar_lea.vmem %s3, %s718
      %p720 = scmp.lt.s32.totalorder %s16, 1
      %s721 = scalar_select %p720, %s16, 1
      %s722 = scalar_lea.vmem %s4, %s721
      // Predicated region
      $region29: #{refinement_residual_block.6} parent=27 // pred_check
        %p723 = pneg %p81
      $region30: #{refinement_residual_block.6} parent=27 // pred_check_branch
        %725 = sbr.rel (%p723) target = $region32
      $region31: #{refinement_residual_block.6} parent=27 // pred_region
        %s726 = smul.u32 32, %s16
      $region32: #{refinement_residual_block.6} parent=27 // pred_fallthru
        _
      // Predicated region
      $region33: #{refinement_residual_block.6} parent=27 // pred_check
        %p727 = pneg %p107
      $region34: #{refinement_residual_block.6} parent=27 // pred_check_branch
        %729 = sbr.rel (%p727) target = $region36
      $region35: #{refinement_residual_block.6} parent=27 // pred_region
        _
      $region36: #{refinement_residual_block.6} parent=27 // pred_fallthru
        _
      // Predicated region
      $region37: #{refinement_residual_block.6} parent=27 // pred_check
        %p730 = pneg %p133
      $region38: #{refinement_residual_block.6} parent=27 // pred_check_branch
        %732 = sbr.rel (%p730) target = $region40
      $region39: #{refinement_residual_block.6} parent=27 // pred_region
        _
      $region40: #{refinement_residual_block.6} parent=27 // pred_fallthru
        _
    $region28: #{refinement_residual_block.6} parent=5 // pred_fallthru
      _
    %p733 = scmp.le.s32.totalorder 2, %s11
    // Predicated region
    $region41: #{refinement_residual_block.6} parent=5 // pred_check
      %p734 = pneg %p733
    $region42: #{refinement_residual_block.6} parent=5 // pred_check_branch
      %736 = sbr.rel (%p734) target = $region44
    $region43: #{refinement_residual_block.6} parent=5 // pred_region
      %s737 = ssub.s32 %s11, 2
      // Predicated region
      $region45: #{refinement_residual_block.6} parent=43 // pred_check
        %p738 = pneg %p87
      $region46: #{refinement_residual_block.6} parent=43 // pred_check_branch
        %740 = sbr.rel (%p738) target = $region48
      $region47: #{refinement_residual_block.6} parent=43 // pred_region
        %s741 = smul.u32 32, %s17
        %p742 = scmp.lt.s32.totalorder %s741, 63
        %s743 = scalar_select %p742, %s741, 63
        %s744 = smul.addr %s743, 8
        %s745 = scalar_lea.vmem %s2, %s744
      $region48: #{refinement_residual_block.6} parent=43 // pred_fallthru
        _
      // Predicated region
      $region49: #{refinement_residual_block.6} parent=43 // pred_check
        %p746 = pneg %p113
      $region50: #{refinement_residual_block.6} parent=43 // pred_check_branch
        %748 = sbr.rel (%p746) target = $region52
      $region51: #{refinement_residual_block.6} parent=43 // pred_region
        %p749 = scmp.lt.s32.totalorder %s17, 1
        %s750 = scalar_select %p749, %s17, 1
        %s751 = scalar_lea.vmem %s3, %s750
      $region52: #{refinement_residual_block.6} parent=43 // pred_fallthru
        _
      // Predicated region
      $region53: #{refinement_residual_block.6} parent=43 // pred_check
        %p752 = pneg %p139
      $region54: #{refinement_residual_block.6} parent=43 // pred_check_branch
        %754 = sbr.rel (%p752) target = $region56
      $region55: #{refinement_residual_block.6} parent=43 // pred_region
        %p755 = scmp.lt.s32.totalorder %s17, 1
        %s756 = scalar_select %p755, %s17, 1
        %s757 = scalar_lea.vmem %s4, %s756
      $region56: #{refinement_residual_block.6} parent=43 // pred_fallthru
        _
    $region44: #{refinement_residual_block.6} parent=5 // pred_fallthru
      _
  $region6: #{refinement_residual_block.6} parent=0 // loop_footer
    %s15 = sadd.s32 1, %s11
  $region7: #{refinement_residual_block.6} parent=0 // loop_footer_branch
    %10 = sbr.rel target = $region3
  $region8: #{refinement_residual_block.6} parent=0 // loop_exit
    _

// kernel: refinement_residual_block.11
$region0: #{refinement_residual_block.11}
  #allocation0 [shape = 'u32[]', space=smem, size = 0x4, offset = 0x4, fixed_abs, tag = 'smem constant byte address 0x4 - core index']
  #allocation1 [shape = 'u32[144,128]{1,0:T(1,128)}', space=vmem, size = 0x12000, scoped, tag = 'internal scratch']
  %s0 = inlined_call_operand.vmem [shape: f32[512,128], index: 0, kind: input, shape index: {}]
  %s1 = inlined_call_operand.vmem [shape: bf16[512,128], index: 1, kind: input, shape index: {}]
  %s2 = inlined_call_operand.vmem [shape: f32[1,128], index: 2, kind: input, shape index: {}]
  %s3 = inlined_call_operand.vmem [shape: f32[1,128], index: 3, kind: input, shape index: {}]
  %s4 = inlined_call_operand.vmem [shape: f32[512,128], index: 4, kind: output, shape index: {}]
  %s5 = sld [smem:[#allocation0]]
  $region49: #{refinement_residual_block.11} parent=0
    _
  %s7 = ssub.s32 1, %s5
  %s8 = scalar_select 0, %s7, %s5
  loop: start=0, step=1, limit=4
  $region2: #{refinement_residual_block.11} parent=0 // loop_pre_header
    _
  $region3: #{refinement_residual_block.11} parent=0 // loop_header
    %s10 = sphi 0, %s14
    %p11 = scmp.ge.s32.totalorder %s10, 4
    %s20 = sphi 0, %s22
    %s23 = sphi 0, %s20
    %s24 = sphi 0, %s23
    %s40 = sphi 0, %s24
    %s46 = sphi 0, %s48
    %s49 = sphi 0, %s46
    %s50 = sphi 0, %s49
    %s66 = sphi 0, %s50
    %s70 = sphi 0, %s70
    %s72 = sphi 0, %s70
    %s73 = sphi 0, %s72
    %s87 = sphi 0, %s73
    %s91 = sphi 0, %s91
    %s93 = sphi 0, %s91
    %s94 = sphi 0, %s93
    %s108 = sphi 0, %s94
    %s114 = sphi 0, %s116
    %s117 = sphi 0, %s114
    %s118 = sphi 0, %s117
    %s134 = sphi 0, %s118
  $region4: #{refinement_residual_block.11} parent=0 // loop_header_branch
    %13 = sbr.rel (%p11) target = $region8
  $region5: #{refinement_residual_block.11} parent=0 // loop_body
    %s15 = ssub.s32 %s10, 1
    %s16 = ssub.s32 %s10, 2
    %s17 = sadd.s32 %s10, 1
    %s18 = ssub.s32 %s10, %s17
    %p19 = scmp.eq.s32.totalorder %s18, 0
    %s21 = sadd.s32 %s20, 1
    %s22 = scalar_select %p19, %s20, %s21
    %p25 = pneg %p19
    %p26 = scmp.eq.s32.totalorder %s10, 1
    %p27 = por %p25, %p26
    %p28 = scmp.ne.s32.totalorder %s20, %s23
    %p29 = scmp.eq.s32.totalorder %s10, 0
    %p30 = por %p28, %p29
    %p31 = scmp.ne.s32.totalorder %s20, %s23
    %p32 = scmp.eq.s32.totalorder %s15, 1
    %p33 = por %p31, %p32
    %p34 = scmp.ne.s32.totalorder %s23, %s24
    %p35 = scmp.eq.s32.totalorder %s15, 0
    %p36 = por %p34, %p35
    %p37 = scmp.ne.s32.totalorder %s23, %s24
    %p38 = scmp.eq.s32.totalorder %s16, 1
    %p39 = por %p37, %p38
    %p41 = scmp.ne.s32.totalorder %s24, %s40
    %p42 = scmp.eq.s32.totalorder %s16, 0
    %p43 = por %p41, %p42
    %s44 = ssub.s32 %s10, %s17
    %p45 = scmp.eq.s32.totalorder %s44, 0
    %s47 = sadd.s32 %s46, 1
    %s48 = scalar_select %p45, %s46, %s47
    %p51 = pneg %p45
    %p52 = scmp.eq.s32.totalorder %s10, 1
    %p53 = por %p51, %p52
    %p54 = scmp.ne.s32.totalorder %s46, %s49
    %p55 = scmp.eq.s32.totalorder %s10, 0
    %p56 = por %p54, %p55
    %p57 = scmp.ne.s32.totalorder %s46, %s49
    %p58 = scmp.eq.s32.totalorder %s15, 1
    %p59 = por %p57, %p58
    %p60 = scmp.ne.s32.totalorder %s49, %s50
    %p61 = scmp.eq.s32.totalorder %s15, 0
    %p62 = por %p60, %p61
    %p63 = scmp.ne.s32.totalorder %s49, %s50
    %p64 = scmp.eq.s32.totalorder %s16, 1
    %p65 = por %p63, %p64
    %p67 = scmp.ne.s32.totalorder %s50, %s66
    %p68 = scmp.eq.s32.totalorder %s16, 0
    %p69 = por %p67, %p68
    %s71 = sadd.s32 %s70, 1
    %p74 = scmp.eq.s32.totalorder %s10, 1
    %p75 = scmp.ne.s32.totalorder %s70, %s72
    %p76 = scmp.eq.s32.totalorder %s10, 0
    %p77 = por %p75, %p76
    %p78 = scmp.ne.s32.totalorder %s70, %s72
    %p79 = scmp.eq.s32.totalorder %s15, 1
    %p80 = por %p78, %p79
    %p81 = scmp.ne.s32.totalorder %s72, %s73
    %p82 = scmp.eq.s32.totalorder %s15, 0
    %p83 = por %p81, %p82
    %p84 = scmp.ne.s32.totalorder %s72, %s73
    %p85 = scmp.eq.s32.totalorder %s16, 1
    %p86 = por %p84, %p85
    %p88 = scmp.ne.s32.totalorder %s73, %s87
    %p89 = scmp.eq.s32.totalorder %s16, 0
    %p90 = por %p88, %p89
    %s92 = sadd.s32 %s91, 1
    %p95 = scmp.eq.s32.totalorder %s10, 1
    %p96 = scmp.ne.s32.totalorder %s91, %s93
    %p97 = scmp.eq.s32.totalorder %s10, 0
    %p98 = por %p96, %p97
    %p99 = scmp.ne.s32.totalorder %s91, %s93
    %p100 = scmp.eq.s32.totalorder %s15, 1
    %p101 = por %p99, %p100
    %p102 = scmp.ne.s32.totalorder %s93, %s94
    %p103 = scmp.eq.s32.totalorder %s15, 0
    %p104 = por %p102, %p103
    %p105 = scmp.ne.s32.totalorder %s93, %s94
    %p106 = scmp.eq.s32.totalorder %s16, 1
    %p107 = por %p105, %p106
    %p109 = scmp.ne.s32.totalorder %s94, %s108
    %p110 = scmp.eq.s32.totalorder %s16, 0
    %p111 = por %p109, %p110
    %s112 = ssub.s32 %s10, %s17
    %p113 = scmp.eq.s32.totalorder %s112, 0
    %s115 = sadd.s32 %s114, 1
    %s116 = scalar_select %p113, %s114, %s115
    %p119 = pneg %p113
    %p120 = scmp.eq.s32.totalorder %s10, 1
    %p121 = por %p119, %p120
    %p122 = scmp.ne.s32.totalorder %s114, %s117
    %p123 = scmp.eq.s32.totalorder %s10, 0
    %p124 = por %p122, %p123
    %p125 = scmp.ne.s32.totalorder %s114, %s117
    %p126 = scmp.eq.s32.totalorder %s15, 1
    %p127 = por %p125, %p126
    %p128 = scmp.ne.s32.totalorder %s117, %s118
    %p129 = scmp.eq.s32.totalorder %s15, 0
    %p130 = por %p128, %p129
    %p131 = scmp.ne.s32.totalorder %s117, %s118
    %p132 = scmp.eq.s32.totalorder %s16, 1
    %p133 = por %p131, %p132
    %p135 = scmp.ne.s32.totalorder %s118, %s134
    %p136 = scmp.eq.s32.totalorder %s16, 0
    %p137 = por %p135, %p136
    %p138 = scmp.le.s32.totalorder 1, %s10
    %p139 = scmp.lt.s32.totalorder %s10, 3
    %p140 = pnand %p138, %p139
    %p141 = pneg %p140
    // Predicated region
    $region9: #{refinement_residual_block.11} parent=5 // pred_check
      _
    $region10: #{refinement_residual_block.11} parent=5 // pred_check_branch
      %143 = sbr.rel (%p140) target = $region12
    $region11: #{refinement_residual_block.11} parent=5 // pred_region
      %s144 = ssub.s32 %s10, 1
      // Predicated region
      $region13: #{refinement_residual_block.11} parent=11 // pred_check
        %p145 = pneg %p83
      $region14: #{refinement_residual_block.11} parent=11 // pred_check_branch
        %147 = sbr.rel (%p145) target = $region16
      $region15: #{refinement_residual_block.11} parent=11 // pred_region
        _
      $region16: #{refinement_residual_block.11} parent=11 // pred_fallthru
        _
      // Predicated region
      $region17: #{refinement_residual_block.11} parent=11 // pred_check
        %p148 = pneg %p104
      $region18: #{refinement_residual_block.11} parent=11 // pred_check_branch
        %150 = sbr.rel (%p148) target = $region20
      $region19: #{refinement_residual_block.11} parent=11 // pred_region
        _
      $region20: #{refinement_residual_block.11} parent=11 // pred_fallthru
        _
    $region12: #{refinement_residual_block.11} parent=5 // pred_fallthru
      _
    %p151 = scmp.lt.s32.totalorder %s10, 2
    // Predicated region
    $region21: #{refinement_residual_block.11} parent=5 // pred_check
      %p152 = pneg %p151
    $region22: #{refinement_residual_block.11} parent=5 // pred_check_branch
      %154 = sbr.rel (%p152) target = $region24
    $region23: #{refinement_residual_block.11} parent=5 // pred_region
      // Predicated region
      $region25: #{refinement_residual_block.11} parent=23 // pred_check
        %p155 = pneg %p30
      $region26: #{refinement_residual_block.11} parent=23 // pred_check_branch
        %157 = sbr.rel (%p155) target = $region28
      $region27: #{refinement_residual_block.11} parent=23 // pred_region
        %s158 = smul.u32 32, %s10
        %p159 = scmp.lt.s32.totalorder %s158, 63
        %s160 = scalar_select %p159, %s158, 63
        %s161 = smul.addr %s160, 8
        %s162 = scalar_lea.vmem %s0, %s161
        %s163 = smul.u32 32, %s10
      $region28: #{refinement_residual_block.11} parent=23 // pred_fallthru
        _
      // Predicated region
      $region29: #{refinement_residual_block.11} parent=23 // pred_check
        %p164 = pneg %p56
      $region30: #{refinement_residual_block.11} parent=23 // pred_check_branch
        %166 = sbr.rel (%p164) target = $region32
      $region31: #{refinement_residual_block.11} parent=23 // pred_region
        %s167 = smul.u32 32, %s10
        %p168 = scmp.lt.s32.totalorder %s167, 63
        %s169 = scalar_select %p168, %s167, 63
        %s170 = smul.addr %s169, 4
        %s171 = scalar_lea.vmem %s1, %s170
        %s172 = smul.u32 32, %s10
      $region32: #{refinement_residual_block.11} parent=23 // pred_fallthru
        _
    $region24: #{refinement_residual_block.11} parent=5 // pred_fallthru
      _
    %p173 = scmp.le.s32.totalorder 1, %s10
    %p174 = scmp.lt.s32.totalorder %s10, 3
    %p175 = pnand %p173, %p174
    %p176 = pneg %p175
    // Predicated region
    $region33: #{refinement_residual_block.11} parent=5 // pred_check
      _
    $region34: #{refinement_residual_block.11} parent=5 // pred_check_branch
      %178 = sbr.rel (%p175) target = $region36
    $region35: #{refinement_residual_block.11} parent=5 // pred_region
      %s179 = ssub.s32 %s10, 1
      %s180 = smul.u32 32, %s15
      %p181 = scmp.lt.s32.totalorder %s180, 63
      %s182 = scalar_select %p181, %s180, 63
      %s183 = smul.addr %s182, 8
      %s184 = scalar_lea.vmem %s0, %s183
      %p185 = pneg %p36
      %p186 = pneg %p33
      %s187 = smul.u32 32, %s15
      %p188 = scmp.lt.s32.totalorder %s187, 63
      %s189 = scalar_select %p188, %s187, 63
      %s190 = smul.addr %s189, 4
      %s191 = scalar_lea.vmem %s1, %s190
      %p192 = pneg %p62
      %p193 = pneg %p59
      %p194 = pneg %p83
      %p195 = pneg %p80
      %p196 = pneg %p104
      %p197 = pneg %p101
      %p198 = pneg %p130
      %p199 = pneg %p127
      %s200 = smul.u32 32, %s15
      %p201 = scmp.lt.s32.totalorder %s200, 63
      %s202 = scalar_select %p201, %s200, 63
      %s203 = smul.addr %s202, 8
      %s204 = scalar_lea.vmem %s4, %s203
      %s205 = smul.u32 32, %s15
      %p206 = scmp.lt.s32.totalorder %s205, 63
      %s207 = scalar_select %p206, %s205, 63
      %s208 = smul.addr %s207, 8
      %s209 = scalar_lea.vmem %s0, %s208
      %s210 = smul.u32 32, %s15
      %s211 = smul.u32 32, %s15
      %p212 = scmp.lt.s32.totalorder %s211, 63
      %s213 = scalar_select %p212, %s211, 63
      %s214 = smul.addr %s213, 4
      %s215 = scalar_lea.vmem %s1, %s214
      %s216 = smul.u32 32, %s15
      %s217 = smul.u32 32, %s15
      %p218 = scmp.lt.s32.totalorder %s217, 63
      %s219 = scalar_select %p218, %s217, 63
      %s220 = smul.addr %s219, 8
      %s221 = scalar_lea.vmem %s4, %s220
      %s222 = smul.u32 32, %s15
      %v223 = vld [vmem:[%s209] sm:$0xff]
      %v224 = vld [vmem:[%s209 + $0x8] sm:$0xff]
      %v225 = vld [vmem:[%s209 + $0x10] sm:$0xff]
      %v226 = vld [vmem:[%s209 + $0x18] sm:$0xff]
      %v227 = vld [vmem:[%s209 + $0x20] sm:$0xff]
      %v228 = vld [vmem:[%s209 + $0x28] sm:$0xff]
      %v229 = vld [vmem:[%s209 + $0x30] sm:$0xff]
      %v230 = vld [vmem:[%s209 + $0x38] sm:$0xff]
      %v231 = vld [vmem:[%s209 + $0x40] sm:$0xff]
      %v232 = vld [vmem:[%s209 + $0x48] sm:$0xff]
      %v233 = vld [vmem:[%s209 + $0x50] sm:$0xff]
      %v234 = vld [vmem:[%s209 + $0x58] sm:$0xff]
      %v235 = vld [vmem:[%s209 + $0x60] sm:$0xff]
      %v236 = vld [vmem:[%s209 + $0x68] sm:$0xff]
      %v237 = vld [vmem:[%s209 + $0x70] sm:$0xff]
      %v238 = vld [vmem:[%s209 + $0x78] sm:$0xff]
      %v239 = vld [vmem:[%s209 + $0x80] sm:$0xff]
      %v240 = vld [vmem:[%s209 + $0x88] sm:$0xff]
      %v241 = vld [vmem:[%s209 + $0x90] sm:$0xff]
      %v242 = vld [vmem:[%s209 + $0x98] sm:$0xff]
      %v243 = vld [vmem:[%s209 + $0xa0] sm:$0xff]
      %v244 = vld [vmem:[%s209 + $0xa8] sm:$0xff]
      %v245 = vld [vmem:[%s209 + $0xb0] sm:$0xff]
      %v246 = vld [vmem:[%s209 + $0xb8] sm:$0xff]
      %v247 = vld [vmem:[%s209 + $0xc0] sm:$0xff]
      %v248 = vld [vmem:[%s209 + $0xc8] sm:$0xff]
      %v249 = vld [vmem:[%s209 + $0xd0] sm:$0xff]
      %v250 = vld [vmem:[%s209 + $0xd8] sm:$0xff]
      %v251 = vld [vmem:[%s209 + $0xe0] sm:$0xff]
      %v252 = vld [vmem:[%s209 + $0xe8] sm:$0xff]
      %v253 = vld [vmem:[%s209 + $0xf0] sm:$0xff]
      %v254 = vld [vmem:[%s209 + $0xf8] sm:$0xff]
      %v255 = vld [vmem:[%s2] sm:$0x1]
      %v257 = vlaneseq
      %v258 = vshrl.u32 %v257, 7
      %v259 = vsub.s32 0, %v258
      %v260 = vrot.slane %v255, %v259
      %v262 = vmul.f32 %v223, %v260
      %v263 = vmul.f32 %v224, %v260
      %v264 = vmul.f32 %v225, %v260
      %v265 = vmul.f32 %v226, %v260
      %v266 = vmul.f32 %v227, %v260
      %v267 = vmul.f32 %v228, %v260
      %v268 = vmul.f32 %v229, %v260
      %v269 = vmul.f32 %v230, %v260
      %v270 = vmul.f32 %v231, %v260
      %v271 = vmul.f32 %v232, %v260
      %v272 = vmul.f32 %v233, %v260
      %v273 = vmul.f32 %v234, %v260
      %v274 = vmul.f32 %v235, %v260
      %v275 = vmul.f32 %v236, %v260
      %v276 = vmul.f32 %v237, %v260
      %v277 = vmul.f32 %v238, %v260
      %v278 = vmul.f32 %v239, %v260
      %v279 = vmul.f32 %v240, %v260
      %v280 = vmul.f32 %v241, %v260
      %v281 = vmul.f32 %v242, %v260
      %v282 = vmul.f32 %v243, %v260
      %v283 = vmul.f32 %v244, %v260
      %v284 = vmul.f32 %v245, %v260
      %v285 = vmul.f32 %v246, %v260
      %v286 = vmul.f32 %v247, %v260
      %v287 = vmul.f32 %v248, %v260
      %v288 = vmul.f32 %v249, %v260
      %v289 = vmul.f32 %v250, %v260
      %v290 = vmul.f32 %v251, %v260
      %v291 = vmul.f32 %v252, %v260
      %v292 = vmul.f32 %v253, %v260
      %v293 = vmul.f32 %v254, %v260
      %v294 = vld [vmem:[%s3] sm:$0x1]
      %v296 = vlaneseq
      %v297 = vshrl.u32 %v296, 7
      %v298 = vsub.s32 0, %v297
      %v299 = vrot.slane %v294, %v298
      %v301 = vadd.f32 %v262, %v299
      %v302 = vadd.f32 %v263, %v299
      %v303 = vadd.f32 %v264, %v299
      %v304 = vadd.f32 %v265, %v299
      %v305 = vadd.f32 %v266, %v299
      %v306 = vadd.f32 %v267, %v299
      %v307 = vadd.f32 %v268, %v299
      %v308 = vadd.f32 %v269, %v299
      %v309 = vadd.f32 %v270, %v299
      %v310 = vadd.f32 %v271, %v299
      %v311 = vadd.f32 %v272, %v299
      %v312 = vadd.f32 %v273, %v299
      %v313 = vadd.f32 %v274, %v299
      %v314 = vadd.f32 %v275, %v299
      %v315 = vadd.f32 %v276, %v299
      %v316 = vadd.f32 %v277, %v299
      %v317 = vadd.f32 %v278, %v299
      %v318 = vadd.f32 %v279, %v299
      %v319 = vadd.f32 %v280, %v299
      %v320 = vadd.f32 %v281, %v299
      %v321 = vadd.f32 %v282, %v299
      %v322 = vadd.f32 %v283, %v299
      %v323 = vadd.f32 %v284, %v299
      %v324 = vadd.f32 %v285, %v299
      %v325 = vadd.f32 %v286, %v299
      %v326 = vadd.f32 %v287, %v299
      %v327 = vadd.f32 %v288, %v299
      %v328 = vadd.f32 %v289, %v299
      %v329 = vadd.f32 %v290, %v299
      %v330 = vadd.f32 %v291, %v299
      %v331 = vadd.f32 %v292, %v299
      %v332 = vadd.f32 %v293, %v299
      %v333 = vld [vmem:[%s215] sm:$0xf]
      %v334 = vld [vmem:[%s215 + $0x4] sm:$0xf]
      %v335 = vld [vmem:[%s215 + $0x8] sm:$0xf]
      %v336 = vld [vmem:[%s215 + $0xc] sm:$0xf]
      %v337 = vld [vmem:[%s215 + $0x10] sm:$0xf]
      %v338 = vld [vmem:[%s215 + $0x14] sm:$0xf]
      %v339 = vld [vmem:[%s215 + $0x18] sm:$0xf]
      %v340 = vld [vmem:[%s215 + $0x1c] sm:$0xf]
      %v341 = vld [vmem:[%s215 + $0x20] sm:$0xf]
      %v342 = vld [vmem:[%s215 + $0x24] sm:$0xf]
      %v343 = vld [vmem:[%s215 + $0x28] sm:$0xf]
      %v344 = vld [vmem:[%s215 + $0x2c] sm:$0xf]
      %v345 = vld [vmem:[%s215 + $0x30] sm:$0xf]
      %v346 = vld [vmem:[%s215 + $0x34] sm:$0xf]
      %v347 = vld [vmem:[%s215 + $0x38] sm:$0xf]
      %v348 = vld [vmem:[%s215 + $0x3c] sm:$0xf]
      %v349 = vld [vmem:[%s215 + $0x40] sm:$0xf]
      %v350 = vld [vmem:[%s215 + $0x44] sm:$0xf]
      %v351 = vld [vmem:[%s215 + $0x48] sm:$0xf]
      %v352 = vld [vmem:[%s215 + $0x4c] sm:$0xf]
      %v353 = vld [vmem:[%s215 + $0x50] sm:$0xf]
      %v354 = vld [vmem:[%s215 + $0x54] sm:$0xf]
      %v355 = vld [vmem:[%s215 + $0x58] sm:$0xf]
      %v356 = vld [vmem:[%s215 + $0x5c] sm:$0xf]
      %v357 = vld [vmem:[%s215 + $0x60] sm:$0xf]
      %v358 = vld [vmem:[%s215 + $0x64] sm:$0xf]
      %v359 = vld [vmem:[%s215 + $0x68] sm:$0xf]
      %v360 = vld [vmem:[%s215 + $0x6c] sm:$0xf]
      %v361 = vld [vmem:[%s215 + $0x70] sm:$0xf]
      %v362 = vld [vmem:[%s215 + $0x74] sm:$0xf]
      %v363 = vld [vmem:[%s215 + $0x78] sm:$0xf]
      %v364 = vld [vmem:[%s215 + $0x7c] sm:$0xf]
      %v365 = vunpack.c.l.bf16 %v333
      %v366 = vunpack.c.l.bf16 %v334
      %v367 = vunpack.c.l.bf16 %v335
      %v368 = vunpack.c.l.bf16 %v336
      %v369 = vunpack.c.l.bf16 %v337
      %v370 = vunpack.c.l.bf16 %v338
      %v371 = vunpack.c.l.bf16 %v339
      %v372 = vunpack.c.l.bf16 %v340
      %v373 = vunpack.c.l.bf16 %v341
      %v374 = vunpack.c.l.bf16 %v342
      %v375 = vunpack.c.l.bf16 %v343
      %v376 = vunpack.c.l.bf16 %v344
      %v377 = vunpack.c.l.bf16 %v345
      %v378 = vunpack.c.l.bf16 %v346
      %v379 = vunpack.c.l.bf16 %v347
      %v380 = vunpack.c.l.bf16 %v348
      %v381 = vunpack.c.l.bf16 %v349
      %v382 = vunpack.c.l.bf16 %v350
      %v383 = vunpack.c.l.bf16 %v351
      %v384 = vunpack.c.l.bf16 %v352
      %v385 = vunpack.c.l.bf16 %v353
      %v386 = vunpack.c.l.bf16 %v354
      %v387 = vunpack.c.l.bf16 %v355
      %v388 = vunpack.c.l.bf16 %v356
      %v389 = vunpack.c.l.bf16 %v357
      %v390 = vunpack.c.l.bf16 %v358
      %v391 = vunpack.c.l.bf16 %v359
      %v392 = vunpack.c.l.bf16 %v360
      %v393 = vunpack.c.l.bf16 %v361
      %v394 = vunpack.c.l.bf16 %v362
      %v395 = vunpack.c.l.bf16 %v363
      %v396 = vunpack.c.l.bf16 %v364
      %v397 = vadd.f32 %v301, %v365
      %v398 = vadd.f32 %v302, %v366
      %v399 = vadd.f32 %v303, %v367
      %v400 = vadd.f32 %v304, %v368
      %v401 = vadd.f32 %v305, %v369
      %v402 = vadd.f32 %v306, %v370
      %v403 = vadd.f32 %v307, %v371
      %v404 = vadd.f32 %v308, %v372
      %v405 = vadd.f32 %v309, %v373
      %v406 = vadd.f32 %v310, %v374
      %v407 = vadd.f32 %v311, %v375
      %v408 = vadd.f32 %v312, %v376
      %v409 = vadd.f32 %v313, %v377
      %v410 = vadd.f32 %v314, %v378
      %v411 = vadd.f32 %v315, %v379
      %v412 = vadd.f32 %v316, %v380
      %v413 = vadd.f32 %v317, %v381
      %v414 = vadd.f32 %v318, %v382
      %v415 = vadd.f32 %v319, %v383
      %v416 = vadd.f32 %v320, %v384
      %v417 = vadd.f32 %v321, %v385
      %v418 = vadd.f32 %v322, %v386
      %v419 = vadd.f32 %v323, %v387
      %v420 = vadd.f32 %v324, %v388
      %v421 = vadd.f32 %v325, %v389
      %v422 = vadd.f32 %v326, %v390
      %v423 = vadd.f32 %v327, %v391
      %v424 = vadd.f32 %v328, %v392
      %v425 = vadd.f32 %v329, %v393
      %v426 = vadd.f32 %v330, %v394
      %v427 = vadd.f32 %v331, %v395
      %v428 = vadd.f32 %v332, %v396
      %v429 = vmax.f32 %v397, 0.0
      %v430 = vmax.f32 %v398, 0.0
      %v431 = vmax.f32 %v399, 0.0
      %v432 = vmax.f32 %v400, 0.0
      %v433 = vmax.f32 %v401, 0.0
      %v434 = vmax.f32 %v402, 0.0
      %v435 = vmax.f32 %v403, 0.0
      %v436 = vmax.f32 %v404, 0.0
      %v437 = vmax.f32 %v405, 0.0
      %v438 = vmax.f32 %v406, 0.0
      %v439 = vmax.f32 %v407, 0.0
      %v440 = vmax.f32 %v408, 0.0
      %v441 = vmax.f32 %v409, 0.0
      %v442 = vmax.f32 %v410, 0.0
      %v443 = vmax.f32 %v411, 0.0
      %v444 = vmax.f32 %v412, 0.0
      %v445 = vmax.f32 %v413, 0.0
      %v446 = vmax.f32 %v414, 0.0
      %v447 = vmax.f32 %v415, 0.0
      %v448 = vmax.f32 %v416, 0.0
      %v449 = vmax.f32 %v417, 0.0
      %v450 = vmax.f32 %v418, 0.0
      %v451 = vmax.f32 %v419, 0.0
      %v452 = vmax.f32 %v420, 0.0
      %v453 = vmax.f32 %v421, 0.0
      %v454 = vmax.f32 %v422, 0.0
      %v455 = vmax.f32 %v423, 0.0
      %v456 = vmax.f32 %v424, 0.0
      %v457 = vmax.f32 %v425, 0.0
      %v458 = vmax.f32 %v426, 0.0
      %v459 = vmax.f32 %v427, 0.0
      %v460 = vmax.f32 %v428, 0.0
      %461 = vst [vmem:[%s221] sm:$0xff] %v429
      %462 = vst [vmem:[%s221 + $0x8] sm:$0xff] %v430
      %463 = vst [vmem:[%s221 + $0x10] sm:$0xff] %v431
      %464 = vst [vmem:[%s221 + $0x18] sm:$0xff] %v432
      %465 = vst [vmem:[%s221 + $0x20] sm:$0xff] %v433
      %466 = vst [vmem:[%s221 + $0x28] sm:$0xff] %v434
      %467 = vst [vmem:[%s221 + $0x30] sm:$0xff] %v435
      %468 = vst [vmem:[%s221 + $0x38] sm:$0xff] %v436
      %469 = vst [vmem:[%s221 + $0x40] sm:$0xff] %v437
      %470 = vst [vmem:[%s221 + $0x48] sm:$0xff] %v438
      %471 = vst [vmem:[%s221 + $0x50] sm:$0xff] %v439
      %472 = vst [vmem:[%s221 + $0x58] sm:$0xff] %v440
      %473 = vst [vmem:[%s221 + $0x60] sm:$0xff] %v441
      %474 = vst [vmem:[%s221 + $0x68] sm:$0xff] %v442
      %475 = vst [vmem:[%s221 + $0x70] sm:$0xff] %v443
      %476 = vst [vmem:[%s221 + $0x78] sm:$0xff] %v444
      %477 = vst [vmem:[%s221 + $0x80] sm:$0xff] %v445
      %478 = vst [vmem:[%s221 + $0x88] sm:$0xff] %v446
      %479 = vst [vmem:[%s221 + $0x90] sm:$0xff] %v447
      %480 = vst [vmem:[%s221 + $0x98] sm:$0xff] %v448
      %481 = vst [vmem:[%s221 + $0xa0] sm:$0xff] %v449
      %482 = vst [vmem:[%s221 + $0xa8] sm:$0xff] %v450
      %483 = vst [vmem:[%s221 + $0xb0] sm:$0xff] %v451
      %484 = vst [vmem:[%s221 + $0xb8] sm:$0xff] %v452
      %485 = vst [vmem:[%s221 + $0xc0] sm:$0xff] %v453
      %486 = vst [vmem:[%s221 + $0xc8] sm:$0xff] %v454
      %487 = vst [vmem:[%s221 + $0xd0] sm:$0xff] %v455
      %488 = vst [vmem:[%s221 + $0xd8] sm:$0xff] %v456
      %489 = vst [vmem:[%s221 + $0xe0] sm:$0xff] %v457
      %490 = vst [vmem:[%s221 + $0xe8] sm:$0xff] %v458
      %491 = vst [vmem:[%s221 + $0xf0] sm:$0xff] %v459
      %492 = vst [vmem:[%s221 + $0xf8] sm:$0xff] %v460
      %s493 = smul.u32 32, %s15
      %p494 = scmp.lt.s32.totalorder %s493, 63
      %s495 = scalar_select %p494, %s493, 63
      %s496 = smul.addr %s495, 8
      %s497 = scalar_lea.vmem %s4, %s496
      // Predicated region
      $region37: #{refinement_residual_block.11} parent=35 // pred_check
        %p498 = pneg %p127
      $region38: #{refinement_residual_block.11} parent=35 // pred_check_branch
        %500 = sbr.rel (%p498) target = $region40
      $region39: #{refinement_residual_block.11} parent=35 // pred_region
        %s501 = smul.u32 32, %s15
      $region40: #{refinement_residual_block.11} parent=35 // pred_fallthru
        _
    $region36: #{refinement_residual_block.11} parent=5 // pred_fallthru
      _
    %p502 = scmp.le.s32.totalorder 2, %s10
    // Predicated region
    $region41: #{refinement_residual_block.11} parent=5 // pred_check
      %p503 = pneg %p502
    $region42: #{refinement_residual_block.11} parent=5 // pred_check_branch
      %505 = sbr.rel (%p503) target = $region44
    $region43: #{refinement_residual_block.11} parent=5 // pred_region
      %s506 = ssub.s32 %s10, 2
      // Predicated region
      $region45: #{refinement_residual_block.11} parent=43 // pred_check
        %p507 = pneg %p133
      $region46: #{refinement_residual_block.11} parent=43 // pred_check_branch
        %509 = sbr.rel (%p507) target = $region48
      $region47: #{refinement_residual_block.11} parent=43 // pred_region
        %s510 = smul.u32 32, %s16
        %p511 = scmp.lt.s32.totalorder %s510, 63
        %s512 = scalar_select %p511, %s510, 63
        %s513 = smul.addr %s512, 8
        %s514 = scalar_lea.vmem %s4, %s513
      $region48: #{refinement_residual_block.11} parent=43 // pred_fallthru
        _
    $region44: #{refinement_residual_block.11} parent=5 // pred_fallthru
      _
  $region6: #{refinement_residual_block.11} parent=0 // loop_footer
    %s14 = sadd.s32 1, %s10
  $region7: #{refinement_residual_block.11} parent=0 // loop_footer_branch
    %9 = sbr.rel target = $region3
  $region8: #{refinement_residual_block.11} parent=0 // loop_exit
    _

// kernel: refinement_residual_block.8
$region0: #{refinement_residual_block.8}
  #allocation0 [shape = 'u32[]', space=smem, size = 0x4, offset = 0x4, fixed_abs, tag = 'smem constant byte address 0x4 - core index']
  #allocation1 [shape = 'u32[144,128]{1,0:T(1,128)}', space=vmem, size = 0x12000, scoped, tag = 'internal scratch']
  %s0 = inlined_call_operand.vmem [shape: bf16[2,18,18,128], index: 0, kind: input, shape index: {}]
  %s1 = inlined_call_operand.vmem [shape: bf16[3,3,128,128], index: 1, kind: input, shape index: {}]
  %s2 = inlined_call_operand.vmem [shape: f32[1,128], index: 2, kind: input, shape index: {}]
  %s3 = inlined_call_operand.vmem [shape: f32[2,16,16,128], index: 3, kind: output, shape index: {0}]
  %s4 = inlined_call_operand.vmem [shape: f32[2,1,128], index: 4, kind: output, shape index: {1}]
  %s5 = inlined_call_operand.vmem [shape: f32[2,1,128], index: 5, kind: output, shape index: {2}]
  %6 = xla_tuple %s3, %s4, %s5
  %s7 = sld [smem:[#allocation0]]
  $region61: #{refinement_residual_block.8} parent=0
    _
  %s9 = ssub.s32 1, %s7
  %s10 = scalar_select 0, %s9, %s7
  loop: start=0, step=1, limit=4
  $region2: #{refinement_residual_block.8} parent=0 // loop_pre_header
    _
  $region3: #{refinement_residual_block.8} parent=0 // loop_header
    %s12 = sphi 0, %s16
    %p13 = scmp.ge.s32.totalorder %s12, 4
    %s22 = sphi 0, %s24
    %s25 = sphi 0, %s22
    %s26 = sphi 0, %s25
    %s42 = sphi 0, %s26
    %s46 = sphi 0, %s46
    %s48 = sphi 0, %s46
    %s49 = sphi 0, %s48
    %s63 = sphi 0, %s49
    %s67 = sphi 0, %s67
    %s69 = sphi 0, %s67
    %s70 = sphi 0, %s69
    %s84 = sphi 0, %s70
    %s90 = sphi 0, %s92
    %s93 = sphi 0, %s90
    %s94 = sphi 0, %s93
    %s110 = sphi 0, %s94
    %s116 = sphi 0, %s118
    %s119 = sphi 0, %s116
    %s120 = sphi 0, %s119
    %s136 = sphi 0, %s120
    %s142 = sphi 0, %s144
    %s145 = sphi 0, %s142
    %s146 = sphi 0, %s145
    %s162 = sphi 0, %s146
  $region4: #{refinement_residual_block.8} parent=0 // loop_header_branch
    %15 = sbr.rel (%p13) target = $region8
  $region5: #{refinement_residual_block.8} parent=0 // loop_body
    %s17 = ssub.s32 %s12, 1
    %s18 = ssub.s32 %s12, 2
    %s19 = sadd.s32 %s12, 1
    %s20 = ssub.s32 %s12, %s19
    %p21 = scmp.eq.s32.totalorder %s20, 0
    %s23 = sadd.s32 %s22, 1
    %s24 = scalar_select %p21, %s22, %s23
    %p27 = pneg %p21
    %p28 = scmp.eq.s32.totalorder %s12, 1
    %p29 = por %p27, %p28
    %p30 = scmp.ne.s32.totalorder %s22, %s25
    %p31 = scmp.eq.s32.totalorder %s12, 0
    %p32 = por %p30, %p31
    %p33 = scmp.ne.s32.totalorder %s22, %s25
    %p34 = scmp.eq.s32.totalorder %s17, 1
    %p35 = por %p33, %p34
    %p36 = scmp.ne.s32.totalorder %s25, %s26
    %p37 = scmp.eq.s32.totalorder %s17, 0
    %p38 = por %p36, %p37
    %p39 = scmp.ne.s32.totalorder %s25, %s26
    %p40 = scmp.eq.s32.totalorder %s18, 1
    %p41 = por %p39, %p40
    %p43 = scmp.ne.s32.totalorder %s26, %s42
    %p44 = scmp.eq.s32.totalorder %s18, 0
    %p45 = por %p43, %p44
    %s47 = sadd.s32 %s46, 1
    %p50 = scmp.eq.s32.totalorder %s12, 1
    %p51 = scmp.ne.s32.totalorder %s46, %s48
    %p52 = scmp.eq.s32.totalorder %s12, 0
    %p53 = por %p51, %p52
    %p54 = scmp.ne.s32.totalorder %s46, %s48
    %p55 = scmp.eq.s32.totalorder %s17, 1
    %p56 = por %p54, %p55
    %p57 = scmp.ne.s32.totalorder %s48, %s49
    %p58 = scmp.eq.s32.totalorder %s17, 0
    %p59 = por %p57, %p58
    %p60 = scmp.ne.s32.totalorder %s48, %s49
    %p61 = scmp.eq.s32.totalorder %s18, 1
    %p62 = por %p60, %p61
    %p64 = scmp.ne.s32.totalorder %s49, %s63
    %p65 = scmp.eq.s32.totalorder %s18, 0
    %p66 = por %p64, %p65
    %s68 = sadd.s32 %s67, 1
    %p71 = scmp.eq.s32.totalorder %s12, 1
    %p72 = scmp.ne.s32.totalorder %s67, %s69
    %p73 = scmp.eq.s32.totalorder %s12, 0
    %p74 = por %p72, %p73
    %p75 = scmp.ne.s32.totalorder %s67, %s69
    %p76 = scmp.eq.s32.totalorder %s17, 1
    %p77 = por %p75, %p76
    %p78 = scmp.ne.s32.totalorder %s69, %s70
    %p79 = scmp.eq.s32.totalorder %s17, 0
    %p80 = por %p78, %p79
    %p81 = scmp.ne.s32.totalorder %s69, %s70
    %p82 = scmp.eq.s32.totalorder %s18, 1
    %p83 = por %p81, %p82
    %p85 = scmp.ne.s32.totalorder %s70, %s84
    %p86 = scmp.eq.s32.totalorder %s18, 0
    %p87 = por %p85, %p86
    %s88 = ssub.s32 %s12, %s19
    %p89 = scmp.eq.s32.totalorder %s88, 0
    %s91 = sadd.s32 %s90, 1
    %s92 = scalar_select %p89, %s90, %s91
    %p95 = pneg %p89
    %p96 = scmp.eq.s32.totalorder %s12, 1
    %p97 = por %p95, %p96
    %p98 = scmp.ne.s32.totalorder %s90, %s93
    %p99 = scmp.eq.s32.totalorder %s12, 0
    %p100 = por %p98, %p99
    %p101 = scmp.ne.s32.totalorder %s90, %s93
    %p102 = scmp.eq.s32.totalorder %s17, 1
    %p103 = por %p101, %p102
    %p104 = scmp.ne.s32.totalorder %s93, %s94
    %p105 = scmp.eq.s32.totalorder %s17, 0
    %p106 = por %p104, %p105
    %p107 = scmp.ne.s32.totalorder %s93, %s94
    %p108 = scmp.eq.s32.totalorder %s18, 1
    %p109 = por %p107, %p108
    %p111 = scmp.ne.s32.totalorder %s94, %s110
    %p112 = scmp.eq.s32.totalorder %s18, 0
    %p113 = por %p111, %p112
    %s114 = ssub.s32 %s12, %s19
    %p115 = scmp.eq.s32.totalorder %s114, 0
    %s117 = sadd.s32 %s116, 1
    %s118 = scalar_select %p115, %s116, %s117
    %p121 = pneg %p115
    %p122 = scmp.eq.s32.totalorder %s12, 1
    %p123 = por %p121, %p122
    %p124 = scmp.ne.s32.totalorder %s116, %s119
    %p125 = scmp.eq.s32.totalorder %s12, 0
    %p126 = por %p124, %p125
    %p127 = scmp.ne.s32.totalorder %s116, %s119
    %p128 = scmp.eq.s32.totalorder %s17, 1
    %p129 = por %p127, %p128
    %p130 = scmp.ne.s32.totalorder %s119, %s120
    %p131 = scmp.eq.s32.totalorder %s17, 0
    %p132 = por %p130, %p131
    %p133 = scmp.ne.s32.totalorder %s119, %s120
    %p134 = scmp.eq.s32.totalorder %s18, 1
    %p135 = por %p133, %p134
    %p137 = scmp.ne.s32.totalorder %s120, %s136
    %p138 = scmp.eq.s32.totalorder %s18, 0
    %p139 = por %p137, %p138
    %s140 = ssub.s32 %s12, %s19
    %p141 = scmp.eq.s32.totalorder %s140, 0
    %s143 = sadd.s32 %s142, 1
    %s144 = scalar_select %p141, %s142, %s143
    %p147 = pneg %p141
    %p148 = scmp.eq.s32.totalorder %s12, 1
    %p149 = por %p147, %p148
    %p150 = scmp.ne.s32.totalorder %s142, %s145
    %p151 = scmp.eq.s32.totalorder %s12, 0
    %p152 = por %p150, %p151
    %p153 = scmp.ne.s32.totalorder %s142, %s145
    %p154 = scmp.eq.s32.totalorder %s17, 1
    %p155 = por %p153, %p154
    %p156 = scmp.ne.s32.totalorder %s145, %s146
    %p157 = scmp.eq.s32.totalorder %s17, 0
    %p158 = por %p156, %p157
    %p159 = scmp.ne.s32.totalorder %s145, %s146
    %p160 = scmp.eq.s32.totalorder %s18, 1
    %p161 = por %p159, %p160
    %p163 = scmp.ne.s32.totalorder %s146, %s162
    %p164 = scmp.eq.s32.totalorder %s18, 0
    %p165 = por %p163, %p164
    %p166 = scmp.le.s32.totalorder 1, %s12
    %p167 = scmp.lt.s32.totalorder %s12, 3
    %p168 = pnand %p166, %p167
    %p169 = pneg %p168
    // Predicated region
    $region9: #{refinement_residual_block.8} parent=5 // pred_check
      _
    $region10: #{refinement_residual_block.8} parent=5 // pred_check_branch
      %171 = sbr.rel (%p168) target = $region12
    $region11: #{refinement_residual_block.8} parent=5 // pred_region
      %s172 = ssub.s32 %s12, 1
      // Predicated region
      $region13: #{refinement_residual_block.8} parent=11 // pred_check
        %p173 = pneg %p59
      $region14: #{refinement_residual_block.8} parent=11 // pred_check_branch
        %175 = sbr.rel (%p173) target = $region16
      $region15: #{refinement_residual_block.8} parent=11 // pred_region
        _
      $region16: #{refinement_residual_block.8} parent=11 // pred_fallthru
        _
      // Predicated region
      $region17: #{refinement_residual_block.8} parent=11 // pred_check
        %p176 = pneg %p80
      $region18: #{refinement_residual_block.8} parent=11 // pred_check_branch
        %178 = sbr.rel (%p176) target = $region20
      $region19: #{refinement_residual_block.8} parent=11 // pred_region
        _
      $region20: #{refinement_residual_block.8} parent=11 // pred_fallthru
        _
    $region12: #{refinement_residual_block.8} parent=5 // pred_fallthru
      _
    %p179 = scmp.lt.s32.totalorder %s12, 2
    // Predicated region
    $region21: #{refinement_residual_block.8} parent=5 // pred_check
      %p180 = pneg %p179
    $region22: #{refinement_residual_block.8} parent=5 // pred_check_branch
      %182 = sbr.rel (%p180) target = $region24
    $region23: #{refinement_residual_block.8} parent=5 // pred_region
      // Predicated region
      $region25: #{refinement_residual_block.8} parent=23 // pred_check
        %p183 = pneg %p32
      $region26: #{refinement_residual_block.8} parent=23 // pred_check_branch
        %185 = sbr.rel (%p183) target = $region28
      $region27: #{refinement_residual_block.8} parent=23 // pred_region
        %p186 = scmp.lt.s32.totalorder %s12, 1
        %s187 = scalar_select %p186, %s12, 1
        %s188 = smul.addr %s187, 54
        %s189 = smul.addr %s188, 4
        %s190 = scalar_lea.vmem %s0, %s189
      $region28: #{refinement_residual_block.8} parent=23 // pred_fallthru
        _
    $region24: #{refinement_residual_block.8} parent=5 // pred_fallthru
      _
    %p191 = scmp.le.s32.totalorder 1, %s12
    %p192 = scmp.lt.s32.totalorder %s12, 3
    %p193 = pnand %p191, %p192
    %p194 = pneg %p193
    // Predicated region
    $region29: #{refinement_residual_block.8} parent=5 // pred_check
      _
    $region30: #{refinement_residual_block.8} parent=5 // pred_check_branch
      %196 = sbr.rel (%p193) target = $region32
    $region31: #{refinement_residual_block.8} parent=5 // pred_region
      %s197 = ssub.s32 %s12, 1
      %p198 = scmp.lt.s32.totalorder %s17, 1
      %s199 = scalar_select %p198, %s17, 1
      %s200 = smul.addr %s199, 54
      %s201 = smul.addr %s200, 4
      %s202 = scalar_lea.vmem %s0, %s201
      %p203 = pneg %p38
      %p204 = pneg %p35
      %p205 = pneg %p59
      %p206 = pneg %p56
      %p207 = pneg %p80
      %p208 = pneg %p77
      %p209 = pneg %p106
      %p210 = pneg %p103
      %p211 = scmp.lt.s32.totalorder %s17, 1
      %s212 = scalar_select %p211, %s17, 1
      %s213 = smul.addr %s212, 32
      %s214 = smul.addr %s213, 8
      %s215 = scalar_lea.vmem %s3, %s214
      %p216 = pneg %p132
      %p217 = pneg %p129
      %p218 = scmp.lt.s32.totalorder %s17, 1
      %s219 = scalar_select %p218, %s17, 1
      %s220 = scalar_lea.vmem %s4, %s219
      %p221 = pneg %p158
      %p222 = pneg %p155
      %p223 = scmp.lt.s32.totalorder %s17, 1
      %s224 = scalar_select %p223, %s17, 1
      %s225 = scalar_lea.vmem %s5, %s224
      %p226 = scmp.lt.s32.totalorder %s17, 1
      %s227 = scalar_select %p226, %s17, 1
      %s228 = smul.addr %s227, 54
      %s229 = smul.addr %s228, 4
      %s230 = scalar_lea.vmem %s0, %s229
      %p231 = scmp.lt.s32.totalorder %s17, 1
      %s232 = scalar_select %p231, %s17, 1
      %s233 = smul.addr %s232, 32
      %s234 = smul.addr %s233, 8
      %s235 = scalar_lea.vmem %s3, %s234
      %p236 = scmp.lt.s32.totalorder %s17, 1
      %s237 = scalar_select %p236, %s17, 1
      %s238 = scalar_lea.vmem %s4, %s237
      %p239 = scmp.lt.s32.totalorder %s17, 1
      %s240 = scalar_select %p239, %s17, 1
      %s241 = scalar_lea.vmem %s5, %s240
      %v243 = vld [vmem:[%s230] sm:$0xf]
      %v244 = vld [vmem:[%s230 + $0x4] sm:$0xf]
      %v245 = vld [vmem:[%s230 + $0xc] sm:$0xf]
      %v246 = vld [vmem:[%s230 + $0x10] sm:$0xf]
      %v247 = vld [vmem:[%s230 + $0x18] sm:$0xf]
      %v248 = vld [vmem:[%s230 + $0x1c] sm:$0xf]
      %v249 = vld [vmem:[%s230 + $0x24] sm:$0xf]
      %v250 = vld [vmem:[%s230 + $0x28] sm:$0xf]
      %v251 = vld [vmem:[%s230 + $0x30] sm:$0xf]
      %v252 = vld [vmem:[%s230 + $0x34] sm:$0xf]
      %v253 = vld [vmem:[%s230 + $0x3c] sm:$0xf]
      %v254 = vld [vmem:[%s230 + $0x40] sm:$0xf]
      %v255 = vld [vmem:[%s230 + $0x48] sm:$0xf]
      %v256 = vld [vmem:[%s230 + $0x4c] sm:$0xf]
      %v257 = vld [vmem:[%s230 + $0x54] sm:$0xf]
      %v258 = vld [vmem:[%s230 + $0x58] sm:$0xf]
      %v259 = vld [vmem:[%s230 + $0x60] sm:$0xf]
      %v260 = vld [vmem:[%s230 + $0x64] sm:$0xf]
      %v261 = vld [vmem:[%s230 + $0x6c] sm:$0xf]
      %v262 = vld [vmem:[%s230 + $0x70] sm:$0xf]
      %v263 = vld [vmem:[%s230 + $0x78] sm:$0xf]
      %v264 = vld [vmem:[%s230 + $0x7c] sm:$0xf]
      %v265 = vld [vmem:[%s230 + $0x84] sm:$0xf]
      %v266 = vld [vmem:[%s230 + $0x88] sm:$0xf]
      %v267 = vld [vmem:[%s230 + $0x90] sm:$0xf]
      %v268 = vld [vmem:[%s230 + $0x94] sm:$0xf]
      %v269 = vld [vmem:[%s230 + $0x9c] sm:$0xf]
      %v270 = vld [vmem:[%s230 + $0xa0] sm:$0xf]
      %v271 = vld [vmem:[%s230 + $0xa8] sm:$0xf]
      %v272 = vld [vmem:[%s230 + $0xac] sm:$0xf]
      %v273 = vld [vmem:[%s230 + $0xb4] sm:$0xf]
      %v274 = vld [vmem:[%s230 + $0xb8] sm:$0xf]
      %v275 = vld [vmem:[%s1] sm:$0xf]
      %v276 = vld [vmem:[%s1 + $0x4] sm:$0xf]
      %v277 = vld [vmem:[%s1 + $0x8] sm:$0xf]
      %v278 = vld [vmem:[%s1 + $0xc] sm:$0xf]
      %v279 = vld [vmem:[%s1 + $0x10] sm:$0xf]
      %v280 = vld [vmem:[%s1 + $0x14] sm:$0xf]
      %v281 = vld [vmem:[%s1 + $0x18] sm:$0xf]
      %v282 = vld [vmem:[%s1 + $0x1c] sm:$0xf]
      %v283 = vld [vmem:[%s1 + $0x20] sm:$0xf]
      %v284 = vld [vmem:[%s1 + $0x24] sm:$0xf]
      %v285 = vld [vmem:[%s1 + $0x28] sm:$0xf]
      %v286 = vld [vmem:[%s1 + $0x2c] sm:$0xf]
      %v287 = vld [vmem:[%s1 + $0x30] sm:$0xf]
      %v288 = vld [vmem:[%s1 + $0x34] sm:$0xf]
      %v289 = vld [vmem:[%s1 + $0x38] sm:$0xf]
      %v290 = vld [vmem:[%s1 + $0x3c] sm:$0xf]
      %v291 = vld [vmem:[%s230 + $0x8] sm:$0x1]
      %v292 = vld [vmem:[%s230 + $0x14] sm:$0x1]
      %v293 = vld [vmem:[%s230 + $0x20] sm:$0x1]
      %v294 = vld [vmem:[%s230 + $0x2c] sm:$0x1]
      %v295 = vld [vmem:[%s230 + $0x38] sm:$0x1]
      %v296 = vld [vmem:[%s230 + $0x44] sm:$0x1]
      %v297 = vld [vmem:[%s230 + $0x50] sm:$0x1]
      %v298 = vld [vmem:[%s230 + $0x5c] sm:$0x1]
      %v299 = vld [vmem:[%s230 + $0x68] sm:$0x1]
      %v300 = vld [vmem:[%s230 + $0x74] sm:$0x1]
      %v301 = vld [vmem:[%s230 + $0x80] sm:$0x1]
      %v302 = vld [vmem:[%s230 + $0x8c] sm:$0x1]
      %v303 = vld [vmem:[%s230 + $0x98] sm:$0x1]
      %v304 = vld [vmem:[%s230 + $0xa4] sm:$0x1]
      %v305 = vld [vmem:[%s230 + $0xb0] sm:$0x1]
      %v306 = vld [vmem:[%s230 + $0xbc] sm:$0x1]
      %vm307 = vsmask.f32 3328
      %vm308 = vsmask.f32 7440
      %vm309 = vmor %vm307, %vm308
      %v311 = vshrl.u32 %v243, 16
      %v313 = vrot.slane %v311, 4
      %v314 = vshll.u32 %v243, 16
      %v316 = vrot.slane %v314, 5
      %v317 = vor.u32 %v313, %v316
      %v318 = vrot.slane %v317, 4
      %v320 = vshll.u32 %v244, 16
      %v322 = vrot.slane %v320, 5
      %v323 = vsel %vm309, %v318, %v322
      %v324 = vshrl.u32 %v244, 16
      %v326 = vrot.slane %v324, 4
      %v327 = vor.u32 %v326, %v322
      %v328 = vrot.slane %v327, 4
      %v330 = vshll.u32 %v291, 16
      %v332 = vrot.slane %v330, 5
      %v333 = vsel %vm309, %v328, %v332
      %v335 = vshrl.u32 %v245, 16
      %v337 = vrot.slane %v335, 4
      %v338 = vshll.u32 %v245, 16
      %v340 = vrot.slane %v338, 5
      %v341 = vor.u32 %v337, %v340
      %v342 = vrot.slane %v341, 4
      %v344 = vshll.u32 %v246, 16
      %v346 = vrot.slane %v344, 5
      %v347 = vsel %vm309, %v342, %v346
      %v348 = vshrl.u32 %v246, 16
      %v350 = vrot.slane %v348, 4
      %v351 = vor.u32 %v350, %v346
      %v352 = vrot.slane %v351, 4
      %v354 = vshll.u32 %v292, 16
      %v356 = vrot.slane %v354, 5
      %v357 = vsel %vm309, %v352, %v356
      %v359 = vshrl.u32 %v247, 16
      %v361 = vrot.slane %v359, 4
      %v362 = vshll.u32 %v247, 16
      %v364 = vrot.slane %v362, 5
      %v365 = vor.u32 %v361, %v364
      %v366 = vrot.slane %v365, 4
      %v368 = vshll.u32 %v248, 16
      %v370 = vrot.slane %v368, 5
      %v371 = vsel %vm309, %v366, %v370
      %v372 = vshrl.u32 %v248, 16
      %v374 = vrot.slane %v372, 4
      %v375 = vor.u32 %v374, %v370
      %v376 = vrot.slane %v375, 4
      %v378 = vshll.u32 %v293, 16
      %v380 = vrot.slane %v378, 5
      %v381 = vsel %vm309, %v376, %v380
      %v383 = vshrl.u32 %v249, 16
      %v385 = vrot.slane %v383, 4
      %v386 = vshll.u32 %v249, 16
      %v388 = vrot.slane %v386, 5
      %v389 = vor.u32 %v385, %v388
      %v390 = vrot.slane %v389, 4
      %v392 = vshll.u32 %v250, 16
      %v394 = vrot.slane %v392, 5
      %v395 = vsel %vm309, %v390, %v394
      %v396 = vshrl.u32 %v250, 16
      %v398 = vrot.slane %v396, 4
      %v399 = vor.u32 %v398, %v394
      %v400 = vrot.slane %v399, 4
      %v402 = vshll.u32 %v294, 16
      %v404 = vrot.slane %v402, 5
      %v405 = vsel %vm309, %v400, %v404
      %v407 = vshrl.u32 %v251, 16
      %v409 = vrot.slane %v407, 4
      %v410 = vshll.u32 %v251, 16
      %v412 = vrot.slane %v410, 5
      %v413 = vor.u32 %v409, %v412
      %v414 = vrot.slane %v413, 4
      %v416 = vshll.u32 %v252, 16
      %v418 = vrot.slane %v416, 5
      %v419 = vsel %vm309, %v414, %v418
      %v420 = vshrl.u32 %v252, 16
      %v422 = vrot.slane %v420, 4
      %v423 = vor.u32 %v422, %v418
      %v424 = vrot.slane %v423, 4
      %v426 = vshll.u32 %v295, 16
      %v428 = vrot.slane %v426, 5
      %v429 = vsel %vm309, %v424, %v428
      %v431 = vshrl.u32 %v253, 16
      %v433 = vrot.slane %v431, 4
      %v434 = vshll.u32 %v253, 16
      %v436 = vrot.slane %v434, 5
      %v437 = vor.u32 %v433, %v436
      %v438 = vrot.slane %v437, 4
      %v440 = vshll.u32 %v254, 16
      %v442 = vrot.slane %v440, 5
      %v443 = vsel %vm309, %v438, %v442
      %v444 = vshrl.u32 %v254, 16
      %v446 = vrot.slane %v444, 4
      %v447 = vor.u32 %v446, %v442
      %v448 = vrot.slane %v447, 4
      %v450 = vshll.u32 %v296, 16
      %v452 = vrot.slane %v450, 5
      %v453 = vsel %vm309, %v448, %v452
      %v455 = vshrl.u32 %v255, 16
      %v457 = vrot.slane %v455, 4
      %v458 = vshll.u32 %v255, 16
      %v460 = vrot.slane %v458, 5
      %v461 = vor.u32 %v457, %v460
      %v462 = vrot.slane %v461, 4
      %v464 = vshll.u32 %v256, 16
      %v466 = vrot.slane %v464, 5
      %v467 = vsel %vm309, %v462, %v466
      %v468 = vshrl.u32 %v256, 16
      %v470 = vrot.slane %v468, 4
      %v471 = vor.u32 %v470, %v466
      %v472 = vrot.slane %v471, 4
      %v474 = vshll.u32 %v297, 16
      %v476 = vrot.slane %v474, 5
      %v477 = vsel %vm309, %v472, %v476
      %v479 = vshrl.u32 %v257, 16
      %v481 = vrot.slane %v479, 4
      %v482 = vshll.u32 %v257, 16
      %v484 = vrot.slane %v482, 5
      %v485 = vor.u32 %v481, %v484
      %v486 = vrot.slane %v485, 4
      %v488 = vshll.u32 %v258, 16
      %v490 = vrot.slane %v488, 5
      %v491 = vsel %vm309, %v486, %v490
      %v492 = vshrl.u32 %v258, 16
      %v494 = vrot.slane %v492, 4
      %v495 = vor.u32 %v494, %v490
      %v496 = vrot.slane %v495, 4
      %v498 = vshll.u32 %v298, 16
      %v500 = vrot.slane %v498, 5
      %v501 = vsel %vm309, %v496, %v500
      %v503 = vshrl.u32 %v259, 16
      %v505 = vrot.slane %v503, 4
      %v506 = vshll.u32 %v259, 16
      %v508 = vrot.slane %v506, 5
      %v509 = vor.u32 %v505, %v508
      %v510 = vrot.slane %v509, 4
      %v512 = vshll.u32 %v260, 16
      %v514 = vrot.slane %v512, 5
      %v515 = vsel %vm309, %v510, %v514
      %v516 = vshrl.u32 %v260, 16
      %v518 = vrot.slane %v516, 4
      %v519 = vor.u32 %v518, %v514
      %v520 = vrot.slane %v519, 4
      %v522 = vshll.u32 %v299, 16
      %v524 = vrot.slane %v522, 5
      %v525 = vsel %vm309, %v520, %v524
      %v527 = vshrl.u32 %v261, 16
      %v529 = vrot.slane %v527, 4
      %v530 = vshll.u32 %v261, 16
      %v532 = vrot.slane %v530, 5
      %v533 = vor.u32 %v529, %v532
      %v534 = vrot.slane %v533, 4
      %v536 = vshll.u32 %v262, 16
      %v538 = vrot.slane %v536, 5
      %v539 = vsel %vm309, %v534, %v538
      %v540 = vshrl.u32 %v262, 16
      %v542 = vrot.slane %v540, 4
      %v543 = vor.u32 %v542, %v538
      %v544 = vrot.slane %v543, 4
      %v546 = vshll.u32 %v300, 16
      %v548 = vrot.slane %v546, 5
      %v549 = vsel %vm309, %v544, %v548
      %v551 = vshrl.u32 %v263, 16
      %v553 = vrot.slane %v551, 4
      %v554 = vshll.u32 %v263, 16
      %v556 = vrot.slane %v554, 5
      %v557 = vor.u32 %v553, %v556
      %v558 = vrot.slane %v557, 4
      %v560 = vshll.u32 %v264, 16
      %v562 = vrot.slane %v560, 5
      %v563 = vsel %vm309, %v558, %v562
      %v564 = vshrl.u32 %v264, 16
      %v566 = vrot.slane %v564, 4
      %v567 = vor.u32 %v566, %v562
      %v568 = vrot.slane %v567, 4
      %v570 = vshll.u32 %v301, 16
      %v572 = vrot.slane %v570, 5
      %v573 = vsel %vm309, %v568, %v572
      %v575 = vshrl.u32 %v265, 16
      %v577 = vrot.slane %v575, 4
      %v578 = vshll.u32 %v265, 16
      %v580 = vrot.slane %v578, 5
      %v581 = vor.u32 %v577, %v580
      %v582 = vrot.slane %v581, 4
      %v584 = vshll.u32 %v266, 16
      %v586 = vrot.slane %v584, 5
      %v587 = vsel %vm309, %v582, %v586
      %v588 = vshrl.u32 %v266, 16
      %v590 = vrot.slane %v588, 4
      %v591 = vor.u32 %v590, %v586
      %v592 = vrot.slane %v591, 4
      %v594 = vshll.u32 %v302, 16
      %v596 = vrot.slane %v594, 5
      %v597 = vsel %vm309, %v592, %v596
      %v599 = vshrl.u32 %v267, 16
      %v601 = vrot.slane %v599, 4
      %v602 = vshll.u32 %v267, 16
      %v604 = vrot.slane %v602, 5
      %v605 = vor.u32 %v601, %v604
      %v606 = vrot.slane %v605, 4
      %v608 = vshll.u32 %v268, 16
      %v610 = vrot.slane %v608, 5
      %v611 = vsel %vm309, %v606, %v610
      %v612 = vshrl.u32 %v268, 16
      %v614 = vrot.slane %v612, 4
      %v615 = vor.u32 %v614, %v610
      %v616 = vrot.slane %v615, 4
      %v618 = vshll.u32 %v303, 16
      %v620 = vrot.slane %v618, 5
      %v621 = vsel %vm309, %v616, %v620
      %v623 = vshrl.u32 %v269, 16
      %v625 = vrot.slane %v623, 4
      %v626 = vshll.u32 %v269, 16
      %v628 = vrot.slane %v626, 5
      %v629 = vor.u32 %v625, %v628
      %v630 = vrot.slane %v629, 4
      %v632 = vshll.u32 %v270, 16
      %v634 = vrot.slane %v632, 5
      %v635 = vsel %vm309, %v630, %v634
      %v636 = vshrl.u32 %v270, 16
      %v638 = vrot.slane %v636, 4
      %v639 = vor.u32 %v638, %v634
      %v640 = vrot.slane %v639, 4
      %v642 = vshll.u32 %v304, 16
      %v644 = vrot.slane %v642, 5
      %v645 = vsel %vm309, %v640, %v644
      %v647 = vshrl.u32 %v271, 16
      %v649 = vrot.slane %v647, 4
      %v650 = vshll.u32 %v271, 16
      %v652 = vrot.slane %v650, 5
      %v653 = vor.u32 %v649, %v652
      %v654 = vrot.slane %v653, 4
      %v656 = vshll.u32 %v272, 16
      %v658 = vrot.slane %v656, 5
      %v659 = vsel %vm309, %v654, %v658
      %v660 = vshrl.u32 %v272, 16
      %v662 = vrot.slane %v660, 4
      %v663 = vor.u32 %v662, %v658
      %v664 = vrot.slane %v663, 4
      %v666 = vshll.u32 %v305, 16
      %v668 = vrot.slane %v666, 5
      %v669 = vsel %vm309, %v664, %v668
      %v671 = vshrl.u32 %v273, 16
      %v673 = vrot.slane %v671, 4
      %v674 = vshll.u32 %v273, 16
      %v676 = vrot.slane %v674, 5
      %v677 = vor.u32 %v673, %v676
      %v678 = vrot.slane %v677, 4
      %v680 = vshll.u32 %v274, 16
      %v682 = vrot.slane %v680, 5
      %v683 = vsel %vm309, %v678, %v682
      %v684 = vshrl.u32 %v274, 16
      %v686 = vrot.slane %v684, 4
      %v687 = vor.u32 %v686, %v682
      %v688 = vrot.slane %v687, 4
      %v690 = vshll.u32 %v306, 16
      %v692 = vrot.slane %v690, 5
      %v693 = vsel %vm309, %v688, %v692
      %s694 = scalar_lea.vmem %s1, 64
      %v695 = vld [vmem:[%s694] sm:$0xf]
      %v696 = vld [vmem:[%s694 + $0x4] sm:$0xf]
      %v697 = vld [vmem:[%s694 + $0x8] sm:$0xf]
      %v698 = vld [vmem:[%s694 + $0xc] sm:$0xf]
      %v699 = vld [vmem:[%s694 + $0x10] sm:$0xf]
      %v700 = vld [vmem:[%s694 + $0x14] sm:$0xf]
      %v701 = vld [vmem:[%s694 + $0x18] sm:$0xf]
      %v702 = vld [vmem:[%s694 + $0x1c] sm:$0xf]
      %v703 = vld [vmem:[%s694 + $0x20] sm:$0xf]
      %v704 = vld [vmem:[%s694 + $0x24] sm:$0xf]
      %v705 = vld [vmem:[%s694 + $0x28] sm:$0xf]
      %v706 = vld [vmem:[%s694 + $0x2c] sm:$0xf]
      %v707 = vld [vmem:[%s694 + $0x30] sm:$0xf]
      %v708 = vld [vmem:[%s694 + $0x34] sm:$0xf]
      %v709 = vld [vmem:[%s694 + $0x38] sm:$0xf]
      %v710 = vld [vmem:[%s694 + $0x3c] sm:$0xf]
      %v711 = vunpack.c.l.b16 %v323
      %v712 = vunpack.c.l.b16 %v333
      %v713 = vunpack.c.l.b16 %v347
      %v714 = vunpack.c.l.b16 %v357
      %v715 = vunpack.c.l.b16 %v371
      %v716 = vunpack.c.l.b16 %v381
      %v717 = vunpack.c.l.b16 %v395
      %v718 = vunpack.c.l.b16 %v405
      %v719 = vunpack.c.l.b16 %v419
      %v720 = vunpack.c.l.b16 %v429
      %v721 = vunpack.c.l.b16 %v443
      %v722 = vunpack.c.l.b16 %v453
      %v723 = vunpack.c.l.b16 %v467
      %v724 = vunpack.c.l.b16 %v477
      %v725 = vunpack.c.l.b16 %v491
      %v726 = vunpack.c.l.b16 %v501
      %v727 = vunpack.c.l.b16 %v515
      %v728 = vunpack.c.l.b16 %v525
      %v729 = vunpack.c.l.b16 %v539
      %v730 = vunpack.c.l.b16 %v549
      %v731 = vunpack.c.l.b16 %v563
      %v732 = vunpack.c.l.b16 %v573
      %v733 = vunpack.c.l.b16 %v587
      %v734 = vunpack.c.l.b16 %v597
      %v735 = vunpack.c.l.b16 %v611
      %v736 = vunpack.c.l.b16 %v621
      %v737 = vunpack.c.l.b16 %v635
      %v738 = vunpack.c.l.b16 %v645
      %v739 = vunpack.c.l.b16 %v659
      %v740 = vunpack.c.l.b16 %v669
      %v741 = vunpack.c.l.b16 %v683
      %v742 = vunpack.c.l.b16 %v693
      %v743 = vpack.c.b16 %v712, %v711
      %v744 = vpack.c.b16 %v714, %v713
      %v745 = vpack.c.b16 %v716, %v715
      %v746 = vpack.c.b16 %v718, %v717
      %v747 = vpack.c.b16 %v720, %v719
      %v748 = vpack.c.b16 %v722, %v721
      %v749 = vpack.c.b16 %v724, %v723
      %v750 = vpack.c.b16 %v726, %v725
      %v751 = vpack.c.b16 %v728, %v727
      %v752 = vpack.c.b16 %v730, %v729
      %v753 = vpack.c.b16 %v732, %v731
      %v754 = vpack.c.b16 %v734, %v733
      %v755 = vpack.c.b16 %v736, %v735
      %v756 = vpack.c.b16 %v738, %v737
      %v757 = vpack.c.b16 %v740, %v739
      %v758 = vpack.c.b16 %v742, %v741
      %v791 = vunpack.c.l.b16 %v695
      %v792 = vunpack.c.l.b16 %v696
      %v793 = vunpack.c.l.b16 %v697
      %v794 = vunpack.c.l.b16 %v698
      %v795 = vunpack.c.l.b16 %v699
      %v796 = vunpack.c.l.b16 %v700
      %v797 = vunpack.c.l.b16 %v701
      %v798 = vunpack.c.l.b16 %v702
      %v799 = vunpack.c.l.b16 %v703
      %v800 = vunpack.c.l.b16 %v704
      %v801 = vunpack.c.l.b16 %v705
      %v802 = vunpack.c.l.b16 %v706
      %v803 = vunpack.c.l.b16 %v707
      %v804 = vunpack.c.l.b16 %v708
      %v805 = vunpack.c.l.b16 %v709
      %v806 = vunpack.c.l.b16 %v710
      %v807 = vpack.c.b16 %v792, %v791
      %v808 = vpack.c.b16 %v794, %v793
      %v809 = vpack.c.b16 %v796, %v795
      %v810 = vpack.c.b16 %v798, %v797
      %v811 = vpack.c.b16 %v800, %v799
      %v812 = vpack.c.b16 %v802, %v801
      %v813 = vpack.c.b16 %v804, %v803
      %v814 = vpack.c.b16 %v806, %v805
      %823 = vmatprep.subr.bf16.mxu0 0
      %824 = vmatpush1.bf16.msra.mxu0 %v807
      %825 = vmatprep.subr.bf16.mxu0 0
      %826 = vmatpush1.bf16.msra.mxu0 %v808
      %827 = vmatprep.subr.bf16.mxu0 0
      %828 = vmatpush1.bf16.msra.mxu0 %v809
      %829 = vmatprep.subr.bf16.mxu0 0
      %830 = vmatpush1.bf16.msra.mxu0 %v810
      %831 = vmatprep.subr.bf16.mxu0 0
      %832 = vmatpush1.bf16.msra.mxu0 %v811
      %833 = vmatprep.subr.bf16.mxu0 0
      %834 = vmatpush1.bf16.msra.mxu0 %v812
      %835 = vmatprep.subr.bf16.mxu0 0
      %836 = vmatpush1.bf16.msra.mxu0 %v813
      %837 = vmatprep.subr.bf16.mxu0 0
      %838 = vmatpush1.bf16.msra.mxu0 %v814
      %839 = vmatprep.subr.bf16.mxu0 0
      %840 = vmatpush1.bf16.msra.mxu0 0
      %841 = vmatprep.subr.bf16.mxu0 0
      %842 = vmatpush1.bf16.msra.mxu0 0
      %843 = vmatprep.subr.bf16.mxu0 0
      %844 = vmatpush1.bf16.msra.mxu0 0
      %845 = vmatprep.subr.bf16.mxu0 0
      %846 = vmatpush1.bf16.msra.mxu0 0
      %847 = vmatprep.subr.bf16.mxu0 0
      %848 = vmatpush1.bf16.msra.mxu0 0
      %849 = vmatprep.subr.bf16.mxu0 0
      %850 = vmatpush1.bf16.msra.mxu0 0
      %851 = vmatprep.subr.bf16.mxu0 0
      %852 = vmatpush1.bf16.msra.mxu0 0
      %853 = vmatprep.subr.bf16.mxu0 0
      %854 = vmatpush1.bf16.msra.mxu0 0
      %855 = vmatprep.mubr.bf16.mxu0 0
      %856 = vmatmul.mubr.bf16.gmra.mrb[0].mxu0 %v743
      %v857 = vpop.f32.mrb[0].mxu0
      %v858 = vadd.f32 0.0, %v857
      %v859 = vpop.f32.mrb[0].mxu0
      %v860 = vpop.f32.mrb[0].mxu0
      %v861 = vadd.f32 0.0, %v860
      %v862 = vpop.f32.mrb[0].mxu0
      %863 = vmatprep.mubr.bf16.mxu0 0
      %864 = vmatmul.mubr.bf16.gmra.mrb[0].mxu0 %v744
      %v865 = vpop.f32.mrb[0].mxu0
      %v866 = vadd.f32 0.0, %v865
      %v867 = vpop.f32.mrb[0].mxu0
      %v868 = vpop.f32.mrb[0].mxu0
      %v869 = vadd.f32 0.0, %v868
      %v870 = vpop.f32.mrb[0].mxu0
      %871 = vmatprep.mubr.bf16.mxu0 0
      %872 = vmatmul.mubr.bf16.gmra.mrb[0].mxu0 %v745
      %v873 = vpop.f32.mrb[0].mxu0
      %v874 = vadd.f32 0.0, %v873
      %v875 = vpop.f32.mrb[0].mxu0
      %v876 = vpop.f32.mrb[0].mxu0
      %v877 = vadd.f32 0.0, %v876
      %v878 = vpop.f32.mrb[0].mxu0
      %879 = vmatprep.mubr.bf16.mxu0 0
      %880 = vmatmul.mubr.bf16.gmra.mrb[0].mxu0 %v746
      %v881 = vpop.f32.mrb[0].mxu0
      %v882 = vadd.f32 0.0, %v881
      %v883 = vpop.f32.mrb[0].mxu0
      %v884 = vpop.f32.mrb[0].mxu0
      %v885 = vadd.f32 0.0, %v884
      %v886 = vpop.f32.mrb[0].mxu0
      %887 = vmatprep.mubr.bf16.mxu0 0
      %888 = vmatmul.mubr.bf16.gmra.mrb[0].mxu0 %v747
      %v889 = vpop.f32.mrb[0].mxu0
      %v890 = vadd.f32 0.0, %v889
      %v891 = vpop.f32.mrb[0].mxu0
      %v892 = vpop.f32.mrb[0].mxu0
      %v893 = vadd.f32 0.0, %v892
      %v894 = vpop.f32.mrb[0].mxu0
      %895 = vmatprep.mubr.bf16.mxu0 0
      %896 = vmatmul.mubr.bf16.gmra.mrb[0].mxu0 %v748
      %v897 = vpop.f32.mrb[0].mxu0
      %v898 = vadd.f32 0.0, %v897
      %v899 = vpop.f32.mrb[0].mxu0
      %v900 = vpop.f32.mrb[0].mxu0
      %v901 = vadd.f32 0.0, %v900
      %v902 = vpop.f32.mrb[0].mxu0
      %903 = vmatprep.mubr.bf16.mxu0 0
      %904 = vmatmul.mubr.bf16.gmra.mrb[0].mxu0 %v749
      %v905 = vpop.f32.mrb[0].mxu0
      %v906 = vadd.f32 0.0, %v905
      %v907 = vpop.f32.mrb[0].mxu0
      %v908 = vpop.f32.mrb[0].mxu0
      %v909 = vadd.f32 0.0, %v908
      %v910 = vpop.f32.mrb[0].mxu0
      %911 = vmatprep.mubr.bf16.mxu0 0
      %912 = vmatmul.mubr.bf16.gmra.mrb[0].mxu0 %v750
      %v913 = vpop.f32.mrb[0].mxu0
      %v914 = vadd.f32 0.0, %v913
      %v915 = vpop.f32.mrb[0].mxu0
      %v916 = vpop.f32.mrb[0].mxu0
      %v917 = vadd.f32 0.0, %v916
      %v918 = vpop.f32.mrb[0].mxu0
      %919 = vmatprep.mubr.bf16.mxu0 0
      %920 = vmatmul.mubr.bf16.gmra.mrb[0].mxu0 %v751
      %v921 = vpop.f32.mrb[0].mxu0
      %v922 = vadd.f32 0.0, %v921
      %v923 = vpop.f32.mrb[0].mxu0
      %v924 = vpop.f32.mrb[0].mxu0
      %v925 = vadd.f32 0.0, %v924
      %v926 = vpop.f32.mrb[0].mxu0
      %927 = vmatprep.mubr.bf16.mxu0 0
      %928 = vmatmul.mubr.bf16.gmra.mrb[0].mxu0 %v752
      %v929 = vpop.f32.mrb[0].mxu0
      %v930 = vadd.f32 0.0, %v929
      %v931 = vpop.f32.mrb[0].mxu0
      %v932 = vpop.f32.mrb[0].mxu0
      %v933 = vadd.f32 0.0, %v932
      %v934 = vpop.f32.mrb[0].mxu0
      %935 = vmatprep.mubr.bf16.mxu0 0
      %936 = vmatmul.mubr.bf16.gmra.mrb[0].mxu0 %v753
      %v937 = vpop.f32.mrb[0].mxu0
      %v938 = vadd.f32 0.0, %v937
      %v939 = vpop.f32.mrb[0].mxu0
      %v940 = vpop.f32.mrb[0].mxu0
      %v941 = vadd.f32 0.0, %v940
      %v942 = vpop.f32.mrb[0].mxu0
      %943 = vmatprep.mubr.bf16.mxu0 0
      %944 = vmatmul.mubr.bf16.gmra.mrb[0].mxu0 %v754
      %v945 = vpop.f32.mrb[0].mxu0
      %v946 = vadd.f32 0.0, %v945
      %v947 = vpop.f32.mrb[0].mxu0
      %v948 = vpop.f32.mrb[0].mxu0
      %v949 = vadd.f32 0.0, %v948
      %v950 = vpop.f32.mrb[0].mxu0
      %951 = vmatprep.mubr.bf16.mxu0 0
      %952 = vmatmul.mubr.bf16.gmra.mrb[0].mxu0 %v755
      %v953 = vpop.f32.mrb[0].mxu0
      %v954 = vadd.f32 0.0, %v953
      %v955 = vpop.f32.mrb[0].mxu0
      %v956 = vpop.f32.mrb[0].mxu0
      %v957 = vadd.f32 0.0, %v956
      %v958 = vpop.f32.mrb[0].mxu0
      %959 = vmatprep.mubr.bf16.mxu0 0
      %960 = vmatmul.mubr.bf16.gmra.mrb[0].mxu0 %v756
      %v961 = vpop.f32.mrb[0].mxu0
      %v962 = vadd.f32 0.0, %v961
      %v963 = vpop.f32.mrb[0].mxu0
      %v964 = vpop.f32.mrb[0].mxu0
      %v965 = vadd.f32 0.0, %v964
      %v966 = vpop.f32.mrb[0].mxu0
      %967 = vmatprep.mubr.bf16.mxu0 0
      %968 = vmatmul.mubr.bf16.gmra.mrb[0].mxu0 %v757
      %v969 = vpop.f32.mrb[0].mxu0
      %v970 = vadd.f32 0.0, %v969
      %v971 = vpop.f32.mrb[0].mxu0
      %v972 = vpop.f32.mrb[0].mxu0
      %v973 = vadd.f32 0.0, %v972
      %v974 = vpop.f32.mrb[0].mxu0
      %975 = vmatprep.mubr.bf16.mxu0 0
      %976 = vmatmul.mubr.bf16.gmra.mrb[0].mxu0 %v758
      %v977 = vpop.f32.mrb[0].mxu0
      %v978 = vadd.f32 0.0, %v977
      %v979 = vpop.f32.mrb[0].mxu0
      %v980 = vpop.f32.mrb[0].mxu0
      %v981 = vadd.f32 0.0, %v980
      %v982 = vpop.f32.mrb[0].mxu0
      %983 = vdwg.mxu0
      %v1016 = vunpack.c.l.b16 %v243
      %v1017 = vunpack.c.l.b16 %v244
      %v1018 = vunpack.c.l.b16 %v245
      %v1019 = vunpack.c.l.b16 %v246
      %v1020 = vunpack.c.l.b16 %v247
      %v1021 = vunpack.c.l.b16 %v248
      %v1022 = vunpack.c.l.b16 %v249
      %v1023 = vunpack.c.l.b16 %v250
      %v1024 = vunpack.c.l.b16 %v251
      %v1025 = vunpack.c.l.b16 %v252
      %v1026 = vunpack.c.l.b16 %v253
      %v1027 = vunpack.c.l.b16 %v254
      %v1028 = vunpack.c.l.b16 %v255
      %v1029 = vunpack.c.l.b16 %v256
      %v1030 = vunpack.c.l.b16 %v257
      %v1031 = vunpack.c.l.b16 %v258
      %v1032 = vunpack.c.l.b16 %v259
      %v1033 = vunpack.c.l.b16 %v260
      %v1034 = vunpack.c.l.b16 %v261
      %v1035 = vunpack.c.l.b16 %v262
      %v1036 = vunpack.c.l.b16 %v263
      %v1037 = vunpack.c.l.b16 %v264
      %v1038 = vunpack.c.l.b16 %v265
      %v1039 = vunpack.c.l.b16 %v266
      %v1040 = vunpack.c.l.b16 %v267
      %v1041 = vunpack.c.l.b16 %v268
      %v1042 = vunpack.c.l.b16 %v269
      %v1043 = vunpack.c.l.b16 %v270
      %v1044 = vunpack.c.l.b16 %v271
      %v1045 = vunpack.c.l.b16 %v272
      %v1046 = vunpack.c.l.b16 %v273
      %v1047 = vunpack.c.l.b16 %v274
      %v1048 = vpack.c.b16 %v1017, %v1016
      %v1049 = vpack.c.b16 %v1019, %v1018
      %v1050 = vpack.c.b16 %v1021, %v1020
      %v1051 = vpack.c.b16 %v1023, %v1022
      %v1052 = vpack.c.b16 %v1025, %v1024
      %v1053 = vpack.c.b16 %v1027, %v1026
      %v1054 = vpack.c.b16 %v1029, %v1028
      %v1055 = vpack.c.b16 %v1031, %v1030
      %v1056 = vpack.c.b16 %v1033, %v1032
      %v1057 = vpack.c.b16 %v1035, %v1034
      %v1058 = vpack.c.b16 %v1037, %v1036
      %v1059 = vpack.c.b16 %v1039, %v1038
      %v1060 = vpack.c.b16 %v1041, %v1040
      %v1061 = vpack.c.b16 %v1043, %v1042
      %v1062 = vpack.c.b16 %v1045, %v1044
      %v1063 = vpack.c.b16 %v1047, %v1046
      %v1096 = vunpack.c.l.b16 %v275
      %v1097 = vunpack.c.l.b16 %v276
      %v1098 = vunpack.c.l.b16 %v277
      %v1099 = vunpack.c.l.b16 %v278
      %v1100 = vunpack.c.l.b16 %v279
      %v1101 = vunpack.c.l.b16 %v280
      %v1102 = vunpack.c.l.b16 %v281
      %v1103 = vunpack.c.l.b16 %v282
      %v1104 = vunpack.c.l.b16 %v283
      %v1105 = vunpack.c.l.b16 %v284
      %v1106 = vunpack.c.l.b16 %v285
      %v1107 = vunpack.c.l.b16 %v286
      %v1108 = vunpack.c.l.b16 %v287
      %v1109 = vunpack.c.l.b16 %v288
      %v1110 = vunpack.c.l.b16 %v289
      %v1111 = vunpack.c.l.b16 %v290
      %v1112 = vpack.c.b16 %v1097, %v1096
      %v1113 = vpack.c.b16 %v1099, %v1098
      %v1114 = vpack.c.b16 %v1101, %v1100
      %v1115 = vpack.c.b16 %v1103, %v1102
      %v1116 = vpack.c.b16 %v1105, %v1104
      %v1117 = vpack.c.b16 %v1107, %v1106
      %v1118 = vpack.c.b16 %v1109, %v1108
      %v1119 = vpack.c.b16 %v1111, %v1110
      %1128 = vmatprep.subr.bf16.mxu0 0
      %1129 = vmatpush1.bf16.msra.mxu0 %v1112
      %1130 = vmatprep.subr.bf16.mxu0 0
      %1131 = vmatpush1.bf16.msra.mxu0 %v1113
      %1132 = vmatprep.subr.bf16.mxu0 0
      %1133 = vmatpush1.bf16.msra.mxu0 %v1114
      %1134 = vmatprep.subr.bf16.mxu0 0
      %1135 = vmatpush1.bf16.msra.mxu0 %v1115
      %1136 = vmatprep.subr.bf16.mxu0 0
      %1137 = vmatpush1.bf16.msra.mxu0 %v1116
      %1138 = vmatprep.subr.bf16.mxu0 0
      %1139 = vmatpush1.bf16.msra.mxu0 %v1117
      %1140 = vmatprep.subr.bf16.mxu0 0
      %1141 = vmatpush1.bf16.msra.mxu0 %v1118
      %1142 = vmatprep.subr.bf16.mxu0 0
      %1143 = vmatpush1.bf16.msra.mxu0 %v1119
      %1144 = vmatprep.subr.bf16.mxu0 0
      %1145 = vmatpush1.bf16.msra.mxu0 0
      %1146 = vmatprep.subr.bf16.mxu0 0
      %1147 = vmatpush1.bf16.msra.mxu0 0
      %1148 = vmatprep.subr.bf16.mxu0 0
      %1149 = vmatpush1.bf16.msra.mxu0 0
      %1150 = vmatprep.subr.bf16.mxu0 0
      %1151 = vmatpush1.bf16.msra.mxu0 0
      %1152 = vmatprep.subr.bf16.mxu0 0
      %1153 = vmatpush1.bf16.msra.mxu0 0
      %1154 = vmatprep.subr.bf16.mxu0 0
      %1155 = vmatpush1.bf16.msra.mxu0 0
      %1156 = vmatprep.subr.bf16.mxu0 0
      %1157 = vmatpush1.bf16.msra.mxu0 0
      %1158 = vmatprep.subr.bf16.mxu0 0
      %1159 = vmatpush1.bf16.msra.mxu0 0
      %1160 = vmatprep.mubr.bf16.mxu0 0
      %1161 = vmatmul.mubr.bf16.gmra.mrb[0].mxu0 %v1048
      %v1162 = vpop.f32.mrb[0].mxu0
      %v1163 = vadd.f32 %v858, %v1162
      %v1164 = vpop.f32.mrb[0].mxu0
      %v1165 = vpop.f32.mrb[0].mxu0
      %v1166 = vadd.f32 %v861, %v1165
      %v1167 = vpop.f32.mrb[0].mxu0
      %1168 = vmatprep.mubr.bf16.mxu0 0
      %1169 = vmatmul.mubr.bf16.gmra.mrb[0].mxu0 %v1049
      %v1170 = vpop.f32.mrb[0].mxu0
      %v1171 = vadd.f32 %v866, %v1170
      %v1172 = vpop.f32.mrb[0].mxu0
      %v1173 = vpop.f32.mrb[0].mxu0
      %v1174 = vadd.f32 %v869, %v1173
      %v1175 = vpop.f32.mrb[0].mxu0
      %1176 = vmatprep.mubr.bf16.mxu0 0
      %1177 = vmatmul.mubr.bf16.gmra.mrb[0].mxu0 %v1050
      %v1178 = vpop.f32.mrb[0].mxu0
      %v1179 = vadd.f32 %v874, %v1178
      %v1180 = vpop.f32.mrb[0].mxu0
      %v1181 = vpop.f32.mrb[0].mxu0
      %v1182 = vadd.f32 %v877, %v1181
      %v1183 = vpop.f32.mrb[0].mxu0
      %1184 = vmatprep.mubr.bf16.mxu0 0
      %1185 = vmatmul.mubr.bf16.gmra.mrb[0].mxu0 %v1051
      %v1186 = vpop.f32.mrb[0].mxu0
      %v1187 = vadd.f32 %v882, %v1186
      %v1188 = vpop.f32.mrb[0].mxu0
      %v1189 = vpop.f32.mrb[0].mxu0
      %v1190 = vadd.f32 %v885, %v1189
      %v1191 = vpop.f32.mrb[0].mxu0
      %1192 = vmatprep.mubr.bf16.mxu0 0
      %1193 = vmatmul.mubr.bf16.gmra.mrb[0].mxu0 %v1052
      %v1194 = vpop.f32.mrb[0].mxu0
      %v1195 = vadd.f32 %v890, %v1194
      %v1196 = vpop.f32.mrb[0].mxu0
      %v1197 = vpop.f32.mrb[0].mxu0
      %v1198 = vadd.f32 %v893, %v1197
      %v1199 = vpop.f32.mrb[0].mxu0
      %1200 = vmatprep.mubr.bf16.mxu0 0
      %1201 = vmatmul.mubr.bf16.gmra.mrb[0].mxu0 %v1053
      %v1202 = vpop.f32.mrb[0].mxu0
      %v1203 = vadd.f32 %v898, %v1202
      %v1204 = vpop.f32.mrb[0].mxu0
      %v1205 = vpop.f32.mrb[0].mxu0
      %v1206 = vadd.f32 %v901, %v1205
      %v1207 = vpop.f32.mrb[0].mxu0
      %1208 = vmatprep.mubr.bf16.mxu0 0
      %1209 = vmatmul.mubr.bf16.gmra.mrb[0].mxu0 %v1054
      %v1210 = vpop.f32.mrb[0].mxu0
      %v1211 = vadd.f32 %v906, %v1210
      %v1212 = vpop.f32.mrb[0].mxu0
      %v1213 = vpop.f32.mrb[0].mxu0
      %v1214 = vadd.f32 %v909, %v1213
      %v1215 = vpop.f32.mrb[0].mxu0
      %1216 = vmatprep.mubr.bf16.mxu0 0
      %1217 = vmatmul.mubr.bf16.gmra.mrb[0].mxu0 %v1055
      %v1218 = vpop.f32.mrb[0].mxu0
      %v1219 = vadd.f32 %v914, %v1218
      %v1220 = vpop.f32.mrb[0].mxu0
      %v1221 = vpop.f32.mrb[0].mxu0
      %v1222 = vadd.f32 %v917, %v1221
      %v1223 = vpop.f32.mrb[0].mxu0
      %1224 = vmatprep.mubr.bf16.mxu0 0
      %1225 = vmatmul.mubr.bf16.gmra.mrb[0].mxu0 %v1056
      %v1226 = vpop.f32.mrb[0].mxu0
      %v1227 = vadd.f32 %v922, %v1226
      %v1228 = vpop.f32.mrb[0].mxu0
      %v1229 = vpop.f32.mrb[0].mxu0
      %v1230 = vadd.f32 %v925, %v1229
      %v1231 = vpop.f32.mrb[0].mxu0
      %1232 = vmatprep.mubr.bf16.mxu0 0
      %1233 = vmatmul.mubr.bf16.gmra.mrb[0].mxu0 %v1057
      %v1234 = vpop.f32.mrb[0].mxu0
      %v1235 = vadd.f32 %v930, %v1234
      %v1236 = vpop.f32.mrb[0].mxu0
      %v1237 = vpop.f32.mrb[0].mxu0
      %v1238 = vadd.f32 %v933, %v1237
      %v1239 = vpop.f32.mrb[0].mxu0
      %1240 = vmatprep.mubr.bf16.mxu0 0
      %1241 = vmatmul.mubr.bf16.gmra.mrb[0].mxu0 %v1058
      %v1242 = vpop.f32.mrb[0].mxu0
      %v1243 = vadd.f32 %v938, %v1242
      %v1244 = vpop.f32.mrb[0].mxu0
      %v1245 = vpop.f32.mrb[0].mxu0
      %v1246 = vadd.f32 %v941, %v1245
      %v1247 = vpop.f32.mrb[0].mxu0
      %1248 = vmatprep.mubr.bf16.mxu0 0
      %1249 = vmatmul.mubr.bf16.gmra.mrb[0].mxu0 %v1059
      %v1250 = vpop.f32.mrb[0].mxu0
      %v1251 = vadd.f32 %v946, %v1250
      %v1252 = vpop.f32.mrb[0].mxu0
      %v1253 = vpop.f32.mrb[0].mxu0
      %v1254 = vadd.f32 %v949, %v1253
      %v1255 = vpop.f32.mrb[0].mxu0
      %1256 = vmatprep.mubr.bf16.mxu0 0
      %1257 = vmatmul.mubr.bf16.gmra.mrb[0].mxu0 %v1060
      %v1258 = vpop.f32.mrb[0].mxu0
      %v1259 = vadd.f32 %v954, %v1258
      %v1260 = vpop.f32.mrb[0].mxu0
      %v1261 = vpop.f32.mrb[0].mxu0
      %v1262 = vadd.f32 %v957, %v1261
      %v1263 = vpop.f32.mrb[0].mxu0
      %1264 = vmatprep.mubr.bf16.mxu0 0
      %1265 = vmatmul.mubr.bf16.gmra.mrb[0].mxu0 %v1061
      %v1266 = vpop.f32.mrb[0].mxu0
      %v1267 = vadd.f32 %v962, %v1266
      %v1268 = vpop.f32.mrb[0].mxu0
      %v1269 = vpop.f32.mrb[0].mxu0
      %v1270 = vadd.f32 %v965, %v1269
      %v1271 = vpop.f32.mrb[0].mxu0
      %1272 = vmatprep.mubr.bf16.mxu0 0
      %1273 = vmatmul.mubr.bf16.gmra.mrb[0].mxu0 %v1062
      %v1274 = vpop.f32.mrb[0].mxu0
      %v1275 = vadd.f32 %v970, %v1274
      %v1276 = vpop.f32.mrb[0].mxu0
      %v1277 = vpop.f32.mrb[0].mxu0
      %v1278 = vadd.f32 %v973, %v1277
      %v1279 = vpop.f32.mrb[0].mxu0
      %1280 = vmatprep.mubr.bf16.mxu0 0
      %1281 = vmatmul.mubr.bf16.gmra.mrb[0].mxu0 %v1063
      %v1282 = vpop.f32.mrb[0].mxu0
      %v1283 = vadd.f32 %v978, %v1282
      %v1284 = vpop.f32.mrb[0].mxu0
      %v1285 = vpop.f32.mrb[0].mxu0
      %v1286 = vadd.f32 %v981, %v1285
      %v1287 = vpop.f32.mrb[0].mxu0
      %1288 = vdwg.mxu0
      %v1289 = vld [vmem:[%s230] sm:$0xe]
      %v1290 = vld [vmem:[%s230 + $0xc] sm:$0xe]
      %v1291 = vld [vmem:[%s230 + $0x18] sm:$0xe]
      %v1292 = vld [vmem:[%s230 + $0x24] sm:$0xe]
      %v1293 = vld [vmem:[%s230 + $0x30] sm:$0xe]
      %v1294 = vld [vmem:[%s230 + $0x3c] sm:$0xe]
      %v1295 = vld [vmem:[%s230 + $0x48] sm:$0xe]
      %v1296 = vld [vmem:[%s230 + $0x54] sm:$0xe]
      %v1297 = vld [vmem:[%s230 + $0x60] sm:$0xe]
      %v1298 = vld [vmem:[%s230 + $0x6c] sm:$0xe]
      %v1299 = vld [vmem:[%s230 + $0x78] sm:$0xe]
      %v1300 = vld [vmem:[%s230 + $0x84] sm:$0xe]
      %v1301 = vld [vmem:[%s230 + $0x90] sm:$0xe]
      %v1302 = vld [vmem:[%s230 + $0x9c] sm:$0xe]
      %v1303 = vld [vmem:[%s230 + $0xa8] sm:$0xe]
      %v1304 = vld [vmem:[%s230 + $0xb4] sm:$0xe]
      %vm1337 = vcmask 1042432
      %vm1338 = vcmask 1046532
      %vm1339 = vmor %vm1337, %vm1338
      %v1340 = vrot.slane %v1289, 5
      %v1341 = vrot.slane %v1340, 4
      %v1342 = vrot.slane %v244, 5
      %v1343 = vsel %vm1339, %v1341, %v1342
      %v1344 = vrot.slane %v1342, 4
      %v1345 = vrot.slane %v291, 5
      %v1346 = vsel %vm1339, %v1344, %v1345
      %v1347 = vrot.slane %v1290, 5
      %v1348 = vrot.slane %v1347, 4
      %v1349 = vrot.slane %v246, 5
      %v1350 = vsel %vm1339, %v1348, %v1349
      %v1351 = vrot.slane %v1349, 4
      %v1352 = vrot.slane %v292, 5
      %v1353 = vsel %vm1339, %v1351, %v1352
      %v1354 = vrot.slane %v1291, 5
      %v1355 = vrot.slane %v1354, 4
      %v1356 = vrot.slane %v248, 5
      %v1357 = vsel %vm1339, %v1355, %v1356
      %v1358 = vrot.slane %v1356, 4
      %v1359 = vrot.slane %v293, 5
      %v1360 = vsel %vm1339, %v1358, %v1359
      %v1361 = vrot.slane %v1292, 5
      %v1362 = vrot.slane %v1361, 4
      %v1363 = vrot.slane %v250, 5
      %v1364 = vsel %vm1339, %v1362, %v1363
      %v1365 = vrot.slane %v1363, 4
      %v1366 = vrot.slane %v294, 5
      %v1367 = vsel %vm1339, %v1365, %v1366
      %v1368 = vrot.slane %v1293, 5
      %v1369 = vrot.slane %v1368, 4
      %v1370 = vrot.slane %v252, 5
      %v1371 = vsel %vm1339, %v1369, %v1370
      %v1372 = vrot.slane %v1370, 4
      %v1373 = vrot.slane %v295, 5
      %v1374 = vsel %vm1339, %v1372, %v1373
      %v1375 = vrot.slane %v1294, 5
      %v1376 = vrot.slane %v1375, 4
      %v1377 = vrot.slane %v254, 5
      %v1378 = vsel %vm1339, %v1376, %v1377
      %v1379 = vrot.slane %v1377, 4
      %v1380 = vrot.slane %v296, 5
      %v1381 = vsel %vm1339, %v1379, %v1380
      %v1382 = vrot.slane %v1295, 5
      %v1383 = vrot.slane %v1382, 4
      %v1384 = vrot.slane %v256, 5
      %v1385 = vsel %vm1339, %v1383, %v1384
      %v1386 = vrot.slane %v1384, 4
      %v1387 = vrot.slane %v297, 5
      %v1388 = vsel %vm1339, %v1386, %v1387
      %v1389 = vrot.slane %v1296, 5
      %v1390 = vrot.slane %v1389, 4
      %v1391 = vrot.slane %v258, 5
      %v1392 = vsel %vm1339, %v1390, %v1391
      %v1393 = vrot.slane %v1391, 4
      %v1394 = vrot.slane %v298, 5
      %v1395 = vsel %vm1339, %v1393, %v1394
      %v1396 = vrot.slane %v1297, 5
      %v1397 = vrot.slane %v1396, 4
      %v1398 = vrot.slane %v260, 5
      %v1399 = vsel %vm1339, %v1397, %v1398
      %v1400 = vrot.slane %v1398, 4
      %v1401 = vrot.slane %v299, 5
      %v1402 = vsel %vm1339, %v1400, %v1401
      %v1403 = vrot.slane %v1298, 5
      %v1404 = vrot.slane %v1403, 4
      %v1405 = vrot.slane %v262, 5
      %v1406 = vsel %vm1339, %v1404, %v1405
      %v1407 = vrot.slane %v1405, 4
      %v1408 = vrot.slane %v300, 5
      %v1409 = vsel %vm1339, %v1407, %v1408
      %v1410 = vrot.slane %v1299, 5
      %v1411 = vrot.slane %v1410, 4
      %v1412 = vrot.slane %v264, 5
      %v1413 = vsel %vm1339, %v1411, %v1412
      %v1414 = vrot.slane %v1412, 4
      %v1415 = vrot.slane %v301, 5
      %v1416 = vsel %vm1339, %v1414, %v1415
      %v1417 = vrot.slane %v1300, 5
      %v1418 = vrot.slane %v1417, 4
      %v1419 = vrot.slane %v266, 5
      %v1420 = vsel %vm1339, %v1418, %v1419
      %v1421 = vrot.slane %v1419, 4
      %v1422 = vrot.slane %v302, 5
      %v1423 = vsel %vm1339, %v1421, %v1422
      %v1424 = vrot.slane %v1301, 5
      %v1425 = vrot.slane %v1424, 4
      %v1426 = vrot.slane %v268, 5
      %v1427 = vsel %vm1339, %v1425, %v1426
      %v1428 = vrot.slane %v1426, 4
      %v1429 = vrot.slane %v303, 5
      %v1430 = vsel %vm1339, %v1428, %v1429
      %v1431 = vrot.slane %v1302, 5
      %v1432 = vrot.slane %v1431, 4
      %v1433 = vrot.slane %v270, 5
      %v1434 = vsel %vm1339, %v1432, %v1433
      %v1435 = vrot.slane %v1433, 4
      %v1436 = vrot.slane %v304, 5
      %v1437 = vsel %vm1339, %v1435, %v1436
      %v1438 = vrot.slane %v1303, 5
      %v1439 = vrot.slane %v1438, 4
      %v1440 = vrot.slane %v272, 5
      %v1441 = vsel %vm1339, %v1439, %v1440
      %v1442 = vrot.slane %v1440, 4
      %v1443 = vrot.slane %v305, 5
      %v1444 = vsel %vm1339, %v1442, %v1443
      %v1445 = vrot.slane %v1304, 5
      %v1446 = vrot.slane %v1445, 4
      %v1447 = vrot.slane %v274, 5
      %v1448 = vsel %vm1339, %v1446, %v1447
      %v1449 = vrot.slane %v1447, 4
      %v1450 = vrot.slane %v306, 5
      %v1451 = vsel %vm1339, %v1449, %v1450
      %s1452 = scalar_lea.vmem %s1, 128
      %v1453 = vld [vmem:[%s1452] sm:$0xf]
      %v1454 = vld [vmem:[%s1452 + $0x4] sm:$0xf]
      %v1455 = vld [vmem:[%s1452 + $0x8] sm:$0xf]
      %v1456 = vld [vmem:[%s1452 + $0xc] sm:$0xf]
      %v1457 = vld [vmem:[%s1452 + $0x10] sm:$0xf]
      %v1458 = vld [vmem:[%s1452 + $0x14] sm:$0xf]
      %v1459 = vld [vmem:[%s1452 + $0x18] sm:$0xf]
      %v1460 = vld [vmem:[%s1452 + $0x1c] sm:$0xf]
      %v1461 = vld [vmem:[%s1452 + $0x20] sm:$0xf]
      %v1462 = vld [vmem:[%s1452 + $0x24] sm:$0xf]
      %v1463 = vld [vmem:[%s1452 + $0x28] sm:$0xf]
      %v1464 = vld [vmem:[%s1452 + $0x2c] sm:$0xf]
      %v1465 = vld [vmem:[%s1452 + $0x30] sm:$0xf]
      %v1466 = vld [vmem:[%s1452 + $0x34] sm:$0xf]
      %v1467 = vld [vmem:[%s1452 + $0x38] sm:$0xf]
      %v1468 = vld [vmem:[%s1452 + $0x3c] sm:$0xf]
      %v1469 = vunpack.c.l.b16 %v1343
      %v1470 = vunpack.c.l.b16 %v1346
      %v1471 = vunpack.c.l.b16 %v1350
      %v1472 = vunpack.c.l.b16 %v1353
      %v1473 = vunpack.c.l.b16 %v1357
      %v1474 = vunpack.c.l.b16 %v1360
      %v1475 = vunpack.c.l.b16 %v1364
      %v1476 = vunpack.c.l.b16 %v1367
      %v1477 = vunpack.c.l.b16 %v1371
      %v1478 = vunpack.c.l.b16 %v1374
      %v1479 = vunpack.c.l.b16 %v1378
      %v1480 = vunpack.c.l.b16 %v1381
      %v1481 = vunpack.c.l.b16 %v1385
      %v1482 = vunpack.c.l.b16 %v1388
      %v1483 = vunpack.c.l.b16 %v1392
      %v1484 = vunpack.c.l.b16 %v1395
      %v1485 = vunpack.c.l.b16 %v1399
      %v1486 = vunpack.c.l.b16 %v1402
      %v1487 = vunpack.c.l.b16 %v1406
      %v1488 = vunpack.c.l.b16 %v1409
      %v1489 = vunpack.c.l.b16 %v1413
      %v1490 = vunpack.c.l.b16 %v1416
      %v1491 = vunpack.c.l.b16 %v1420
      %v1492 = vunpack.c.l.b16 %v1423
      %v1493 = vunpack.c.l.b16 %v1427
      %v1494 = vunpack.c.l.b16 %v1430
      %v1495 = vunpack.c.l.b16 %v1434
      %v1496 = vunpack.c.l.b16 %v1437
      %v1497 = vunpack.c.l.b16 %v1441
      %v1498 = vunpack.c.l.b16 %v1444
      %v1499 = vunpack.c.l.b16 %v1448
      %v1500 = vunpack.c.l.b16 %v1451
      %v1501 = vpack.c.b16 %v1470, %v1469
      %v1502 = vpack.c.b16 %v1472, %v1471
      %v1503 = vpack.c.b16 %v1474, %v1473
      %v1504 = vpack.c.b16 %v1476, %v1475
      %v1505 = vpack.c.b16 %v1478, %v1477
      %v1506 = vpack.c.b16 %v1480, %v1479
      %v1507 = vpack.c.b16 %v1482, %v1481
      %v1508 = vpack.c.b16 %v1484, %v1483
      %v1509 = vpack.c.b16 %v1486, %v1485
      %v1510 = vpack.c.b16 %v1488, %v1487
      %v1511 = vpack.c.b16 %v1490, %v1489
      %v1512 = vpack.c.b16 %v1492, %v1491
      %v1513 = vpack.c.b16 %v1494, %v1493
      %v1514 = vpack.c.b16 %v1496, %v1495
      %v1515 = vpack.c.b16 %v1498, %v1497
      %v1516 = vpack.c.b16 %v1500, %v1499
      %v1549 = vunpack.c.l.b16 %v1453
      %v1550 = vunpack.c.l.b16 %v1454
      %v1551 = vunpack.c.l.b16 %v1455
      %v1552 = vunpack.c.l.b16 %v1456
      %v1553 = vunpack.c.l.b16 %v1457
      %v1554 = vunpack.c.l.b16 %v1458
      %v1555 = vunpack.c.l.b16 %v1459
      %v1556 = vunpack.c.l.b16 %v1460
      %v1557 = vunpack.c.l.b16 %v1461
      %v1558 = vunpack.c.l.b16 %v1462
      %v1559 = vunpack.c.l.b16 %v1463
      %v1560 = vunpack.c.l.b16 %v1464
      %v1561 = vunpack.c.l.b16 %v1465
      %v1562 = vunpack.c.l.b16 %v1466
      %v1563 = vunpack.c.l.b16 %v1467
      %v1564 = vunpack.c.l.b16 %v1468
      %v1565 = vpack.c.b16 %v1550, %v1549
      %v1566 = vpack.c.b16 %v1552, %v1551
      %v1567 = vpack.c.b16 %v1554, %v1553
      %v1568 = vpack.c.b16 %v1556, %v1555
      %v1569 = vpack.c.b16 %v1558, %v1557
      %v1570 = vpack.c.b16 %v1560, %v1559
      %v1571 = vpack.c.b16 %v1562, %v1561
      %v1572 = vpack.c.b16 %v1564, %v1563
      %1581 = vmatprep.subr.bf16.mxu0 0
      %1582 = vmatpush1.bf16.msra.mxu0 %v1565
      %1583 = vmatprep.subr.bf16.mxu0 0
      %1584 = vmatpush1.bf16.msra.mxu0 %v1566
      %1585 = vmatprep.subr.bf16.mxu0 0
      %1586 = vmatpush1.bf16.msra.mxu0 %v1567
      %1587 = vmatprep.subr.bf16.mxu0 0
      %1588 = vmatpush1.bf16.msra.mxu0 %v1568
      %1589 = vmatprep.subr.bf16.mxu0 0
      %1590 = vmatpush1.bf16.msra.mxu0 %v1569
      %1591 = vmatprep.subr.bf16.mxu0 0
      %1592 = vmatpush1.bf16.msra.mxu0 %v1570
      %1593 = vmatprep.subr.bf16.mxu0 0
      %1594 = vmatpush1.bf16.msra.mxu0 %v1571
      %1595 = vmatprep.subr.bf16.mxu0 0
      %1596 = vmatpush1.bf16.msra.mxu0 %v1572
      %1597 = vmatprep.subr.bf16.mxu0 0
      %1598 = vmatpush1.bf16.msra.mxu0 0
      %1599 = vmatprep.subr.bf16.mxu0 0
      %1600 = vmatpush1.bf16.msra.mxu0 0
      %1601 = vmatprep.subr.bf16.mxu0 0
      %1602 = vmatpush1.bf16.msra.mxu0 0
      %1603 = vmatprep.subr.bf16.mxu0 0
      %1604 = vmatpush1.bf16.msra.mxu0 0
      %1605 = vmatprep.subr.bf16.mxu0 0
      %1606 = vmatpush1.bf16.msra.mxu0 0
      %1607 = vmatprep.subr.bf16.mxu0 0
      %1608 = vmatpush1.bf16.msra.mxu0 0
      %1609 = vmatprep.subr.bf16.mxu0 0
      %1610 = vmatpush1.bf16.msra.mxu0 0
      %1611 = vmatprep.subr.bf16.mxu0 0
      %1612 = vmatpush1.bf16.msra.mxu0 0
      %1613 = vmatprep.mubr.bf16.mxu0 0
      %1614 = vmatmul.mubr.bf16.gmra.mrb[0].mxu0 %v1501
      %v1615 = vpop.f32.mrb[0].mxu0
      %v1616 = vadd.f32 0.0, %v1615
      %v1617 = vpop.f32.mrb[0].mxu0
      %v1618 = vpop.f32.mrb[0].mxu0
      %v1619 = vadd.f32 0.0, %v1618
      %v1620 = vpop.f32.mrb[0].mxu0
      %1621 = vmatprep.mubr.bf16.mxu0 0
      %1622 = vmatmul.mubr.bf16.gmra.mrb[0].mxu0 %v1502
      %v1623 = vpop.f32.mrb[0].mxu0
      %v1624 = vadd.f32 0.0, %v1623
      %v1625 = vpop.f32.mrb[0].mxu0
      %v1626 = vpop.f32.mrb[0].mxu0
      %v1627 = vadd.f32 0.0, %v1626
      %v1628 = vpop.f32.mrb[0].mxu0
      %1629 = vmatprep.mubr.bf16.mxu0 0
      %1630 = vmatmul.mubr.bf16.gmra.mrb[0].mxu0 %v1503
      %v1631 = vpop.f32.mrb[0].mxu0
      %v1632 = vadd.f32 0.0, %v1631
      %v1633 = vpop.f32.mrb[0].mxu0
      %v1634 = vpop.f32.mrb[0].mxu0
      %v1635 = vadd.f32 0.0, %v1634
      %v1636 = vpop.f32.mrb[0].mxu0
      %1637 = vmatprep.mubr.bf16.mxu0 0
      %1638 = vmatmul.mubr.bf16.gmra.mrb[0].mxu0 %v1504
      %v1639 = vpop.f32.mrb[0].mxu0
      %v1640 = vadd.f32 0.0, %v1639
      %v1641 = vpop.f32.mrb[0].mxu0
      %v1642 = vpop.f32.mrb[0].mxu0
      %v1643 = vadd.f32 0.0, %v1642
      %v1644 = vpop.f32.mrb[0].mxu0
      %1645 = vmatprep.mubr.bf16.mxu0 0
      %1646 = vmatmul.mubr.bf16.gmra.mrb[0].mxu0 %v1505
      %v1647 = vpop.f32.mrb[0].mxu0
      %v1648 = vadd.f32 0.0, %v1647
      %v1649 = vpop.f32.mrb[0].mxu0
      %v1650 = vpop.f32.mrb[0].mxu0
      %v1651 = vadd.f32 0.0, %v1650
      %v1652 = vpop.f32.mrb[0].mxu0
      %1653 = vmatprep.mubr.bf16.mxu0 0
      %1654 = vmatmul.mubr.bf16.gmra.mrb[0].mxu0 %v1506
      %v1655 = vpop.f32.mrb[0].mxu0
      %v1656 = vadd.f32 0.0, %v1655
      %v1657 = vpop.f32.mrb[0].mxu0
      %v1658 = vpop.f32.mrb[0].mxu0
      %v1659 = vadd.f32 0.0, %v1658
      %v1660 = vpop.f32.mrb[0].mxu0
      %1661 = vmatprep.mubr.bf16.mxu0 0
      %1662 = vmatmul.mubr.bf16.gmra.mrb[0].mxu0 %v1507
      %v1663 = vpop.f32.mrb[0].mxu0
      %v1664 = vadd.f32 0.0, %v1663
      %v1665 = vpop.f32.mrb[0].mxu0
      %v1666 = vpop.f32.mrb[0].mxu0
      %v1667 = vadd.f32 0.0, %v1666
      %v1668 = vpop.f32.mrb[0].mxu0
      %1669 = vmatprep.mubr.bf16.mxu0 0
      %1670 = vmatmul.mubr.bf16.gmra.mrb[0].mxu0 %v1508
      %v1671 = vpop.f32.mrb[0].mxu0
      %v1672 = vadd.f32 0.0, %v1671
      %v1673 = vpop.f32.mrb[0].mxu0
      %v1674 = vpop.f32.mrb[0].mxu0
      %v1675 = vadd.f32 0.0, %v1674
      %v1676 = vpop.f32.mrb[0].mxu0
      %1677 = vmatprep.mubr.bf16.mxu0 0
      %1678 = vmatmul.mubr.bf16.gmra.mrb[0].mxu0 %v1509
      %v1679 = vpop.f32.mrb[0].mxu0
      %v1680 = vadd.f32 0.0, %v1679
      %v1681 = vpop.f32.mrb[0].mxu0
      %v1682 = vpop.f32.mrb[0].mxu0
      %v1683 = vadd.f32 0.0, %v1682
      %v1684 = vpop.f32.mrb[0].mxu0
      %1685 = vmatprep.mubr.bf16.mxu0 0
      %1686 = vmatmul.mubr.bf16.gmra.mrb[0].mxu0 %v1510
      %v1687 = vpop.f32.mrb[0].mxu0
      %v1688 = vadd.f32 0.0, %v1687
      %v1689 = vpop.f32.mrb[0].mxu0
      %v1690 = vpop.f32.mrb[0].mxu0
      %v1691 = vadd.f32 0.0, %v1690
      %v1692 = vpop.f32.mrb[0].mxu0
      %1693 = vmatprep.mubr.bf16.mxu0 0
      %1694 = vmatmul.mubr.bf16.gmra.mrb[0].mxu0 %v1511
      %v1695 = vpop.f32.mrb[0].mxu0
      %v1696 = vadd.f32 0.0, %v1695
      %v1697 = vpop.f32.mrb[0].mxu0
      %v1698 = vpop.f32.mrb[0].mxu0
      %v1699 = vadd.f32 0.0, %v1698
      %v1700 = vpop.f32.mrb[0].mxu0
      %1701 = vmatprep.mubr.bf16.mxu0 0
      %1702 = vmatmul.mubr.bf16.gmra.mrb[0].mxu0 %v1512
      %v1703 = vpop.f32.mrb[0].mxu0
      %v1704 = vadd.f32 0.0, %v1703
      %v1705 = vpop.f32.mrb[0].mxu0
      %v1706 = vpop.f32.mrb[0].mxu0
      %v1707 = vadd.f32 0.0, %v1706
      %v1708 = vpop.f32.mrb[0].mxu0
      %1709 = vmatprep.mubr.bf16.mxu0 0
      %1710 = vmatmul.mubr.bf16.gmra.mrb[0].mxu0 %v1513
      %v1711 = vpop.f32.mrb[0].mxu0
      %v1712 = vadd.f32 0.0, %v1711
      %v1713 = vpop.f32.mrb[0].mxu0
      %v1714 = vpop.f32.mrb[0].mxu0
      %v1715 = vadd.f32 0.0, %v1714
      %v1716 = vpop.f32.mrb[0].mxu0
      %1717 = vmatprep.mubr.bf16.mxu0 0
      %1718 = vmatmul.mubr.bf16.gmra.mrb[0].mxu0 %v1514
      %v1719 = vpop.f32.mrb[0].mxu0
      %v1720 = vadd.f32 0.0, %v1719
      %v1721 = vpop.f32.mrb[0].mxu0
      %v1722 = vpop.f32.mrb[0].mxu0
      %v1723 = vadd.f32 0.0, %v1722
      %v1724 = vpop.f32.mrb[0].mxu0
      %1725 = vmatprep.mubr.bf16.mxu0 0
      %1726 = vmatmul.mubr.bf16.gmra.mrb[0].mxu0 %v1515
      %v1727 = vpop.f32.mrb[0].mxu0
      %v1728 = vadd.f32 0.0, %v1727
      %v1729 = vpop.f32.mrb[0].mxu0
      %v1730 = vpop.f32.mrb[0].mxu0
      %v1731 = vadd.f32 0.0, %v1730
      %v1732 = vpop.f32.mrb[0].mxu0
      %1733 = vmatprep.mubr.bf16.mxu0 0
      %1734 = vmatmul.mubr.bf16.gmra.mrb[0].mxu0 %v1516
      %v1735 = vpop.f32.mrb[0].mxu0
      %v1736 = vadd.f32 0.0, %v1735
      %v1737 = vpop.f32.mrb[0].mxu0
      %v1738 = vpop.f32.mrb[0].mxu0
      %v1739 = vadd.f32 0.0, %v1738
      %v1740 = vpop.f32.mrb[0].mxu0
      %1741 = vdwg.mxu0
      %v1742 = vadd.f32 %v1163, %v1616
      %v1743 = vadd.f32 %v1166, %v1619
      %v1744 = vadd.f32 %v1171, %v1624
      %v1745 = vadd.f32 %v1174, %v1627
      %v1746 = vadd.f32 %v1179, %v1632
      %v1747 = vadd.f32 %v1182, %v1635
      %v1748 = vadd.f32 %v1187, %v1640
      %v1749 = vadd.f32 %v1190, %v1643
      %v1750 = vadd.f32 %v1195, %v1648
      %v1751 = vadd.f32 %v1198, %v1651
      %v1752 = vadd.f32 %v1203, %v1656
      %v1753 = vadd.f32 %v1206, %v1659
      %v1754 = vadd.f32 %v1211, %v1664
      %v1755 = vadd.f32 %v1214, %v1667
      %v1756 = vadd.f32 %v1219, %v1672
      %v1757 = vadd.f32 %v1222, %v1675
      %v1758 = vadd.f32 %v1227, %v1680
      %v1759 = vadd.f32 %v1230, %v1683
      %v1760 = vadd.f32 %v1235, %v1688
      %v1761 = vadd.f32 %v1238, %v1691
      %v1762 = vadd.f32 %v1243, %v1696
      %v1763 = vadd.f32 %v1246, %v1699
      %v1764 = vadd.f32 %v1251, %v1704
      %v1765 = vadd.f32 %v1254, %v1707
      %v1766 = vadd.f32 %v1259, %v1712
      %v1767 = vadd.f32 %v1262, %v1715
      %v1768 = vadd.f32 %v1267, %v1720
      %v1769 = vadd.f32 %v1270, %v1723
      %v1770 = vadd.f32 %v1275, %v1728
      %v1771 = vadd.f32 %v1278, %v1731
      %v1772 = vadd.f32 %v1283, %v1736
      %v1773 = vadd.f32 %v1286, %v1739
      %s1774 = scalar_lea.vmem %s230, 12
      %v1775 = vld [vmem:[%s1774] sm:$0xf]
      %v1776 = vld [vmem:[%s1774 + $0x4] sm:$0xf]
      %v1777 = vld [vmem:[%s1774 + $0xc] sm:$0xf]
      %v1778 = vld [vmem:[%s1774 + $0x10] sm:$0xf]
      %v1779 = vld [vmem:[%s1774 + $0x18] sm:$0xf]
      %v1780 = vld [vmem:[%s1774 + $0x1c] sm:$0xf]
      %v1781 = vld [vmem:[%s1774 + $0x24] sm:$0xf]
      %v1782 = vld [vmem:[%s1774 + $0x28] sm:$0xf]
      %v1783 = vld [vmem:[%s1774 + $0x30] sm:$0xf]
      %v1784 = vld [vmem:[%s1774 + $0x34] sm:$0xf]
      %v1785 = vld [vmem:[%s1774 + $0x3c] sm:$0xf]
      %v1786 = vld [vmem:[%s1774 + $0x40] sm:$0xf]
      %v1787 = vld [vmem:[%s1774 + $0x48] sm:$0xf]
      %v1788 = vld [vmem:[%s1774 + $0x4c] sm:$0xf]
      %v1789 = vld [vmem:[%s1774 + $0x54] sm:$0xf]
      %v1790 = vld [vmem:[%s1774 + $0x58] sm:$0xf]
      %v1791 = vld [vmem:[%s1774 + $0x60] sm:$0xf]
      %v1792 = vld [vmem:[%s1774 + $0x64] sm:$0xf]
      %v1793 = vld [vmem:[%s1774 + $0x6c] sm:$0xf]
      %v1794 = vld [vmem:[%s1774 + $0x70] sm:$0xf]
      %v1795 = vld [vmem:[%s1774 + $0x78] sm:$0xf]
      %v1796 = vld [vmem:[%s1774 + $0x7c] sm:$0xf]
      %v1797 = vld [vmem:[%s1774 + $0x84] sm:$0xf]
      %v1798 = vld [vmem:[%s1774 + $0x88] sm:$0xf]
      %v1799 = vld [vmem:[%s1774 + $0x90] sm:$0xf]
      %v1800 = vld [vmem:[%s1774 + $0x94] sm:$0xf]
      %v1801 = vld [vmem:[%s1774 + $0x9c] sm:$0xf]
      %v1802 = vld [vmem:[%s1774 + $0xa0] sm:$0xf]
      %v1803 = vld [vmem:[%s1774 + $0xa8] sm:$0xf]
      %v1804 = vld [vmem:[%s1774 + $0xac] sm:$0xf]
      %v1805 = vld [vmem:[%s1774 + $0xb4] sm:$0xf]
      %v1806 = vld [vmem:[%s1774 + $0xb8] sm:$0xf]
      %s1807 = scalar_lea.vmem %s1, 192
      %v1808 = vld [vmem:[%s1807] sm:$0xf]
      %v1809 = vld [vmem:[%s1807 + $0x4] sm:$0xf]
      %v1810 = vld [vmem:[%s1807 + $0x8] sm:$0xf]
      %v1811 = vld [vmem:[%s1807 + $0xc] sm:$0xf]
      %v1812 = vld [vmem:[%s1807 + $0x10] sm:$0xf]
      %v1813 = vld [vmem:[%s1807 + $0x14] sm:$0xf]
      %v1814 = vld [vmem:[%s1807 + $0x18] sm:$0xf]
      %v1815 = vld [vmem:[%s1807 + $0x1c] sm:$0xf]
      %v1816 = vld [vmem:[%s1807 + $0x20] sm:$0xf]
      %v1817 = vld [vmem:[%s1807 + $0x24] sm:$0xf]
      %v1818 = vld [vmem:[%s1807 + $0x28] sm:$0xf]
      %v1819 = vld [vmem:[%s1807 + $0x2c] sm:$0xf]
      %v1820 = vld [vmem:[%s1807 + $0x30] sm:$0xf]
      %v1821 = vld [vmem:[%s1807 + $0x34] sm:$0xf]
      %v1822 = vld [vmem:[%s1807 + $0x38] sm:$0xf]
      %v1823 = vld [vmem:[%s1807 + $0x3c] sm:$0xf]
      %v1856 = vunpack.c.l.b16 %v1775
      %v1857 = vunpack.c.l.b16 %v1776
      %v1858 = vunpack.c.l.b16 %v1777
      %v1859 = vunpack.c.l.b16 %v1778
      %v1860 = vunpack.c.l.b16 %v1779
      %v1861 = vunpack.c.l.b16 %v1780
      %v1862 = vunpack.c.l.b16 %v1781
      %v1863 = vunpack.c.l.b16 %v1782
      %v1864 = vunpack.c.l.b16 %v1783
      %v1865 = vunpack.c.l.b16 %v1784
      %v1866 = vunpack.c.l.b16 %v1785
      %v1867 = vunpack.c.l.b16 %v1786
      %v1868 = vunpack.c.l.b16 %v1787
      %v1869 = vunpack.c.l.b16 %v1788
      %v1870 = vunpack.c.l.b16 %v1789
      %v1871 = vunpack.c.l.b16 %v1790
      %v1872 = vunpack.c.l.b16 %v1791
      %v1873 = vunpack.c.l.b16 %v1792
      %v1874 = vunpack.c.l.b16 %v1793
      %v1875 = vunpack.c.l.b16 %v1794
      %v1876 = vunpack.c.l.b16 %v1795
      %v1877 = vunpack.c.l.b16 %v1796
      %v1878 = vunpack.c.l.b16 %v1797
      %v1879 = vunpack.c.l.b16 %v1798
      %v1880 = vunpack.c.l.b16 %v1799
      %v1881 = vunpack.c.l.b16 %v1800
      %v1882 = vunpack.c.l.b16 %v1801
      %v1883 = vunpack.c.l.b16 %v1802
      %v1884 = vunpack.c.l.b16 %v1803
      %v1885 = vunpack.c.l.b16 %v1804
      %v1886 = vunpack.c.l.b16 %v1805
      %v1887 = vunpack.c.l.b16 %v1806
      %v1888 = vpack.c.b16 %v1857, %v1856
      %v1889 = vpack.c.b16 %v1859, %v1858
      %v1890 = vpack.c.b16 %v1861, %v1860
      %v1891 = vpack.c.b16 %v1863, %v1862
      %v1892 = vpack.c.b16 %v1865, %v1864
      %v1893 = vpack.c.b16 %v1867, %v1866
      %v1894 = vpack.c.b16 %v1869, %v1868
      %v1895 = vpack.c.b16 %v1871, %v1870
      %v1896 = vpack.c.b16 %v1873, %v1872
      %v1897 = vpack.c.b16 %v1875, %v1874
      %v1898 = vpack.c.b16 %v1877, %v1876
      %v1899 = vpack.c.b16 %v1879, %v1878
      %v1900 = vpack.c.b16 %v1881, %v1880
      %v1901 = vpack.c.b16 %v1883, %v1882
      %v1902 = vpack.c.b16 %v1885, %v1884
      %v1903 = vpack.c.b16 %v1887, %v1886
      %v1936 = vunpack.c.l.b16 %v1808
      %v1937 = vunpack.c.l.b16 %v1809
      %v1938 = vunpack.c.l.b16 %v1810
      %v1939 = vunpack.c.l.b16 %v1811
      %v1940 = vunpack.c.l.b16 %v1812
      %v1941 = vunpack.c.l.b16 %v1813
      %v1942 = vunpack.c.l.b16 %v1814
      %v1943 = vunpack.c.l.b16 %v1815
      %v1944 = vunpack.c.l.b16 %v1816
      %v1945 = vunpack.c.l.b16 %v1817
      %v1946 = vunpack.c.l.b16 %v1818
      %v1947 = vunpack.c.l.b16 %v1819
      %v1948 = vunpack.c.l.b16 %v1820
      %v1949 = vunpack.c.l.b16 %v1821
      %v1950 = vunpack.c.l.b16 %v1822
      %v1951 = vunpack.c.l.b16 %v1823
      %v1952 = vpack.c.b16 %v1937, %v1936
      %v1953 = vpack.c.b16 %v1939, %v1938
      %v1954 = vpack.c.b16 %v1941, %v1940
      %v1955 = vpack.c.b16 %v1943, %v1942
      %v1956 = vpack.c.b16 %v1945, %v1944
      %v1957 = vpack.c.b16 %v1947, %v1946
      %v1958 = vpack.c.b16 %v1949, %v1948
      %v1959 = vpack.c.b16 %v1951, %v1950
      %1968 = vmatprep.subr.bf16.mxu0 0
      %1969 = vmatpush1.bf16.msra.mxu0 %v1952
      %1970 = vmatprep.subr.bf16.mxu0 0
      %1971 = vmatpush1.bf16.msra.mxu0 %v1953
      %1972 = vmatprep.subr.bf16.mxu0 0
      %1973 = vmatpush1.bf16.msra.mxu0 %v1954
      %1974 = vmatprep.subr.bf16.mxu0 0
      %1975 = vmatpush1.bf16.msra.mxu0 %v1955
      %1976 = vmatprep.subr.bf16.mxu0 0
      %1977 = vmatpush1.bf16.msra.mxu0 %v1956
      %1978 = vmatprep.subr.bf16.mxu0 0
      %1979 = vmatpush1.bf16.msra.mxu0 %v1957
      %1980 = vmatprep.subr.bf16.mxu0 0
      %1981 = vmatpush1.bf16.msra.mxu0 %v1958
      %1982 = vmatprep.subr.bf16.mxu0 0
      %1983 = vmatpush1.bf16.msra.mxu0 %v1959
      %1984 = vmatprep.subr.bf16.mxu0 0
      %1985 = vmatpush1.bf16.msra.mxu0 0
      %1986 = vmatprep.subr.bf16.mxu0 0
      %1987 = vmatpush1.bf16.msra.mxu0 0
      %1988 = vmatprep.subr.bf16.mxu0 0
      %1989 = vmatpush1.bf16.msra.mxu0 0
      %1990 = vmatprep.subr.bf16.mxu0 0
      %1991 = vmatpush1.bf16.msra.mxu0 0
      %1992 = vmatprep.subr.bf16.mxu0 0
      %1993 = vmatpush1.bf16.msra.mxu0 0
      %1994 = vmatprep.subr.bf16.mxu0 0
      %1995 = vmatpush1.bf16.msra.mxu0 0
      %1996 = vmatprep.subr.bf16.mxu0 0
      %1997 = vmatpush1.bf16.msra.mxu0 0
      %1998 = vmatprep.subr.bf16.mxu0 0
      %1999 = vmatpush1.bf16.msra.mxu0 0
      %2000 = vmatprep.mubr.bf16.mxu0 0
      %2001 = vmatmul.mubr.bf16.gmra.mrb[0].mxu0 %v1888
      %v2002 = vpop.f32.mrb[0].mxu0
      %v2003 = vadd.f32 0.0, %v2002
      %v2004 = vpop.f32.mrb[0].mxu0
      %v2005 = vpop.f32.mrb[0].mxu0
      %v2006 = vadd.f32 0.0, %v2005
      %v2007 = vpop.f32.mrb[0].mxu0
      %2008 = vmatprep.mubr.bf16.mxu0 0
      %2009 = vmatmul.mubr.bf16.gmra.mrb[0].mxu0 %v1889
      %v2010 = vpop.f32.mrb[0].mxu0
      %v2011 = vadd.f32 0.0, %v2010
      %v2012 = vpop.f32.mrb[0].mxu0
      %v2013 = vpop.f32.mrb[0].mxu0
      %v2014 = vadd.f32 0.0, %v2013
      %v2015 = vpop.f32.mrb[0].mxu0
      %2016 = vmatprep.mubr.bf16.mxu0 0
      %2017 = vmatmul.mubr.bf16.gmra.mrb[0].mxu0 %v1890
      %v2018 = vpop.f32.mrb[0].mxu0
      %v2019 = vadd.f32 0.0, %v2018
      %v2020 = vpop.f32.mrb[0].mxu0
      %v2021 = vpop.f32.mrb[0].mxu0
      %v2022 = vadd.f32 0.0, %v2021
      %v2023 = vpop.f32.mrb[0].mxu0
      %2024 = vmatprep.mubr.bf16.mxu0 0
      %2025 = vmatmul.mubr.bf16.gmra.mrb[0].mxu0 %v1891
      %v2026 = vpop.f32.mrb[0].mxu0
      %v2027 = vadd.f32 0.0, %v2026
      %v2028 = vpop.f32.mrb[0].mxu0
      %v2029 = vpop.f32.mrb[0].mxu0
      %v2030 = vadd.f32 0.0, %v2029
      %v2031 = vpop.f32.mrb[0].mxu0
      %2032 = vmatprep.mubr.bf16.mxu0 0
      %2033 = vmatmul.mubr.bf16.gmra.mrb[0].mxu0 %v1892
      %v2034 = vpop.f32.mrb[0].mxu0
      %v2035 = vadd.f32 0.0, %v2034
      %v2036 = vpop.f32.mrb[0].mxu0
      %v2037 = vpop.f32.mrb[0].mxu0
      %v2038 = vadd.f32 0.0, %v2037
      %v2039 = vpop.f32.mrb[0].mxu0
      %2040 = vmatprep.mubr.bf16.mxu0 0
      %2041 = vmatmul.mubr.bf16.gmra.mrb[0].mxu0 %v1893
      %v2042 = vpop.f32.mrb[0].mxu0
      %v2043 = vadd.f32 0.0, %v2042
      %v2044 = vpop.f32.mrb[0].mxu0
      %v2045 = vpop.f32.mrb[0].mxu0
      %v2046 = vadd.f32 0.0, %v2045
      %v2047 = vpop.f32.mrb[0].mxu0
      %2048 = vmatprep.mubr.bf16.mxu0 0
      %2049 = vmatmul.mubr.bf16.gmra.mrb[0].mxu0 %v1894
      %v2050 = vpop.f32.mrb[0].mxu0
      %v2051 = vadd.f32 0.0, %v2050
      %v2052 = vpop.f32.mrb[0].mxu0
      %v2053 = vpop.f32.mrb[0].mxu0
      %v2054 = vadd.f32 0.0, %v2053
      %v2055 = vpop.f32.mrb[0].mxu0
      %2056 = vmatprep.mubr.bf16.mxu0 0
      %2057 = vmatmul.mubr.bf16.gmra.mrb[0].mxu0 %v1895
      %v2058 = vpop.f32.mrb[0].mxu0
      %v2059 = vadd.f32 0.0, %v2058
      %v2060 = vpop.f32.mrb[0].mxu0
      %v2061 = vpop.f32.mrb[0].mxu0
      %v2062 = vadd.f32 0.0, %v2061
      %v2063 = vpop.f32.mrb[0].mxu0
      %2064 = vmatprep.mubr.bf16.mxu0 0
      %2065 = vmatmul.mubr.bf16.gmra.mrb[0].mxu0 %v1896
      %v2066 = vpop.f32.mrb[0].mxu0
      %v2067 = vadd.f32 0.0, %v2066
      %v2068 = vpop.f32.mrb[0].mxu0
      %v2069 = vpop.f32.mrb[0].mxu0
      %v2070 = vadd.f32 0.0, %v2069
      %v2071 = vpop.f32.mrb[0].mxu0
      %2072 = vmatprep.mubr.bf16.mxu0 0
      %2073 = vmatmul.mubr.bf16.gmra.mrb[0].mxu0 %v1897
      %v2074 = vpop.f32.mrb[0].mxu0
      %v2075 = vadd.f32 0.0, %v2074
      %v2076 = vpop.f32.mrb[0].mxu0
      %v2077 = vpop.f32.mrb[0].mxu0
      %v2078 = vadd.f32 0.0, %v2077
      %v2079 = vpop.f32.mrb[0].mxu0
      %2080 = vmatprep.mubr.bf16.mxu0 0
      %2081 = vmatmul.mubr.bf16.gmra.mrb[0].mxu0 %v1898
      %v2082 = vpop.f32.mrb[0].mxu0
      %v2083 = vadd.f32 0.0, %v2082
      %v2084 = vpop.f32.mrb[0].mxu0
      %v2085 = vpop.f32.mrb[0].mxu0
      %v2086 = vadd.f32 0.0, %v2085
      %v2087 = vpop.f32.mrb[0].mxu0
      %2088 = vmatprep.mubr.bf16.mxu0 0
      %2089 = vmatmul.mubr.bf16.gmra.mrb[0].mxu0 %v1899
      %v2090 = vpop.f32.mrb[0].mxu0
      %v2091 = vadd.f32 0.0, %v2090
      %v2092 = vpop.f32.mrb[0].mxu0
      %v2093 = vpop.f32.mrb[0].mxu0
      %v2094 = vadd.f32 0.0, %v2093
      %v2095 = vpop.f32.mrb[0].mxu0
      %2096 = vmatprep.mubr.bf16.mxu0 0
      %2097 = vmatmul.mubr.bf16.gmra.mrb[0].mxu0 %v1900
      %v2098 = vpop.f32.mrb[0].mxu0
      %v2099 = vadd.f32 0.0, %v2098
      %v2100 = vpop.f32.mrb[0].mxu0
      %v2101 = vpop.f32.mrb[0].mxu0
      %v2102 = vadd.f32 0.0, %v2101
      %v2103 = vpop.f32.mrb[0].mxu0
      %2104 = vmatprep.mubr.bf16.mxu0 0
      %2105 = vmatmul.mubr.bf16.gmra.mrb[0].mxu0 %v1901
      %v2106 = vpop.f32.mrb[0].mxu0
      %v2107 = vadd.f32 0.0, %v2106
      %v2108 = vpop.f32.mrb[0].mxu0
      %v2109 = vpop.f32.mrb[0].mxu0
      %v2110 = vadd.f32 0.0, %v2109
      %v2111 = vpop.f32.mrb[0].mxu0
      %2112 = vmatprep.mubr.bf16.mxu0 0
      %2113 = vmatmul.mubr.bf16.gmra.mrb[0].mxu0 %v1902
      %v2114 = vpop.f32.mrb[0].mxu0
      %v2115 = vadd.f32 0.0, %v2114
      %v2116 = vpop.f32.mrb[0].mxu0
      %v2117 = vpop.f32.mrb[0].mxu0
      %v2118 = vadd.f32 0.0, %v2117
      %v2119 = vpop.f32.mrb[0].mxu0
      %2120 = vmatprep.mubr.bf16.mxu0 0
      %2121 = vmatmul.mubr.bf16.gmra.mrb[0].mxu0 %v1903
      %v2122 = vpop.f32.mrb[0].mxu0
      %v2123 = vadd.f32 0.0, %v2122
      %v2124 = vpop.f32.mrb[0].mxu0
      %v2125 = vpop.f32.mrb[0].mxu0
      %v2126 = vadd.f32 0.0, %v2125
      %v2127 = vpop.f32.mrb[0].mxu0
      %2128 = vdwg.mxu0
      %v2129 = vadd.f32 %v1742, %v2003
      %v2130 = vadd.f32 %v1743, %v2006
      %v2131 = vadd.f32 %v1744, %v2011
      %v2132 = vadd.f32 %v1745, %v2014
      %v2133 = vadd.f32 %v1746, %v2019
      %v2134 = vadd.f32 %v1747, %v2022
      %v2135 = vadd.f32 %v1748, %v2027
      %v2136 = vadd.f32 %v1749, %v2030
      %v2137 = vadd.f32 %v1750, %v2035
      %v2138 = vadd.f32 %v1751, %v2038
      %v2139 = vadd.f32 %v1752, %v2043
      %v2140 = vadd.f32 %v1753, %v2046
      %v2141 = vadd.f32 %v1754, %v2051
      %v2142 = vadd.f32 %v1755, %v2054
      %v2143 = vadd.f32 %v1756, %v2059
      %v2144 = vadd.f32 %v1757, %v2062
      %v2145 = vadd.f32 %v1758, %v2067
      %v2146 = vadd.f32 %v1759, %v2070
      %v2147 = vadd.f32 %v1760, %v2075
      %v2148 = vadd.f32 %v1761, %v2078
      %v2149 = vadd.f32 %v1762, %v2083
      %v2150 = vadd.f32 %v1763, %v2086
      %v2151 = vadd.f32 %v1764, %v2091
      %v2152 = vadd.f32 %v1765, %v2094
      %v2153 = vadd.f32 %v1766, %v2099
      %v2154 = vadd.f32 %v1767, %v2102
      %v2155 = vadd.f32 %v1768, %v2107
      %v2156 = vadd.f32 %v1769, %v2110
      %v2157 = vadd.f32 %v1770, %v2115
      %v2158 = vadd.f32 %v1771, %v2118
      %v2159 = vadd.f32 %v1772, %v2123
      %v2160 = vadd.f32 %v1773, %v2126
      %v2161 = vld [vmem:[%s1774] sm:$0xf]
      %v2162 = vld [vmem:[%s1774 + $0x4] sm:$0xf]
      %v2163 = vld [vmem:[%s1774 + $0x8] sm:$0x1]
      %v2164 = vld [vmem:[%s1774 + $0xc] sm:$0xf]
      %v2165 = vld [vmem:[%s1774 + $0x10] sm:$0xf]
      %v2166 = vld [vmem:[%s1774 + $0x14] sm:$0x1]
      %v2167 = vld [vmem:[%s1774 + $0x18] sm:$0xf]
      %v2168 = vld [vmem:[%s1774 + $0x1c] sm:$0xf]
      %v2169 = vld [vmem:[%s1774 + $0x20] sm:$0x1]
      %v2170 = vld [vmem:[%s1774 + $0x24] sm:$0xf]
      %v2171 = vld [vmem:[%s1774 + $0x28] sm:$0xf]
      %v2172 = vld [vmem:[%s1774 + $0x2c] sm:$0x1]
      %v2173 = vld [vmem:[%s1774 + $0x30] sm:$0xf]
      %v2174 = vld [vmem:[%s1774 + $0x34] sm:$0xf]
      %v2175 = vld [vmem:[%s1774 + $0x38] sm:$0x1]
      %v2176 = vld [vmem:[%s1774 + $0x3c] sm:$0xf]
      %v2177 = vld [vmem:[%s1774 + $0x40] sm:$0xf]
      %v2178 = vld [vmem:[%s1774 + $0x44] sm:$0x1]
      %v2179 = vld [vmem:[%s1774 + $0x48] sm:$0xf]
      %v2180 = vld [vmem:[%s1774 + $0x4c] sm:$0xf]
      %v2181 = vld [vmem:[%s1774 + $0x50] sm:$0x1]
      %v2182 = vld [vmem:[%s1774 + $0x54] sm:$0xf]
      %v2183 = vld [vmem:[%s1774 + $0x58] sm:$0xf]
      %v2184 = vld [vmem:[%s1774 + $0x5c] sm:$0x1]
      %v2185 = vld [vmem:[%s1774 + $0x60] sm:$0xf]
      %v2186 = vld [vmem:[%s1774 + $0x64] sm:$0xf]
      %v2187 = vld [vmem:[%s1774 + $0x68] sm:$0x1]
      %v2188 = vld [vmem:[%s1774 + $0x6c] sm:$0xf]
      %v2189 = vld [vmem:[%s1774 + $0x70] sm:$0xf]
      %v2190 = vld [vmem:[%s1774 + $0x74] sm:$0x1]
      %v2191 = vld [vmem:[%s1774 + $0x78] sm:$0xf]
      %v2192 = vld [vmem:[%s1774 + $0x7c] sm:$0xf]
      %v2193 = vld [vmem:[%s1774 + $0x80] sm:$0x1]
      %v2194 = vld [vmem:[%s1774 + $0x84] sm:$0xf]
      %v2195 = vld [vmem:[%s1774 + $0x88] sm:$0xf]
      %v2196 = vld [vmem:[%s1774 + $0x8c] sm:$0x1]
      %v2197 = vld [vmem:[%s1774 + $0x90] sm:$0xf]
      %v2198 = vld [vmem:[%s1774 + $0x94] sm:$0xf]
      %v2199 = vld [vmem:[%s1774 + $0x98] sm:$0x1]
      %v2200 = vld [vmem:[%s1774 + $0x9c] sm:$0xf]
      %v2201 = vld [vmem:[%s1774 + $0xa0] sm:$0xf]
      %v2202 = vld [vmem:[%s1774 + $0xa4] sm:$0x1]
      %v2203 = vld [vmem:[%s1774 + $0xa8] sm:$0xf]
      %v2204 = vld [vmem:[%s1774 + $0xac] sm:$0xf]
      %v2205 = vld [vmem:[%s1774 + $0xb0] sm:$0x1]
      %v2206 = vld [vmem:[%s1774 + $0xb4] sm:$0xf]
      %v2207 = vld [vmem:[%s1774 + $0xb8] sm:$0xf]
      %v2208 = vld [vmem:[%s1774 + $0xbc] sm:$0x1]
      %v2210 = vshrl.u32 %v2161, 16
      %v2212 = vrot.slane %v2210, 4
      %v2213 = vshll.u32 %v2161, 16
      %v2215 = vrot.slane %v2213, 5
      %v2216 = vor.u32 %v2212, %v2215
      %v2217 = vrot.slane %v2216, 4
      %v2219 = vshll.u32 %v2162, 16
      %v2221 = vrot.slane %v2219, 5
      %v2222 = vsel %vm309, %v2217, %v2221
      %v2223 = vshrl.u32 %v2162, 16
      %v2225 = vrot.slane %v2223, 4
      %v2226 = vor.u32 %v2225, %v2221
      %v2227 = vrot.slane %v2226, 4
      %v2229 = vshll.u32 %v2163, 16
      %v2231 = vrot.slane %v2229, 5
      %v2232 = vsel %vm309, %v2227, %v2231
      %v2234 = vshrl.u32 %v2164, 16
      %v2236 = vrot.slane %v2234, 4
      %v2237 = vshll.u32 %v2164, 16
      %v2239 = vrot.slane %v2237, 5
      %v2240 = vor.u32 %v2236, %v2239
      %v2241 = vrot.slane %v2240, 4
      %v2243 = vshll.u32 %v2165, 16
      %v2245 = vrot.slane %v2243, 5
      %v2246 = vsel %vm309, %v2241, %v2245
      %v2247 = vshrl.u32 %v2165, 16
      %v2249 = vrot.slane %v2247, 4
      %v2250 = vor.u32 %v2249, %v2245
      %v2251 = vrot.slane %v2250, 4
      %v2253 = vshll.u32 %v2166, 16
      %v2255 = vrot.slane %v2253, 5
      %v2256 = vsel %vm309, %v2251, %v2255
      %v2258 = vshrl.u32 %v2167, 16
      %v2260 = vrot.slane %v2258, 4
      %v2261 = vshll.u32 %v2167, 16
      %v2263 = vrot.slane %v2261, 5
      %v2264 = vor.u32 %v2260, %v2263
      %v2265 = vrot.slane %v2264, 4
      %v2267 = vshll.u32 %v2168, 16
      %v2269 = vrot.slane %v2267, 5
      %v2270 = vsel %vm309, %v2265, %v2269
      %v2271 = vshrl.u32 %v2168, 16
      %v2273 = vrot.slane %v2271, 4
      %v2274 = vor.u32 %v2273, %v2269
      %v2275 = vrot.slane %v2274, 4
      %v2277 = vshll.u32 %v2169, 16
      %v2279 = vrot.slane %v2277, 5
      %v2280 = vsel %vm309, %v2275, %v2279
      %v2282 = vshrl.u32 %v2170, 16
      %v2284 = vrot.slane %v2282, 4
      %v2285 = vshll.u32 %v2170, 16
      %v2287 = vrot.slane %v2285, 5
      %v2288 = vor.u32 %v2284, %v2287
      %v2289 = vrot.slane %v2288, 4
      %v2291 = vshll.u32 %v2171, 16
      %v2293 = vrot.slane %v2291, 5
      %v2294 = vsel %vm309, %v2289, %v2293
      %v2295 = vshrl.u32 %v2171, 16
      %v2297 = vrot.slane %v2295, 4
      %v2298 = vor.u32 %v2297, %v2293
      %v2299 = vrot.slane %v2298, 4
      %v2301 = vshll.u32 %v2172, 16
      %v2303 = vrot.slane %v2301, 5
      %v2304 = vsel %vm309, %v2299, %v2303
      %v2306 = vshrl.u32 %v2173, 16
      %v2308 = vrot.slane %v2306, 4
      %v2309 = vshll.u32 %v2173, 16
      %v2311 = vrot.slane %v2309, 5
      %v2312 = vor.u32 %v2308, %v2311
      %v2313 = vrot.slane %v2312, 4
      %v2315 = vshll.u32 %v2174, 16
      %v2317 = vrot.slane %v2315, 5
      %v2318 = vsel %vm309, %v2313, %v2317
      %v2319 = vshrl.u32 %v2174, 16
      %v2321 = vrot.slane %v2319, 4
      %v2322 = vor.u32 %v2321, %v2317
      %v2323 = vrot.slane %v2322, 4
      %v2325 = vshll.u32 %v2175, 16
      %v2327 = vrot.slane %v2325, 5
      %v2328 = vsel %vm309, %v2323, %v2327
      %v2330 = vshrl.u32 %v2176, 16
      %v2332 = vrot.slane %v2330, 4
      %v2333 = vshll.u32 %v2176, 16
      %v2335 = vrot.slane %v2333, 5
      %v2336 = vor.u32 %v2332, %v2335
      %v2337 = vrot.slane %v2336, 4
      %v2339 = vshll.u32 %v2177, 16
      %v2341 = vrot.slane %v2339, 5
      %v2342 = vsel %vm309, %v2337, %v2341
      %v2343 = vshrl.u32 %v2177, 16
      %v2345 = vrot.slane %v2343, 4
      %v2346 = vor.u32 %v2345, %v2341
      %v2347 = vrot.slane %v2346, 4
      %v2349 = vshll.u32 %v2178, 16
      %v2351 = vrot.slane %v2349, 5
      %v2352 = vsel %vm309, %v2347, %v2351
      %v2354 = vshrl.u32 %v2179, 16
      %v2356 = vrot.slane %v2354, 4
      %v2357 = vshll.u32 %v2179, 16
      %v2359 = vrot.slane %v2357, 5
      %v2360 = vor.u32 %v2356, %v2359
      %v2361 = vrot.slane %v2360, 4
      %v2363 = vshll.u32 %v2180, 16
      %v2365 = vrot.slane %v2363, 5
      %v2366 = vsel %vm309, %v2361, %v2365
      %v2367 = vshrl.u32 %v2180, 16
      %v2369 = vrot.slane %v2367, 4
      %v2370 = vor.u32 %v2369, %v2365
      %v2371 = vrot.slane %v2370, 4
      %v2373 = vshll.u32 %v2181, 16
      %v2375 = vrot.slane %v2373, 5
      %v2376 = vsel %vm309, %v2371, %v2375
      %v2378 = vshrl.u32 %v2182, 16
      %v2380 = vrot.slane %v2378, 4
      %v2381 = vshll.u32 %v2182, 16
      %v2383 = vrot.slane %v2381, 5
      %v2384 = vor.u32 %v2380, %v2383
      %v2385 = vrot.slane %v2384, 4
      %v2387 = vshll.u32 %v2183, 16
      %v2389 = vrot.slane %v2387, 5
      %v2390 = vsel %vm309, %v2385, %v2389
      %v2391 = vshrl.u32 %v2183, 16
      %v2393 = vrot.slane %v2391, 4
      %v2394 = vor.u32 %v2393, %v2389
      %v2395 = vrot.slane %v2394, 4
      %v2397 = vshll.u32 %v2184, 16
      %v2399 = vrot.slane %v2397, 5
      %v2400 = vsel %vm309, %v2395, %v2399
      %v2402 = vshrl.u32 %v2185, 16
      %v2404 = vrot.slane %v2402, 4
      %v2405 = vshll.u32 %v2185, 16
      %v2407 = vrot.slane %v2405, 5
      %v2408 = vor.u32 %v2404, %v2407
      %v2409 = vrot.slane %v2408, 4
      %v2411 = vshll.u32 %v2186, 16
      %v2413 = vrot.slane %v2411, 5
      %v2414 = vsel %vm309, %v2409, %v2413
      %v2415 = vshrl.u32 %v2186, 16
      %v2417 = vrot.slane %v2415, 4
      %v2418 = vor.u32 %v2417, %v2413
      %v2419 = vrot.slane %v2418, 4
      %v2421 = vshll.u32 %v2187, 16
      %v2423 = vrot.slane %v2421, 5
      %v2424 = vsel %vm309, %v2419, %v2423
      %v2426 = vshrl.u32 %v2188, 16
      %v2428 = vrot.slane %v2426, 4
      %v2429 = vshll.u32 %v2188, 16
      %v2431 = vrot.slane %v2429, 5
      %v2432 = vor.u32 %v2428, %v2431
      %v2433 = vrot.slane %v2432, 4
      %v2435 = vshll.u32 %v2189, 16
      %v2437 = vrot.slane %v2435, 5
      %v2438 = vsel %vm309, %v2433, %v2437
      %v2439 = vshrl.u32 %v2189, 16
      %v2441 = vrot.slane %v2439, 4
      %v2442 = vor.u32 %v2441, %v2437
      %v2443 = vrot.slane %v2442, 4
      %v2445 = vshll.u32 %v2190, 16
      %v2447 = vrot.slane %v2445, 5
      %v2448 = vsel %vm309, %v2443, %v2447
      %v2450 = vshrl.u32 %v2191, 16
      %v2452 = vrot.slane %v2450, 4
      %v2453 = vshll.u32 %v2191, 16
      %v2455 = vrot.slane %v2453, 5
      %v2456 = vor.u32 %v2452, %v2455
      %v2457 = vrot.slane %v2456, 4
      %v2459 = vshll.u32 %v2192, 16
      %v2461 = vrot.slane %v2459, 5
      %v2462 = vsel %vm309, %v2457, %v2461
      %v2463 = vshrl.u32 %v2192, 16
      %v2465 = vrot.slane %v2463, 4
      %v2466 = vor.u32 %v2465, %v2461
      %v2467 = vrot.slane %v2466, 4
      %v2469 = vshll.u32 %v2193, 16
      %v2471 = vrot.slane %v2469, 5
      %v2472 = vsel %vm309, %v2467, %v2471
      %v2474 = vshrl.u32 %v2194, 16
      %v2476 = vrot.slane %v2474, 4
      %v2477 = vshll.u32 %v2194, 16
      %v2479 = vrot.slane %v2477, 5
      %v2480 = vor.u32 %v2476, %v2479
      %v2481 = vrot.slane %v2480, 4
      %v2483 = vshll.u32 %v2195, 16
      %v2485 = vrot.slane %v2483, 5
      %v2486 = vsel %vm309, %v2481, %v2485
      %v2487 = vshrl.u32 %v2195, 16
      %v2489 = vrot.slane %v2487, 4
      %v2490 = vor.u32 %v2489, %v2485
      %v2491 = vrot.slane %v2490, 4
      %v2493 = vshll.u32 %v2196, 16
      %v2495 = vrot.slane %v2493, 5
      %v2496 = vsel %vm309, %v2491, %v2495
      %v2498 = vshrl.u32 %v2197, 16
      %v2500 = vrot.slane %v2498, 4
      %v2501 = vshll.u32 %v2197, 16
      %v2503 = vrot.slane %v2501, 5
      %v2504 = vor.u32 %v2500, %v2503
      %v2505 = vrot.slane %v2504, 4
      %v2507 = vshll.u32 %v2198, 16
      %v2509 = vrot.slane %v2507, 5
      %v2510 = vsel %vm309, %v2505, %v2509
      %v2511 = vshrl.u32 %v2198, 16
      %v2513 = vrot.slane %v2511, 4
      %v2514 = vor.u32 %v2513, %v2509
      %v2515 = vrot.slane %v2514, 4
      %v2517 = vshll.u32 %v2199, 16
      %v2519 = vrot.slane %v2517, 5
      %v2520 = vsel %vm309, %v2515, %v2519
      %v2522 = vshrl.u32 %v2200, 16
      %v2524 = vrot.slane %v2522, 4
      %v2525 = vshll.u32 %v2200, 16
      %v2527 = vrot.slane %v2525, 5
      %v2528 = vor.u32 %v2524, %v2527
      %v2529 = vrot.slane %v2528, 4
      %v2531 = vshll.u32 %v2201, 16
      %v2533 = vrot.slane %v2531, 5
      %v2534 = vsel %vm309, %v2529, %v2533
      %v2535 = vshrl.u32 %v2201, 16
      %v2537 = vrot.slane %v2535, 4
      %v2538 = vor.u32 %v2537, %v2533
      %v2539 = vrot.slane %v2538, 4
      %v2541 = vshll.u32 %v2202, 16
      %v2543 = vrot.slane %v2541, 5
      %v2544 = vsel %vm309, %v2539, %v2543
      %v2546 = vshrl.u32 %v2203, 16
      %v2548 = vrot.slane %v2546, 4
      %v2549 = vshll.u32 %v2203, 16
      %v2551 = vrot.slane %v2549, 5
      %v2552 = vor.u32 %v2548, %v2551
      %v2553 = vrot.slane %v2552, 4
      %v2555 = vshll.u32 %v2204, 16
      %v2557 = vrot.slane %v2555, 5
      %v2558 = vsel %vm309, %v2553, %v2557
      %v2559 = vshrl.u32 %v2204, 16
      %v2561 = vrot.slane %v2559, 4
      %v2562 = vor.u32 %v2561, %v2557
      %v2563 = vrot.slane %v2562, 4
      %v2565 = vshll.u32 %v2205, 16
      %v2567 = vrot.slane %v2565, 5
      %v2568 = vsel %vm309, %v2563, %v2567
      %v2570 = vshrl.u32 %v2206, 16
      %v2572 = vrot.slane %v2570, 4
      %v2573 = vshll.u32 %v2206, 16
      %v2575 = vrot.slane %v2573, 5
      %v2576 = vor.u32 %v2572, %v2575
      %v2577 = vrot.slane %v2576, 4
      %v2579 = vshll.u32 %v2207, 16
      %v2581 = vrot.slane %v2579, 5
      %v2582 = vsel %vm309, %v2577, %v2581
      %v2583 = vshrl.u32 %v2207, 16
      %v2585 = vrot.slane %v2583, 4
      %v2586 = vor.u32 %v2585, %v2581
      %v2587 = vrot.slane %v2586, 4
      %v2589 = vshll.u32 %v2208, 16
      %v2591 = vrot.slane %v2589, 5
      %v2592 = vsel %vm309, %v2587, %v2591
      %s2593 = scalar_lea.vmem %s1, 256
      %v2594 = vld [vmem:[%s2593] sm:$0xf]
      %v2595 = vld [vmem:[%s2593 + $0x4] sm:$0xf]
      %v2596 = vld [vmem:[%s2593 + $0x8] sm:$0xf]
      %v2597 = vld [vmem:[%s2593 + $0xc] sm:$0xf]
      %v2598 = vld [vmem:[%s2593 + $0x10] sm:$0xf]
      %v2599 = vld [vmem:[%s2593 + $0x14] sm:$0xf]
      %v2600 = vld [vmem:[%s2593 + $0x18] sm:$0xf]
      %v2601 = vld [vmem:[%s2593 + $0x1c] sm:$0xf]
      %v2602 = vld [vmem:[%s2593 + $0x20] sm:$0xf]
      %v2603 = vld [vmem:[%s2593 + $0x24] sm:$0xf]
      %v2604 = vld [vmem:[%s2593 + $0x28] sm:$0xf]
      %v2605 = vld [vmem:[%s2593 + $0x2c] sm:$0xf]
      %v2606 = vld [vmem:[%s2593 + $0x30] sm:$0xf]
      %v2607 = vld [vmem:[%s2593 + $0x34] sm:$0xf]
      %v2608 = vld [vmem:[%s2593 + $0x38] sm:$0xf]
      %v2609 = vld [vmem:[%s2593 + $0x3c] sm:$0xf]
      %v2610 = vunpack.c.l.b16 %v2222
      %v2611 = vunpack.c.l.b16 %v2232
      %v2612 = vunpack.c.l.b16 %v2246
      %v2613 = vunpack.c.l.b16 %v2256
      %v2614 = vunpack.c.l.b16 %v2270
      %v2615 = vunpack.c.l.b16 %v2280
      %v2616 = vunpack.c.l.b16 %v2294
      %v2617 = vunpack.c.l.b16 %v2304
      %v2618 = vunpack.c.l.b16 %v2318
      %v2619 = vunpack.c.l.b16 %v2328
      %v2620 = vunpack.c.l.b16 %v2342
      %v2621 = vunpack.c.l.b16 %v2352
      %v2622 = vunpack.c.l.b16 %v2366
      %v2623 = vunpack.c.l.b16 %v2376
      %v2624 = vunpack.c.l.b16 %v2390
      %v2625 = vunpack.c.l.b16 %v2400
      %v2626 = vunpack.c.l.b16 %v2414
      %v2627 = vunpack.c.l.b16 %v2424
      %v2628 = vunpack.c.l.b16 %v2438
      %v2629 = vunpack.c.l.b16 %v2448
      %v2630 = vunpack.c.l.b16 %v2462
      %v2631 = vunpack.c.l.b16 %v2472
      %v2632 = vunpack.c.l.b16 %v2486
      %v2633 = vunpack.c.l.b16 %v2496
      %v2634 = vunpack.c.l.b16 %v2510
      %v2635 = vunpack.c.l.b16 %v2520
      %v2636 = vunpack.c.l.b16 %v2534
      %v2637 = vunpack.c.l.b16 %v2544
      %v2638 = vunpack.c.l.b16 %v2558
      %v2639 = vunpack.c.l.b16 %v2568
      %v2640 = vunpack.c.l.b16 %v2582
      %v2641 = vunpack.c.l.b16 %v2592
      %v2642 = vpack.c.b16 %v2611, %v2610
      %v2643 = vpack.c.b16 %v2613, %v2612
      %v2644 = vpack.c.b16 %v2615, %v2614
      %v2645 = vpack.c.b16 %v2617, %v2616
      %v2646 = vpack.c.b16 %v2619, %v2618
      %v2647 = vpack.c.b16 %v2621, %v2620
      %v2648 = vpack.c.b16 %v2623, %v2622
      %v2649 = vpack.c.b16 %v2625, %v2624
      %v2650 = vpack.c.b16 %v2627, %v2626
      %v2651 = vpack.c.b16 %v2629, %v2628
      %v2652 = vpack.c.b16 %v2631, %v2630
      %v2653 = vpack.c.b16 %v2633, %v2632
      %v2654 = vpack.c.b16 %v2635, %v2634
      %v2655 = vpack.c.b16 %v2637, %v2636
      %v2656 = vpack.c.b16 %v2639, %v2638
      %v2657 = vpack.c.b16 %v2641, %v2640
      %v2690 = vunpack.c.l.b16 %v2594
      %v2691 = vunpack.c.l.b16 %v2595
      %v2692 = vunpack.c.l.b16 %v2596
      %v2693 = vunpack.c.l.b16 %v2597
      %v2694 = vunpack.c.l.b16 %v2598
      %v2695 = vunpack.c.l.b16 %v2599
      %v2696 = vunpack.c.l.b16 %v2600
      %v2697 = vunpack.c.l.b16 %v2601
      %v2698 = vunpack.c.l.b16 %v2602
      %v2699 = vunpack.c.l.b16 %v2603
      %v2700 = vunpack.c.l.b16 %v2604
      %v2701 = vunpack.c.l.b16 %v2605
      %v2702 = vunpack.c.l.b16 %v2606
      %v2703 = vunpack.c.l.b16 %v2607
      %v2704 = vunpack.c.l.b16 %v2608
      %v2705 = vunpack.c.l.b16 %v2609
      %v2706 = vpack.c.b16 %v2691, %v2690
      %v2707 = vpack.c.b16 %v2693, %v2692
      %v2708 = vpack.c.b16 %v2695, %v2694
      %v2709 = vpack.c.b16 %v2697, %v2696
      %v2710 = vpack.c.b16 %v2699, %v2698
      %v2711 = vpack.c.b16 %v2701, %v2700
      %v2712 = vpack.c.b16 %v2703, %v2702
      %v2713 = vpack.c.b16 %v2705, %v2704
      %2722 = vmatprep.subr.bf16.mxu0 0
      %2723 = vmatpush1.bf16.msra.mxu0 %v2706
      %2724 = vmatprep.subr.bf16.mxu0 0
      %2725 = vmatpush1.bf16.msra.mxu0 %v2707
      %2726 = vmatprep.subr.bf16.mxu0 0
      %2727 = vmatpush1.bf16.msra.mxu0 %v2708
      %2728 = vmatprep.subr.bf16.mxu0 0
      %2729 = vmatpush1.bf16.msra.mxu0 %v2709
      %2730 = vmatprep.subr.bf16.mxu0 0
      %2731 = vmatpush1.bf16.msra.mxu0 %v2710
      %2732 = vmatprep.subr.bf16.mxu0 0
      %2733 = vmatpush1.bf16.msra.mxu0 %v2711
      %2734 = vmatprep.subr.bf16.mxu0 0
      %2735 = vmatpush1.bf16.msra.mxu0 %v2712
      %2736 = vmatprep.subr.bf16.mxu0 0
      %2737 = vmatpush1.bf16.msra.mxu0 %v2713
      %2738 = vmatprep.subr.bf16.mxu0 0
      %2739 = vmatpush1.bf16.msra.mxu0 0
      %2740 = vmatprep.subr.bf16.mxu0 0
      %2741 = vmatpush1.bf16.msra.mxu0 0
      %2742 = vmatprep.subr.bf16.mxu0 0
      %2743 = vmatpush1.bf16.msra.mxu0 0
      %2744 = vmatprep.subr.bf16.mxu0 0
      %2745 = vmatpush1.bf16.msra.mxu0 0
      %2746 = vmatprep.subr.bf16.mxu0 0
      %2747 = vmatpush1.bf16.msra.mxu0 0
      %2748 = vmatprep.subr.bf16.mxu0 0
      %2749 = vmatpush1.bf16.msra.mxu0 0
      %2750 = vmatprep.subr.bf16.mxu0 0
      %2751 = vmatpush1.bf16.msra.mxu0 0
      %2752 = vmatprep.subr.bf16.mxu0 0
      %2753 = vmatpush1.bf16.msra.mxu0 0
      %2754 = vmatprep.mubr.bf16.mxu0 0
      %2755 = vmatmul.mubr.bf16.gmra.mrb[0].mxu0 %v2642
      %v2756 = vpop.f32.mrb[0].mxu0
      %v2757 = vadd.f32 0.0, %v2756
      %v2758 = vpop.f32.mrb[0].mxu0
      %v2759 = vpop.f32.mrb[0].mxu0
      %v2760 = vadd.f32 0.0, %v2759
      %v2761 = vpop.f32.mrb[0].mxu0
      %2762 = vmatprep.mubr.bf16.mxu0 0
      %2763 = vmatmul.mubr.bf16.gmra.mrb[0].mxu0 %v2643
      %v2764 = vpop.f32.mrb[0].mxu0
      %v2765 = vadd.f32 0.0, %v2764
      %v2766 = vpop.f32.mrb[0].mxu0
      %v2767 = vpop.f32.mrb[0].mxu0
      %v2768 = vadd.f32 0.0, %v2767
      %v2769 = vpop.f32.mrb[0].mxu0
      %2770 = vmatprep.mubr.bf16.mxu0 0
      %2771 = vmatmul.mubr.bf16.gmra.mrb[0].mxu0 %v2644
      %v2772 = vpop.f32.mrb[0].mxu0
      %v2773 = vadd.f32 0.0, %v2772
      %v2774 = vpop.f32.mrb[0].mxu0
      %v2775 = vpop.f32.mrb[0].mxu0
      %v2776 = vadd.f32 0.0, %v2775
      %v2777 = vpop.f32.mrb[0].mxu0
      %2778 = vmatprep.mubr.bf16.mxu0 0
      %2779 = vmatmul.mubr.bf16.gmra.mrb[0].mxu0 %v2645
      %v2780 = vpop.f32.mrb[0].mxu0
      %v2781 = vadd.f32 0.0, %v2780
      %v2782 = vpop.f32.mrb[0].mxu0
      %v2783 = vpop.f32.mrb[0].mxu0
      %v2784 = vadd.f32 0.0, %v2783
      %v2785 = vpop.f32.mrb[0].mxu0
      %2786 = vmatprep.mubr.bf16.mxu0 0
      %2787 = vmatmul.mubr.bf16.gmra.mrb[0].mxu0 %v2646
      %v2788 = vpop.f32.mrb[0].mxu0
      %v2789 = vadd.f32 0.0, %v2788
      %v2790 = vpop.f32.mrb[0].mxu0
      %v2791 = vpop.f32.mrb[0].mxu0
      %v2792 = vadd.f32 0.0, %v2791
      %v2793 = vpop.f32.mrb[0].mxu0
      %2794 = vmatprep.mubr.bf16.mxu0 0
      %2795 = vmatmul.mubr.bf16.gmra.mrb[0].mxu0 %v2647
      %v2796 = vpop.f32.mrb[0].mxu0
      %v2797 = vadd.f32 0.0, %v2796
      %v2798 = vpop.f32.mrb[0].mxu0
      %v2799 = vpop.f32.mrb[0].mxu0
      %v2800 = vadd.f32 0.0, %v2799
      %v2801 = vpop.f32.mrb[0].mxu0
      %2802 = vmatprep.mubr.bf16.mxu0 0
      %2803 = vmatmul.mubr.bf16.gmra.mrb[0].mxu0 %v2648
      %v2804 = vpop.f32.mrb[0].mxu0
      %v2805 = vadd.f32 0.0, %v2804
      %v2806 = vpop.f32.mrb[0].mxu0
      %v2807 = vpop.f32.mrb[0].mxu0
      %v2808 = vadd.f32 0.0, %v2807
      %v2809 = vpop.f32.mrb[0].mxu0
      %2810 = vmatprep.mubr.bf16.mxu0 0
      %2811 = vmatmul.mubr.bf16.gmra.mrb[0].mxu0 %v2649
      %v2812 = vpop.f32.mrb[0].mxu0
      %v2813 = vadd.f32 0.0, %v2812
      %v2814 = vpop.f32.mrb[0].mxu0
      %v2815 = vpop.f32.mrb[0].mxu0
      %v2816 = vadd.f32 0.0, %v2815
      %v2817 = vpop.f32.mrb[0].mxu0
      %2818 = vmatprep.mubr.bf16.mxu0 0
      %2819 = vmatmul.mubr.bf16.gmra.mrb[0].mxu0 %v2650
      %v2820 = vpop.f32.mrb[0].mxu0
      %v2821 = vadd.f32 0.0, %v2820
      %v2822 = vpop.f32.mrb[0].mxu0
      %v2823 = vpop.f32.mrb[0].mxu0
      %v2824 = vadd.f32 0.0, %v2823
      %v2825 = vpop.f32.mrb[0].mxu0
      %2826 = vmatprep.mubr.bf16.mxu0 0
      %2827 = vmatmul.mubr.bf16.gmra.mrb[0].mxu0 %v2651
      %v2828 = vpop.f32.mrb[0].mxu0
      %v2829 = vadd.f32 0.0, %v2828
      %v2830 = vpop.f32.mrb[0].mxu0
      %v2831 = vpop.f32.mrb[0].mxu0
      %v2832 = vadd.f32 0.0, %v2831
      %v2833 = vpop.f32.mrb[0].mxu0
      %2834 = vmatprep.mubr.bf16.mxu0 0
      %2835 = vmatmul.mubr.bf16.gmra.mrb[0].mxu0 %v2652
      %v2836 = vpop.f32.mrb[0].mxu0
      %v2837 = vadd.f32 0.0, %v2836
      %v2838 = vpop.f32.mrb[0].mxu0
      %v2839 = vpop.f32.mrb[0].mxu0
      %v2840 = vadd.f32 0.0, %v2839
      %v2841 = vpop.f32.mrb[0].mxu0
      %2842 = vmatprep.mubr.bf16.mxu0 0
      %2843 = vmatmul.mubr.bf16.gmra.mrb[0].mxu0 %v2653
      %v2844 = vpop.f32.mrb[0].mxu0
      %v2845 = vadd.f32 0.0, %v2844
      %v2846 = vpop.f32.mrb[0].mxu0
      %v2847 = vpop.f32.mrb[0].mxu0
      %v2848 = vadd.f32 0.0, %v2847
      %v2849 = vpop.f32.mrb[0].mxu0
      %2850 = vmatprep.mubr.bf16.mxu0 0
      %2851 = vmatmul.mubr.bf16.gmra.mrb[0].mxu0 %v2654
      %v2852 = vpop.f32.mrb[0].mxu0
      %v2853 = vadd.f32 0.0, %v2852
      %v2854 = vpop.f32.mrb[0].mxu0
      %v2855 = vpop.f32.mrb[0].mxu0
      %v2856 = vadd.f32 0.0, %v2855
      %v2857 = vpop.f32.mrb[0].mxu0
      %2858 = vmatprep.mubr.bf16.mxu0 0
      %2859 = vmatmul.mubr.bf16.gmra.mrb[0].mxu0 %v2655
      %v2860 = vpop.f32.mrb[0].mxu0
      %v2861 = vadd.f32 0.0, %v2860
      %v2862 = vpop.f32.mrb[0].mxu0
      %v2863 = vpop.f32.mrb[0].mxu0
      %v2864 = vadd.f32 0.0, %v2863
      %v2865 = vpop.f32.mrb[0].mxu0
      %2866 = vmatprep.mubr.bf16.mxu0 0
      %2867 = vmatmul.mubr.bf16.gmra.mrb[0].mxu0 %v2656
      %v2868 = vpop.f32.mrb[0].mxu0
      %v2869 = vadd.f32 0.0, %v2868
      %v2870 = vpop.f32.mrb[0].mxu0
      %v2871 = vpop.f32.mrb[0].mxu0
      %v2872 = vadd.f32 0.0, %v2871
      %v2873 = vpop.f32.mrb[0].mxu0
      %2874 = vmatprep.mubr.bf16.mxu0 0
      %2875 = vmatmul.mubr.bf16.gmra.mrb[0].mxu0 %v2657
      %v2876 = vpop.f32.mrb[0].mxu0
      %v2877 = vadd.f32 0.0, %v2876
      %v2878 = vpop.f32.mrb[0].mxu0
      %v2879 = vpop.f32.mrb[0].mxu0
      %v2880 = vadd.f32 0.0, %v2879
      %v2881 = vpop.f32.mrb[0].mxu0
      %2882 = vdwg.mxu0
      %v2883 = vadd.f32 %v2129, %v2757
      %v2884 = vadd.f32 %v2130, %v2760
      %v2885 = vadd.f32 %v2131, %v2765
      %v2886 = vadd.f32 %v2132, %v2768
      %v2887 = vadd.f32 %v2133, %v2773
      %v2888 = vadd.f32 %v2134, %v2776
      %v2889 = vadd.f32 %v2135, %v2781
      %v2890 = vadd.f32 %v2136, %v2784
      %v2891 = vadd.f32 %v2137, %v2789
      %v2892 = vadd.f32 %v2138, %v2792
      %v2893 = vadd.f32 %v2139, %v2797
      %v2894 = vadd.f32 %v2140, %v2800
      %v2895 = vadd.f32 %v2141, %v2805
      %v2896 = vadd.f32 %v2142, %v2808
      %v2897 = vadd.f32 %v2143, %v2813
      %v2898 = vadd.f32 %v2144, %v2816
      %v2899 = vadd.f32 %v2145, %v2821
      %v2900 = vadd.f32 %v2146, %v2824
      %v2901 = vadd.f32 %v2147, %v2829
      %v2902 = vadd.f32 %v2148, %v2832
      %v2903 = vadd.f32 %v2149, %v2837
      %v2904 = vadd.f32 %v2150, %v2840
      %v2905 = vadd.f32 %v2151, %v2845
      %v2906 = vadd.f32 %v2152, %v2848
      %v2907 = vadd.f32 %v2153, %v2853
      %v2908 = vadd.f32 %v2154, %v2856
      %v2909 = vadd.f32 %v2155, %v2861
      %v2910 = vadd.f32 %v2156, %v2864
      %v2911 = vadd.f32 %v2157, %v2869
      %v2912 = vadd.f32 %v2158, %v2872
      %v2913 = vadd.f32 %v2159, %v2877
      %v2914 = vadd.f32 %v2160, %v2880
      %v2915 = vld [vmem:[%s1774] sm:$0xe]
      %v2916 = vld [vmem:[%s1774 + $0xc] sm:$0xe]
      %v2917 = vld [vmem:[%s1774 + $0x18] sm:$0xe]
      %v2918 = vld [vmem:[%s1774 + $0x24] sm:$0xe]
      %v2919 = vld [vmem:[%s1774 + $0x30] sm:$0xe]
      %v2920 = vld [vmem:[%s1774 + $0x3c] sm:$0xe]
      %v2921 = vld [vmem:[%s1774 + $0x48] sm:$0xe]
      %v2922 = vld [vmem:[%s1774 + $0x54] sm:$0xe]
      %v2923 = vld [vmem:[%s1774 + $0x60] sm:$0xe]
      %v2924 = vld [vmem:[%s1774 + $0x6c] sm:$0xe]
      %v2925 = vld [vmem:[%s1774 + $0x78] sm:$0xe]
      %v2926 = vld [vmem:[%s1774 + $0x84] sm:$0xe]
      %v2927 = vld [vmem:[%s1774 + $0x90] sm:$0xe]
      %v2928 = vld [vmem:[%s1774 + $0x9c] sm:$0xe]
      %v2929 = vld [vmem:[%s1774 + $0xa8] sm:$0xe]
      %v2930 = vld [vmem:[%s1774 + $0xb4] sm:$0xe]
      %v2979 = vrot.slane %v2915, 5
      %v2980 = vrot.slane %v2979, 4
      %v2981 = vrot.slane %v2162, 5
      %v2982 = vsel %vm1339, %v2980, %v2981
      %v2983 = vrot.slane %v2981, 4
      %v2984 = vrot.slane %v2163, 5
      %v2985 = vsel %vm1339, %v2983, %v2984
      %v2986 = vrot.slane %v2916, 5
      %v2987 = vrot.slane %v2986, 4
      %v2988 = vrot.slane %v2165, 5
      %v2989 = vsel %vm1339, %v2987, %v2988
      %v2990 = vrot.slane %v2988, 4
      %v2991 = vrot.slane %v2166, 5
      %v2992 = vsel %vm1339, %v2990, %v2991
      %v2993 = vrot.slane %v2917, 5
      %v2994 = vrot.slane %v2993, 4
      %v2995 = vrot.slane %v2168, 5
      %v2996 = vsel %vm1339, %v2994, %v2995
      %v2997 = vrot.slane %v2995, 4
      %v2998 = vrot.slane %v2169, 5
      %v2999 = vsel %vm1339, %v2997, %v2998
      %v3000 = vrot.slane %v2918, 5
      %v3001 = vrot.slane %v3000, 4
      %v3002 = vrot.slane %v2171, 5
      %v3003 = vsel %vm1339, %v3001, %v3002
      %v3004 = vrot.slane %v3002, 4
      %v3005 = vrot.slane %v2172, 5
      %v3006 = vsel %vm1339, %v3004, %v3005
      %v3007 = vrot.slane %v2919, 5
      %v3008 = vrot.slane %v3007, 4
      %v3009 = vrot.slane %v2174, 5
      %v3010 = vsel %vm1339, %v3008, %v3009
      %v3011 = vrot.slane %v3009, 4
      %v3012 = vrot.slane %v2175, 5
      %v3013 = vsel %vm1339, %v3011, %v3012
      %v3014 = vrot.slane %v2920, 5
      %v3015 = vrot.slane %v3014, 4
      %v3016 = vrot.slane %v2177, 5
      %v3017 = vsel %vm1339, %v3015, %v3016
      %v3018 = vrot.slane %v3016, 4
      %v3019 = vrot.slane %v2178, 5
      %v3020 = vsel %vm1339, %v3018, %v3019
      %v3021 = vrot.slane %v2921, 5
      %v3022 = vrot.slane %v3021, 4
      %v3023 = vrot.slane %v2180, 5
      %v3024 = vsel %vm1339, %v3022, %v3023
      %v3025 = vrot.slane %v3023, 4
      %v3026 = vrot.slane %v2181, 5
      %v3027 = vsel %vm1339, %v3025, %v3026
      %v3028 = vrot.slane %v2922, 5
      %v3029 = vrot.slane %v3028, 4
      %v3030 = vrot.slane %v2183, 5
      %v3031 = vsel %vm1339, %v3029, %v3030
      %v3032 = vrot.slane %v3030, 4
      %v3033 = vrot.slane %v2184, 5
      %v3034 = vsel %vm1339, %v3032, %v3033
      %v3035 = vrot.slane %v2923, 5
      %v3036 = vrot.slane %v3035, 4
      %v3037 = vrot.slane %v2186, 5
      %v3038 = vsel %vm1339, %v3036, %v3037
      %v3039 = vrot.slane %v3037, 4
      %v3040 = vrot.slane %v2187, 5
      %v3041 = vsel %vm1339, %v3039, %v3040
      %v3042 = vrot.slane %v2924, 5
      %v3043 = vrot.slane %v3042, 4
      %v3044 = vrot.slane %v2189, 5
      %v3045 = vsel %vm1339, %v3043, %v3044
      %v3046 = vrot.slane %v3044, 4
      %v3047 = vrot.slane %v2190, 5
      %v3048 = vsel %vm1339, %v3046, %v3047
      %v3049 = vrot.slane %v2925, 5
      %v3050 = vrot.slane %v3049, 4
      %v3051 = vrot.slane %v2192, 5
      %v3052 = vsel %vm1339, %v3050, %v3051
      %v3053 = vrot.slane %v3051, 4
      %v3054 = vrot.slane %v2193, 5
      %v3055 = vsel %vm1339, %v3053, %v3054
      %v3056 = vrot.slane %v2926, 5
      %v3057 = vrot.slane %v3056, 4
      %v3058 = vrot.slane %v2195, 5
      %v3059 = vsel %vm1339, %v3057, %v3058
      %v3060 = vrot.slane %v3058, 4
      %v3061 = vrot.slane %v2196, 5
      %v3062 = vsel %vm1339, %v3060, %v3061
      %v3063 = vrot.slane %v2927, 5
      %v3064 = vrot.slane %v3063, 4
      %v3065 = vrot.slane %v2198, 5
      %v3066 = vsel %vm1339, %v3064, %v3065
      %v3067 = vrot.slane %v3065, 4
      %v3068 = vrot.slane %v2199, 5
      %v3069 = vsel %vm1339, %v3067, %v3068
      %v3070 = vrot.slane %v2928, 5
      %v3071 = vrot.slane %v3070, 4
      %v3072 = vrot.slane %v2201, 5
      %v3073 = vsel %vm1339, %v3071, %v3072
      %v3074 = vrot.slane %v3072, 4
      %v3075 = vrot.slane %v2202, 5
      %v3076 = vsel %vm1339, %v3074, %v3075
      %v3077 = vrot.slane %v2929, 5
      %v3078 = vrot.slane %v3077, 4
      %v3079 = vrot.slane %v2204, 5
      %v3080 = vsel %vm1339, %v3078, %v3079
      %v3081 = vrot.slane %v3079, 4
      %v3082 = vrot.slane %v2205, 5
      %v3083 = vsel %vm1339, %v3081, %v3082
      %v3084 = vrot.slane %v2930, 5
      %v3085 = vrot.slane %v3084, 4
      %v3086 = vrot.slane %v2207, 5
      %v3087 = vsel %vm1339, %v3085, %v3086
      %v3088 = vrot.slane %v3086, 4
      %v3089 = vrot.slane %v2208, 5
      %v3090 = vsel %vm1339, %v3088, %v3089
      %s3091 = scalar_lea.vmem %s1, 320
      %v3092 = vld [vmem:[%s3091] sm:$0xf]
      %v3093 = vld [vmem:[%s3091 + $0x4] sm:$0xf]
      %v3094 = vld [vmem:[%s3091 + $0x8] sm:$0xf]
      %v3095 = vld [vmem:[%s3091 + $0xc] sm:$0xf]
      %v3096 = vld [vmem:[%s3091 + $0x10] sm:$0xf]
      %v3097 = vld [vmem:[%s3091 + $0x14] sm:$0xf]
      %v3098 = vld [vmem:[%s3091 + $0x18] sm:$0xf]
      %v3099 = vld [vmem:[%s3091 + $0x1c] sm:$0xf]
      %v3100 = vld [vmem:[%s3091 + $0x20] sm:$0xf]
      %v3101 = vld [vmem:[%s3091 + $0x24] sm:$0xf]
      %v3102 = vld [vmem:[%s3091 + $0x28] sm:$0xf]
      %v3103 = vld [vmem:[%s3091 + $0x2c] sm:$0xf]
      %v3104 = vld [vmem:[%s3091 + $0x30] sm:$0xf]
      %v3105 = vld [vmem:[%s3091 + $0x34] sm:$0xf]
      %v3106 = vld [vmem:[%s3091 + $0x38] sm:$0xf]
      %v3107 = vld [vmem:[%s3091 + $0x3c] sm:$0xf]
      %v3108 = vunpack.c.l.b16 %v2982
      %v3109 = vunpack.c.l.b16 %v2985
      %v3110 = vunpack.c.l.b16 %v2989
      %v3111 = vunpack.c.l.b16 %v2992
      %v3112 = vunpack.c.l.b16 %v2996
      %v3113 = vunpack.c.l.b16 %v2999
      %v3114 = vunpack.c.l.b16 %v3003
      %v3115 = vunpack.c.l.b16 %v3006
      %v3116 = vunpack.c.l.b16 %v3010
      %v3117 = vunpack.c.l.b16 %v3013
      %v3118 = vunpack.c.l.b16 %v3017
      %v3119 = vunpack.c.l.b16 %v3020
      %v3120 = vunpack.c.l.b16 %v3024
      %v3121 = vunpack.c.l.b16 %v3027
      %v3122 = vunpack.c.l.b16 %v3031
      %v3123 = vunpack.c.l.b16 %v3034
      %v3124 = vunpack.c.l.b16 %v3038
      %v3125 = vunpack.c.l.b16 %v3041
      %v3126 = vunpack.c.l.b16 %v3045
      %v3127 = vunpack.c.l.b16 %v3048
      %v3128 = vunpack.c.l.b16 %v3052
      %v3129 = vunpack.c.l.b16 %v3055
      %v3130 = vunpack.c.l.b16 %v3059
      %v3131 = vunpack.c.l.b16 %v3062
      %v3132 = vunpack.c.l.b16 %v3066
      %v3133 = vunpack.c.l.b16 %v3069
      %v3134 = vunpack.c.l.b16 %v3073
      %v3135 = vunpack.c.l.b16 %v3076
      %v3136 = vunpack.c.l.b16 %v3080
      %v3137 = vunpack.c.l.b16 %v3083
      %v3138 = vunpack.c.l.b16 %v3087
      %v3139 = vunpack.c.l.b16 %v3090
      %v3140 = vpack.c.b16 %v3109, %v3108
      %v3141 = vpack.c.b16 %v3111, %v3110
      %v3142 = vpack.c.b16 %v3113, %v3112
      %v3143 = vpack.c.b16 %v3115, %v3114
      %v3144 = vpack.c.b16 %v3117, %v3116
      %v3145 = vpack.c.b16 %v3119, %v3118
      %v3146 = vpack.c.b16 %v3121, %v3120
      %v3147 = vpack.c.b16 %v3123, %v3122
      %v3148 = vpack.c.b16 %v3125, %v3124
      %v3149 = vpack.c.b16 %v3127, %v3126
      %v3150 = vpack.c.b16 %v3129, %v3128
      %v3151 = vpack.c.b16 %v3131, %v3130
      %v3152 = vpack.c.b16 %v3133, %v3132
      %v3153 = vpack.c.b16 %v3135, %v3134
      %v3154 = vpack.c.b16 %v3137, %v3136
      %v3155 = vpack.c.b16 %v3139, %v3138
      %v3188 = vunpack.c.l.b16 %v3092
      %v3189 = vunpack.c.l.b16 %v3093
      %v3190 = vunpack.c.l.b16 %v3094
      %v3191 = vunpack.c.l.b16 %v3095
      %v3192 = vunpack.c.l.b16 %v3096
      %v3193 = vunpack.c.l.b16 %v3097
      %v3194 = vunpack.c.l.b16 %v3098
      %v3195 = vunpack.c.l.b16 %v3099
      %v3196 = vunpack.c.l.b16 %v3100
      %v3197 = vunpack.c.l.b16 %v3101
      %v3198 = vunpack.c.l.b16 %v3102
      %v3199 = vunpack.c.l.b16 %v3103
      %v3200 = vunpack.c.l.b16 %v3104
      %v3201 = vunpack.c.l.b16 %v3105
      %v3202 = vunpack.c.l.b16 %v3106
      %v3203 = vunpack.c.l.b16 %v3107
      %v3204 = vpack.c.b16 %v3189, %v3188
      %v3205 = vpack.c.b16 %v3191, %v3190
      %v3206 = vpack.c.b16 %v3193, %v3192
      %v3207 = vpack.c.b16 %v3195, %v3194
      %v3208 = vpack.c.b16 %v3197, %v3196
      %v3209 = vpack.c.b16 %v3199, %v3198
      %v3210 = vpack.c.b16 %v3201, %v3200
      %v3211 = vpack.c.b16 %v3203, %v3202
      %3220 = vmatprep.subr.bf16.mxu0 0
      %3221 = vmatpush1.bf16.msra.mxu0 %v3204
      %3222 = vmatprep.subr.bf16.mxu0 0
      %3223 = vmatpush1.bf16.msra.mxu0 %v3205
      %3224 = vmatprep.subr.bf16.mxu0 0
      %3225 = vmatpush1.bf16.msra.mxu0 %v3206
      %3226 = vmatprep.subr.bf16.mxu0 0
      %3227 = vmatpush1.bf16.msra.mxu0 %v3207
      %3228 = vmatprep.subr.bf16.mxu0 0
      %3229 = vmatpush1.bf16.msra.mxu0 %v3208
      %3230 = vmatprep.subr.bf16.mxu0 0
      %3231 = vmatpush1.bf16.msra.mxu0 %v3209
      %3232 = vmatprep.subr.bf16.mxu0 0
      %3233 = vmatpush1.bf16.msra.mxu0 %v3210
      %3234 = vmatprep.subr.bf16.mxu0 0
      %3235 = vmatpush1.bf16.msra.mxu0 %v3211
      %3236 = vmatprep.subr.bf16.mxu0 0
      %3237 = vmatpush1.bf16.msra.mxu0 0
      %3238 = vmatprep.subr.bf16.mxu0 0
      %3239 = vmatpush1.bf16.msra.mxu0 0
      %3240 = vmatprep.subr.bf16.mxu0 0
      %3241 = vmatpush1.bf16.msra.mxu0 0
      %3242 = vmatprep.subr.bf16.mxu0 0
      %3243 = vmatpush1.bf16.msra.mxu0 0
      %3244 = vmatprep.subr.bf16.mxu0 0
      %3245 = vmatpush1.bf16.msra.mxu0 0
      %3246 = vmatprep.subr.bf16.mxu0 0
      %3247 = vmatpush1.bf16.msra.mxu0 0
      %3248 = vmatprep.subr.bf16.mxu0 0
      %3249 = vmatpush1.bf16.msra.mxu0 0
      %3250 = vmatprep.subr.bf16.mxu0 0
      %3251 = vmatpush1.bf16.msra.mxu0 0
      %3252 = vmatprep.mubr.bf16.mxu0 0
      %3253 = vmatmul.mubr.bf16.gmra.mrb[0].mxu0 %v3140
      %v3254 = vpop.f32.mrb[0].mxu0
      %v3255 = vadd.f32 0.0, %v3254
      %v3256 = vpop.f32.mrb[0].mxu0
      %v3257 = vpop.f32.mrb[0].mxu0
      %v3258 = vadd.f32 0.0, %v3257
      %v3259 = vpop.f32.mrb[0].mxu0
      %3260 = vmatprep.mubr.bf16.mxu0 0
      %3261 = vmatmul.mubr.bf16.gmra.mrb[0].mxu0 %v3141
      %v3262 = vpop.f32.mrb[0].mxu0
      %v3263 = vadd.f32 0.0, %v3262
      %v3264 = vpop.f32.mrb[0].mxu0
      %v3265 = vpop.f32.mrb[0].mxu0
      %v3266 = vadd.f32 0.0, %v3265
      %v3267 = vpop.f32.mrb[0].mxu0
      %3268 = vmatprep.mubr.bf16.mxu0 0
      %3269 = vmatmul.mubr.bf16.gmra.mrb[0].mxu0 %v3142
      %v3270 = vpop.f32.mrb[0].mxu0
      %v3271 = vadd.f32 0.0, %v3270
      %v3272 = vpop.f32.mrb[0].mxu0
      %v3273 = vpop.f32.mrb[0].mxu0
      %v3274 = vadd.f32 0.0, %v3273
      %v3275 = vpop.f32.mrb[0].mxu0
      %3276 = vmatprep.mubr.bf16.mxu0 0
      %3277 = vmatmul.mubr.bf16.gmra.mrb[0].mxu0 %v3143
      %v3278 = vpop.f32.mrb[0].mxu0
      %v3279 = vadd.f32 0.0, %v3278
      %v3280 = vpop.f32.mrb[0].mxu0
      %v3281 = vpop.f32.mrb[0].mxu0
      %v3282 = vadd.f32 0.0, %v3281
      %v3283 = vpop.f32.mrb[0].mxu0
      %3284 = vmatprep.mubr.bf16.mxu0 0
      %3285 = vmatmul.mubr.bf16.gmra.mrb[0].mxu0 %v3144
      %v3286 = vpop.f32.mrb[0].mxu0
      %v3287 = vadd.f32 0.0, %v3286
      %v3288 = vpop.f32.mrb[0].mxu0
      %v3289 = vpop.f32.mrb[0].mxu0
      %v3290 = vadd.f32 0.0, %v3289
      %v3291 = vpop.f32.mrb[0].mxu0
      %3292 = vmatprep.mubr.bf16.mxu0 0
      %3293 = vmatmul.mubr.bf16.gmra.mrb[0].mxu0 %v3145
      %v3294 = vpop.f32.mrb[0].mxu0
      %v3295 = vadd.f32 0.0, %v3294
      %v3296 = vpop.f32.mrb[0].mxu0
      %v3297 = vpop.f32.mrb[0].mxu0
      %v3298 = vadd.f32 0.0, %v3297
      %v3299 = vpop.f32.mrb[0].mxu0
      %3300 = vmatprep.mubr.bf16.mxu0 0
      %3301 = vmatmul.mubr.bf16.gmra.mrb[0].mxu0 %v3146
      %v3302 = vpop.f32.mrb[0].mxu0
      %v3303 = vadd.f32 0.0, %v3302
      %v3304 = vpop.f32.mrb[0].mxu0
      %v3305 = vpop.f32.mrb[0].mxu0
      %v3306 = vadd.f32 0.0, %v3305
      %v3307 = vpop.f32.mrb[0].mxu0
      %3308 = vmatprep.mubr.bf16.mxu0 0
      %3309 = vmatmul.mubr.bf16.gmra.mrb[0].mxu0 %v3147
      %v3310 = vpop.f32.mrb[0].mxu0
      %v3311 = vadd.f32 0.0, %v3310
      %v3312 = vpop.f32.mrb[0].mxu0
      %v3313 = vpop.f32.mrb[0].mxu0
      %v3314 = vadd.f32 0.0, %v3313
      %v3315 = vpop.f32.mrb[0].mxu0
      %3316 = vmatprep.mubr.bf16.mxu0 0
      %3317 = vmatmul.mubr.bf16.gmra.mrb[0].mxu0 %v3148
      %v3318 = vpop.f32.mrb[0].mxu0
      %v3319 = vadd.f32 0.0, %v3318
      %v3320 = vpop.f32.mrb[0].mxu0
      %v3321 = vpop.f32.mrb[0].mxu0
      %v3322 = vadd.f32 0.0, %v3321
      %v3323 = vpop.f32.mrb[0].mxu0
      %3324 = vmatprep.mubr.bf16.mxu0 0
      %3325 = vmatmul.mubr.bf16.gmra.mrb[0].mxu0 %v3149
      %v3326 = vpop.f32.mrb[0].mxu0
      %v3327 = vadd.f32 0.0, %v3326
      %v3328 = vpop.f32.mrb[0].mxu0
      %v3329 = vpop.f32.mrb[0].mxu0
      %v3330 = vadd.f32 0.0, %v3329
      %v3331 = vpop.f32.mrb[0].mxu0
      %3332 = vmatprep.mubr.bf16.mxu0 0
      %3333 = vmatmul.mubr.bf16.gmra.mrb[0].mxu0 %v3150
      %v3334 = vpop.f32.mrb[0].mxu0
      %v3335 = vadd.f32 0.0, %v3334
      %v3336 = vpop.f32.mrb[0].mxu0
      %v3337 = vpop.f32.mrb[0].mxu0
      %v3338 = vadd.f32 0.0, %v3337
      %v3339 = vpop.f32.mrb[0].mxu0
      %3340 = vmatprep.mubr.bf16.mxu0 0
      %3341 = vmatmul.mubr.bf16.gmra.mrb[0].mxu0 %v3151
      %v3342 = vpop.f32.mrb[0].mxu0
      %v3343 = vadd.f32 0.0, %v3342
      %v3344 = vpop.f32.mrb[0].mxu0
      %v3345 = vpop.f32.mrb[0].mxu0
      %v3346 = vadd.f32 0.0, %v3345
      %v3347 = vpop.f32.mrb[0].mxu0
      %3348 = vmatprep.mubr.bf16.mxu0 0
      %3349 = vmatmul.mubr.bf16.gmra.mrb[0].mxu0 %v3152
      %v3350 = vpop.f32.mrb[0].mxu0
      %v3351 = vadd.f32 0.0, %v3350
      %v3352 = vpop.f32.mrb[0].mxu0
      %v3353 = vpop.f32.mrb[0].mxu0
      %v3354 = vadd.f32 0.0, %v3353
      %v3355 = vpop.f32.mrb[0].mxu0
      %3356 = vmatprep.mubr.bf16.mxu0 0
      %3357 = vmatmul.mubr.bf16.gmra.mrb[0].mxu0 %v3153
      %v3358 = vpop.f32.mrb[0].mxu0
      %v3359 = vadd.f32 0.0, %v3358
      %v3360 = vpop.f32.mrb[0].mxu0
      %v3361 = vpop.f32.mrb[0].mxu0
      %v3362 = vadd.f32 0.0, %v3361
      %v3363 = vpop.f32.mrb[0].mxu0
      %3364 = vmatprep.mubr.bf16.mxu0 0
      %3365 = vmatmul.mubr.bf16.gmra.mrb[0].mxu0 %v3154
      %v3366 = vpop.f32.mrb[0].mxu0
      %v3367 = vadd.f32 0.0, %v3366
      %v3368 = vpop.f32.mrb[0].mxu0
      %v3369 = vpop.f32.mrb[0].mxu0
      %v3370 = vadd.f32 0.0, %v3369
      %v3371 = vpop.f32.mrb[0].mxu0
      %3372 = vmatprep.mubr.bf16.mxu0 0
      %3373 = vmatmul.mubr.bf16.gmra.mrb[0].mxu0 %v3155
      %v3374 = vpop.f32.mrb[0].mxu0
      %v3375 = vadd.f32 0.0, %v3374
      %v3376 = vpop.f32.mrb[0].mxu0
      %v3377 = vpop.f32.mrb[0].mxu0
      %v3378 = vadd.f32 0.0, %v3377
      %v3379 = vpop.f32.mrb[0].mxu0
      %3380 = vdwg.mxu0
      %v3381 = vadd.f32 %v2883, %v3255
      %v3382 = vadd.f32 %v2884, %v3258
      %v3383 = vadd.f32 %v2885, %v3263
      %v3384 = vadd.f32 %v2886, %v3266
      %v3385 = vadd.f32 %v2887, %v3271
      %v3386 = vadd.f32 %v2888, %v3274
      %v3387 = vadd.f32 %v2889, %v3279
      %v3388 = vadd.f32 %v2890, %v3282
      %v3389 = vadd.f32 %v2891, %v3287
      %v3390 = vadd.f32 %v2892, %v3290
      %v3391 = vadd.f32 %v2893, %v3295
      %v3392 = vadd.f32 %v2894, %v3298
      %v3393 = vadd.f32 %v2895, %v3303
      %v3394 = vadd.f32 %v2896, %v3306
      %v3395 = vadd.f32 %v2897, %v3311
      %v3396 = vadd.f32 %v2898, %v3314
      %v3397 = vadd.f32 %v2899, %v3319
      %v3398 = vadd.f32 %v2900, %v3322
      %v3399 = vadd.f32 %v2901, %v3327
      %v3400 = vadd.f32 %v2902, %v3330
      %v3401 = vadd.f32 %v2903, %v3335
      %v3402 = vadd.f32 %v2904, %v3338
      %v3403 = vadd.f32 %v2905, %v3343
      %v3404 = vadd.f32 %v2906, %v3346
      %v3405 = vadd.f32 %v2907, %v3351
      %v3406 = vadd.f32 %v2908, %v3354
      %v3407 = vadd.f32 %v2909, %v3359
      %v3408 = vadd.f32 %v2910, %v3362
      %v3409 = vadd.f32 %v2911, %v3367
      %v3410 = vadd.f32 %v2912, %v3370
      %v3411 = vadd.f32 %v2913, %v3375
      %v3412 = vadd.f32 %v2914, %v3378
      %s3413 = scalar_lea.vmem %s230, 24
      %v3414 = vld [vmem:[%s3413] sm:$0xf]
      %v3415 = vld [vmem:[%s3413 + $0x4] sm:$0xf]
      %v3416 = vld [vmem:[%s3413 + $0xc] sm:$0xf]
      %v3417 = vld [vmem:[%s3413 + $0x10] sm:$0xf]
      %v3418 = vld [vmem:[%s3413 + $0x18] sm:$0xf]
      %v3419 = vld [vmem:[%s3413 + $0x1c] sm:$0xf]
      %v3420 = vld [vmem:[%s3413 + $0x24] sm:$0xf]
      %v3421 = vld [vmem:[%s3413 + $0x28] sm:$0xf]
      %v3422 = vld [vmem:[%s3413 + $0x30] sm:$0xf]
      %v3423 = vld [vmem:[%s3413 + $0x34] sm:$0xf]
      %v3424 = vld [vmem:[%s3413 + $0x3c] sm:$0xf]
      %v3425 = vld [vmem:[%s3413 + $0x40] sm:$0xf]
      %v3426 = vld [vmem:[%s3413 + $0x48] sm:$0xf]
      %v3427 = vld [vmem:[%s3413 + $0x4c] sm:$0xf]
      %v3428 = vld [vmem:[%s3413 + $0x54] sm:$0xf]
      %v3429 = vld [vmem:[%s3413 + $0x58] sm:$0xf]
      %v3430 = vld [vmem:[%s3413 + $0x60] sm:$0xf]
      %v3431 = vld [vmem:[%s3413 + $0x64] sm:$0xf]
      %v3432 = vld [vmem:[%s3413 + $0x6c] sm:$0xf]
      %v3433 = vld [vmem:[%s3413 + $0x70] sm:$0xf]
      %v3434 = vld [vmem:[%s3413 + $0x78] sm:$0xf]
      %v3435 = vld [vmem:[%s3413 + $0x7c] sm:$0xf]
      %v3436 = vld [vmem:[%s3413 + $0x84] sm:$0xf]
      %v3437 = vld [vmem:[%s3413 + $0x88] sm:$0xf]
      %v3438 = vld [vmem:[%s3413 + $0x90] sm:$0xf]
      %v3439 = vld [vmem:[%s3413 + $0x94] sm:$0xf]
      %v3440 = vld [vmem:[%s3413 + $0x9c] sm:$0xf]
      %v3441 = vld [vmem:[%s3413 + $0xa0] sm:$0xf]
      %v3442 = vld [vmem:[%s3413 + $0xa8] sm:$0xf]
      %v3443 = vld [vmem:[%s3413 + $0xac] sm:$0xf]
      %v3444 = vld [vmem:[%s3413 + $0xb4] sm:$0xf]
      %v3445 = vld [vmem:[%s3413 + $0xb8] sm:$0xf]
      %s3446 = scalar_lea.vmem %s1, 384
      %v3447 = vld [vmem:[%s3446] sm:$0xf]
      %v3448 = vld [vmem:[%s3446 + $0x4] sm:$0xf]
      %v3449 = vld [vmem:[%s3446 + $0x8] sm:$0xf]
      %v3450 = vld [vmem:[%s3446 + $0xc] sm:$0xf]
      %v3451 = vld [vmem:[%s3446 + $0x10] sm:$0xf]
      %v3452 = vld [vmem:[%s3446 + $0x14] sm:$0xf]
      %v3453 = vld [vmem:[%s3446 + $0x18] sm:$0xf]
      %v3454 = vld [vmem:[%s3446 + $0x1c] sm:$0xf]
      %v3455 = vld [vmem:[%s3446 + $0x20] sm:$0xf]
      %v3456 = vld [vmem:[%s3446 + $0x24] sm:$0xf]
      %v3457 = vld [vmem:[%s3446 + $0x28] sm:$0xf]
      %v3458 = vld [vmem:[%s3446 + $0x2c] sm:$0xf]
      %v3459 = vld [vmem:[%s3446 + $0x30] sm:$0xf]
      %v3460 = vld [vmem:[%s3446 + $0x34] sm:$0xf]
      %v3461 = vld [vmem:[%s3446 + $0x38] sm:$0xf]
      %v3462 = vld [vmem:[%s3446 + $0x3c] sm:$0xf]
      %v3495 = vunpack.c.l.b16 %v3414
      %v3496 = vunpack.c.l.b16 %v3415
      %v3497 = vunpack.c.l.b16 %v3416
      %v3498 = vunpack.c.l.b16 %v3417
      %v3499 = vunpack.c.l.b16 %v3418
      %v3500 = vunpack.c.l.b16 %v3419
      %v3501 = vunpack.c.l.b16 %v3420
      %v3502 = vunpack.c.l.b16 %v3421
      %v3503 = vunpack.c.l.b16 %v3422
      %v3504 = vunpack.c.l.b16 %v3423
      %v3505 = vunpack.c.l.b16 %v3424
      %v3506 = vunpack.c.l.b16 %v3425
      %v3507 = vunpack.c.l.b16 %v3426
      %v3508 = vunpack.c.l.b16 %v3427
      %v3509 = vunpack.c.l.b16 %v3428
      %v3510 = vunpack.c.l.b16 %v3429
      %v3511 = vunpack.c.l.b16 %v3430
      %v3512 = vunpack.c.l.b16 %v3431
      %v3513 = vunpack.c.l.b16 %v3432
      %v3514 = vunpack.c.l.b16 %v3433
      %v3515 = vunpack.c.l.b16 %v3434
      %v3516 = vunpack.c.l.b16 %v3435
      %v3517 = vunpack.c.l.b16 %v3436
      %v3518 = vunpack.c.l.b16 %v3437
      %v3519 = vunpack.c.l.b16 %v3438
      %v3520 = vunpack.c.l.b16 %v3439
      %v3521 = vunpack.c.l.b16 %v3440
      %v3522 = vunpack.c.l.b16 %v3441
      %v3523 = vunpack.c.l.b16 %v3442
      %v3524 = vunpack.c.l.b16 %v3443
      %v3525 = vunpack.c.l.b16 %v3444
      %v3526 = vunpack.c.l.b16 %v3445
      %v3527 = vpack.c.b16 %v3496, %v3495
      %v3528 = vpack.c.b16 %v3498, %v3497
      %v3529 = vpack.c.b16 %v3500, %v3499
      %v3530 = vpack.c.b16 %v3502, %v3501
      %v3531 = vpack.c.b16 %v3504, %v3503
      %v3532 = vpack.c.b16 %v3506, %v3505
      %v3533 = vpack.c.b16 %v3508, %v3507
      %v3534 = vpack.c.b16 %v3510, %v3509
      %v3535 = vpack.c.b16 %v3512, %v3511
      %v3536 = vpack.c.b16 %v3514, %v3513
      %v3537 = vpack.c.b16 %v3516, %v3515
      %v3538 = vpack.c.b16 %v3518, %v3517
      %v3539 = vpack.c.b16 %v3520, %v3519
      %v3540 = vpack.c.b16 %v3522, %v3521
      %v3541 = vpack.c.b16 %v3524, %v3523
      %v3542 = vpack.c.b16 %v3526, %v3525
      %v3575 = vunpack.c.l.b16 %v3447
      %v3576 = vunpack.c.l.b16 %v3448
      %v3577 = vunpack.c.l.b16 %v3449
      %v3578 = vunpack.c.l.b16 %v3450
      %v3579 = vunpack.c.l.b16 %v3451
      %v3580 = vunpack.c.l.b16 %v3452
      %v3581 = vunpack.c.l.b16 %v3453
      %v3582 = vunpack.c.l.b16 %v3454
      %v3583 = vunpack.c.l.b16 %v3455
      %v3584 = vunpack.c.l.b16 %v3456
      %v3585 = vunpack.c.l.b16 %v3457
      %v3586 = vunpack.c.l.b16 %v3458
      %v3587 = vunpack.c.l.b16 %v3459
      %v3588 = vunpack.c.l.b16 %v3460
      %v3589 = vunpack.c.l.b16 %v3461
      %v3590 = vunpack.c.l.b16 %v3462
      %v3591 = vpack.c.b16 %v3576, %v3575
      %v3592 = vpack.c.b16 %v3578, %v3577
      %v3593 = vpack.c.b16 %v3580, %v3579
      %v3594 = vpack.c.b16 %v3582, %v3581
      %v3595 = vpack.c.b16 %v3584, %v3583
      %v3596 = vpack.c.b16 %v3586, %v3585
      %v3597 = vpack.c.b16 %v3588, %v3587
      %v3598 = vpack.c.b16 %v3590, %v3589
      %3607 = vmatprep.subr.bf16.mxu0 0
      %3608 = vmatpush1.bf16.msra.mxu0 %v3591
      %3609 = vmatprep.subr.bf16.mxu0 0
      %3610 = vmatpush1.bf16.msra.mxu0 %v3592
      %3611 = vmatprep.subr.bf16.mxu0 0
      %3612 = vmatpush1.bf16.msra.mxu0 %v3593
      %3613 = vmatprep.subr.bf16.mxu0 0
      %3614 = vmatpush1.bf16.msra.mxu0 %v3594
      %3615 = vmatprep.subr.bf16.mxu0 0
      %3616 = vmatpush1.bf16.msra.mxu0 %v3595
      %3617 = vmatprep.subr.bf16.mxu0 0
      %3618 = vmatpush1.bf16.msra.mxu0 %v3596
      %3619 = vmatprep.subr.bf16.mxu0 0
      %3620 = vmatpush1.bf16.msra.mxu0 %v3597
      %3621 = vmatprep.subr.bf16.mxu0 0
      %3622 = vmatpush1.bf16.msra.mxu0 %v3598
      %3623 = vmatprep.subr.bf16.mxu0 0
      %3624 = vmatpush1.bf16.msra.mxu0 0
      %3625 = vmatprep.subr.bf16.mxu0 0
      %3626 = vmatpush1.bf16.msra.mxu0 0
      %3627 = vmatprep.subr.bf16.mxu0 0
      %3628 = vmatpush1.bf16.msra.mxu0 0
      %3629 = vmatprep.subr.bf16.mxu0 0
      %3630 = vmatpush1.bf16.msra.mxu0 0
      %3631 = vmatprep.subr.bf16.mxu0 0
      %3632 = vmatpush1.bf16.msra.mxu0 0
      %3633 = vmatprep.subr.bf16.mxu0 0
      %3634 = vmatpush1.bf16.msra.mxu0 0
      %3635 = vmatprep.subr.bf16.mxu0 0
      %3636 = vmatpush1.bf16.msra.mxu0 0
      %3637 = vmatprep.subr.bf16.mxu0 0
      %3638 = vmatpush1.bf16.msra.mxu0 0
      %3639 = vmatprep.mubr.bf16.mxu0 0
      %3640 = vmatmul.mubr.bf16.gmra.mrb[0].mxu0 %v3527
      %v3641 = vpop.f32.mrb[0].mxu0
      %v3642 = vadd.f32 0.0, %v3641
      %v3643 = vpop.f32.mrb[0].mxu0
      %v3644 = vpop.f32.mrb[0].mxu0
      %v3645 = vadd.f32 0.0, %v3644
      %v3646 = vpop.f32.mrb[0].mxu0
      %3647 = vmatprep.mubr.bf16.mxu0 0
      %3648 = vmatmul.mubr.bf16.gmra.mrb[0].mxu0 %v3528
      %v3649 = vpop.f32.mrb[0].mxu0
      %v3650 = vadd.f32 0.0, %v3649
      %v3651 = vpop.f32.mrb[0].mxu0
      %v3652 = vpop.f32.mrb[0].mxu0
      %v3653 = vadd.f32 0.0, %v3652
      %v3654 = vpop.f32.mrb[0].mxu0
      %3655 = vmatprep.mubr.bf16.mxu0 0
      %3656 = vmatmul.mubr.bf16.gmra.mrb[0].mxu0 %v3529
      %v3657 = vpop.f32.mrb[0].mxu0
      %v3658 = vadd.f32 0.0, %v3657
      %v3659 = vpop.f32.mrb[0].mxu0
      %v3660 = vpop.f32.mrb[0].mxu0
      %v3661 = vadd.f32 0.0, %v3660
      %v3662 = vpop.f32.mrb[0].mxu0
      %3663 = vmatprep.mubr.bf16.mxu0 0
      %3664 = vmatmul.mubr.bf16.gmra.mrb[0].mxu0 %v3530
      %v3665 = vpop.f32.mrb[0].mxu0
      %v3666 = vadd.f32 0.0, %v3665
      %v3667 = vpop.f32.mrb[0].mxu0
      %v3668 = vpop.f32.mrb[0].mxu0
      %v3669 = vadd.f32 0.0, %v3668
      %v3670 = vpop.f32.mrb[0].mxu0
      %3671 = vmatprep.mubr.bf16.mxu0 0
      %3672 = vmatmul.mubr.bf16.gmra.mrb[0].mxu0 %v3531
      %v3673 = vpop.f32.mrb[0].mxu0
      %v3674 = vadd.f32 0.0, %v3673
      %v3675 = vpop.f32.mrb[0].mxu0
      %v3676 = vpop.f32.mrb[0].mxu0
      %v3677 = vadd.f32 0.0, %v3676
      %v3678 = vpop.f32.mrb[0].mxu0
      %3679 = vmatprep.mubr.bf16.mxu0 0
      %3680 = vmatmul.mubr.bf16.gmra.mrb[0].mxu0 %v3532
      %v3681 = vpop.f32.mrb[0].mxu0
      %v3682 = vadd.f32 0.0, %v3681
      %v3683 = vpop.f32.mrb[0].mxu0
      %v3684 = vpop.f32.mrb[0].mxu0
      %v3685 = vadd.f32 0.0, %v3684
      %v3686 = vpop.f32.mrb[0].mxu0
      %3687 = vmatprep.mubr.bf16.mxu0 0
      %3688 = vmatmul.mubr.bf16.gmra.mrb[0].mxu0 %v3533
      %v3689 = vpop.f32.mrb[0].mxu0
      %v3690 = vadd.f32 0.0, %v3689
      %v3691 = vpop.f32.mrb[0].mxu0
      %v3692 = vpop.f32.mrb[0].mxu0
      %v3693 = vadd.f32 0.0, %v3692
      %v3694 = vpop.f32.mrb[0].mxu0
      %3695 = vmatprep.mubr.bf16.mxu0 0
      %3696 = vmatmul.mubr.bf16.gmra.mrb[0].mxu0 %v3534
      %v3697 = vpop.f32.mrb[0].mxu0
      %v3698 = vadd.f32 0.0, %v3697
      %v3699 = vpop.f32.mrb[0].mxu0
      %v3700 = vpop.f32.mrb[0].mxu0
      %v3701 = vadd.f32 0.0, %v3700
      %v3702 = vpop.f32.mrb[0].mxu0
      %3703 = vmatprep.mubr.bf16.mxu0 0
      %3704 = vmatmul.mubr.bf16.gmra.mrb[0].mxu0 %v3535
      %v3705 = vpop.f32.mrb[0].mxu0
      %v3706 = vadd.f32 0.0, %v3705
      %v3707 = vpop.f32.mrb[0].mxu0
      %v3708 = vpop.f32.mrb[0].mxu0
      %v3709 = vadd.f32 0.0, %v3708
      %v3710 = vpop.f32.mrb[0].mxu0
      %3711 = vmatprep.mubr.bf16.mxu0 0
      %3712 = vmatmul.mubr.bf16.gmra.mrb[0].mxu0 %v3536
      %v3713 = vpop.f32.mrb[0].mxu0
      %v3714 = vadd.f32 0.0, %v3713
      %v3715 = vpop.f32.mrb[0].mxu0
      %v3716 = vpop.f32.mrb[0].mxu0
      %v3717 = vadd.f32 0.0, %v3716
      %v3718 = vpop.f32.mrb[0].mxu0
      %3719 = vmatprep.mubr.bf16.mxu0 0
      %3720 = vmatmul.mubr.bf16.gmra.mrb[0].mxu0 %v3537
      %v3721 = vpop.f32.mrb[0].mxu0
      %v3722 = vadd.f32 0.0, %v3721
      %v3723 = vpop.f32.mrb[0].mxu0
      %v3724 = vpop.f32.mrb[0].mxu0
      %v3725 = vadd.f32 0.0, %v3724
      %v3726 = vpop.f32.mrb[0].mxu0
      %3727 = vmatprep.mubr.bf16.mxu0 0
      %3728 = vmatmul.mubr.bf16.gmra.mrb[0].mxu0 %v3538
      %v3729 = vpop.f32.mrb[0].mxu0
      %v3730 = vadd.f32 0.0, %v3729
      %v3731 = vpop.f32.mrb[0].mxu0
      %v3732 = vpop.f32.mrb[0].mxu0
      %v3733 = vadd.f32 0.0, %v3732
      %v3734 = vpop.f32.mrb[0].mxu0
      %3735 = vmatprep.mubr.bf16.mxu0 0
      %3736 = vmatmul.mubr.bf16.gmra.mrb[0].mxu0 %v3539
      %v3737 = vpop.f32.mrb[0].mxu0
      %v3738 = vadd.f32 0.0, %v3737
      %v3739 = vpop.f32.mrb[0].mxu0
      %v3740 = vpop.f32.mrb[0].mxu0
      %v3741 = vadd.f32 0.0, %v3740
      %v3742 = vpop.f32.mrb[0].mxu0
      %3743 = vmatprep.mubr.bf16.mxu0 0
      %3744 = vmatmul.mubr.bf16.gmra.mrb[0].mxu0 %v3540
      %v3745 = vpop.f32.mrb[0].mxu0
      %v3746 = vadd.f32 0.0, %v3745
      %v3747 = vpop.f32.mrb[0].mxu0
      %v3748 = vpop.f32.mrb[0].mxu0
      %v3749 = vadd.f32 0.0, %v3748
      %v3750 = vpop.f32.mrb[0].mxu0
      %3751 = vmatprep.mubr.bf16.mxu0 0
      %3752 = vmatmul.mubr.bf16.gmra.mrb[0].mxu0 %v3541
      %v3753 = vpop.f32.mrb[0].mxu0
      %v3754 = vadd.f32 0.0, %v3753
      %v3755 = vpop.f32.mrb[0].mxu0
      %v3756 = vpop.f32.mrb[0].mxu0
      %v3757 = vadd.f32 0.0, %v3756
      %v3758 = vpop.f32.mrb[0].mxu0
      %3759 = vmatprep.mubr.bf16.mxu0 0
      %3760 = vmatmul.mubr.bf16.gmra.mrb[0].mxu0 %v3542
      %v3761 = vpop.f32.mrb[0].mxu0
      %v3762 = vadd.f32 0.0, %v3761
      %v3763 = vpop.f32.mrb[0].mxu0
      %v3764 = vpop.f32.mrb[0].mxu0
      %v3765 = vadd.f32 0.0, %v3764
      %v3766 = vpop.f32.mrb[0].mxu0
      %3767 = vdwg.mxu0
      %v3768 = vadd.f32 %v3381, %v3642
      %v3769 = vadd.f32 %v3382, %v3645
      %v3770 = vadd.f32 %v3383, %v3650
      %v3771 = vadd.f32 %v3384, %v3653
      %v3772 = vadd.f32 %v3385, %v3658
      %v3773 = vadd.f32 %v3386, %v3661
      %v3774 = vadd.f32 %v3387, %v3666
      %v3775 = vadd.f32 %v3388, %v3669
      %v3776 = vadd.f32 %v3389, %v3674
      %v3777 = vadd.f32 %v3390, %v3677
      %v3778 = vadd.f32 %v3391, %v3682
      %v3779 = vadd.f32 %v3392, %v3685
      %v3780 = vadd.f32 %v3393, %v3690
      %v3781 = vadd.f32 %v3394, %v3693
      %v3782 = vadd.f32 %v3395, %v3698
      %v3783 = vadd.f32 %v3396, %v3701
      %v3784 = vadd.f32 %v3397, %v3706
      %v3785 = vadd.f32 %v3398, %v3709
      %v3786 = vadd.f32 %v3399, %v3714
      %v3787 = vadd.f32 %v3400, %v3717
      %v3788 = vadd.f32 %v3401, %v3722
      %v3789 = vadd.f32 %v3402, %v3725
      %v3790 = vadd.f32 %v3403, %v3730
      %v3791 = vadd.f32 %v3404, %v3733
      %v3792 = vadd.f32 %v3405, %v3738
      %v3793 = vadd.f32 %v3406, %v3741
      %v3794 = vadd.f32 %v3407, %v3746
      %v3795 = vadd.f32 %v3408, %v3749
      %v3796 = vadd.f32 %v3409, %v3754
      %v3797 = vadd.f32 %v3410, %v3757
      %v3798 = vadd.f32 %v3411, %v3762
      %v3799 = vadd.f32 %v3412, %v3765
      %v3800 = vld [vmem:[%s3413] sm:$0xf]
      %v3801 = vld [vmem:[%s3413 + $0x4] sm:$0xf]
      %v3802 = vld [vmem:[%s3413 + $0x8] sm:$0x1]
      %v3803 = vld [vmem:[%s3413 + $0xc] sm:$0xf]
      %v3804 = vld [vmem:[%s3413 + $0x10] sm:$0xf]
      %v3805 = vld [vmem:[%s3413 + $0x14] sm:$0x1]
      %v3806 = vld [vmem:[%s3413 + $0x18] sm:$0xf]
      %v3807 = vld [vmem:[%s3413 + $0x1c] sm:$0xf]
      %v3808 = vld [vmem:[%s3413 + $0x20] sm:$0x1]
      %v3809 = vld [vmem:[%s3413 + $0x24] sm:$0xf]
      %v3810 = vld [vmem:[%s3413 + $0x28] sm:$0xf]
      %v3811 = vld [vmem:[%s3413 + $0x2c] sm:$0x1]
      %v3812 = vld [vmem:[%s3413 + $0x30] sm:$0xf]
      %v3813 = vld [vmem:[%s3413 + $0x34] sm:$0xf]
      %v3814 = vld [vmem:[%s3413 + $0x38] sm:$0x1]
      %v3815 = vld [vmem:[%s3413 + $0x3c] sm:$0xf]
      %v3816 = vld [vmem:[%s3413 + $0x40] sm:$0xf]
      %v3817 = vld [vmem:[%s3413 + $0x44] sm:$0x1]
      %v3818 = vld [vmem:[%s3413 + $0x48] sm:$0xf]
      %v3819 = vld [vmem:[%s3413 + $0x4c] sm:$0xf]
      %v3820 = vld [vmem:[%s3413 + $0x50] sm:$0x1]
      %v3821 = vld [vmem:[%s3413 + $0x54] sm:$0xf]
      %v3822 = vld [vmem:[%s3413 + $0x58] sm:$0xf]
      %v3823 = vld [vmem:[%s3413 + $0x5c] sm:$0x1]
      %v3824 = vld [vmem:[%s3413 + $0x60] sm:$0xf]
      %v3825 = vld [vmem:[%s3413 + $0x64] sm:$0xf]
      %v3826 = vld [vmem:[%s3413 + $0x68] sm:$0x1]
      %v3827 = vld [vmem:[%s3413 + $0x6c] sm:$0xf]
      %v3828 = vld [vmem:[%s3413 + $0x70] sm:$0xf]
      %v3829 = vld [vmem:[%s3413 + $0x74] sm:$0x1]
      %v3830 = vld [vmem:[%s3413 + $0x78] sm:$0xf]
      %v3831 = vld [vmem:[%s3413 + $0x7c] sm:$0xf]
      %v3832 = vld [vmem:[%s3413 + $0x80] sm:$0x1]
      %v3833 = vld [vmem:[%s3413 + $0x84] sm:$0xf]
      %v3834 = vld [vmem:[%s3413 + $0x88] sm:$0xf]
      %v3835 = vld [vmem:[%s3413 + $0x8c] sm:$0x1]
      %v3836 = vld [vmem:[%s3413 + $0x90] sm:$0xf]
      %v3837 = vld [vmem:[%s3413 + $0x94] sm:$0xf]
      %v3838 = vld [vmem:[%s3413 + $0x98] sm:$0x1]
      %v3839 = vld [vmem:[%s3413 + $0x9c] sm:$0xf]
      %v3840 = vld [vmem:[%s3413 + $0xa0] sm:$0xf]
      %v3841 = vld [vmem:[%s3413 + $0xa4] sm:$0x1]
      %v3842 = vld [vmem:[%s3413 + $0xa8] sm:$0xf]
      %v3843 = vld [vmem:[%s3413 + $0xac] sm:$0xf]
      %v3844 = vld [vmem:[%s3413 + $0xb0] sm:$0x1]
      %v3845 = vld [vmem:[%s3413 + $0xb4] sm:$0xf]
      %v3846 = vld [vmem:[%s3413 + $0xb8] sm:$0xf]
      %v3847 = vld [vmem:[%s3413 + $0xbc] sm:$0x1]
      %v3849 = vshrl.u32 %v3800, 16
      %v3851 = vrot.slane %v3849, 4
      %v3852 = vshll.u32 %v3800, 16
      %v3854 = vrot.slane %v3852, 5
      %v3855 = vor.u32 %v3851, %v3854
      %v3856 = vrot.slane %v3855, 4
      %v3858 = vshll.u32 %v3801, 16
      %v3860 = vrot.slane %v3858, 5
      %v3861 = vsel %vm309, %v3856, %v3860
      %v3862 = vshrl.u32 %v3801, 16
      %v3864 = vrot.slane %v3862, 4
      %v3865 = vor.u32 %v3864, %v3860
      %v3866 = vrot.slane %v3865, 4
      %v3868 = vshll.u32 %v3802, 16
      %v3870 = vrot.slane %v3868, 5
      %v3871 = vsel %vm309, %v3866, %v3870
      %v3873 = vshrl.u32 %v3803, 16
      %v3875 = vrot.slane %v3873, 4
      %v3876 = vshll.u32 %v3803, 16
      %v3878 = vrot.slane %v3876, 5
      %v3879 = vor.u32 %v3875, %v3878
      %v3880 = vrot.slane %v3879, 4
      %v3882 = vshll.u32 %v3804, 16
      %v3884 = vrot.slane %v3882, 5
      %v3885 = vsel %vm309, %v3880, %v3884
      %v3886 = vshrl.u32 %v3804, 16
      %v3888 = vrot.slane %v3886, 4
      %v3889 = vor.u32 %v3888, %v3884
      %v3890 = vrot.slane %v3889, 4
      %v3892 = vshll.u32 %v3805, 16
      %v3894 = vrot.slane %v3892, 5
      %v3895 = vsel %vm309, %v3890, %v3894
      %v3897 = vshrl.u32 %v3806, 16
      %v3899 = vrot.slane %v3897, 4
      %v3900 = vshll.u32 %v3806, 16
      %v3902 = vrot.slane %v3900, 5
      %v3903 = vor.u32 %v3899, %v3902
      %v3904 = vrot.slane %v3903, 4
      %v3906 = vshll.u32 %v3807, 16
      %v3908 = vrot.slane %v3906, 5
      %v3909 = vsel %vm309, %v3904, %v3908
      %v3910 = vshrl.u32 %v3807, 16
      %v3912 = vrot.slane %v3910, 4
      %v3913 = vor.u32 %v3912, %v3908
      %v3914 = vrot.slane %v3913, 4
      %v3916 = vshll.u32 %v3808, 16
      %v3918 = vrot.slane %v3916, 5
      %v3919 = vsel %vm309, %v3914, %v3918
      %v3921 = vshrl.u32 %v3809, 16
      %v3923 = vrot.slane %v3921, 4
      %v3924 = vshll.u32 %v3809, 16
      %v3926 = vrot.slane %v3924, 5
      %v3927 = vor.u32 %v3923, %v3926
      %v3928 = vrot.slane %v3927, 4
      %v3930 = vshll.u32 %v3810, 16
      %v3932 = vrot.slane %v3930, 5
      %v3933 = vsel %vm309, %v3928, %v3932
      %v3934 = vshrl.u32 %v3810, 16
      %v3936 = vrot.slane %v3934, 4
      %v3937 = vor.u32 %v3936, %v3932
      %v3938 = vrot.slane %v3937, 4
      %v3940 = vshll.u32 %v3811, 16
      %v3942 = vrot.slane %v3940, 5
      %v3943 = vsel %vm309, %v3938, %v3942
      %v3945 = vshrl.u32 %v3812, 16
      %v3947 = vrot.slane %v3945, 4
      %v3948 = vshll.u32 %v3812, 16
      %v3950 = vrot.slane %v3948, 5
      %v3951 = vor.u32 %v3947, %v3950
      %v3952 = vrot.slane %v3951, 4
      %v3954 = vshll.u32 %v3813, 16
      %v3956 = vrot.slane %v3954, 5
      %v3957 = vsel %vm309, %v3952, %v3956
      %v3958 = vshrl.u32 %v3813, 16
      %v3960 = vrot.slane %v3958, 4
      %v3961 = vor.u32 %v3960, %v3956
      %v3962 = vrot.slane %v3961, 4
      %v3964 = vshll.u32 %v3814, 16
      %v3966 = vrot.slane %v3964, 5
      %v3967 = vsel %vm309, %v3962, %v3966
      %v3969 = vshrl.u32 %v3815, 16
      %v3971 = vrot.slane %v3969, 4
      %v3972 = vshll.u32 %v3815, 16
      %v3974 = vrot.slane %v3972, 5
      %v3975 = vor.u32 %v3971, %v3974
      %v3976 = vrot.slane %v3975, 4
      %v3978 = vshll.u32 %v3816, 16
      %v3980 = vrot.slane %v3978, 5
      %v3981 = vsel %vm309, %v3976, %v3980
      %v3982 = vshrl.u32 %v3816, 16
      %v3984 = vrot.slane %v3982, 4
      %v3985 = vor.u32 %v3984, %v3980
      %v3986 = vrot.slane %v3985, 4
      %v3988 = vshll.u32 %v3817, 16
      %v3990 = vrot.slane %v3988, 5
      %v3991 = vsel %vm309, %v3986, %v3990
      %v3993 = vshrl.u32 %v3818, 16
      %v3995 = vrot.slane %v3993, 4
      %v3996 = vshll.u32 %v3818, 16
      %v3998 = vrot.slane %v3996, 5
      %v3999 = vor.u32 %v3995, %v3998
      %v4000 = vrot.slane %v3999, 4
      %v4002 = vshll.u32 %v3819, 16
      %v4004 = vrot.slane %v4002, 5
      %v4005 = vsel %vm309, %v4000, %v4004
      %v4006 = vshrl.u32 %v3819, 16
      %v4008 = vrot.slane %v4006, 4
      %v4009 = vor.u32 %v4008, %v4004
      %v4010 = vrot.slane %v4009, 4
      %v4012 = vshll.u32 %v3820, 16
      %v4014 = vrot.slane %v4012, 5
      %v4015 = vsel %vm309, %v4010, %v4014
      %v4017 = vshrl.u32 %v3821, 16
      %v4019 = vrot.slane %v4017, 4
      %v4020 = vshll.u32 %v3821, 16
      %v4022 = vrot.slane %v4020, 5
      %v4023 = vor.u32 %v4019, %v4022
      %v4024 = vrot.slane %v4023, 4
      %v4026 = vshll.u32 %v3822, 16
      %v4028 = vrot.slane %v4026, 5
      %v4029 = vsel %vm309, %v4024, %v4028
      %v4030 = vshrl.u32 %v3822, 16
      %v4032 = vrot.slane %v4030, 4
      %v4033 = vor.u32 %v4032, %v4028
      %v4034 = vrot.slane %v4033, 4
      %v4036 = vshll.u32 %v3823, 16
      %v4038 = vrot.slane %v4036, 5
      %v4039 = vsel %vm309, %v4034, %v4038
      %v4041 = vshrl.u32 %v3824, 16
      %v4043 = vrot.slane %v4041, 4
      %v4044 = vshll.u32 %v3824, 16
      %v4046 = vrot.slane %v4044, 5
      %v4047 = vor.u32 %v4043, %v4046
      %v4048 = vrot.slane %v4047, 4
      %v4050 = vshll.u32 %v3825, 16
      %v4052 = vrot.slane %v4050, 5
      %v4053 = vsel %vm309, %v4048, %v4052
      %v4054 = vshrl.u32 %v3825, 16
      %v4056 = vrot.slane %v4054, 4
      %v4057 = vor.u32 %v4056, %v4052
      %v4058 = vrot.slane %v4057, 4
      %v4060 = vshll.u32 %v3826, 16
      %v4062 = vrot.slane %v4060, 5
      %v4063 = vsel %vm309, %v4058, %v4062
      %v4065 = vshrl.u32 %v3827, 16
      %v4067 = vrot.slane %v4065, 4
      %v4068 = vshll.u32 %v3827, 16
      %v4070 = vrot.slane %v4068, 5
      %v4071 = vor.u32 %v4067, %v4070
      %v4072 = vrot.slane %v4071, 4
      %v4074 = vshll.u32 %v3828, 16
      %v4076 = vrot.slane %v4074, 5
      %v4077 = vsel %vm309, %v4072, %v4076
      %v4078 = vshrl.u32 %v3828, 16
      %v4080 = vrot.slane %v4078, 4
      %v4081 = vor.u32 %v4080, %v4076
      %v4082 = vrot.slane %v4081, 4
      %v4084 = vshll.u32 %v3829, 16
      %v4086 = vrot.slane %v4084, 5
      %v4087 = vsel %vm309, %v4082, %v4086
      %v4089 = vshrl.u32 %v3830, 16
      %v4091 = vrot.slane %v4089, 4
      %v4092 = vshll.u32 %v3830, 16
      %v4094 = vrot.slane %v4092, 5
      %v4095 = vor.u32 %v4091, %v4094
      %v4096 = vrot.slane %v4095, 4
      %v4098 = vshll.u32 %v3831, 16
      %v4100 = vrot.slane %v4098, 5
      %v4101 = vsel %vm309, %v4096, %v4100
      %v4102 = vshrl.u32 %v3831, 16
      %v4104 = vrot.slane %v4102, 4
      %v4105 = vor.u32 %v4104, %v4100
      %v4106 = vrot.slane %v4105, 4
      %v4108 = vshll.u32 %v3832, 16
      %v4110 = vrot.slane %v4108, 5
      %v4111 = vsel %vm309, %v4106, %v4110
      %v4113 = vshrl.u32 %v3833, 16
      %v4115 = vrot.slane %v4113, 4
      %v4116 = vshll.u32 %v3833, 16
      %v4118 = vrot.slane %v4116, 5
      %v4119 = vor.u32 %v4115, %v4118
      %v4120 = vrot.slane %v4119, 4
      %v4122 = vshll.u32 %v3834, 16
      %v4124 = vrot.slane %v4122, 5
      %v4125 = vsel %vm309, %v4120, %v4124
      %v4126 = vshrl.u32 %v3834, 16
      %v4128 = vrot.slane %v4126, 4
      %v4129 = vor.u32 %v4128, %v4124
      %v4130 = vrot.slane %v4129, 4
      %v4132 = vshll.u32 %v3835, 16
      %v4134 = vrot.slane %v4132, 5
      %v4135 = vsel %vm309, %v4130, %v4134
      %v4137 = vshrl.u32 %v3836, 16
      %v4139 = vrot.slane %v4137, 4
      %v4140 = vshll.u32 %v3836, 16
      %v4142 = vrot.slane %v4140, 5
      %v4143 = vor.u32 %v4139, %v4142
      %v4144 = vrot.slane %v4143, 4
      %v4146 = vshll.u32 %v3837, 16
      %v4148 = vrot.slane %v4146, 5
      %v4149 = vsel %vm309, %v4144, %v4148
      %v4150 = vshrl.u32 %v3837, 16
      %v4152 = vrot.slane %v4150, 4
      %v4153 = vor.u32 %v4152, %v4148
      %v4154 = vrot.slane %v4153, 4
      %v4156 = vshll.u32 %v3838, 16
      %v4158 = vrot.slane %v4156, 5
      %v4159 = vsel %vm309, %v4154, %v4158
      %v4161 = vshrl.u32 %v3839, 16
      %v4163 = vrot.slane %v4161, 4
      %v4164 = vshll.u32 %v3839, 16
      %v4166 = vrot.slane %v4164, 5
      %v4167 = vor.u32 %v4163, %v4166
      %v4168 = vrot.slane %v4167, 4
      %v4170 = vshll.u32 %v3840, 16
      %v4172 = vrot.slane %v4170, 5
      %v4173 = vsel %vm309, %v4168, %v4172
      %v4174 = vshrl.u32 %v3840, 16
      %v4176 = vrot.slane %v4174, 4
      %v4177 = vor.u32 %v4176, %v4172
      %v4178 = vrot.slane %v4177, 4
      %v4180 = vshll.u32 %v3841, 16
      %v4182 = vrot.slane %v4180, 5
      %v4183 = vsel %vm309, %v4178, %v4182
      %v4185 = vshrl.u32 %v3842, 16
      %v4187 = vrot.slane %v4185, 4
      %v4188 = vshll.u32 %v3842, 16
      %v4190 = vrot.slane %v4188, 5
      %v4191 = vor.u32 %v4187, %v4190
      %v4192 = vrot.slane %v4191, 4
      %v4194 = vshll.u32 %v3843, 16
      %v4196 = vrot.slane %v4194, 5
      %v4197 = vsel %vm309, %v4192, %v4196
      %v4198 = vshrl.u32 %v3843, 16
      %v4200 = vrot.slane %v4198, 4
      %v4201 = vor.u32 %v4200, %v4196
      %v4202 = vrot.slane %v4201, 4
      %v4204 = vshll.u32 %v3844, 16
      %v4206 = vrot.slane %v4204, 5
      %v4207 = vsel %vm309, %v4202, %v4206
      %v4209 = vshrl.u32 %v3845, 16
      %v4211 = vrot.slane %v4209, 4
      %v4212 = vshll.u32 %v3845, 16
      %v4214 = vrot.slane %v4212, 5
      %v4215 = vor.u32 %v4211, %v4214
      %v4216 = vrot.slane %v4215, 4
      %v4218 = vshll.u32 %v3846, 16
      %v4220 = vrot.slane %v4218, 5
      %v4221 = vsel %vm309, %v4216, %v4220
      %v4222 = vshrl.u32 %v3846, 16
      %v4224 = vrot.slane %v4222, 4
      %v4225 = vor.u32 %v4224, %v4220
      %v4226 = vrot.slane %v4225, 4
      %v4228 = vshll.u32 %v3847, 16
      %v4230 = vrot.slane %v4228, 5
      %v4231 = vsel %vm309, %v4226, %v4230
      %s4232 = scalar_lea.vmem %s1, 448
      %v4233 = vld [vmem:[%s4232] sm:$0xf]
      %v4234 = vld [vmem:[%s4232 + $0x4] sm:$0xf]
      %v4235 = vld [vmem:[%s4232 + $0x8] sm:$0xf]
      %v4236 = vld [vmem:[%s4232 + $0xc] sm:$0xf]
      %v4237 = vld [vmem:[%s4232 + $0x10] sm:$0xf]
      %v4238 = vld [vmem:[%s4232 + $0x14] sm:$0xf]
      %v4239 = vld [vmem:[%s4232 + $0x18] sm:$0xf]
      %v4240 = vld [vmem:[%s4232 + $0x1c] sm:$0xf]
      %v4241 = vld [vmem:[%s4232 + $0x20] sm:$0xf]
      %v4242 = vld [vmem:[%s4232 + $0x24] sm:$0xf]
      %v4243 = vld [vmem:[%s4232 + $0x28] sm:$0xf]
      %v4244 = vld [vmem:[%s4232 + $0x2c] sm:$0xf]
      %v4245 = vld [vmem:[%s4232 + $0x30] sm:$0xf]
      %v4246 = vld [vmem:[%s4232 + $0x34] sm:$0xf]
      %v4247 = vld [vmem:[%s4232 + $0x38] sm:$0xf]
      %v4248 = vld [vmem:[%s4232 + $0x3c] sm:$0xf]
      %v4249 = vunpack.c.l.b16 %v3861
      %v4250 = vunpack.c.l.b16 %v3871
      %v4251 = vunpack.c.l.b16 %v3885
      %v4252 = vunpack.c.l.b16 %v3895
      %v4253 = vunpack.c.l.b16 %v3909
      %v4254 = vunpack.c.l.b16 %v3919
      %v4255 = vunpack.c.l.b16 %v3933
      %v4256 = vunpack.c.l.b16 %v3943
      %v4257 = vunpack.c.l.b16 %v3957
      %v4258 = vunpack.c.l.b16 %v3967
      %v4259 = vunpack.c.l.b16 %v3981
      %v4260 = vunpack.c.l.b16 %v3991
      %v4261 = vunpack.c.l.b16 %v4005
      %v4262 = vunpack.c.l.b16 %v4015
      %v4263 = vunpack.c.l.b16 %v4029
      %v4264 = vunpack.c.l.b16 %v4039
      %v4265 = vunpack.c.l.b16 %v4053
      %v4266 = vunpack.c.l.b16 %v4063
      %v4267 = vunpack.c.l.b16 %v4077
      %v4268 = vunpack.c.l.b16 %v4087
      %v4269 = vunpack.c.l.b16 %v4101
      %v4270 = vunpack.c.l.b16 %v4111
      %v4271 = vunpack.c.l.b16 %v4125
      %v4272 = vunpack.c.l.b16 %v4135
      %v4273 = vunpack.c.l.b16 %v4149
      %v4274 = vunpack.c.l.b16 %v4159
      %v4275 = vunpack.c.l.b16 %v4173
      %v4276 = vunpack.c.l.b16 %v4183
      %v4277 = vunpack.c.l.b16 %v4197
      %v4278 = vunpack.c.l.b16 %v4207
      %v4279 = vunpack.c.l.b16 %v4221
      %v4280 = vunpack.c.l.b16 %v4231
      %v4281 = vpack.c.b16 %v4250, %v4249
      %v4282 = vpack.c.b16 %v4252, %v4251
      %v4283 = vpack.c.b16 %v4254, %v4253
      %v4284 = vpack.c.b16 %v4256, %v4255
      %v4285 = vpack.c.b16 %v4258, %v4257
      %v4286 = vpack.c.b16 %v4260, %v4259
      %v4287 = vpack.c.b16 %v4262, %v4261
      %v4288 = vpack.c.b16 %v4264, %v4263
      %v4289 = vpack.c.b16 %v4266, %v4265
      %v4290 = vpack.c.b16 %v4268, %v4267
      %v4291 = vpack.c.b16 %v4270, %v4269
      %v4292 = vpack.c.b16 %v4272, %v4271
      %v4293 = vpack.c.b16 %v4274, %v4273
      %v4294 = vpack.c.b16 %v4276, %v4275
      %v4295 = vpack.c.b16 %v4278, %v4277
      %v4296 = vpack.c.b16 %v4280, %v4279
      %v4329 = vunpack.c.l.b16 %v4233
      %v4330 = vunpack.c.l.b16 %v4234
      %v4331 = vunpack.c.l.b16 %v4235
      %v4332 = vunpack.c.l.b16 %v4236
      %v4333 = vunpack.c.l.b16 %v4237
      %v4334 = vunpack.c.l.b16 %v4238
      %v4335 = vunpack.c.l.b16 %v4239
      %v4336 = vunpack.c.l.b16 %v4240
      %v4337 = vunpack.c.l.b16 %v4241
      %v4338 = vunpack.c.l.b16 %v4242
      %v4339 = vunpack.c.l.b16 %v4243
      %v4340 = vunpack.c.l.b16 %v4244
      %v4341 = vunpack.c.l.b16 %v4245
      %v4342 = vunpack.c.l.b16 %v4246
      %v4343 = vunpack.c.l.b16 %v4247
      %v4344 = vunpack.c.l.b16 %v4248
      %v4345 = vpack.c.b16 %v4330, %v4329
      %v4346 = vpack.c.b16 %v4332, %v4331
      %v4347 = vpack.c.b16 %v4334, %v4333
      %v4348 = vpack.c.b16 %v4336, %v4335
      %v4349 = vpack.c.b16 %v4338, %v4337
      %v4350 = vpack.c.b16 %v4340, %v4339
      %v4351 = vpack.c.b16 %v4342, %v4341
      %v4352 = vpack.c.b16 %v4344, %v4343
      %4361 = vmatprep.subr.bf16.mxu0 0
      %4362 = vmatpush1.bf16.msra.mxu0 %v4345
      %4363 = vmatprep.subr.bf16.mxu0 0
      %4364 = vmatpush1.bf16.msra.mxu0 %v4346
      %4365 = vmatprep.subr.bf16.mxu0 0
      %4366 = vmatpush1.bf16.msra.mxu0 %v4347
      %4367 = vmatprep.subr.bf16.mxu0 0
      %4368 = vmatpush1.bf16.msra.mxu0 %v4348
      %4369 = vmatprep.subr.bf16.mxu0 0
      %4370 = vmatpush1.bf16.msra.mxu0 %v4349
      %4371 = vmatprep.subr.bf16.mxu0 0
      %4372 = vmatpush1.bf16.msra.mxu0 %v4350
      %4373 = vmatprep.subr.bf16.mxu0 0
      %4374 = vmatpush1.bf16.msra.mxu0 %v4351
      %4375 = vmatprep.subr.bf16.mxu0 0
      %4376 = vmatpush1.bf16.msra.mxu0 %v4352
      %4377 = vmatprep.subr.bf16.mxu0 0
      %4378 = vmatpush1.bf16.msra.mxu0 0
      %4379 = vmatprep.subr.bf16.mxu0 0
      %4380 = vmatpush1.bf16.msra.mxu0 0
      %4381 = vmatprep.subr.bf16.mxu0 0
      %4382 = vmatpush1.bf16.msra.mxu0 0
      %4383 = vmatprep.subr.bf16.mxu0 0
      %4384 = vmatpush1.bf16.msra.mxu0 0
      %4385 = vmatprep.subr.bf16.mxu0 0
      %4386 = vmatpush1.bf16.msra.mxu0 0
      %4387 = vmatprep.subr.bf16.mxu0 0
      %4388 = vmatpush1.bf16.msra.mxu0 0
      %4389 = vmatprep.subr.bf16.mxu0 0
      %4390 = vmatpush1.bf16.msra.mxu0 0
      %4391 = vmatprep.subr.bf16.mxu0 0
      %4392 = vmatpush1.bf16.msra.mxu0 0
      %4393 = vmatprep.mubr.bf16.mxu0 0
      %4394 = vmatmul.mubr.bf16.gmra.mrb[0].mxu0 %v4281
      %v4395 = vpop.f32.mrb[0].mxu0
      %v4396 = vadd.f32 0.0, %v4395
      %v4397 = vpop.f32.mrb[0].mxu0
      %v4398 = vpop.f32.mrb[0].mxu0
      %v4399 = vadd.f32 0.0, %v4398
      %v4400 = vpop.f32.mrb[0].mxu0
      %4401 = vmatprep.mubr.bf16.mxu0 0
      %4402 = vmatmul.mubr.bf16.gmra.mrb[0].mxu0 %v4282
      %v4403 = vpop.f32.mrb[0].mxu0
      %v4404 = vadd.f32 0.0, %v4403
      %v4405 = vpop.f32.mrb[0].mxu0
      %v4406 = vpop.f32.mrb[0].mxu0
      %v4407 = vadd.f32 0.0, %v4406
      %v4408 = vpop.f32.mrb[0].mxu0
      %4409 = vmatprep.mubr.bf16.mxu0 0
      %4410 = vmatmul.mubr.bf16.gmra.mrb[0].mxu0 %v4283
      %v4411 = vpop.f32.mrb[0].mxu0
      %v4412 = vadd.f32 0.0, %v4411
      %v4413 = vpop.f32.mrb[0].mxu0
      %v4414 = vpop.f32.mrb[0].mxu0
      %v4415 = vadd.f32 0.0, %v4414
      %v4416 = vpop.f32.mrb[0].mxu0
      %4417 = vmatprep.mubr.bf16.mxu0 0
      %4418 = vmatmul.mubr.bf16.gmra.mrb[0].mxu0 %v4284
      %v4419 = vpop.f32.mrb[0].mxu0
      %v4420 = vadd.f32 0.0, %v4419
      %v4421 = vpop.f32.mrb[0].mxu0
      %v4422 = vpop.f32.mrb[0].mxu0
      %v4423 = vadd.f32 0.0, %v4422
      %v4424 = vpop.f32.mrb[0].mxu0
      %4425 = vmatprep.mubr.bf16.mxu0 0
      %4426 = vmatmul.mubr.bf16.gmra.mrb[0].mxu0 %v4285
      %v4427 = vpop.f32.mrb[0].mxu0
      %v4428 = vadd.f32 0.0, %v4427
      %v4429 = vpop.f32.mrb[0].mxu0
      %v4430 = vpop.f32.mrb[0].mxu0
      %v4431 = vadd.f32 0.0, %v4430
      %v4432 = vpop.f32.mrb[0].mxu0
      %4433 = vmatprep.mubr.bf16.mxu0 0
      %4434 = vmatmul.mubr.bf16.gmra.mrb[0].mxu0 %v4286
      %v4435 = vpop.f32.mrb[0].mxu0
      %v4436 = vadd.f32 0.0, %v4435
      %v4437 = vpop.f32.mrb[0].mxu0
      %v4438 = vpop.f32.mrb[0].mxu0
      %v4439 = vadd.f32 0.0, %v4438
      %v4440 = vpop.f32.mrb[0].mxu0
      %4441 = vmatprep.mubr.bf16.mxu0 0
      %4442 = vmatmul.mubr.bf16.gmra.mrb[0].mxu0 %v4287
      %v4443 = vpop.f32.mrb[0].mxu0
      %v4444 = vadd.f32 0.0, %v4443
      %v4445 = vpop.f32.mrb[0].mxu0
      %v4446 = vpop.f32.mrb[0].mxu0
      %v4447 = vadd.f32 0.0, %v4446
      %v4448 = vpop.f32.mrb[0].mxu0
      %4449 = vmatprep.mubr.bf16.mxu0 0
      %4450 = vmatmul.mubr.bf16.gmra.mrb[0].mxu0 %v4288
      %v4451 = vpop.f32.mrb[0].mxu0
      %v4452 = vadd.f32 0.0, %v4451
      %v4453 = vpop.f32.mrb[0].mxu0
      %v4454 = vpop.f32.mrb[0].mxu0
      %v4455 = vadd.f32 0.0, %v4454
      %v4456 = vpop.f32.mrb[0].mxu0
      %4457 = vmatprep.mubr.bf16.mxu0 0
      %4458 = vmatmul.mubr.bf16.gmra.mrb[0].mxu0 %v4289
      %v4459 = vpop.f32.mrb[0].mxu0
      %v4460 = vadd.f32 0.0, %v4459
      %v4461 = vpop.f32.mrb[0].mxu0
      %v4462 = vpop.f32.mrb[0].mxu0
      %v4463 = vadd.f32 0.0, %v4462
      %v4464 = vpop.f32.mrb[0].mxu0
      %4465 = vmatprep.mubr.bf16.mxu0 0
      %4466 = vmatmul.mubr.bf16.gmra.mrb[0].mxu0 %v4290
      %v4467 = vpop.f32.mrb[0].mxu0
      %v4468 = vadd.f32 0.0, %v4467
      %v4469 = vpop.f32.mrb[0].mxu0
      %v4470 = vpop.f32.mrb[0].mxu0
      %v4471 = vadd.f32 0.0, %v4470
      %v4472 = vpop.f32.mrb[0].mxu0
      %4473 = vmatprep.mubr.bf16.mxu0 0
      %4474 = vmatmul.mubr.bf16.gmra.mrb[0].mxu0 %v4291
      %v4475 = vpop.f32.mrb[0].mxu0
      %v4476 = vadd.f32 0.0, %v4475
      %v4477 = vpop.f32.mrb[0].mxu0
      %v4478 = vpop.f32.mrb[0].mxu0
      %v4479 = vadd.f32 0.0, %v4478
      %v4480 = vpop.f32.mrb[0].mxu0
      %4481 = vmatprep.mubr.bf16.mxu0 0
      %4482 = vmatmul.mubr.bf16.gmra.mrb[0].mxu0 %v4292
      %v4483 = vpop.f32.mrb[0].mxu0
      %v4484 = vadd.f32 0.0, %v4483
      %v4485 = vpop.f32.mrb[0].mxu0
      %v4486 = vpop.f32.mrb[0].mxu0
      %v4487 = vadd.f32 0.0, %v4486
      %v4488 = vpop.f32.mrb[0].mxu0
      %4489 = vmatprep.mubr.bf16.mxu0 0
      %4490 = vmatmul.mubr.bf16.gmra.mrb[0].mxu0 %v4293
      %v4491 = vpop.f32.mrb[0].mxu0
      %v4492 = vadd.f32 0.0, %v4491
      %v4493 = vpop.f32.mrb[0].mxu0
      %v4494 = vpop.f32.mrb[0].mxu0
      %v4495 = vadd.f32 0.0, %v4494
      %v4496 = vpop.f32.mrb[0].mxu0
      %4497 = vmatprep.mubr.bf16.mxu0 0
      %4498 = vmatmul.mubr.bf16.gmra.mrb[0].mxu0 %v4294
      %v4499 = vpop.f32.mrb[0].mxu0
      %v4500 = vadd.f32 0.0, %v4499
      %v4501 = vpop.f32.mrb[0].mxu0
      %v4502 = vpop.f32.mrb[0].mxu0
      %v4503 = vadd.f32 0.0, %v4502
      %v4504 = vpop.f32.mrb[0].mxu0
      %4505 = vmatprep.mubr.bf16.mxu0 0
      %4506 = vmatmul.mubr.bf16.gmra.mrb[0].mxu0 %v4295
      %v4507 = vpop.f32.mrb[0].mxu0
      %v4508 = vadd.f32 0.0, %v4507
      %v4509 = vpop.f32.mrb[0].mxu0
      %v4510 = vpop.f32.mrb[0].mxu0
      %v4511 = vadd.f32 0.0, %v4510
      %v4512 = vpop.f32.mrb[0].mxu0
      %4513 = vmatprep.mubr.bf16.mxu0 0
      %4514 = vmatmul.mubr.bf16.gmra.mrb[0].mxu0 %v4296
      %v4515 = vpop.f32.mrb[0].mxu0
      %v4516 = vadd.f32 0.0, %v4515
      %v4517 = vpop.f32.mrb[0].mxu0
      %v4518 = vpop.f32.mrb[0].mxu0
      %v4519 = vadd.f32 0.0, %v4518
      %v4520 = vpop.f32.mrb[0].mxu0
      %4521 = vdwg.mxu0
      %v4522 = vadd.f32 %v3768, %v4396
      %v4523 = vadd.f32 %v3769, %v4399
      %v4524 = vadd.f32 %v3770, %v4404
      %v4525 = vadd.f32 %v3771, %v4407
      %v4526 = vadd.f32 %v3772, %v4412
      %v4527 = vadd.f32 %v3773, %v4415
      %v4528 = vadd.f32 %v3774, %v4420
      %v4529 = vadd.f32 %v3775, %v4423
      %v4530 = vadd.f32 %v3776, %v4428
      %v4531 = vadd.f32 %v3777, %v4431
      %v4532 = vadd.f32 %v3778, %v4436
      %v4533 = vadd.f32 %v3779, %v4439
      %v4534 = vadd.f32 %v3780, %v4444
      %v4535 = vadd.f32 %v3781, %v4447
      %v4536 = vadd.f32 %v3782, %v4452
      %v4537 = vadd.f32 %v3783, %v4455
      %v4538 = vadd.f32 %v3784, %v4460
      %v4539 = vadd.f32 %v3785, %v4463
      %v4540 = vadd.f32 %v3786, %v4468
      %v4541 = vadd.f32 %v3787, %v4471
      %v4542 = vadd.f32 %v3788, %v4476
      %v4543 = vadd.f32 %v3789, %v4479
      %v4544 = vadd.f32 %v3790, %v4484
      %v4545 = vadd.f32 %v3791, %v4487
      %v4546 = vadd.f32 %v3792, %v4492
      %v4547 = vadd.f32 %v3793, %v4495
      %v4548 = vadd.f32 %v3794, %v4500
      %v4549 = vadd.f32 %v3795, %v4503
      %v4550 = vadd.f32 %v3796, %v4508
      %v4551 = vadd.f32 %v3797, %v4511
      %v4552 = vadd.f32 %v3798, %v4516
      %v4553 = vadd.f32 %v3799, %v4519
      %v4554 = vld [vmem:[%s3413] sm:$0xe]
      %v4555 = vld [vmem:[%s3413 + $0xc] sm:$0xe]
      %v4556 = vld [vmem:[%s3413 + $0x18] sm:$0xe]
      %v4557 = vld [vmem:[%s3413 + $0x24] sm:$0xe]
      %v4558 = vld [vmem:[%s3413 + $0x30] sm:$0xe]
      %v4559 = vld [vmem:[%s3413 + $0x3c] sm:$0xe]
      %v4560 = vld [vmem:[%s3413 + $0x48] sm:$0xe]
      %v4561 = vld [vmem:[%s3413 + $0x54] sm:$0xe]
      %v4562 = vld [vmem:[%s3413 + $0x60] sm:$0xe]
      %v4563 = vld [vmem:[%s3413 + $0x6c] sm:$0xe]
      %v4564 = vld [vmem:[%s3413 + $0x78] sm:$0xe]
      %v4565 = vld [vmem:[%s3413 + $0x84] sm:$0xe]
      %v4566 = vld [vmem:[%s3413 + $0x90] sm:$0xe]
      %v4567 = vld [vmem:[%s3413 + $0x9c] sm:$0xe]
      %v4568 = vld [vmem:[%s3413 + $0xa8] sm:$0xe]
      %v4569 = vld [vmem:[%s3413 + $0xb4] sm:$0xe]
      %v4618 = vrot.slane %v4554, 5
      %v4619 = vrot.slane %v4618, 4
      %v4620 = vrot.slane %v3801, 5
      %v4621 = vsel %vm1339, %v4619, %v4620
      %v4622 = vrot.slane %v4620, 4
      %v4623 = vrot.slane %v3802, 5
      %v4624 = vsel %vm1339, %v4622, %v4623
      %v4625 = vrot.slane %v4555, 5
      %v4626 = vrot.slane %v4625, 4
      %v4627 = vrot.slane %v3804, 5
      %v4628 = vsel %vm1339, %v4626, %v4627
      %v4629 = vrot.slane %v4627, 4
      %v4630 = vrot.slane %v3805, 5
      %v4631 = vsel %vm1339, %v4629, %v4630
      %v4632 = vrot.slane %v4556, 5
      %v4633 = vrot.slane %v4632, 4
      %v4634 = vrot.slane %v3807, 5
      %v4635 = vsel %vm1339, %v4633, %v4634
      %v4636 = vrot.slane %v4634, 4
      %v4637 = vrot.slane %v3808, 5
      %v4638 = vsel %vm1339, %v4636, %v4637
      %v4639 = vrot.slane %v4557, 5
      %v4640 = vrot.slane %v4639, 4
      %v4641 = vrot.slane %v3810, 5
      %v4642 = vsel %vm1339, %v4640, %v4641
      %v4643 = vrot.slane %v4641, 4
      %v4644 = vrot.slane %v3811, 5
      %v4645 = vsel %vm1339, %v4643, %v4644
      %v4646 = vrot.slane %v4558, 5
      %v4647 = vrot.slane %v4646, 4
      %v4648 = vrot.slane %v3813, 5
      %v4649 = vsel %vm1339, %v4647, %v4648
      %v4650 = vrot.slane %v4648, 4
      %v4651 = vrot.slane %v3814, 5
      %v4652 = vsel %vm1339, %v4650, %v4651
      %v4653 = vrot.slane %v4559, 5
      %v4654 = vrot.slane %v4653, 4
      %v4655 = vrot.slane %v3816, 5
      %v4656 = vsel %vm1339, %v4654, %v4655
      %v4657 = vrot.slane %v4655, 4
      %v4658 = vrot.slane %v3817, 5
      %v4659 = vsel %vm1339, %v4657, %v4658
      %v4660 = vrot.slane %v4560, 5
      %v4661 = vrot.slane %v4660, 4
      %v4662 = vrot.slane %v3819, 5
      %v4663 = vsel %vm1339, %v4661, %v4662
      %v4664 = vrot.slane %v4662, 4
      %v4665 = vrot.slane %v3820, 5
      %v4666 = vsel %vm1339, %v4664, %v4665
      %v4667 = vrot.slane %v4561, 5
      %v4668 = vrot.slane %v4667, 4
      %v4669 = vrot.slane %v3822, 5
      %v4670 = vsel %vm1339, %v4668, %v4669
      %v4671 = vrot.slane %v4669, 4
      %v4672 = vrot.slane %v3823, 5
      %v4673 = vsel %vm1339, %v4671, %v4672
      %v4674 = vrot.slane %v4562, 5
      %v4675 = vrot.slane %v4674, 4
      %v4676 = vrot.slane %v3825, 5
      %v4677 = vsel %vm1339, %v4675, %v4676
      %v4678 = vrot.slane %v4676, 4
      %v4679 = vrot.slane %v3826, 5
      %v4680 = vsel %vm1339, %v4678, %v4679
      %v4681 = vrot.slane %v4563, 5
      %v4682 = vrot.slane %v4681, 4
      %v4683 = vrot.slane %v3828, 5
      %v4684 = vsel %vm1339, %v4682, %v4683
      %v4685 = vrot.slane %v4683, 4
      %v4686 = vrot.slane %v3829, 5
      %v4687 = vsel %vm1339, %v4685, %v4686
      %v4688 = vrot.slane %v4564, 5
      %v4689 = vrot.slane %v4688, 4
      %v4690 = vrot.slane %v3831, 5
      %v4691 = vsel %vm1339, %v4689, %v4690
      %v4692 = vrot.slane %v4690, 4
      %v4693 = vrot.slane %v3832, 5
      %v4694 = vsel %vm1339, %v4692, %v4693
      %v4695 = vrot.slane %v4565, 5
      %v4696 = vrot.slane %v4695, 4
      %v4697 = vrot.slane %v3834, 5
      %v4698 = vsel %vm1339, %v4696, %v4697
      %v4699 = vrot.slane %v4697, 4
      %v4700 = vrot.slane %v3835, 5
      %v4701 = vsel %vm1339, %v4699, %v4700
      %v4702 = vrot.slane %v4566, 5
      %v4703 = vrot.slane %v4702, 4
      %v4704 = vrot.slane %v3837, 5
      %v4705 = vsel %vm1339, %v4703, %v4704
      %v4706 = vrot.slane %v4704, 4
      %v4707 = vrot.slane %v3838, 5
      %v4708 = vsel %vm1339, %v4706, %v4707
      %v4709 = vrot.slane %v4567, 5
      %v4710 = vrot.slane %v4709, 4
      %v4711 = vrot.slane %v3840, 5
      %v4712 = vsel %vm1339, %v4710, %v4711
      %v4713 = vrot.slane %v4711, 4
      %v4714 = vrot.slane %v3841, 5
      %v4715 = vsel %vm1339, %v4713, %v4714
      %v4716 = vrot.slane %v4568, 5
      %v4717 = vrot.slane %v4716, 4
      %v4718 = vrot.slane %v3843, 5
      %v4719 = vsel %vm1339, %v4717, %v4718
      %v4720 = vrot.slane %v4718, 4
      %v4721 = vrot.slane %v3844, 5
      %v4722 = vsel %vm1339, %v4720, %v4721
      %v4723 = vrot.slane %v4569, 5
      %v4724 = vrot.slane %v4723, 4
      %v4725 = vrot.slane %v3846, 5
      %v4726 = vsel %vm1339, %v4724, %v4725
      %v4727 = vrot.slane %v4725, 4
      %v4728 = vrot.slane %v3847, 5
      %v4729 = vsel %vm1339, %v4727, %v4728
      %s4730 = scalar_lea.vmem %s1, 512
      %v4731 = vld [vmem:[%s4730] sm:$0xf]
      %v4732 = vld [vmem:[%s4730 + $0x4] sm:$0xf]
      %v4733 = vld [vmem:[%s4730 + $0x8] sm:$0xf]
      %v4734 = vld [vmem:[%s4730 + $0xc] sm:$0xf]
      %v4735 = vld [vmem:[%s4730 + $0x10] sm:$0xf]
      %v4736 = vld [vmem:[%s4730 + $0x14] sm:$0xf]
      %v4737 = vld [vmem:[%s4730 + $0x18] sm:$0xf]
      %v4738 = vld [vmem:[%s4730 + $0x1c] sm:$0xf]
      %v4739 = vld [vmem:[%s4730 + $0x20] sm:$0xf]
      %v4740 = vld [vmem:[%s4730 + $0x24] sm:$0xf]
      %v4741 = vld [vmem:[%s4730 + $0x28] sm:$0xf]
      %v4742 = vld [vmem:[%s4730 + $0x2c] sm:$0xf]
      %v4743 = vld [vmem:[%s4730 + $0x30] sm:$0xf]
      %v4744 = vld [vmem:[%s4730 + $0x34] sm:$0xf]
      %v4745 = vld [vmem:[%s4730 + $0x38] sm:$0xf]
      %v4746 = vld [vmem:[%s4730 + $0x3c] sm:$0xf]
      %v4747 = vunpack.c.l.b16 %v4621
      %v4748 = vunpack.c.l.b16 %v4624
      %v4749 = vunpack.c.l.b16 %v4628
      %v4750 = vunpack.c.l.b16 %v4631
      %v4751 = vunpack.c.l.b16 %v4635
      %v4752 = vunpack.c.l.b16 %v4638
      %v4753 = vunpack.c.l.b16 %v4642
      %v4754 = vunpack.c.l.b16 %v4645
      %v4755 = vunpack.c.l.b16 %v4649
      %v4756 = vunpack.c.l.b16 %v4652
      %v4757 = vunpack.c.l.b16 %v4656
      %v4758 = vunpack.c.l.b16 %v4659
      %v4759 = vunpack.c.l.b16 %v4663
      %v4760 = vunpack.c.l.b16 %v4666
      %v4761 = vunpack.c.l.b16 %v4670
      %v4762 = vunpack.c.l.b16 %v4673
      %v4763 = vunpack.c.l.b16 %v4677
      %v4764 = vunpack.c.l.b16 %v4680
      %v4765 = vunpack.c.l.b16 %v4684
      %v4766 = vunpack.c.l.b16 %v4687
      %v4767 = vunpack.c.l.b16 %v4691
      %v4768 = vunpack.c.l.b16 %v4694
      %v4769 = vunpack.c.l.b16 %v4698
      %v4770 = vunpack.c.l.b16 %v4701
      %v4771 = vunpack.c.l.b16 %v4705
      %v4772 = vunpack.c.l.b16 %v4708
      %v4773 = vunpack.c.l.b16 %v4712
      %v4774 = vunpack.c.l.b16 %v4715
      %v4775 = vunpack.c.l.b16 %v4719
      %v4776 = vunpack.c.l.b16 %v4722
      %v4777 = vunpack.c.l.b16 %v4726
      %v4778 = vunpack.c.l.b16 %v4729
      %v4779 = vpack.c.b16 %v4748, %v4747
      %v4780 = vpack.c.b16 %v4750, %v4749
      %v4781 = vpack.c.b16 %v4752, %v4751
      %v4782 = vpack.c.b16 %v4754, %v4753
      %v4783 = vpack.c.b16 %v4756, %v4755
      %v4784 = vpack.c.b16 %v4758, %v4757
      %v4785 = vpack.c.b16 %v4760, %v4759
      %v4786 = vpack.c.b16 %v4762, %v4761
      %v4787 = vpack.c.b16 %v4764, %v4763
      %v4788 = vpack.c.b16 %v4766, %v4765
      %v4789 = vpack.c.b16 %v4768, %v4767
      %v4790 = vpack.c.b16 %v4770, %v4769
      %v4791 = vpack.c.b16 %v4772, %v4771
      %v4792 = vpack.c.b16 %v4774, %v4773
      %v4793 = vpack.c.b16 %v4776, %v4775
      %v4794 = vpack.c.b16 %v4778, %v4777
      %v4827 = vunpack.c.l.b16 %v4731
      %v4828 = vunpack.c.l.b16 %v4732
      %v4829 = vunpack.c.l.b16 %v4733
      %v4830 = vunpack.c.l.b16 %v4734
      %v4831 = vunpack.c.l.b16 %v4735
      %v4832 = vunpack.c.l.b16 %v4736
      %v4833 = vunpack.c.l.b16 %v4737
      %v4834 = vunpack.c.l.b16 %v4738
      %v4835 = vunpack.c.l.b16 %v4739
      %v4836 = vunpack.c.l.b16 %v4740
      %v4837 = vunpack.c.l.b16 %v4741
      %v4838 = vunpack.c.l.b16 %v4742
      %v4839 = vunpack.c.l.b16 %v4743
      %v4840 = vunpack.c.l.b16 %v4744
      %v4841 = vunpack.c.l.b16 %v4745
      %v4842 = vunpack.c.l.b16 %v4746
      %v4843 = vpack.c.b16 %v4828, %v4827
      %v4844 = vpack.c.b16 %v4830, %v4829
      %v4845 = vpack.c.b16 %v4832, %v4831
      %v4846 = vpack.c.b16 %v4834, %v4833
      %v4847 = vpack.c.b16 %v4836, %v4835
      %v4848 = vpack.c.b16 %v4838, %v4837
      %v4849 = vpack.c.b16 %v4840, %v4839
      %v4850 = vpack.c.b16 %v4842, %v4841
      %4859 = vmatprep.subr.bf16.mxu0 0
      %4860 = vmatpush1.bf16.msra.mxu0 %v4843
      %4861 = vmatprep.subr.bf16.mxu0 0
      %4862 = vmatpush1.bf16.msra.mxu0 %v4844
      %4863 = vmatprep.subr.bf16.mxu0 0
      %4864 = vmatpush1.bf16.msra.mxu0 %v4845
      %4865 = vmatprep.subr.bf16.mxu0 0
      %4866 = vmatpush1.bf16.msra.mxu0 %v4846
      %4867 = vmatprep.subr.bf16.mxu0 0
      %4868 = vmatpush1.bf16.msra.mxu0 %v4847
      %4869 = vmatprep.subr.bf16.mxu0 0
      %4870 = vmatpush1.bf16.msra.mxu0 %v4848
      %4871 = vmatprep.subr.bf16.mxu0 0
      %4872 = vmatpush1.bf16.msra.mxu0 %v4849
      %4873 = vmatprep.subr.bf16.mxu0 0
      %4874 = vmatpush1.bf16.msra.mxu0 %v4850
      %4875 = vmatprep.subr.bf16.mxu0 0
      %4876 = vmatpush1.bf16.msra.mxu0 0
      %4877 = vmatprep.subr.bf16.mxu0 0
      %4878 = vmatpush1.bf16.msra.mxu0 0
      %4879 = vmatprep.subr.bf16.mxu0 0
      %4880 = vmatpush1.bf16.msra.mxu0 0
      %4881 = vmatprep.subr.bf16.mxu0 0
      %4882 = vmatpush1.bf16.msra.mxu0 0
      %4883 = vmatprep.subr.bf16.mxu0 0
      %4884 = vmatpush1.bf16.msra.mxu0 0
      %4885 = vmatprep.subr.bf16.mxu0 0
      %4886 = vmatpush1.bf16.msra.mxu0 0
      %4887 = vmatprep.subr.bf16.mxu0 0
      %4888 = vmatpush1.bf16.msra.mxu0 0
      %4889 = vmatprep.subr.bf16.mxu0 0
      %4890 = vmatpush1.bf16.msra.mxu0 0
      %4891 = vmatprep.mubr.bf16.mxu0 0
      %4892 = vmatmul.mubr.bf16.gmra.mrb[0].mxu0 %v4779
      %v4893 = vpop.f32.mrb[0].mxu0
      %v4894 = vadd.f32 0.0, %v4893
      %v4895 = vpop.f32.mrb[0].mxu0
      %v4896 = vpop.f32.mrb[0].mxu0
      %v4897 = vadd.f32 0.0, %v4896
      %v4898 = vpop.f32.mrb[0].mxu0
      %4899 = vmatprep.mubr.bf16.mxu0 0
      %4900 = vmatmul.mubr.bf16.gmra.mrb[0].mxu0 %v4780
      %v4901 = vpop.f32.mrb[0].mxu0
      %v4902 = vadd.f32 0.0, %v4901
      %v4903 = vpop.f32.mrb[0].mxu0
      %v4904 = vpop.f32.mrb[0].mxu0
      %v4905 = vadd.f32 0.0, %v4904
      %v4906 = vpop.f32.mrb[0].mxu0
      %4907 = vmatprep.mubr.bf16.mxu0 0
      %4908 = vmatmul.mubr.bf16.gmra.mrb[0].mxu0 %v4781
      %v4909 = vpop.f32.mrb[0].mxu0
      %v4910 = vadd.f32 0.0, %v4909
      %v4911 = vpop.f32.mrb[0].mxu0
      %v4912 = vpop.f32.mrb[0].mxu0
      %v4913 = vadd.f32 0.0, %v4912
      %v4914 = vpop.f32.mrb[0].mxu0
      %4915 = vmatprep.mubr.bf16.mxu0 0
      %4916 = vmatmul.mubr.bf16.gmra.mrb[0].mxu0 %v4782
      %v4917 = vpop.f32.mrb[0].mxu0
      %v4918 = vadd.f32 0.0, %v4917
      %v4919 = vpop.f32.mrb[0].mxu0
      %v4920 = vpop.f32.mrb[0].mxu0
      %v4921 = vadd.f32 0.0, %v4920
      %v4922 = vpop.f32.mrb[0].mxu0
      %4923 = vmatprep.mubr.bf16.mxu0 0
      %4924 = vmatmul.mubr.bf16.gmra.mrb[0].mxu0 %v4783
      %v4925 = vpop.f32.mrb[0].mxu0
      %v4926 = vadd.f32 0.0, %v4925
      %v4927 = vpop.f32.mrb[0].mxu0
      %v4928 = vpop.f32.mrb[0].mxu0
      %v4929 = vadd.f32 0.0, %v4928
      %v4930 = vpop.f32.mrb[0].mxu0
      %4931 = vmatprep.mubr.bf16.mxu0 0
      %4932 = vmatmul.mubr.bf16.gmra.mrb[0].mxu0 %v4784
      %v4933 = vpop.f32.mrb[0].mxu0
      %v4934 = vadd.f32 0.0, %v4933
      %v4935 = vpop.f32.mrb[0].mxu0
      %v4936 = vpop.f32.mrb[0].mxu0
      %v4937 = vadd.f32 0.0, %v4936
      %v4938 = vpop.f32.mrb[0].mxu0
      %4939 = vmatprep.mubr.bf16.mxu0 0
      %4940 = vmatmul.mubr.bf16.gmra.mrb[0].mxu0 %v4785
      %v4941 = vpop.f32.mrb[0].mxu0
      %v4942 = vadd.f32 0.0, %v4941
      %v4943 = vpop.f32.mrb[0].mxu0
      %v4944 = vpop.f32.mrb[0].mxu0
      %v4945 = vadd.f32 0.0, %v4944
      %v4946 = vpop.f32.mrb[0].mxu0
      %4947 = vmatprep.mubr.bf16.mxu0 0
      %4948 = vmatmul.mubr.bf16.gmra.mrb[0].mxu0 %v4786
      %v4949 = vpop.f32.mrb[0].mxu0
      %v4950 = vadd.f32 0.0, %v4949
      %v4951 = vpop.f32.mrb[0].mxu0
      %v4952 = vpop.f32.mrb[0].mxu0
      %v4953 = vadd.f32 0.0, %v4952
      %v4954 = vpop.f32.mrb[0].mxu0
      %4955 = vmatprep.mubr.bf16.mxu0 0
      %4956 = vmatmul.mubr.bf16.gmra.mrb[0].mxu0 %v4787
      %v4957 = vpop.f32.mrb[0].mxu0
      %v4958 = vadd.f32 0.0, %v4957
      %v4959 = vpop.f32.mrb[0].mxu0
      %v4960 = vpop.f32.mrb[0].mxu0
      %v4961 = vadd.f32 0.0, %v4960
      %v4962 = vpop.f32.mrb[0].mxu0
      %4963 = vmatprep.mubr.bf16.mxu0 0
      %4964 = vmatmul.mubr.bf16.gmra.mrb[0].mxu0 %v4788
      %v4965 = vpop.f32.mrb[0].mxu0
      %v4966 = vadd.f32 0.0, %v4965
      %v4967 = vpop.f32.mrb[0].mxu0
      %v4968 = vpop.f32.mrb[0].mxu0
      %v4969 = vadd.f32 0.0, %v4968
      %v4970 = vpop.f32.mrb[0].mxu0
      %4971 = vmatprep.mubr.bf16.mxu0 0
      %4972 = vmatmul.mubr.bf16.gmra.mrb[0].mxu0 %v4789
      %v4973 = vpop.f32.mrb[0].mxu0
      %v4974 = vadd.f32 0.0, %v4973
      %v4975 = vpop.f32.mrb[0].mxu0
      %v4976 = vpop.f32.mrb[0].mxu0
      %v4977 = vadd.f32 0.0, %v4976
      %v4978 = vpop.f32.mrb[0].mxu0
      %4979 = vmatprep.mubr.bf16.mxu0 0
      %4980 = vmatmul.mubr.bf16.gmra.mrb[0].mxu0 %v4790
      %v4981 = vpop.f32.mrb[0].mxu0
      %v4982 = vadd.f32 0.0, %v4981
      %v4983 = vpop.f32.mrb[0].mxu0
      %v4984 = vpop.f32.mrb[0].mxu0
      %v4985 = vadd.f32 0.0, %v4984
      %v4986 = vpop.f32.mrb[0].mxu0
      %4987 = vmatprep.mubr.bf16.mxu0 0
      %4988 = vmatmul.mubr.bf16.gmra.mrb[0].mxu0 %v4791
      %v4989 = vpop.f32.mrb[0].mxu0
      %v4990 = vadd.f32 0.0, %v4989
      %v4991 = vpop.f32.mrb[0].mxu0
      %v4992 = vpop.f32.mrb[0].mxu0
      %v4993 = vadd.f32 0.0, %v4992
      %v4994 = vpop.f32.mrb[0].mxu0
      %4995 = vmatprep.mubr.bf16.mxu0 0
      %4996 = vmatmul.mubr.bf16.gmra.mrb[0].mxu0 %v4792
      %v4997 = vpop.f32.mrb[0].mxu0
      %v4998 = vadd.f32 0.0, %v4997
      %v4999 = vpop.f32.mrb[0].mxu0
      %v5000 = vpop.f32.mrb[0].mxu0
      %v5001 = vadd.f32 0.0, %v5000
      %v5002 = vpop.f32.mrb[0].mxu0
      %5003 = vmatprep.mubr.bf16.mxu0 0
      %5004 = vmatmul.mubr.bf16.gmra.mrb[0].mxu0 %v4793
      %v5005 = vpop.f32.mrb[0].mxu0
      %v5006 = vadd.f32 0.0, %v5005
      %v5007 = vpop.f32.mrb[0].mxu0
      %v5008 = vpop.f32.mrb[0].mxu0
      %v5009 = vadd.f32 0.0, %v5008
      %v5010 = vpop.f32.mrb[0].mxu0
      %5011 = vmatprep.mubr.bf16.mxu0 0
      %5012 = vmatmul.mubr.bf16.gmra.mrb[0].mxu0 %v4794
      %v5013 = vpop.f32.mrb[0].mxu0
      %v5014 = vadd.f32 0.0, %v5013
      %v5015 = vpop.f32.mrb[0].mxu0
      %v5016 = vpop.f32.mrb[0].mxu0
      %v5017 = vadd.f32 0.0, %v5016
      %v5018 = vpop.f32.mrb[0].mxu0
      %5019 = vdwg.mxu0
      %v5020 = vadd.f32 %v4522, %v4894
      %v5021 = vadd.f32 %v4523, %v4897
      %v5022 = vadd.f32 %v4524, %v4902
      %v5023 = vadd.f32 %v4525, %v4905
      %v5024 = vadd.f32 %v4526, %v4910
      %v5025 = vadd.f32 %v4527, %v4913
      %v5026 = vadd.f32 %v4528, %v4918
      %v5027 = vadd.f32 %v4529, %v4921
      %v5028 = vadd.f32 %v4530, %v4926
      %v5029 = vadd.f32 %v4531, %v4929
      %v5030 = vadd.f32 %v4532, %v4934
      %v5031 = vadd.f32 %v4533, %v4937
      %v5032 = vadd.f32 %v4534, %v4942
      %v5033 = vadd.f32 %v4535, %v4945
      %v5034 = vadd.f32 %v4536, %v4950
      %v5035 = vadd.f32 %v4537, %v4953
      %v5036 = vadd.f32 %v4538, %v4958
      %v5037 = vadd.f32 %v4539, %v4961
      %v5038 = vadd.f32 %v4540, %v4966
      %v5039 = vadd.f32 %v4541, %v4969
      %v5040 = vadd.f32 %v4542, %v4974
      %v5041 = vadd.f32 %v4543, %v4977
      %v5042 = vadd.f32 %v4544, %v4982
      %v5043 = vadd.f32 %v4545, %v4985
      %v5044 = vadd.f32 %v4546, %v4990
      %v5045 = vadd.f32 %v4547, %v4993
      %v5046 = vadd.f32 %v4548, %v4998
      %v5047 = vadd.f32 %v4549, %v5001
      %v5048 = vadd.f32 %v4550, %v5006
      %v5049 = vadd.f32 %v4551, %v5009
      %v5050 = vadd.f32 %v4552, %v5014
      %v5051 = vadd.f32 %v4553, %v5017
      %v5052 = vld [vmem:[%s2] sm:$0x1]
      %v5054 = vlaneseq
      %v5055 = vshrl.u32 %v5054, 7
      %v5056 = vsub.s32 0, %v5055
      %v5057 = vrot.slane %v5052, %v5056
      %v5059 = vadd.f32 %v5020, %v5057
      %v5060 = vadd.f32 %v5021, %v5057
      %v5061 = vadd.f32 %v5022, %v5057
      %v5062 = vadd.f32 %v5023, %v5057
      %v5063 = vadd.f32 %v5024, %v5057
      %v5064 = vadd.f32 %v5025, %v5057
      %v5065 = vadd.f32 %v5026, %v5057
      %v5066 = vadd.f32 %v5027, %v5057
      %v5067 = vadd.f32 %v5028, %v5057
      %v5068 = vadd.f32 %v5029, %v5057
      %v5069 = vadd.f32 %v5030, %v5057
      %v5070 = vadd.f32 %v5031, %v5057
      %v5071 = vadd.f32 %v5032, %v5057
      %v5072 = vadd.f32 %v5033, %v5057
      %v5073 = vadd.f32 %v5034, %v5057
      %v5074 = vadd.f32 %v5035, %v5057
      %v5075 = vadd.f32 %v5036, %v5057
      %v5076 = vadd.f32 %v5037, %v5057
      %v5077 = vadd.f32 %v5038, %v5057
      %v5078 = vadd.f32 %v5039, %v5057
      %v5079 = vadd.f32 %v5040, %v5057
      %v5080 = vadd.f32 %v5041, %v5057
      %v5081 = vadd.f32 %v5042, %v5057
      %v5082 = vadd.f32 %v5043, %v5057
      %v5083 = vadd.f32 %v5044, %v5057
      %v5084 = vadd.f32 %v5045, %v5057
      %v5085 = vadd.f32 %v5046, %v5057
      %v5086 = vadd.f32 %v5047, %v5057
      %v5087 = vadd.f32 %v5048, %v5057
      %v5088 = vadd.f32 %v5049, %v5057
      %v5089 = vadd.f32 %v5050, %v5057
      %v5090 = vadd.f32 %v5051, %v5057
      %5091 = vst [vmem:[%s235] sm:$0xff] %v5059
      %5092 = vst [vmem:[%s235 + $0x8] sm:$0xff] %v5060
      %5093 = vst [vmem:[%s235 + $0x10] sm:$0xff] %v5061
      %5094 = vst [vmem:[%s235 + $0x18] sm:$0xff] %v5062
      %5095 = vst [vmem:[%s235 + $0x20] sm:$0xff] %v5063
      %5096 = vst [vmem:[%s235 + $0x28] sm:$0xff] %v5064
      %5097 = vst [vmem:[%s235 + $0x30] sm:$0xff] %v5065
      %5098 = vst [vmem:[%s235 + $0x38] sm:$0xff] %v5066
      %5099 = vst [vmem:[%s235 + $0x40] sm:$0xff] %v5067
      %5100 = vst [vmem:[%s235 + $0x48] sm:$0xff] %v5068
      %5101 = vst [vmem:[%s235 + $0x50] sm:$0xff] %v5069
      %5102 = vst [vmem:[%s235 + $0x58] sm:$0xff] %v5070
      %5103 = vst [vmem:[%s235 + $0x60] sm:$0xff] %v5071
      %5104 = vst [vmem:[%s235 + $0x68] sm:$0xff] %v5072
      %5105 = vst [vmem:[%s235 + $0x70] sm:$0xff] %v5073
      %5106 = vst [vmem:[%s235 + $0x78] sm:$0xff] %v5074
      %5107 = vst [vmem:[%s235 + $0x80] sm:$0xff] %v5075
      %5108 = vst [vmem:[%s235 + $0x88] sm:$0xff] %v5076
      %5109 = vst [vmem:[%s235 + $0x90] sm:$0xff] %v5077
      %5110 = vst [vmem:[%s235 + $0x98] sm:$0xff] %v5078
      %5111 = vst [vmem:[%s235 + $0xa0] sm:$0xff] %v5079
      %5112 = vst [vmem:[%s235 + $0xa8] sm:$0xff] %v5080
      %5113 = vst [vmem:[%s235 + $0xb0] sm:$0xff] %v5081
      %5114 = vst [vmem:[%s235 + $0xb8] sm:$0xff] %v5082
      %5115 = vst [vmem:[%s235 + $0xc0] sm:$0xff] %v5083
      %5116 = vst [vmem:[%s235 + $0xc8] sm:$0xff] %v5084
      %5117 = vst [vmem:[%s235 + $0xd0] sm:$0xff] %v5085
      %5118 = vst [vmem:[%s235 + $0xd8] sm:$0xff] %v5086
      %5119 = vst [vmem:[%s235 + $0xe0] sm:$0xff] %v5087
      %5120 = vst [vmem:[%s235 + $0xe8] sm:$0xff] %v5088
      %5121 = vst [vmem:[%s235 + $0xf0] sm:$0xff] %v5089
      %5122 = vst [vmem:[%s235 + $0xf8] sm:$0xff] %v5090
      %v5123 = vadd.f32 %v5059, %v5060
      %v5124 = vadd.f32 %v5123, %v5061
      %v5125 = vadd.f32 %v5124, %v5062
      %v5126 = vadd.f32 %v5125, %v5063
      %v5127 = vadd.f32 %v5126, %v5064
      %v5128 = vadd.f32 %v5127, %v5065
      %v5129 = vadd.f32 %v5128, %v5066
      %v5130 = vadd.f32 %v5129, %v5067
      %v5131 = vadd.f32 %v5130, %v5068
      %v5132 = vadd.f32 %v5131, %v5069
      %v5133 = vadd.f32 %v5132, %v5070
      %v5134 = vadd.f32 %v5133, %v5071
      %v5135 = vadd.f32 %v5134, %v5072
      %v5136 = vadd.f32 %v5135, %v5073
      %v5137 = vadd.f32 %v5136, %v5074
      %v5138 = vadd.f32 %v5137, %v5075
      %v5139 = vadd.f32 %v5138, %v5076
      %v5140 = vadd.f32 %v5139, %v5077
      %v5141 = vadd.f32 %v5140, %v5078
      %v5142 = vadd.f32 %v5141, %v5079
      %v5143 = vadd.f32 %v5142, %v5080
      %v5144 = vadd.f32 %v5143, %v5081
      %v5145 = vadd.f32 %v5144, %v5082
      %v5146 = vadd.f32 %v5145, %v5083
      %v5147 = vadd.f32 %v5146, %v5084
      %v5148 = vadd.f32 %v5147, %v5085
      %v5149 = vadd.f32 %v5148, %v5086
      %v5150 = vadd.f32 %v5149, %v5087
      %v5151 = vadd.f32 %v5150, %v5088
      %v5152 = vadd.f32 %v5151, %v5089
      %v5153 = vadd.f32 %v5152, %v5090
      %v5154 = vrot.slane %v5153, 4
      %v5155 = vadd.f32 %v5153, %v5154
      %v5156 = vrot.slane %v5155, 2
      %v5157 = vadd.f32 %v5155, %v5156
      %v5158 = vrot.slane %v5157, 1
      %v5159 = vadd.f32 %v5157, %v5158
      %5160 = vst [vmem:[%s238] sm:$0x1] %v5159
      %v5161 = vmul.f32 %v5059, %v5059
      %v5162 = vmul.f32 %v5060, %v5060
      %v5163 = vmul.f32 %v5061, %v5061
      %v5164 = vmul.f32 %v5062, %v5062
      %v5165 = vmul.f32 %v5063, %v5063
      %v5166 = vmul.f32 %v5064, %v5064
      %v5167 = vmul.f32 %v5065, %v5065
      %v5168 = vmul.f32 %v5066, %v5066
      %v5169 = vmul.f32 %v5067, %v5067
      %v5170 = vmul.f32 %v5068, %v5068
      %v5171 = vmul.f32 %v5069, %v5069
      %v5172 = vmul.f32 %v5070, %v5070
      %v5173 = vmul.f32 %v5071, %v5071
      %v5174 = vmul.f32 %v5072, %v5072
      %v5175 = vmul.f32 %v5073, %v5073
      %v5176 = vmul.f32 %v5074, %v5074
      %v5177 = vmul.f32 %v5075, %v5075
      %v5178 = vmul.f32 %v5076, %v5076
      %v5179 = vmul.f32 %v5077, %v5077
      %v5180 = vmul.f32 %v5078, %v5078
      %v5181 = vmul.f32 %v5079, %v5079
      %v5182 = vmul.f32 %v5080, %v5080
      %v5183 = vmul.f32 %v5081, %v5081
      %v5184 = vmul.f32 %v5082, %v5082
      %v5185 = vmul.f32 %v5083, %v5083
      %v5186 = vmul.f32 %v5084, %v5084
      %v5187 = vmul.f32 %v5085, %v5085
      %v5188 = vmul.f32 %v5086, %v5086
      %v5189 = vmul.f32 %v5087, %v5087
      %v5190 = vmul.f32 %v5088, %v5088
      %v5191 = vmul.f32 %v5089, %v5089
      %v5192 = vmul.f32 %v5090, %v5090
      %v5193 = vadd.f32 %v5161, %v5162
      %v5194 = vadd.f32 %v5193, %v5163
      %v5195 = vadd.f32 %v5194, %v5164
      %v5196 = vadd.f32 %v5195, %v5165
      %v5197 = vadd.f32 %v5196, %v5166
      %v5198 = vadd.f32 %v5197, %v5167
      %v5199 = vadd.f32 %v5198, %v5168
      %v5200 = vadd.f32 %v5199, %v5169
      %v5201 = vadd.f32 %v5200, %v5170
      %v5202 = vadd.f32 %v5201, %v5171
      %v5203 = vadd.f32 %v5202, %v5172
      %v5204 = vadd.f32 %v5203, %v5173
      %v5205 = vadd.f32 %v5204, %v5174
      %v5206 = vadd.f32 %v5205, %v5175
      %v5207 = vadd.f32 %v5206, %v5176
      %v5208 = vadd.f32 %v5207, %v5177
      %v5209 = vadd.f32 %v5208, %v5178
      %v5210 = vadd.f32 %v5209, %v5179
      %v5211 = vadd.f32 %v5210, %v5180
      %v5212 = vadd.f32 %v5211, %v5181
      %v5213 = vadd.f32 %v5212, %v5182
      %v5214 = vadd.f32 %v5213, %v5183
      %v5215 = vadd.f32 %v5214, %v5184
      %v5216 = vadd.f32 %v5215, %v5185
      %v5217 = vadd.f32 %v5216, %v5186
      %v5218 = vadd.f32 %v5217, %v5187
      %v5219 = vadd.f32 %v5218, %v5188
      %v5220 = vadd.f32 %v5219, %v5189
      %v5221 = vadd.f32 %v5220, %v5190
      %v5222 = vadd.f32 %v5221, %v5191
      %v5223 = vadd.f32 %v5222, %v5192
      %v5224 = vrot.slane %v5223, 4
      %v5225 = vadd.f32 %v5223, %v5224
      %v5226 = vrot.slane %v5225, 2
      %v5227 = vadd.f32 %v5225, %v5226
      %v5228 = vrot.slane %v5227, 1
      %v5229 = vadd.f32 %v5227, %v5228
      %5230 = vst [vmem:[%s241] sm:$0x1] %v5229
      %p5231 = scmp.lt.s32.totalorder %s17, 1
      %s5232 = scalar_select %p5231, %s17, 1
      %s5233 = smul.addr %s5232, 32
      %s5234 = smul.addr %s5233, 8
      %s5235 = scalar_lea.vmem %s3, %s5234
      %p5236 = scmp.lt.s32.totalorder %s17, 1
      %s5237 = scalar_select %p5236, %s17, 1
      %s5238 = scalar_lea.vmem %s4, %s5237
      %p5239 = scmp.lt.s32.totalorder %s17, 1
      %s5240 = scalar_select %p5239, %s17, 1
      %s5241 = scalar_lea.vmem %s5, %s5240
      // Predicated region
      $region33: #{refinement_residual_block.8} parent=31 // pred_check
        %p5242 = pneg %p103
      $region34: #{refinement_residual_block.8} parent=31 // pred_check_branch
        %5244 = sbr.rel (%p5242) target = $region36
      $region35: #{refinement_residual_block.8} parent=31 // pred_region
        _
      $region36: #{refinement_residual_block.8} parent=31 // pred_fallthru
        _
      // Predicated region
      $region37: #{refinement_residual_block.8} parent=31 // pred_check
        %p5245 = pneg %p129
      $region38: #{refinement_residual_block.8} parent=31 // pred_check_branch
        %5247 = sbr.rel (%p5245) target = $region40
      $region39: #{refinement_residual_block.8} parent=31 // pred_region
        _
      $region40: #{refinement_residual_block.8} parent=31 // pred_fallthru
        _
      // Predicated region
      $region41: #{refinement_residual_block.8} parent=31 // pred_check
        %p5248 = pneg %p155
      $region42: #{refinement_residual_block.8} parent=31 // pred_check_branch
        %5250 = sbr.rel (%p5248) target = $region44
      $region43: #{refinement_residual_block.8} parent=31 // pred_region
        _
      $region44: #{refinement_residual_block.8} parent=31 // pred_fallthru
        _
    $region32: #{refinement_residual_block.8} parent=5 // pred_fallthru
      _
    %p5251 = scmp.le.s32.totalorder 2, %s12
    // Predicated region
    $region45: #{refinement_residual_block.8} parent=5 // pred_check
      %p5252 = pneg %p5251
    $region46: #{refinement_residual_block.8} parent=5 // pred_check_branch
      %5254 = sbr.rel (%p5252) target = $region48
    $region47: #{refinement_residual_block.8} parent=5 // pred_region
      %s5255 = ssub.s32 %s12, 2
      // Predicated region
      $region49: #{refinement_residual_block.8} parent=47 // pred_check
        %p5256 = pneg %p109
      $region50: #{refinement_residual_block.8} parent=47 // pred_check_branch
        %5258 = sbr.rel (%p5256) target = $region52
      $region51: #{refinement_residual_block.8} parent=47 // pred_region
        %p5259 = scmp.lt.s32.totalorder %s18, 1
        %s5260 = scalar_select %p5259, %s18, 1
        %s5261 = smul.addr %s5260, 32
        %s5262 = smul.addr %s5261, 8
        %s5263 = scalar_lea.vmem %s3, %s5262
      $region52: #{refinement_residual_block.8} parent=47 // pred_fallthru
        _
      // Predicated region
      $region53: #{refinement_residual_block.8} parent=47 // pred_check
        %p5264 = pneg %p135
      $region54: #{refinement_residual_block.8} parent=47 // pred_check_branch
        %5266 = sbr.rel (%p5264) target = $region56
      $region55: #{refinement_residual_block.8} parent=47 // pred_region
        %p5267 = scmp.lt.s32.totalorder %s18, 1
        %s5268 = scalar_select %p5267, %s18, 1
        %s5269 = scalar_lea.vmem %s4, %s5268
      $region56: #{refinement_residual_block.8} parent=47 // pred_fallthru
        _
      // Predicated region
      $region57: #{refinement_residual_block.8} parent=47 // pred_check
        %p5270 = pneg %p161
      $region58: #{refinement_residual_block.8} parent=47 // pred_check_branch
        %5272 = sbr.rel (%p5270) target = $region60
      $region59: #{refinement_residual_block.8} parent=47 // pred_region
        %p5273 = scmp.lt.s32.totalorder %s18, 1
        %s5274 = scalar_select %p5273, %s18, 1
        %s5275 = scalar_lea.vmem %s5, %s5274
      $region60: #{refinement_residual_block.8} parent=47 // pred_fallthru
        _
    $region48: #{refinement_residual_block.8} parent=5 // pred_fallthru
      _
  $region6: #{refinement_residual_block.8} parent=0 // loop_footer
    %s16 = sadd.s32 1, %s12
  $region7: #{refinement_residual_block.8} parent=0 // loop_footer_branch
    %11 = sbr.rel target = $region3
  $region8: #{refinement_residual_block.8} parent=0 // loop_exit
    _

</llo_original>
